<compile_context>
chip_gen: v5e
topology: v5e:2x2
jax: 0.10.0
libtpu: 0.0.40
codegen_flags: <defaults>
</compile_context>

<pallas_src>
import functools

import jax
import jax.numpy as jnp
from jax import lax
from jax.experimental import pallas as pl
from jax.experimental.pallas import tpu as pltpu

# ---- module constants (from model.py) ----
BLOCK_SIZE = 256
N_EMBED = 384
NUM_HEADS = 6
HEAD_SIZE = N_EMBED // NUM_HEADS  # 64
Q_CHUNK = 128                     # query-row tile inside the kernel


# ----------------------------------------------------------------------------
# Fused kernel: one grid step == Bblk batch elements; full forward in-kernel.
# ----------------------------------------------------------------------------
def _mha_fused_kernel(x_ref, wqkv_ref, wproj_ref, b_ref, o_ref, *,
                      num_heads, seq_len, approx_recip):
    # x_ref    : (Bblk*T, C)  activations (compute dtype: bf16 or f32)
    # wqkv_ref : (C, 3C)      [Q (pre-scaled by C**-0.5) | K | V], compute dtype
    # wproj_ref: (C, C)       output projection in x@W form, compute dtype
    # b_ref    : (1, C)       projection bias (f32)
    # o_ref    : (Bblk*T, C)  lane-dense output
    M, C = x_ref.shape
    T = seq_len
    n_batch = M // T
    H = C // num_heads
    cdt = x_ref.dtype

    # Fused QKV projection over the whole batch block (big M amortizes MXU
    # weight loads); f32 accumulation, then cast to the compute dtype ONCE.
    qkv = jnp.dot(x_ref[...], wqkv_ref[...],
                  preferred_element_type=jnp.float32).astype(cdt)      # (M, 3C)

    wproj = wproj_ref[...]                                             # (C, C)
    bias = b_ref[...]                                                  # (1, C) f32

    tq = min(Q_CHUNK, T)
    for b in range(n_batch):                       # static, unrolled batch loop
        base = b * T
        # Per-head K/V column slices hoisted out of the query-tile loop
        # (the f32->cdt cast already happened once above).
        k_heads = [qkv[base:base + T, C + h * H: C + (h + 1) * H]
                   for h in range(num_heads)]
        v_heads = [qkv[base:base + T, 2 * C + h * H: 2 * C + (h + 1) * H]
                   for h in range(num_heads)]

        for r0 in range(0, T, tq):                 # static query tiles
            rows = min(tq, T - r0)
            kv_len = r0 + rows                     # keys >= kv_len are fully masked

            # causal mask for this (query tile, trimmed key range)
            row_ids = r0 + lax.broadcasted_iota(jnp.int32, (rows, kv_len), 0)
            col_ids = lax.broadcasted_iota(jnp.int32, (rows, kv_len), 1)
            causal = col_ids <= row_ids

            head_outs = []
            for h in range(num_heads):             # static, unrolled head loop
                # Q columns were pre-scaled by C**-0.5 in the wrapper.
                q_h = qkv[base + r0: base + r0 + rows, h * H:(h + 1) * H]   # (rows, H)
                k_h = k_heads[h][:kv_len, :]                                # (kv_len, H)
                v_h = v_heads[h][:kv_len, :]                                # (kv_len, H)

                # scores = q @ k^T without materializing k^T (contract minor dims)
                s = lax.dot_general(q_h, k_h, (((1,), (1,)), ((), ())),
                                    preferred_element_type=jnp.float32)     # (rows, kv_len)
                s = jnp.where(causal, s, -jnp.inf)

                # softmax in f32 (diagonal guarantees >= 1 unmasked entry / row)
                s = s - jnp.max(s, axis=-1, keepdims=True)
                p = jnp.exp(s)
                denom = jnp.sum(p, axis=-1, keepdims=True)
                if approx_recip:
                    p = p * pl.reciprocal(denom, approx=True)   # EUP, bf16 path
                else:
                    p = p / denom                               # exact, f32 path

                head_outs.append(
                    jnp.dot(p.astype(cdt), v_h,
                            preferred_element_type=jnp.float32).astype(cdt))  # (rows, H)

            # Head concat -> ONE 384-deep projection matmul per query tile.
            cat = jnp.concatenate(head_outs, axis=-1)                        # (rows, C)
            out_tile = jnp.dot(cat, wproj,
                               preferred_element_type=jnp.float32) + bias    # (rows, C) f32
            o_ref[pl.ds(base + r0, rows), :] = out_tile.astype(o_ref.dtype)


# ----------------------------------------------------------------------------
# Wrapper
# ----------------------------------------------------------------------------
def _pick_batch_block(batch, bmax):
    """Largest divisor of `batch` that is <= bmax."""
    bblk = max(1, min(batch, bmax))
    while batch % bblk:
        bblk -= 1
    return bblk


def multi_head_attention(x, params, *, compute_dtype=jnp.bfloat16,
                         out_dtype=jnp.float32, batch_block=4):
    """x: (B,T,C) f32. params: wq/wk/wv (NH,C,H) [x@W form], w_proj (C,C), b_proj (C,)."""
    B, T, C = x.shape
    NH, _, H = params["wq"].shape
    assert NH * H == C
    assert T <= BLOCK_SIZE

    # Fold the reference's C**-0.5 (C = n_embed) score scale into the Q weights.
    scale = jnp.float32(C) ** -0.5

    def stack(w):  # (NH, C, H) -> (C, NH*H), heads concatenated along columns
        return jnp.transpose(w, (1, 0, 2)).reshape(C, NH * H)

    w_qkv = jnp.concatenate(
        [stack(params["wq"]) * scale, stack(params["wk"]), stack(params["wv"])],
        axis=1).astype(compute_dtype)                                   # (C, 3C)
    w_proj = params["w_proj"].astype(compute_dtype)                     # (C, C)
    bias = params["b_proj"].reshape(1, C).astype(jnp.float32)           # (1, C)

    # Batch-blocked grid; x/out presented as a flat lane-dense (B*T, C) slab.
    # batch_block=4 fits v5e's 16 MiB scoped-VMEM default; 8 is fine on v6e/v7x.
    bblk = _pick_batch_block(B, batch_block)
    grid = (B // bblk,)
    x2d = x.reshape(B * T, C).astype(compute_dtype)

    kernel = functools.partial(
        _mha_fused_kernel, num_heads=NH, seq_len=T,
        approx_recip=(jnp.dtype(compute_dtype) != jnp.dtype(jnp.float32)))

    out2d = pl.pallas_call(
        kernel,
        out_shape=jax.ShapeDtypeStruct((B * T, C), out_dtype),
        grid_spec=pltpu.PrefetchScalarGridSpec(
            num_scalar_prefetch=0,
            grid=grid,
            in_specs=[
                pl.BlockSpec((bblk * T, C), lambda g: (g, 0)),
                pl.BlockSpec((C, 3 * C), lambda g: (0, 0)),   # resident weights
                pl.BlockSpec((C, C), lambda g: (0, 0)),       # resident weights
                pl.BlockSpec((1, C), lambda g: (0, 0)),
            ],
            out_specs=pl.BlockSpec((bblk * T, C), lambda g: (g, 0)),
        ),
        compiler_params=pltpu.CompilerParams(
            dimension_semantics=("parallel",)),
    )(x2d, w_qkv, w_proj, bias)

    return out2d.reshape(B, T, C)


# ----------------------------------------------------------------------------
# Pure-JAX reference of the PyTorch forward (dropout = identity)
# ----------------------------------------------------------------------------
def _reference(x, params):
    B, T, C = x.shape
    outs = []
    for h in range(NUM_HEADS):
        q = x @ params["wq"][h]
        k = x @ params["wk"][h]
        v = x @ params["wv"][h]
        wei = (q @ jnp.swapaxes(k, -1, -2)) * (C ** -0.5)
        mask = jnp.tril(jnp.ones((T, T), dtype=bool))
        wei = jnp.where(mask, wei, -jnp.inf)
        wei = jax.nn.softmax(wei, axis=-1)
        outs.append(wei @ v)
    cat = jnp.concatenate(outs, axis=-1)
    return cat @ params["w_proj"] + params["b_proj"]


def init_params(key):
    ks = jax.random.split(key, 5)
    scale = 0.02
    wq = scale * jax.random.normal(ks[0], (NUM_HEADS, N_EMBED, HEAD_SIZE), jnp.float32)
    wk = scale * jax.random.normal(ks[1], (NUM_HEADS, N_EMBED, HEAD_SIZE), jnp.float32)
    wv = scale * jax.random.normal(ks[2], (NUM_HEADS, N_EMBED, HEAD_SIZE), jnp.float32)
    w_proj = scale * jax.random.normal(ks[3], (N_EMBED, N_EMBED), jnp.float32)  # (in, out)
    b_proj = scale * jax.random.normal(ks[4], (N_EMBED,), jnp.float32)
    return dict(wq=wq, wk=wk, wv=wv, w_proj=w_proj, b_proj=b_proj)


if __name__ == "__main__":
    key = jax.random.PRNGKey(0)
    k_param, k_x, k_x2 = jax.random.split(key, 3)
    params = init_params(k_param)

    # --- primary check: small shapes, both compute paths -------------------
    B, T = 2, 64  # T <= block_size (256)
    x = jax.random.normal(k_x, (B, T, N_EMBED), jnp.float32)
    ref = _reference(x, params)

    # f32 compute path (exact softmax divide): tight structural check.
    out_f32 = jax.block_until_ready(
        multi_head_attention(x, params, compute_dtype=jnp.float32))
    assert out_f32.shape == (B, T, N_EMBED)
    assert jnp.allclose(out_f32, ref, atol=5e-3, rtol=5e-3), "f32 kernel mismatch vs reference"

    # default bf16-MXU path (f32 accumulation, f32 softmax, EUP reciprocal).
    out = jax.block_until_ready(multi_head_attention(x, params))
    assert out.shape == (B, T, N_EMBED)
    assert jnp.allclose(out, ref, atol=2e-2, rtol=2e-2), "bf16 kernel mismatch vs reference"

    # --- secondary check: full block_size exercises multi-tile query loop,
    # causal kv trimming and the batch-blocked (Bblk=4) grid step ------------
    B2, T2 = 4, BLOCK_SIZE
    x2 = jax.random.normal(k_x2, (B2, T2, N_EMBED), jnp.float32)
    ref2 = _reference(x2, params)
    out2 = jax.block_until_ready(
        multi_head_attention(x2, params, compute_dtype=jnp.float32))
    assert out2.shape == (B2, T2, N_EMBED)
    assert jnp.allclose(out2, ref2, atol=5e-3, rtol=5e-3), "f32 kernel mismatch at T=256"

    print("KERNEL_OK")
</pallas_src>

<mosaic_0001>
module attributes {stable_mosaic.version = 11 : i64} {
  func.func @_mha_fused_kernel(%arg0: i32, %arg1: memref<128x384xf32, #tpu.memory_space<vmem>>, %arg2: memref<384x1152xf32, #tpu.memory_space<vmem>>, %arg3: memref<384x384xf32, #tpu.memory_space<vmem>>, %arg4: memref<1x384xf32, #tpu.memory_space<vmem>>, %arg5: memref<128x384xf32, #tpu.memory_space<vmem>>) attributes {dimension_semantics = [#tpu.dimension_semantics<parallel>], iteration_bounds = array<i64: 1>, scalar_prefetch = 0 : i64, scratch_operands = 0 : i64, tpu.core_type = #tpu.core_type<tc>, window_params = [{transform_indices = @transform_0, window_bounds = array<i64: 128, 384>}, {pipeline_mode = #tpu.pipeline_mode<synchronous>, transform_indices = @transform_1, window_bounds = array<i64: 384, 1152>}, {pipeline_mode = #tpu.pipeline_mode<synchronous>, transform_indices = @transform_2, window_bounds = array<i64: 384, 384>}, {pipeline_mode = #tpu.pipeline_mode<synchronous>, transform_indices = @transform_3, window_bounds = array<i64: 1, 384>}, {transform_indices = @transform_4, window_bounds = array<i64: 128, 384>}]} {
    %c0 = arith.constant 0 : index
    %c0_0 = arith.constant 0 : index
    %0 = vector.load %arg1[%c0, %c0_0] : memref<128x384xf32, #tpu.memory_space<vmem>>, vector<128x384xf32>
    %c0_1 = arith.constant 0 : index
    %c0_2 = arith.constant 0 : index
    %1 = vector.load %arg2[%c0_1, %c0_2] : memref<384x1152xf32, #tpu.memory_space<vmem>>, vector<384x1152xf32>
    %cst = arith.constant dense<0.000000e+00> : vector<128x1152xf32>
    %2 = tpu.matmul %0, %1, %cst {dimension_numbers = #tpu.dot_dimension_numbers<[1], [0], [0], [1], [0, 0, 1, 1], [], []>} : vector<128x384xf32>, vector<384x1152xf32>, vector<128x1152xf32> -> vector<128x1152xf32>
    %c0_3 = arith.constant 0 : index
    %c0_4 = arith.constant 0 : index
    %3 = vector.load %arg3[%c0_3, %c0_4] : memref<384x384xf32, #tpu.memory_space<vmem>>, vector<384x384xf32>
    %c0_5 = arith.constant 0 : index
    %c0_6 = arith.constant 0 : index
    %4 = vector.load %arg4[%c0_5, %c0_6] : memref<1x384xf32, #tpu.memory_space<vmem>>, vector<1x384xf32>
    %5 = vector.extract_strided_slice %2 {offsets = [0, 384], sizes = [64, 64], strides = [1, 1]} : vector<128x1152xf32> to vector<64x64xf32>
    %6 = vector.extract_strided_slice %2 {offsets = [0, 448], sizes = [64, 64], strides = [1, 1]} : vector<128x1152xf32> to vector<64x64xf32>
    %7 = vector.extract_strided_slice %2 {offsets = [0, 512], sizes = [64, 64], strides = [1, 1]} : vector<128x1152xf32> to vector<64x64xf32>
    %8 = vector.extract_strided_slice %2 {offsets = [0, 576], sizes = [64, 64], strides = [1, 1]} : vector<128x1152xf32> to vector<64x64xf32>
    %9 = vector.extract_strided_slice %2 {offsets = [0, 640], sizes = [64, 64], strides = [1, 1]} : vector<128x1152xf32> to vector<64x64xf32>
    %10 = vector.extract_strided_slice %2 {offsets = [0, 704], sizes = [64, 64], strides = [1, 1]} : vector<128x1152xf32> to vector<64x64xf32>
    %11 = vector.extract_strided_slice %2 {offsets = [0, 768], sizes = [64, 64], strides = [1, 1]} : vector<128x1152xf32> to vector<64x64xf32>
    %12 = vector.extract_strided_slice %2 {offsets = [0, 832], sizes = [64, 64], strides = [1, 1]} : vector<128x1152xf32> to vector<64x64xf32>
    %13 = vector.extract_strided_slice %2 {offsets = [0, 896], sizes = [64, 64], strides = [1, 1]} : vector<128x1152xf32> to vector<64x64xf32>
    %14 = vector.extract_strided_slice %2 {offsets = [0, 960], sizes = [64, 64], strides = [1, 1]} : vector<128x1152xf32> to vector<64x64xf32>
    %15 = vector.extract_strided_slice %2 {offsets = [0, 1024], sizes = [64, 64], strides = [1, 1]} : vector<128x1152xf32> to vector<64x64xf32>
    %16 = vector.extract_strided_slice %2 {offsets = [0, 1088], sizes = [64, 64], strides = [1, 1]} : vector<128x1152xf32> to vector<64x64xf32>
    %17 = tpu.iota {dimensions = array<i32: 0>} : vector<64x64xi32>
    %c0_i32 = arith.constant 0 : i32
    %18 = vector.broadcast %c0_i32 : i32 to vector<64x64xi32>
    %19 = arith.addi %18, %17 : vector<64x64xi32>
    %20 = tpu.iota {dimensions = array<i32: 1>} : vector<64x64xi32>
    %21 = arith.cmpi sle, %20, %19 : vector<64x64xi32>
    %22 = vector.extract_strided_slice %2 {offsets = [0, 0], sizes = [64, 64], strides = [1, 1]} : vector<128x1152xf32> to vector<64x64xf32>
    %cst_7 = arith.constant dense<0.000000e+00> : vector<64x64xf32>
    %23 = tpu.matmul %22, %5, %cst_7 {dimension_numbers = #tpu.dot_dimension_numbers<[1], [1], [0], [0], [0, 0, 1, 0], [], []>} : vector<64x64xf32>, vector<64x64xf32>, vector<64x64xf32> -> vector<64x64xf32>
    %cst_8 = arith.constant 0xFF800000 : f32
    %24 = vector.broadcast %cst_8 : f32 to vector<64x64xf32>
    %25 = arith.select %21, %23, %24 : vector<64x64xi1>, vector<64x64xf32>
    %cst_9 = arith.constant dense<0xFF800000> : vector<64xf32>
    %26 = vector.multi_reduction <maximumf>, %25, %cst_9 [1] : vector<64x64xf32> to vector<64xf32>
    %27 = vector.shape_cast %26 : vector<64xf32> to vector<64x1xf32>
    %28 = vector.broadcast %27 : vector<64x1xf32> to vector<64x64xf32>
    %29 = arith.subf %25, %28 : vector<64x64xf32>
    %30 = math.exp %29 : vector<64x64xf32>
    %cst_10 = arith.constant dense<0.000000e+00> : vector<64xf32>
    %31 = vector.multi_reduction <add>, %30, %cst_10 [1] : vector<64x64xf32> to vector<64xf32>
    %32 = vector.shape_cast %31 : vector<64xf32> to vector<64x1xf32>
    %33 = vector.broadcast %32 : vector<64x1xf32> to vector<64x64xf32>
    %34 = arith.divf %30, %33 : vector<64x64xf32>
    %cst_11 = arith.constant dense<0.000000e+00> : vector<64x64xf32>
    %35 = tpu.matmul %34, %11, %cst_11 {dimension_numbers = #tpu.dot_dimension_numbers<[1], [0], [0], [1], [0, 0, 1, 1], [], []>} : vector<64x64xf32>, vector<64x64xf32>, vector<64x64xf32> -> vector<64x64xf32>
    %36 = vector.extract_strided_slice %2 {offsets = [0, 64], sizes = [64, 64], strides = [1, 1]} : vector<128x1152xf32> to vector<64x64xf32>
    %cst_12 = arith.constant dense<0.000000e+00> : vector<64x64xf32>
    %37 = tpu.matmul %36, %6, %cst_12 {dimension_numbers = #tpu.dot_dimension_numbers<[1], [1], [0], [0], [0, 0, 1, 0], [], []>} : vector<64x64xf32>, vector<64x64xf32>, vector<64x64xf32> -> vector<64x64xf32>
    %cst_13 = arith.constant 0xFF800000 : f32
    %38 = vector.broadcast %cst_13 : f32 to vector<64x64xf32>
    %39 = arith.select %21, %37, %38 : vector<64x64xi1>, vector<64x64xf32>
    %cst_14 = arith.constant dense<0xFF800000> : vector<64xf32>
    %40 = vector.multi_reduction <maximumf>, %39, %cst_14 [1] : vector<64x64xf32> to vector<64xf32>
    %41 = vector.shape_cast %40 : vector<64xf32> to vector<64x1xf32>
    %42 = vector.broadcast %41 : vector<64x1xf32> to vector<64x64xf32>
    %43 = arith.subf %39, %42 : vector<64x64xf32>
    %44 = math.exp %43 : vector<64x64xf32>
    %cst_15 = arith.constant dense<0.000000e+00> : vector<64xf32>
    %45 = vector.multi_reduction <add>, %44, %cst_15 [1] : vector<64x64xf32> to vector<64xf32>
    %46 = vector.shape_cast %45 : vector<64xf32> to vector<64x1xf32>
    %47 = vector.broadcast %46 : vector<64x1xf32> to vector<64x64xf32>
    %48 = arith.divf %44, %47 : vector<64x64xf32>
    %cst_16 = arith.constant dense<0.000000e+00> : vector<64x64xf32>
    %49 = tpu.matmul %48, %12, %cst_16 {dimension_numbers = #tpu.dot_dimension_numbers<[1], [0], [0], [1], [0, 0, 1, 1], [], []>} : vector<64x64xf32>, vector<64x64xf32>, vector<64x64xf32> -> vector<64x64xf32>
    %50 = vector.extract_strided_slice %2 {offsets = [0, 128], sizes = [64, 64], strides = [1, 1]} : vector<128x1152xf32> to vector<64x64xf32>
    %cst_17 = arith.constant dense<0.000000e+00> : vector<64x64xf32>
    %51 = tpu.matmul %50, %7, %cst_17 {dimension_numbers = #tpu.dot_dimension_numbers<[1], [1], [0], [0], [0, 0, 1, 0], [], []>} : vector<64x64xf32>, vector<64x64xf32>, vector<64x64xf32> -> vector<64x64xf32>
    %cst_18 = arith.constant 0xFF800000 : f32
    %52 = vector.broadcast %cst_18 : f32 to vector<64x64xf32>
    %53 = arith.select %21, %51, %52 : vector<64x64xi1>, vector<64x64xf32>
    %cst_19 = arith.constant dense<0xFF800000> : vector<64xf32>
    %54 = vector.multi_reduction <maximumf>, %53, %cst_19 [1] : vector<64x64xf32> to vector<64xf32>
    %55 = vector.shape_cast %54 : vector<64xf32> to vector<64x1xf32>
    %56 = vector.broadcast %55 : vector<64x1xf32> to vector<64x64xf32>
    %57 = arith.subf %53, %56 : vector<64x64xf32>
    %58 = math.exp %57 : vector<64x64xf32>
    %cst_20 = arith.constant dense<0.000000e+00> : vector<64xf32>
    %59 = vector.multi_reduction <add>, %58, %cst_20 [1] : vector<64x64xf32> to vector<64xf32>
    %60 = vector.shape_cast %59 : vector<64xf32> to vector<64x1xf32>
    %61 = vector.broadcast %60 : vector<64x1xf32> to vector<64x64xf32>
    %62 = arith.divf %58, %61 : vector<64x64xf32>
    %cst_21 = arith.constant dense<0.000000e+00> : vector<64x64xf32>
    %63 = tpu.matmul %62, %13, %cst_21 {dimension_numbers = #tpu.dot_dimension_numbers<[1], [0], [0], [1], [0, 0, 1, 1], [], []>} : vector<64x64xf32>, vector<64x64xf32>, vector<64x64xf32> -> vector<64x64xf32>
    %64 = vector.extract_strided_slice %2 {offsets = [0, 192], sizes = [64, 64], strides = [1, 1]} : vector<128x1152xf32> to vector<64x64xf32>
    %cst_22 = arith.constant dense<0.000000e+00> : vector<64x64xf32>
    %65 = tpu.matmul %64, %8, %cst_22 {dimension_numbers = #tpu.dot_dimension_numbers<[1], [1], [0], [0], [0, 0, 1, 0], [], []>} : vector<64x64xf32>, vector<64x64xf32>, vector<64x64xf32> -> vector<64x64xf32>
    %cst_23 = arith.constant 0xFF800000 : f32
    %66 = vector.broadcast %cst_23 : f32 to vector<64x64xf32>
    %67 = arith.select %21, %65, %66 : vector<64x64xi1>, vector<64x64xf32>
    %cst_24 = arith.constant dense<0xFF800000> : vector<64xf32>
    %68 = vector.multi_reduction <maximumf>, %67, %cst_24 [1] : vector<64x64xf32> to vector<64xf32>
    %69 = vector.shape_cast %68 : vector<64xf32> to vector<64x1xf32>
    %70 = vector.broadcast %69 : vector<64x1xf32> to vector<64x64xf32>
    %71 = arith.subf %67, %70 : vector<64x64xf32>
    %72 = math.exp %71 : vector<64x64xf32>
    %cst_25 = arith.constant dense<0.000000e+00> : vector<64xf32>
    %73 = vector.multi_reduction <add>, %72, %cst_25 [1] : vector<64x64xf32> to vector<64xf32>
    %74 = vector.shape_cast %73 : vector<64xf32> to vector<64x1xf32>
    %75 = vector.broadcast %74 : vector<64x1xf32> to vector<64x64xf32>
    %76 = arith.divf %72, %75 : vector<64x64xf32>
    %cst_26 = arith.constant dense<0.000000e+00> : vector<64x64xf32>
    %77 = tpu.matmul %76, %14, %cst_26 {dimension_numbers = #tpu.dot_dimension_numbers<[1], [0], [0], [1], [0, 0, 1, 1], [], []>} : vector<64x64xf32>, vector<64x64xf32>, vector<64x64xf32> -> vector<64x64xf32>
    %78 = vector.extract_strided_slice %2 {offsets = [0, 256], sizes = [64, 64], strides = [1, 1]} : vector<128x1152xf32> to vector<64x64xf32>
    %cst_27 = arith.constant dense<0.000000e+00> : vector<64x64xf32>
    %79 = tpu.matmul %78, %9, %cst_27 {dimension_numbers = #tpu.dot_dimension_numbers<[1], [1], [0], [0], [0, 0, 1, 0], [], []>} : vector<64x64xf32>, vector<64x64xf32>, vector<64x64xf32> -> vector<64x64xf32>
    %cst_28 = arith.constant 0xFF800000 : f32
    %80 = vector.broadcast %cst_28 : f32 to vector<64x64xf32>
    %81 = arith.select %21, %79, %80 : vector<64x64xi1>, vector<64x64xf32>
    %cst_29 = arith.constant dense<0xFF800000> : vector<64xf32>
    %82 = vector.multi_reduction <maximumf>, %81, %cst_29 [1] : vector<64x64xf32> to vector<64xf32>
    %83 = vector.shape_cast %82 : vector<64xf32> to vector<64x1xf32>
    %84 = vector.broadcast %83 : vector<64x1xf32> to vector<64x64xf32>
    %85 = arith.subf %81, %84 : vector<64x64xf32>
    %86 = math.exp %85 : vector<64x64xf32>
    %cst_30 = arith.constant dense<0.000000e+00> : vector<64xf32>
    %87 = vector.multi_reduction <add>, %86, %cst_30 [1] : vector<64x64xf32> to vector<64xf32>
    %88 = vector.shape_cast %87 : vector<64xf32> to vector<64x1xf32>
    %89 = vector.broadcast %88 : vector<64x1xf32> to vector<64x64xf32>
    %90 = arith.divf %86, %89 : vector<64x64xf32>
    %cst_31 = arith.constant dense<0.000000e+00> : vector<64x64xf32>
    %91 = tpu.matmul %90, %15, %cst_31 {dimension_numbers = #tpu.dot_dimension_numbers<[1], [0], [0], [1], [0, 0, 1, 1], [], []>} : vector<64x64xf32>, vector<64x64xf32>, vector<64x64xf32> -> vector<64x64xf32>
    %92 = vector.extract_strided_slice %2 {offsets = [0, 320], sizes = [64, 64], strides = [1, 1]} : vector<128x1152xf32> to vector<64x64xf32>
    %cst_32 = arith.constant dense<0.000000e+00> : vector<64x64xf32>
    %93 = tpu.matmul %92, %10, %cst_32 {dimension_numbers = #tpu.dot_dimension_numbers<[1], [1], [0], [0], [0, 0, 1, 0], [], []>} : vector<64x64xf32>, vector<64x64xf32>, vector<64x64xf32> -> vector<64x64xf32>
    %cst_33 = arith.constant 0xFF800000 : f32
    %94 = vector.broadcast %cst_33 : f32 to vector<64x64xf32>
    %95 = arith.select %21, %93, %94 : vector<64x64xi1>, vector<64x64xf32>
    %cst_34 = arith.constant dense<0xFF800000> : vector<64xf32>
    %96 = vector.multi_reduction <maximumf>, %95, %cst_34 [1] : vector<64x64xf32> to vector<64xf32>
    %97 = vector.shape_cast %96 : vector<64xf32> to vector<64x1xf32>
    %98 = vector.broadcast %97 : vector<64x1xf32> to vector<64x64xf32>
    %99 = arith.subf %95, %98 : vector<64x64xf32>
    %100 = math.exp %99 : vector<64x64xf32>
    %cst_35 = arith.constant dense<0.000000e+00> : vector<64xf32>
    %101 = vector.multi_reduction <add>, %100, %cst_35 [1] : vector<64x64xf32> to vector<64xf32>
    %102 = vector.shape_cast %101 : vector<64xf32> to vector<64x1xf32>
    %103 = vector.broadcast %102 : vector<64x1xf32> to vector<64x64xf32>
    %104 = arith.divf %100, %103 : vector<64x64xf32>
    %cst_36 = arith.constant dense<0.000000e+00> : vector<64x64xf32>
    %105 = tpu.matmul %104, %16, %cst_36 {dimension_numbers = #tpu.dot_dimension_numbers<[1], [0], [0], [1], [0, 0, 1, 1], [], []>} : vector<64x64xf32>, vector<64x64xf32>, vector<64x64xf32> -> vector<64x64xf32>
    %106 = tpu.concatenate %35, %49, %63, %77, %91, %105 in 1 : vector<64x64xf32>, vector<64x64xf32>, vector<64x64xf32>, vector<64x64xf32>, vector<64x64xf32>, vector<64x64xf32> -> vector<64x384xf32>
    %cst_37 = arith.constant dense<0.000000e+00> : vector<64x384xf32>
    %107 = tpu.matmul %106, %3, %cst_37 {dimension_numbers = #tpu.dot_dimension_numbers<[1], [0], [0], [1], [0, 0, 1, 1], [], []>} : vector<64x384xf32>, vector<384x384xf32>, vector<64x384xf32> -> vector<64x384xf32>
    %108 = vector.broadcast %4 : vector<1x384xf32> to vector<64x384xf32>
    %109 = arith.addf %107, %108 : vector<64x384xf32>
    %c0_38 = arith.constant 0 : index
    %c0_39 = arith.constant 0 : index
    %110 = vector.load %arg5[%c0_38, %c0_39] : memref<128x384xf32, #tpu.memory_space<vmem>>, vector<64x384xf32>
    tpu.vector_store %arg5[%c0_38, %c0_39], %109 {strides = array<i32>} : memref<128x384xf32, #tpu.memory_space<vmem>>, vector<64x384xf32>,
    %111 = vector.extract_strided_slice %2 {offsets = [64, 384], sizes = [64, 64], strides = [1, 1]} : vector<128x1152xf32> to vector<64x64xf32>
    %112 = vector.extract_strided_slice %2 {offsets = [64, 448], sizes = [64, 64], strides = [1, 1]} : vector<128x1152xf32> to vector<64x64xf32>
    %113 = vector.extract_strided_slice %2 {offsets = [64, 512], sizes = [64, 64], strides = [1, 1]} : vector<128x1152xf32> to vector<64x64xf32>
    %114 = vector.extract_strided_slice %2 {offsets = [64, 576], sizes = [64, 64], strides = [1, 1]} : vector<128x1152xf32> to vector<64x64xf32>
    %115 = vector.extract_strided_slice %2 {offsets = [64, 640], sizes = [64, 64], strides = [1, 1]} : vector<128x1152xf32> to vector<64x64xf32>
    %116 = vector.extract_strided_slice %2 {offsets = [64, 704], sizes = [64, 64], strides = [1, 1]} : vector<128x1152xf32> to vector<64x64xf32>
    %117 = vector.extract_strided_slice %2 {offsets = [64, 768], sizes = [64, 64], strides = [1, 1]} : vector<128x1152xf32> to vector<64x64xf32>
    %118 = vector.extract_strided_slice %2 {offsets = [64, 832], sizes = [64, 64], strides = [1, 1]} : vector<128x1152xf32> to vector<64x64xf32>
    %119 = vector.extract_strided_slice %2 {offsets = [64, 896], sizes = [64, 64], strides = [1, 1]} : vector<128x1152xf32> to vector<64x64xf32>
    %120 = vector.extract_strided_slice %2 {offsets = [64, 960], sizes = [64, 64], strides = [1, 1]} : vector<128x1152xf32> to vector<64x64xf32>
    %121 = vector.extract_strided_slice %2 {offsets = [64, 1024], sizes = [64, 64], strides = [1, 1]} : vector<128x1152xf32> to vector<64x64xf32>
    %122 = vector.extract_strided_slice %2 {offsets = [64, 1088], sizes = [64, 64], strides = [1, 1]} : vector<128x1152xf32> to vector<64x64xf32>
    %123 = tpu.iota {dimensions = array<i32: 0>} : vector<64x64xi32>
    %c0_i32_40 = arith.constant 0 : i32
    %124 = vector.broadcast %c0_i32_40 : i32 to vector<64x64xi32>
    %125 = arith.addi %124, %123 : vector<64x64xi32>
    %126 = tpu.iota {dimensions = array<i32: 1>} : vector<64x64xi32>
    %127 = arith.cmpi sle, %126, %125 : vector<64x64xi32>
    %128 = vector.extract_strided_slice %2 {offsets = [64, 0], sizes = [64, 64], strides = [1, 1]} : vector<128x1152xf32> to vector<64x64xf32>
    %cst_41 = arith.constant dense<0.000000e+00> : vector<64x64xf32>
    %129 = tpu.matmul %128, %111, %cst_41 {dimension_numbers = #tpu.dot_dimension_numbers<[1], [1], [0], [0], [0, 0, 1, 0], [], []>} : vector<64x64xf32>, vector<64x64xf32>, vector<64x64xf32> -> vector<64x64xf32>
    %cst_42 = arith.constant 0xFF800000 : f32
    %130 = vector.broadcast %cst_42 : f32 to vector<64x64xf32>
    %131 = arith.select %127, %129, %130 : vector<64x64xi1>, vector<64x64xf32>
    %cst_43 = arith.constant dense<0xFF800000> : vector<64xf32>
    %132 = vector.multi_reduction <maximumf>, %131, %cst_43 [1] : vector<64x64xf32> to vector<64xf32>
    %133 = vector.shape_cast %132 : vector<64xf32> to vector<64x1xf32>
    %134 = vector.broadcast %133 : vector<64x1xf32> to vector<64x64xf32>
    %135 = arith.subf %131, %134 : vector<64x64xf32>
    %136 = math.exp %135 : vector<64x64xf32>
    %cst_44 = arith.constant dense<0.000000e+00> : vector<64xf32>
    %137 = vector.multi_reduction <add>, %136, %cst_44 [1] : vector<64x64xf32> to vector<64xf32>
    %138 = vector.shape_cast %137 : vector<64xf32> to vector<64x1xf32>
    %139 = vector.broadcast %138 : vector<64x1xf32> to vector<64x64xf32>
    %140 = arith.divf %136, %139 : vector<64x64xf32>
    %cst_45 = arith.constant dense<0.000000e+00> : vector<64x64xf32>
    %141 = tpu.matmul %140, %117, %cst_45 {dimension_numbers = #tpu.dot_dimension_numbers<[1], [0], [0], [1], [0, 0, 1, 1], [], []>} : vector<64x64xf32>, vector<64x64xf32>, vector<64x64xf32> -> vector<64x64xf32>
    %142 = vector.extract_strided_slice %2 {offsets = [64, 64], sizes = [64, 64], strides = [1, 1]} : vector<128x1152xf32> to vector<64x64xf32>
    %cst_46 = arith.constant dense<0.000000e+00> : vector<64x64xf32>
    %143 = tpu.matmul %142, %112, %cst_46 {dimension_numbers = #tpu.dot_dimension_numbers<[1], [1], [0], [0], [0, 0, 1, 0], [], []>} : vector<64x64xf32>, vector<64x64xf32>, vector<64x64xf32> -> vector<64x64xf32>
    %cst_47 = arith.constant 0xFF800000 : f32
    %144 = vector.broadcast %cst_47 : f32 to vector<64x64xf32>
    %145 = arith.select %127, %143, %144 : vector<64x64xi1>, vector<64x64xf32>
    %cst_48 = arith.constant dense<0xFF800000> : vector<64xf32>
    %146 = vector.multi_reduction <maximumf>, %145, %cst_48 [1] : vector<64x64xf32> to vector<64xf32>
    %147 = vector.shape_cast %146 : vector<64xf32> to vector<64x1xf32>
    %148 = vector.broadcast %147 : vector<64x1xf32> to vector<64x64xf32>
    %149 = arith.subf %145, %148 : vector<64x64xf32>
    %150 = math.exp %149 : vector<64x64xf32>
    %cst_49 = arith.constant dense<0.000000e+00> : vector<64xf32>
    %151 = vector.multi_reduction <add>, %150, %cst_49 [1] : vector<64x64xf32> to vector<64xf32>
    %152 = vector.shape_cast %151 : vector<64xf32> to vector<64x1xf32>
    %153 = vector.broadcast %152 : vector<64x1xf32> to vector<64x64xf32>
    %154 = arith.divf %150, %153 : vector<64x64xf32>
    %cst_50 = arith.constant dense<0.000000e+00> : vector<64x64xf32>
    %155 = tpu.matmul %154, %118, %cst_50 {dimension_numbers = #tpu.dot_dimension_numbers<[1], [0], [0], [1], [0, 0, 1, 1], [], []>} : vector<64x64xf32>, vector<64x64xf32>, vector<64x64xf32> -> vector<64x64xf32>
    %156 = vector.extract_strided_slice %2 {offsets = [64, 128], sizes = [64, 64], strides = [1, 1]} : vector<128x1152xf32> to vector<64x64xf32>
    %cst_51 = arith.constant dense<0.000000e+00> : vector<64x64xf32>
    %157 = tpu.matmul %156, %113, %cst_51 {dimension_numbers = #tpu.dot_dimension_numbers<[1], [1], [0], [0], [0, 0, 1, 0], [], []>} : vector<64x64xf32>, vector<64x64xf32>, vector<64x64xf32> -> vector<64x64xf32>
    %cst_52 = arith.constant 0xFF800000 : f32
    %158 = vector.broadcast %cst_52 : f32 to vector<64x64xf32>
    %159 = arith.select %127, %157, %158 : vector<64x64xi1>, vector<64x64xf32>
    %cst_53 = arith.constant dense<0xFF800000> : vector<64xf32>
    %160 = vector.multi_reduction <maximumf>, %159, %cst_53 [1] : vector<64x64xf32> to vector<64xf32>
    %161 = vector.shape_cast %160 : vector<64xf32> to vector<64x1xf32>
    %162 = vector.broadcast %161 : vector<64x1xf32> to vector<64x64xf32>
    %163 = arith.subf %159, %162 : vector<64x64xf32>
    %164 = math.exp %163 : vector<64x64xf32>
    %cst_54 = arith.constant dense<0.000000e+00> : vector<64xf32>
    %165 = vector.multi_reduction <add>, %164, %cst_54 [1] : vector<64x64xf32> to vector<64xf32>
    %166 = vector.shape_cast %165 : vector<64xf32> to vector<64x1xf32>
    %167 = vector.broadcast %166 : vector<64x1xf32> to vector<64x64xf32>
    %168 = arith.divf %164, %167 : vector<64x64xf32>
    %cst_55 = arith.constant dense<0.000000e+00> : vector<64x64xf32>
    %169 = tpu.matmul %168, %119, %cst_55 {dimension_numbers = #tpu.dot_dimension_numbers<[1], [0], [0], [1], [0, 0, 1, 1], [], []>} : vector<64x64xf32>, vector<64x64xf32>, vector<64x64xf32> -> vector<64x64xf32>
    %170 = vector.extract_strided_slice %2 {offsets = [64, 192], sizes = [64, 64], strides = [1, 1]} : vector<128x1152xf32> to vector<64x64xf32>
    %cst_56 = arith.constant dense<0.000000e+00> : vector<64x64xf32>
    %171 = tpu.matmul %170, %114, %cst_56 {dimension_numbers = #tpu.dot_dimension_numbers<[1], [1], [0], [0], [0, 0, 1, 0], [], []>} : vector<64x64xf32>, vector<64x64xf32>, vector<64x64xf32> -> vector<64x64xf32>
    %cst_57 = arith.constant 0xFF800000 : f32
    %172 = vector.broadcast %cst_57 : f32 to vector<64x64xf32>
    %173 = arith.select %127, %171, %172 : vector<64x64xi1>, vector<64x64xf32>
    %cst_58 = arith.constant dense<0xFF800000> : vector<64xf32>
    %174 = vector.multi_reduction <maximumf>, %173, %cst_58 [1] : vector<64x64xf32> to vector<64xf32>
    %175 = vector.shape_cast %174 : vector<64xf32> to vector<64x1xf32>
    %176 = vector.broadcast %175 : vector<64x1xf32> to vector<64x64xf32>
    %177 = arith.subf %173, %176 : vector<64x64xf32>
    %178 = math.exp %177 : vector<64x64xf32>
    %cst_59 = arith.constant dense<0.000000e+00> : vector<64xf32>
    %179 = vector.multi_reduction <add>, %178, %cst_59 [1] : vector<64x64xf32> to vector<64xf32>
    %180 = vector.shape_cast %179 : vector<64xf32> to vector<64x1xf32>
    %181 = vector.broadcast %180 : vector<64x1xf32> to vector<64x64xf32>
    %182 = arith.divf %178, %181 : vector<64x64xf32>
    %cst_60 = arith.constant dense<0.000000e+00> : vector<64x64xf32>
    %183 = tpu.matmul %182, %120, %cst_60 {dimension_numbers = #tpu.dot_dimension_numbers<[1], [0], [0], [1], [0, 0, 1, 1], [], []>} : vector<64x64xf32>, vector<64x64xf32>, vector<64x64xf32> -> vector<64x64xf32>
    %184 = vector.extract_strided_slice %2 {offsets = [64, 256], sizes = [64, 64], strides = [1, 1]} : vector<128x1152xf32> to vector<64x64xf32>
    %cst_61 = arith.constant dense<0.000000e+00> : vector<64x64xf32>
    %185 = tpu.matmul %184, %115, %cst_61 {dimension_numbers = #tpu.dot_dimension_numbers<[1], [1], [0], [0], [0, 0, 1, 0], [], []>} : vector<64x64xf32>, vector<64x64xf32>, vector<64x64xf32> -> vector<64x64xf32>
    %cst_62 = arith.constant 0xFF800000 : f32
    %186 = vector.broadcast %cst_62 : f32 to vector<64x64xf32>
    %187 = arith.select %127, %185, %186 : vector<64x64xi1>, vector<64x64xf32>
    %cst_63 = arith.constant dense<0xFF800000> : vector<64xf32>
    %188 = vector.multi_reduction <maximumf>, %187, %cst_63 [1] : vector<64x64xf32> to vector<64xf32>
    %189 = vector.shape_cast %188 : vector<64xf32> to vector<64x1xf32>
    %190 = vector.broadcast %189 : vector<64x1xf32> to vector<64x64xf32>
    %191 = arith.subf %187, %190 : vector<64x64xf32>
    %192 = math.exp %191 : vector<64x64xf32>
    %cst_64 = arith.constant dense<0.000000e+00> : vector<64xf32>
    %193 = vector.multi_reduction <add>, %192, %cst_64 [1] : vector<64x64xf32> to vector<64xf32>
    %194 = vector.shape_cast %193 : vector<64xf32> to vector<64x1xf32>
    %195 = vector.broadcast %194 : vector<64x1xf32> to vector<64x64xf32>
    %196 = arith.divf %192, %195 : vector<64x64xf32>
    %cst_65 = arith.constant dense<0.000000e+00> : vector<64x64xf32>
    %197 = tpu.matmul %196, %121, %cst_65 {dimension_numbers = #tpu.dot_dimension_numbers<[1], [0], [0], [1], [0, 0, 1, 1], [], []>} : vector<64x64xf32>, vector<64x64xf32>, vector<64x64xf32> -> vector<64x64xf32>
    %198 = vector.extract_strided_slice %2 {offsets = [64, 320], sizes = [64, 64], strides = [1, 1]} : vector<128x1152xf32> to vector<64x64xf32>
    %cst_66 = arith.constant dense<0.000000e+00> : vector<64x64xf32>
    %199 = tpu.matmul %198, %116, %cst_66 {dimension_numbers = #tpu.dot_dimension_numbers<[1], [1], [0], [0], [0, 0, 1, 0], [], []>} : vector<64x64xf32>, vector<64x64xf32>, vector<64x64xf32> -> vector<64x64xf32>
    %cst_67 = arith.constant 0xFF800000 : f32
    %200 = vector.broadcast %cst_67 : f32 to vector<64x64xf32>
    %201 = arith.select %127, %199, %200 : vector<64x64xi1>, vector<64x64xf32>
    %cst_68 = arith.constant dense<0xFF800000> : vector<64xf32>
    %202 = vector.multi_reduction <maximumf>, %201, %cst_68 [1] : vector<64x64xf32> to vector<64xf32>
    %203 = vector.shape_cast %202 : vector<64xf32> to vector<64x1xf32>
    %204 = vector.broadcast %203 : vector<64x1xf32> to vector<64x64xf32>
    %205 = arith.subf %201, %204 : vector<64x64xf32>
    %206 = math.exp %205 : vector<64x64xf32>
    %cst_69 = arith.constant dense<0.000000e+00> : vector<64xf32>
    %207 = vector.multi_reduction <add>, %206, %cst_69 [1] : vector<64x64xf32> to vector<64xf32>
    %208 = vector.shape_cast %207 : vector<64xf32> to vector<64x1xf32>
    %209 = vector.broadcast %208 : vector<64x1xf32> to vector<64x64xf32>
    %210 = arith.divf %206, %209 : vector<64x64xf32>
    %cst_70 = arith.constant dense<0.000000e+00> : vector<64x64xf32>
    %211 = tpu.matmul %210, %122, %cst_70 {dimension_numbers = #tpu.dot_dimension_numbers<[1], [0], [0], [1], [0, 0, 1, 1], [], []>} : vector<64x64xf32>, vector<64x64xf32>, vector<64x64xf32> -> vector<64x64xf32>
    %212 = tpu.concatenate %141, %155, %169, %183, %197, %211 in 1 : vector<64x64xf32>, vector<64x64xf32>, vector<64x64xf32>, vector<64x64xf32>, vector<64x64xf32>, vector<64x64xf32> -> vector<64x384xf32>
    %cst_71 = arith.constant dense<0.000000e+00> : vector<64x384xf32>
    %213 = tpu.matmul %212, %3, %cst_71 {dimension_numbers = #tpu.dot_dimension_numbers<[1], [0], [0], [1], [0, 0, 1, 1], [], []>} : vector<64x384xf32>, vector<384x384xf32>, vector<64x384xf32> -> vector<64x384xf32>
    %214 = vector.broadcast %4 : vector<1x384xf32> to vector<64x384xf32>
    %215 = arith.addf %213, %214 : vector<64x384xf32>
    %c64 = arith.constant 64 : index
    %c0_72 = arith.constant 0 : index
    %216 = vector.load %arg5[%c64, %c0_72] : memref<128x384xf32, #tpu.memory_space<vmem>>, vector<64x384xf32>
    tpu.vector_store %arg5[%c64, %c0_72], %215 {strides = array<i32>} : memref<128x384xf32, #tpu.memory_space<vmem>>, vector<64x384xf32>,
    return
  }
  func.func @transform_0(%arg0: i32) -> (i32, i32) {
    %c0_i32 = arith.constant 0 : i32
    %c0_i32_0 = arith.constant 0 : i32
    return %arg0, %c0_i32 : i32, i32
  }
  func.func @transform_1(%arg0: i32) -> (i32, i32) {
    %c0_i32 = arith.constant 0 : i32
    %c0_i32_0 = arith.constant 0 : i32
    %c0_i32_1 = arith.constant 0 : i32
    return %c0_i32, %c0_i32_0 : i32, i32
  }
  func.func @transform_2(%arg0: i32) -> (i32, i32) {
    %c0_i32 = arith.constant 0 : i32
    %c0_i32_0 = arith.constant 0 : i32
    %c0_i32_1 = arith.constant 0 : i32
    return %c0_i32, %c0_i32_0 : i32, i32
  }
  func.func @transform_3(%arg0: i32) -> (i32, i32) {
    %c0_i32 = arith.constant 0 : i32
    %c0_i32_0 = arith.constant 0 : i32
    %c0_i32_1 = arith.constant 0 : i32
    return %c0_i32, %c0_i32_0 : i32, i32
  }
  func.func @transform_4(%arg0: i32) -> (i32, i32) {
    %c0_i32 = arith.constant 0 : i32
    %c0_i32_0 = arith.constant 0 : i32
    return %arg0, %c0_i32 : i32, i32
  }
}

</mosaic_0001>

<llo_original>
// kernel: tpu_custom_call.1
$region0: #{tpu_custom_call.1}
  #allocation0 [shape = 'u32[]', space=smem, size = 0x4, offset = 0x4, fixed_abs, tag = 'smem constant byte address 0x4 - core index']
  #allocation1 [shape = 'u32[72,128]{1,0:T(1,128)}', space=vmem, size = 0x9000, scoped, tag = 'internal scratch']
  %s0 = inlined_call_operand.hbm [shape: f32[128,384], index: 0, kind: input, shape index: {}]
  %s1 = inlined_call_operand.hbm [shape: f32[384,1152], index: 1, kind: input, shape index: {}]
  %s2 = inlined_call_operand.hbm [shape: f32[384,384], index: 2, kind: input, shape index: {}]
  %s3 = inlined_call_operand.hbm [shape: f32[1,384], index: 3, kind: input, shape index: {}]
  %s4 = inlined_call_operand.hbm [shape: f32[128,384], index: 4, kind: output, shape index: {}]
  %s5 = sld [smem:[#allocation0]]
  $region42: #{tpu_custom_call.1} parent=0
    _
  %s7 = ssub.s32 1, %s5
  %s8 = scalar_select 0, %s7, %s5
  $region1: #{tpu_custom_call.1} parent=0
    #allocation2 [shape = 'u8[196608]{0}', space=vmem, size = 0x30000, scoped, tag = 'input window, operand 0, single buffered']
    #allocation3 [shape = 's32[1]{0}', space=sflag, size = 0x4, scoped, tag = 'scoped memory for tpu_custom_call.1']
    #allocation4 [shape = 's32[1]{0}', space=sflag, size = 0x4, scoped, tag = 'scoped memory for tpu_custom_call.1']
    #allocation5 [shape = 'u8[1769472]{0}', space=vmem, size = 0x1b0000, scoped, tag = 'input window, operand 1, single buffered']
    #allocation6 [shape = 's32[1]{0}', space=sflag, size = 0x4, scoped, tag = 'scoped memory for tpu_custom_call.1']
    #allocation7 [shape = 'u8[589824]{0}', space=vmem, size = 0x90000, scoped, tag = 'input window, operand 2, single buffered']
    #allocation8 [shape = 'u8[1536]{0}', space=vmem, size = 0x800, scoped, tag = 'input window, operand 3, single buffered']
    #allocation9 [shape = 's32[1]{0}', space=sflag, size = 0x4, scoped, tag = 'scoped memory for tpu_custom_call.1']
    #allocation10 [shape = 'u8[196608]{0}', space=vmem, size = 0x30000, scoped, tag = 'output window, operand 0, single buffered']
    %9 = vsyncpa [#allocation3], 0
    %10 = vsyncpa [#allocation6], 0
    %11 = vsyncpa [#allocation9], 0
    %12 = vsyncpa [#allocation4], 0
    // Predicated region
    $region2: #{tpu_custom_call.1} parent=1 // pred_check
      _
    $region3: #{tpu_custom_call.1} parent=1 // pred_check_branch
      %14 = sbr.rel (0) target = $region5
    $region4: #{tpu_custom_call.1} parent=1 // pred_region
      %16 = vsyncadd [#allocation3], 0
      %s17 = sshll.u32 %s0, 4
      %s18 = int_to_ptr.hbm [resolvable:$true] %s17
      %s19 = sshll.u32 [#allocation2], 4
      %s20 = int_to_ptr.vmem [resolvable:$true] %s19
      %25 = dma.hbm_to_vmem [thread:$0]  %s18, 6144, %s20, [#allocation3], 384, 384, 24
    $region5: #{tpu_custom_call.1} parent=1 // pred_fallthru
      _
    // Predicated region
    $region6: #{tpu_custom_call.1} parent=1 // pred_check
      _
    $region7: #{tpu_custom_call.1} parent=1 // pred_check_branch
      %27 = sbr.rel (0) target = $region9
    $region8: #{tpu_custom_call.1} parent=1 // pred_region
      %29 = vsyncadd [#allocation6], 0
      %s30 = sshll.u32 %s1, 4
      %s31 = int_to_ptr.hbm [resolvable:$true] %s30
      %s32 = sshll.u32 [#allocation5], 4
      %s33 = int_to_ptr.vmem [resolvable:$true] %s32
      %38 = dma.hbm_to_vmem [thread:$0]  %s31, 55296, %s33, [#allocation6], 1152, 1152, 72
    $region9: #{tpu_custom_call.1} parent=1 // pred_fallthru
      _
    // Predicated region
    $region10: #{tpu_custom_call.1} parent=1 // pred_check
      _
    $region11: #{tpu_custom_call.1} parent=1 // pred_check_branch
      %40 = sbr.rel (0) target = $region13
    $region12: #{tpu_custom_call.1} parent=1 // pred_region
      %42 = vsyncadd [#allocation6], 0
      %s43 = sshll.u32 %s2, 4
      %s44 = int_to_ptr.hbm [resolvable:$true] %s43
      %s45 = sshll.u32 [#allocation7], 4
      %s46 = int_to_ptr.vmem [resolvable:$true] %s45
      %51 = dma.hbm_to_vmem [thread:$0]  %s44, 18432, %s46, [#allocation6], 384, 384, 24
    $region13: #{tpu_custom_call.1} parent=1 // pred_fallthru
      _
    // Predicated region
    $region14: #{tpu_custom_call.1} parent=1 // pred_check
      _
    $region15: #{tpu_custom_call.1} parent=1 // pred_check_branch
      %53 = sbr.rel (0) target = $region17
    $region16: #{tpu_custom_call.1} parent=1 // pred_region
      %55 = vsyncadd [#allocation9], 0
      %s57 = sshll.u32 %s3, 4
      %s58 = int_to_ptr.hbm [resolvable:$true] %s57
      %s59 = sshll.u32 [#allocation8], 4
      %s60 = int_to_ptr.vmem [resolvable:$true] %s59
      %62 = dma.hbm_to_vmem [thread:$0]  %s58, 48, %s60, [#allocation9]
    $region17: #{tpu_custom_call.1} parent=1 // pred_fallthru
      _
    // Predicated region
    $region18: #{tpu_custom_call.1} parent=1 // pred_check
      _
    $region19: #{tpu_custom_call.1} parent=1 // pred_check_branch
      %64 = sbr.rel (0) target = $region21
    $region20: #{tpu_custom_call.1} parent=1 // pred_region
      %66 = dma.done [#allocation3], 6144
    $region21: #{tpu_custom_call.1} parent=1 // pred_fallthru
      _
    // Predicated region
    $region22: #{tpu_custom_call.1} parent=1 // pred_check
      _
    $region23: #{tpu_custom_call.1} parent=1 // pred_check_branch
      %68 = sbr.rel (0) target = $region25
    $region24: #{tpu_custom_call.1} parent=1 // pred_region
      %70 = dma.done [#allocation6], 55296
    $region25: #{tpu_custom_call.1} parent=1 // pred_fallthru
      _
    // Predicated region
    $region26: #{tpu_custom_call.1} parent=1 // pred_check
      _
    $region27: #{tpu_custom_call.1} parent=1 // pred_check_branch
      %72 = sbr.rel (0) target = $region29
    $region28: #{tpu_custom_call.1} parent=1 // pred_region
      %74 = dma.done [#allocation6], 18432
    $region29: #{tpu_custom_call.1} parent=1 // pred_fallthru
      _
    // Predicated region
    $region30: #{tpu_custom_call.1} parent=1 // pred_check
      _
    $region31: #{tpu_custom_call.1} parent=1 // pred_check_branch
      %76 = sbr.rel (0) target = $region33
    $region32: #{tpu_custom_call.1} parent=1 // pred_region
      %78 = dma.done [#allocation9], 48
    $region33: #{tpu_custom_call.1} parent=1 // pred_fallthru
      _
    %v79 = vld [vmem:[#allocation2] sm:$0xff]
    %v80 = vld [vmem:[#allocation2 + $0x8] sm:$0xff]
    %v81 = vld [vmem:[#allocation2 + $0x10] sm:$0xff]
    %v82 = vld [vmem:[#allocation2 + $0x18] sm:$0xff]
    %v83 = vld [vmem:[#allocation2 + $0x20] sm:$0xff]
    %v84 = vld [vmem:[#allocation2 + $0x28] sm:$0xff]
    %v85 = vld [vmem:[#allocation2 + $0x30] sm:$0xff]
    %v86 = vld [vmem:[#allocation2 + $0x38] sm:$0xff]
    %v87 = vld [vmem:[#allocation2 + $0x40] sm:$0xff]
    %v88 = vld [vmem:[#allocation2 + $0x48] sm:$0xff]
    %v89 = vld [vmem:[#allocation2 + $0x50] sm:$0xff]
    %v90 = vld [vmem:[#allocation2 + $0x58] sm:$0xff]
    %v91 = vld [vmem:[#allocation2 + $0x60] sm:$0xff]
    %v92 = vld [vmem:[#allocation2 + $0x68] sm:$0xff]
    %v93 = vld [vmem:[#allocation2 + $0x70] sm:$0xff]
    %v94 = vld [vmem:[#allocation2 + $0x78] sm:$0xff]
    %v95 = vld [vmem:[#allocation2 + $0x80] sm:$0xff]
    %v96 = vld [vmem:[#allocation2 + $0x88] sm:$0xff]
    %v97 = vld [vmem:[#allocation2 + $0x90] sm:$0xff]
    %v98 = vld [vmem:[#allocation2 + $0x98] sm:$0xff]
    %v99 = vld [vmem:[#allocation2 + $0xa0] sm:$0xff]
    %v100 = vld [vmem:[#allocation2 + $0xa8] sm:$0xff]
    %v101 = vld [vmem:[#allocation2 + $0xb0] sm:$0xff]
    %v102 = vld [vmem:[#allocation2 + $0xb8] sm:$0xff]
    %v103 = vld [vmem:[#allocation2 + $0xc0] sm:$0xff]
    %v104 = vld [vmem:[#allocation2 + $0xc8] sm:$0xff]
    %v105 = vld [vmem:[#allocation2 + $0xd0] sm:$0xff]
    %v106 = vld [vmem:[#allocation2 + $0xd8] sm:$0xff]
    %v107 = vld [vmem:[#allocation2 + $0xe0] sm:$0xff]
    %v108 = vld [vmem:[#allocation2 + $0xe8] sm:$0xff]
    %v109 = vld [vmem:[#allocation2 + $0xf0] sm:$0xff]
    %v110 = vld [vmem:[#allocation2 + $0xf8] sm:$0xff]
    %v111 = vld [vmem:[#allocation2 + $0x100] sm:$0xff]
    %v112 = vld [vmem:[#allocation2 + $0x108] sm:$0xff]
    %v113 = vld [vmem:[#allocation2 + $0x110] sm:$0xff]
    %v114 = vld [vmem:[#allocation2 + $0x118] sm:$0xff]
    %v115 = vld [vmem:[#allocation2 + $0x120] sm:$0xff]
    %v116 = vld [vmem:[#allocation2 + $0x128] sm:$0xff]
    %v117 = vld [vmem:[#allocation2 + $0x130] sm:$0xff]
    %v118 = vld [vmem:[#allocation2 + $0x138] sm:$0xff]
    %v119 = vld [vmem:[#allocation2 + $0x140] sm:$0xff]
    %v120 = vld [vmem:[#allocation2 + $0x148] sm:$0xff]
    %v121 = vld [vmem:[#allocation2 + $0x150] sm:$0xff]
    %v122 = vld [vmem:[#allocation2 + $0x158] sm:$0xff]
    %v123 = vld [vmem:[#allocation2 + $0x160] sm:$0xff]
    %v124 = vld [vmem:[#allocation2 + $0x168] sm:$0xff]
    %v125 = vld [vmem:[#allocation2 + $0x170] sm:$0xff]
    %v126 = vld [vmem:[#allocation2 + $0x178] sm:$0xff]
    %v127 = vld [vmem:[#allocation5] sm:$0xff]
    %v128 = vld [vmem:[#allocation5 + $0x8] sm:$0xff]
    %v129 = vld [vmem:[#allocation5 + $0x10] sm:$0xff]
    %v130 = vld [vmem:[#allocation5 + $0x18] sm:$0xff]
    %v131 = vld [vmem:[#allocation5 + $0x20] sm:$0xff]
    %v132 = vld [vmem:[#allocation5 + $0x28] sm:$0xff]
    %v133 = vld [vmem:[#allocation5 + $0x30] sm:$0xff]
    %v134 = vld [vmem:[#allocation5 + $0x38] sm:$0xff]
    %v135 = vld [vmem:[#allocation5 + $0x40] sm:$0xff]
    %v136 = vld [vmem:[#allocation5 + $0x48] sm:$0xff]
    %v137 = vld [vmem:[#allocation5 + $0x50] sm:$0xff]
    %v138 = vld [vmem:[#allocation5 + $0x58] sm:$0xff]
    %v139 = vld [vmem:[#allocation5 + $0x60] sm:$0xff]
    %v140 = vld [vmem:[#allocation5 + $0x68] sm:$0xff]
    %v141 = vld [vmem:[#allocation5 + $0x70] sm:$0xff]
    %v142 = vld [vmem:[#allocation5 + $0x78] sm:$0xff]
    %v143 = vld [vmem:[#allocation5 + $0x80] sm:$0xff]
    %v144 = vld [vmem:[#allocation5 + $0x88] sm:$0xff]
    %v145 = vld [vmem:[#allocation5 + $0x90] sm:$0xff]
    %v146 = vld [vmem:[#allocation5 + $0x98] sm:$0xff]
    %v147 = vld [vmem:[#allocation5 + $0xa0] sm:$0xff]
    %v148 = vld [vmem:[#allocation5 + $0xa8] sm:$0xff]
    %v149 = vld [vmem:[#allocation5 + $0xb0] sm:$0xff]
    %v150 = vld [vmem:[#allocation5 + $0xb8] sm:$0xff]
    %v151 = vld [vmem:[#allocation5 + $0xc0] sm:$0xff]
    %v152 = vld [vmem:[#allocation5 + $0xc8] sm:$0xff]
    %v153 = vld [vmem:[#allocation5 + $0xd0] sm:$0xff]
    %v154 = vld [vmem:[#allocation5 + $0xd8] sm:$0xff]
    %v155 = vld [vmem:[#allocation5 + $0xe0] sm:$0xff]
    %v156 = vld [vmem:[#allocation5 + $0xe8] sm:$0xff]
    %v157 = vld [vmem:[#allocation5 + $0xf0] sm:$0xff]
    %v158 = vld [vmem:[#allocation5 + $0xf8] sm:$0xff]
    %v159 = vld [vmem:[#allocation5 + $0x100] sm:$0xff]
    %v160 = vld [vmem:[#allocation5 + $0x108] sm:$0xff]
    %v161 = vld [vmem:[#allocation5 + $0x110] sm:$0xff]
    %v162 = vld [vmem:[#allocation5 + $0x118] sm:$0xff]
    %v163 = vld [vmem:[#allocation5 + $0x120] sm:$0xff]
    %v164 = vld [vmem:[#allocation5 + $0x128] sm:$0xff]
    %v165 = vld [vmem:[#allocation5 + $0x130] sm:$0xff]
    %v166 = vld [vmem:[#allocation5 + $0x138] sm:$0xff]
    %v167 = vld [vmem:[#allocation5 + $0x140] sm:$0xff]
    %v168 = vld [vmem:[#allocation5 + $0x148] sm:$0xff]
    %v169 = vld [vmem:[#allocation5 + $0x150] sm:$0xff]
    %v170 = vld [vmem:[#allocation5 + $0x158] sm:$0xff]
    %v171 = vld [vmem:[#allocation5 + $0x160] sm:$0xff]
    %v172 = vld [vmem:[#allocation5 + $0x168] sm:$0xff]
    %v173 = vld [vmem:[#allocation5 + $0x170] sm:$0xff]
    %v174 = vld [vmem:[#allocation5 + $0x178] sm:$0xff]
    %v175 = vld [vmem:[#allocation5 + $0x180] sm:$0xff]
    %v176 = vld [vmem:[#allocation5 + $0x188] sm:$0xff]
    %v177 = vld [vmem:[#allocation5 + $0x190] sm:$0xff]
    %v178 = vld [vmem:[#allocation5 + $0x198] sm:$0xff]
    %v179 = vld [vmem:[#allocation5 + $0x1a0] sm:$0xff]
    %v180 = vld [vmem:[#allocation5 + $0x1a8] sm:$0xff]
    %v181 = vld [vmem:[#allocation5 + $0x1b0] sm:$0xff]
    %v182 = vld [vmem:[#allocation5 + $0x1b8] sm:$0xff]
    %v183 = vld [vmem:[#allocation5 + $0x1c0] sm:$0xff]
    %v184 = vld [vmem:[#allocation5 + $0x1c8] sm:$0xff]
    %v185 = vld [vmem:[#allocation5 + $0x1d0] sm:$0xff]
    %v186 = vld [vmem:[#allocation5 + $0x1d8] sm:$0xff]
    %v187 = vld [vmem:[#allocation5 + $0x1e0] sm:$0xff]
    %v188 = vld [vmem:[#allocation5 + $0x1e8] sm:$0xff]
    %v189 = vld [vmem:[#allocation5 + $0x1f0] sm:$0xff]
    %v190 = vld [vmem:[#allocation5 + $0x1f8] sm:$0xff]
    %v191 = vld [vmem:[#allocation5 + $0x200] sm:$0xff]
    %v192 = vld [vmem:[#allocation5 + $0x208] sm:$0xff]
    %v193 = vld [vmem:[#allocation5 + $0x210] sm:$0xff]
    %v194 = vld [vmem:[#allocation5 + $0x218] sm:$0xff]
    %v195 = vld [vmem:[#allocation5 + $0x220] sm:$0xff]
    %v196 = vld [vmem:[#allocation5 + $0x228] sm:$0xff]
    %v197 = vld [vmem:[#allocation5 + $0x230] sm:$0xff]
    %v198 = vld [vmem:[#allocation5 + $0x238] sm:$0xff]
    %v199 = vld [vmem:[#allocation5 + $0x240] sm:$0xff]
    %v200 = vld [vmem:[#allocation5 + $0x248] sm:$0xff]
    %v201 = vld [vmem:[#allocation5 + $0x250] sm:$0xff]
    %v202 = vld [vmem:[#allocation5 + $0x258] sm:$0xff]
    %v203 = vld [vmem:[#allocation5 + $0x260] sm:$0xff]
    %v204 = vld [vmem:[#allocation5 + $0x268] sm:$0xff]
    %v205 = vld [vmem:[#allocation5 + $0x270] sm:$0xff]
    %v206 = vld [vmem:[#allocation5 + $0x278] sm:$0xff]
    %v207 = vld [vmem:[#allocation5 + $0x280] sm:$0xff]
    %v208 = vld [vmem:[#allocation5 + $0x288] sm:$0xff]
    %v209 = vld [vmem:[#allocation5 + $0x290] sm:$0xff]
    %v210 = vld [vmem:[#allocation5 + $0x298] sm:$0xff]
    %v211 = vld [vmem:[#allocation5 + $0x2a0] sm:$0xff]
    %v212 = vld [vmem:[#allocation5 + $0x2a8] sm:$0xff]
    %v213 = vld [vmem:[#allocation5 + $0x2b0] sm:$0xff]
    %v214 = vld [vmem:[#allocation5 + $0x2b8] sm:$0xff]
    %v215 = vld [vmem:[#allocation5 + $0x2c0] sm:$0xff]
    %v216 = vld [vmem:[#allocation5 + $0x2c8] sm:$0xff]
    %v217 = vld [vmem:[#allocation5 + $0x2d0] sm:$0xff]
    %v218 = vld [vmem:[#allocation5 + $0x2d8] sm:$0xff]
    %v219 = vld [vmem:[#allocation5 + $0x2e0] sm:$0xff]
    %v220 = vld [vmem:[#allocation5 + $0x2e8] sm:$0xff]
    %v221 = vld [vmem:[#allocation5 + $0x2f0] sm:$0xff]
    %v222 = vld [vmem:[#allocation5 + $0x2f8] sm:$0xff]
    %v223 = vld [vmem:[#allocation5 + $0x300] sm:$0xff]
    %v224 = vld [vmem:[#allocation5 + $0x308] sm:$0xff]
    %v225 = vld [vmem:[#allocation5 + $0x310] sm:$0xff]
    %v226 = vld [vmem:[#allocation5 + $0x318] sm:$0xff]
    %v227 = vld [vmem:[#allocation5 + $0x320] sm:$0xff]
    %v228 = vld [vmem:[#allocation5 + $0x328] sm:$0xff]
    %v229 = vld [vmem:[#allocation5 + $0x330] sm:$0xff]
    %v230 = vld [vmem:[#allocation5 + $0x338] sm:$0xff]
    %v231 = vld [vmem:[#allocation5 + $0x340] sm:$0xff]
    %v232 = vld [vmem:[#allocation5 + $0x348] sm:$0xff]
    %v233 = vld [vmem:[#allocation5 + $0x350] sm:$0xff]
    %v234 = vld [vmem:[#allocation5 + $0x358] sm:$0xff]
    %v235 = vld [vmem:[#allocation5 + $0x360] sm:$0xff]
    %v236 = vld [vmem:[#allocation5 + $0x368] sm:$0xff]
    %v237 = vld [vmem:[#allocation5 + $0x370] sm:$0xff]
    %v238 = vld [vmem:[#allocation5 + $0x378] sm:$0xff]
    %v239 = vld [vmem:[#allocation5 + $0x380] sm:$0xff]
    %v240 = vld [vmem:[#allocation5 + $0x388] sm:$0xff]
    %v241 = vld [vmem:[#allocation5 + $0x390] sm:$0xff]
    %v242 = vld [vmem:[#allocation5 + $0x398] sm:$0xff]
    %v243 = vld [vmem:[#allocation5 + $0x3a0] sm:$0xff]
    %v244 = vld [vmem:[#allocation5 + $0x3a8] sm:$0xff]
    %v245 = vld [vmem:[#allocation5 + $0x3b0] sm:$0xff]
    %v246 = vld [vmem:[#allocation5 + $0x3b8] sm:$0xff]
    %v247 = vld [vmem:[#allocation5 + $0x3c0] sm:$0xff]
    %v248 = vld [vmem:[#allocation5 + $0x3c8] sm:$0xff]
    %v249 = vld [vmem:[#allocation5 + $0x3d0] sm:$0xff]
    %v250 = vld [vmem:[#allocation5 + $0x3d8] sm:$0xff]
    %v251 = vld [vmem:[#allocation5 + $0x3e0] sm:$0xff]
    %v252 = vld [vmem:[#allocation5 + $0x3e8] sm:$0xff]
    %v253 = vld [vmem:[#allocation5 + $0x3f0] sm:$0xff]
    %v254 = vld [vmem:[#allocation5 + $0x3f8] sm:$0xff]
    %v255 = vld [vmem:[#allocation5 + $0x400] sm:$0xff]
    %v256 = vld [vmem:[#allocation5 + $0x408] sm:$0xff]
    %v257 = vld [vmem:[#allocation5 + $0x410] sm:$0xff]
    %v258 = vld [vmem:[#allocation5 + $0x418] sm:$0xff]
    %v259 = vld [vmem:[#allocation5 + $0x420] sm:$0xff]
    %v260 = vld [vmem:[#allocation5 + $0x428] sm:$0xff]
    %v261 = vld [vmem:[#allocation5 + $0x430] sm:$0xff]
    %v262 = vld [vmem:[#allocation5 + $0x438] sm:$0xff]
    %v263 = vld [vmem:[#allocation5 + $0x440] sm:$0xff]
    %v264 = vld [vmem:[#allocation5 + $0x448] sm:$0xff]
    %v265 = vld [vmem:[#allocation5 + $0x450] sm:$0xff]
    %v266 = vld [vmem:[#allocation5 + $0x458] sm:$0xff]
    %v267 = vld [vmem:[#allocation5 + $0x460] sm:$0xff]
    %v268 = vld [vmem:[#allocation5 + $0x468] sm:$0xff]
    %v269 = vld [vmem:[#allocation5 + $0x470] sm:$0xff]
    %v270 = vld [vmem:[#allocation5 + $0x478] sm:$0xff]
    %v271 = vld [vmem:[#allocation5 + $0x480] sm:$0xff]
    %v272 = vld [vmem:[#allocation5 + $0x488] sm:$0xff]
    %v273 = vld [vmem:[#allocation5 + $0x490] sm:$0xff]
    %v274 = vld [vmem:[#allocation5 + $0x498] sm:$0xff]
    %v275 = vld [vmem:[#allocation5 + $0x4a0] sm:$0xff]
    %v276 = vld [vmem:[#allocation5 + $0x4a8] sm:$0xff]
    %v277 = vld [vmem:[#allocation5 + $0x4b0] sm:$0xff]
    %v278 = vld [vmem:[#allocation5 + $0x4b8] sm:$0xff]
    %v279 = vld [vmem:[#allocation5 + $0x4c0] sm:$0xff]
    %v280 = vld [vmem:[#allocation5 + $0x4c8] sm:$0xff]
    %v281 = vld [vmem:[#allocation5 + $0x4d0] sm:$0xff]
    %v282 = vld [vmem:[#allocation5 + $0x4d8] sm:$0xff]
    %v283 = vld [vmem:[#allocation5 + $0x4e0] sm:$0xff]
    %v284 = vld [vmem:[#allocation5 + $0x4e8] sm:$0xff]
    %v285 = vld [vmem:[#allocation5 + $0x4f0] sm:$0xff]
    %v286 = vld [vmem:[#allocation5 + $0x4f8] sm:$0xff]
    %v287 = vld [vmem:[#allocation5 + $0x500] sm:$0xff]
    %v288 = vld [vmem:[#allocation5 + $0x508] sm:$0xff]
    %v289 = vld [vmem:[#allocation5 + $0x510] sm:$0xff]
    %v290 = vld [vmem:[#allocation5 + $0x518] sm:$0xff]
    %v291 = vld [vmem:[#allocation5 + $0x520] sm:$0xff]
    %v292 = vld [vmem:[#allocation5 + $0x528] sm:$0xff]
    %v293 = vld [vmem:[#allocation5 + $0x530] sm:$0xff]
    %v294 = vld [vmem:[#allocation5 + $0x538] sm:$0xff]
    %v295 = vld [vmem:[#allocation5 + $0x540] sm:$0xff]
    %v296 = vld [vmem:[#allocation5 + $0x548] sm:$0xff]
    %v297 = vld [vmem:[#allocation5 + $0x550] sm:$0xff]
    %v298 = vld [vmem:[#allocation5 + $0x558] sm:$0xff]
    %v299 = vld [vmem:[#allocation5 + $0x560] sm:$0xff]
    %v300 = vld [vmem:[#allocation5 + $0x568] sm:$0xff]
    %v301 = vld [vmem:[#allocation5 + $0x570] sm:$0xff]
    %v302 = vld [vmem:[#allocation5 + $0x578] sm:$0xff]
    %v303 = vld [vmem:[#allocation5 + $0x580] sm:$0xff]
    %v304 = vld [vmem:[#allocation5 + $0x588] sm:$0xff]
    %v305 = vld [vmem:[#allocation5 + $0x590] sm:$0xff]
    %v306 = vld [vmem:[#allocation5 + $0x598] sm:$0xff]
    %v307 = vld [vmem:[#allocation5 + $0x5a0] sm:$0xff]
    %v308 = vld [vmem:[#allocation5 + $0x5a8] sm:$0xff]
    %v309 = vld [vmem:[#allocation5 + $0x5b0] sm:$0xff]
    %v310 = vld [vmem:[#allocation5 + $0x5b8] sm:$0xff]
    %v311 = vld [vmem:[#allocation5 + $0x5c0] sm:$0xff]
    %v312 = vld [vmem:[#allocation5 + $0x5c8] sm:$0xff]
    %v313 = vld [vmem:[#allocation5 + $0x5d0] sm:$0xff]
    %v314 = vld [vmem:[#allocation5 + $0x5d8] sm:$0xff]
    %v315 = vld [vmem:[#allocation5 + $0x5e0] sm:$0xff]
    %v316 = vld [vmem:[#allocation5 + $0x5e8] sm:$0xff]
    %v317 = vld [vmem:[#allocation5 + $0x5f0] sm:$0xff]
    %v318 = vld [vmem:[#allocation5 + $0x5f8] sm:$0xff]
    %v319 = vld [vmem:[#allocation5 + $0x600] sm:$0xff]
    %v320 = vld [vmem:[#allocation5 + $0x608] sm:$0xff]
    %v321 = vld [vmem:[#allocation5 + $0x610] sm:$0xff]
    %v322 = vld [vmem:[#allocation5 + $0x618] sm:$0xff]
    %v323 = vld [vmem:[#allocation5 + $0x620] sm:$0xff]
    %v324 = vld [vmem:[#allocation5 + $0x628] sm:$0xff]
    %v325 = vld [vmem:[#allocation5 + $0x630] sm:$0xff]
    %v326 = vld [vmem:[#allocation5 + $0x638] sm:$0xff]
    %v327 = vld [vmem:[#allocation5 + $0x640] sm:$0xff]
    %v328 = vld [vmem:[#allocation5 + $0x648] sm:$0xff]
    %v329 = vld [vmem:[#allocation5 + $0x650] sm:$0xff]
    %v330 = vld [vmem:[#allocation5 + $0x658] sm:$0xff]
    %v331 = vld [vmem:[#allocation5 + $0x660] sm:$0xff]
    %v332 = vld [vmem:[#allocation5 + $0x668] sm:$0xff]
    %v333 = vld [vmem:[#allocation5 + $0x670] sm:$0xff]
    %v334 = vld [vmem:[#allocation5 + $0x678] sm:$0xff]
    %v335 = vld [vmem:[#allocation5 + $0x680] sm:$0xff]
    %v336 = vld [vmem:[#allocation5 + $0x688] sm:$0xff]
    %v337 = vld [vmem:[#allocation5 + $0x690] sm:$0xff]
    %v338 = vld [vmem:[#allocation5 + $0x698] sm:$0xff]
    %v339 = vld [vmem:[#allocation5 + $0x6a0] sm:$0xff]
    %v340 = vld [vmem:[#allocation5 + $0x6a8] sm:$0xff]
    %v341 = vld [vmem:[#allocation5 + $0x6b0] sm:$0xff]
    %v342 = vld [vmem:[#allocation5 + $0x6b8] sm:$0xff]
    %v343 = vld [vmem:[#allocation5 + $0x6c0] sm:$0xff]
    %v344 = vld [vmem:[#allocation5 + $0x6c8] sm:$0xff]
    %v345 = vld [vmem:[#allocation5 + $0x6d0] sm:$0xff]
    %v346 = vld [vmem:[#allocation5 + $0x6d8] sm:$0xff]
    %v347 = vld [vmem:[#allocation5 + $0x6e0] sm:$0xff]
    %v348 = vld [vmem:[#allocation5 + $0x6e8] sm:$0xff]
    %v349 = vld [vmem:[#allocation5 + $0x6f0] sm:$0xff]
    %v350 = vld [vmem:[#allocation5 + $0x6f8] sm:$0xff]
    %v351 = vld [vmem:[#allocation5 + $0x700] sm:$0xff]
    %v352 = vld [vmem:[#allocation5 + $0x708] sm:$0xff]
    %v353 = vld [vmem:[#allocation5 + $0x710] sm:$0xff]
    %v354 = vld [vmem:[#allocation5 + $0x718] sm:$0xff]
    %v355 = vld [vmem:[#allocation5 + $0x720] sm:$0xff]
    %v356 = vld [vmem:[#allocation5 + $0x728] sm:$0xff]
    %v357 = vld [vmem:[#allocation5 + $0x730] sm:$0xff]
    %v358 = vld [vmem:[#allocation5 + $0x738] sm:$0xff]
    %v359 = vld [vmem:[#allocation5 + $0x740] sm:$0xff]
    %v360 = vld [vmem:[#allocation5 + $0x748] sm:$0xff]
    %v361 = vld [vmem:[#allocation5 + $0x750] sm:$0xff]
    %v362 = vld [vmem:[#allocation5 + $0x758] sm:$0xff]
    %v363 = vld [vmem:[#allocation5 + $0x760] sm:$0xff]
    %v364 = vld [vmem:[#allocation5 + $0x768] sm:$0xff]
    %v365 = vld [vmem:[#allocation5 + $0x770] sm:$0xff]
    %v366 = vld [vmem:[#allocation5 + $0x778] sm:$0xff]
    %v367 = vld [vmem:[#allocation5 + $0x780] sm:$0xff]
    %v368 = vld [vmem:[#allocation5 + $0x788] sm:$0xff]
    %v369 = vld [vmem:[#allocation5 + $0x790] sm:$0xff]
    %v370 = vld [vmem:[#allocation5 + $0x798] sm:$0xff]
    %v371 = vld [vmem:[#allocation5 + $0x7a0] sm:$0xff]
    %v372 = vld [vmem:[#allocation5 + $0x7a8] sm:$0xff]
    %v373 = vld [vmem:[#allocation5 + $0x7b0] sm:$0xff]
    %v374 = vld [vmem:[#allocation5 + $0x7b8] sm:$0xff]
    %v375 = vld [vmem:[#allocation5 + $0x7c0] sm:$0xff]
    %v376 = vld [vmem:[#allocation5 + $0x7c8] sm:$0xff]
    %v377 = vld [vmem:[#allocation5 + $0x7d0] sm:$0xff]
    %v378 = vld [vmem:[#allocation5 + $0x7d8] sm:$0xff]
    %v379 = vld [vmem:[#allocation5 + $0x7e0] sm:$0xff]
    %v380 = vld [vmem:[#allocation5 + $0x7e8] sm:$0xff]
    %v381 = vld [vmem:[#allocation5 + $0x7f0] sm:$0xff]
    %v382 = vld [vmem:[#allocation5 + $0x7f8] sm:$0xff]
    %v383 = vld [vmem:[#allocation5 + $0x800] sm:$0xff]
    %v384 = vld [vmem:[#allocation5 + $0x808] sm:$0xff]
    %v385 = vld [vmem:[#allocation5 + $0x810] sm:$0xff]
    %v386 = vld [vmem:[#allocation5 + $0x818] sm:$0xff]
    %v387 = vld [vmem:[#allocation5 + $0x820] sm:$0xff]
    %v388 = vld [vmem:[#allocation5 + $0x828] sm:$0xff]
    %v389 = vld [vmem:[#allocation5 + $0x830] sm:$0xff]
    %v390 = vld [vmem:[#allocation5 + $0x838] sm:$0xff]
    %v391 = vld [vmem:[#allocation5 + $0x840] sm:$0xff]
    %v392 = vld [vmem:[#allocation5 + $0x848] sm:$0xff]
    %v393 = vld [vmem:[#allocation5 + $0x850] sm:$0xff]
    %v394 = vld [vmem:[#allocation5 + $0x858] sm:$0xff]
    %v395 = vld [vmem:[#allocation5 + $0x860] sm:$0xff]
    %v396 = vld [vmem:[#allocation5 + $0x868] sm:$0xff]
    %v397 = vld [vmem:[#allocation5 + $0x870] sm:$0xff]
    %v398 = vld [vmem:[#allocation5 + $0x878] sm:$0xff]
    %v399 = vld [vmem:[#allocation5 + $0x880] sm:$0xff]
    %v400 = vld [vmem:[#allocation5 + $0x888] sm:$0xff]
    %v401 = vld [vmem:[#allocation5 + $0x890] sm:$0xff]
    %v402 = vld [vmem:[#allocation5 + $0x898] sm:$0xff]
    %v403 = vld [vmem:[#allocation5 + $0x8a0] sm:$0xff]
    %v404 = vld [vmem:[#allocation5 + $0x8a8] sm:$0xff]
    %v405 = vld [vmem:[#allocation5 + $0x8b0] sm:$0xff]
    %v406 = vld [vmem:[#allocation5 + $0x8b8] sm:$0xff]
    %v407 = vld [vmem:[#allocation5 + $0x8c0] sm:$0xff]
    %v408 = vld [vmem:[#allocation5 + $0x8c8] sm:$0xff]
    %v409 = vld [vmem:[#allocation5 + $0x8d0] sm:$0xff]
    %v410 = vld [vmem:[#allocation5 + $0x8d8] sm:$0xff]
    %v411 = vld [vmem:[#allocation5 + $0x8e0] sm:$0xff]
    %v412 = vld [vmem:[#allocation5 + $0x8e8] sm:$0xff]
    %v413 = vld [vmem:[#allocation5 + $0x8f0] sm:$0xff]
    %v414 = vld [vmem:[#allocation5 + $0x8f8] sm:$0xff]
    %v415 = vld [vmem:[#allocation5 + $0x900] sm:$0xff]
    %v416 = vld [vmem:[#allocation5 + $0x908] sm:$0xff]
    %v417 = vld [vmem:[#allocation5 + $0x910] sm:$0xff]
    %v418 = vld [vmem:[#allocation5 + $0x918] sm:$0xff]
    %v419 = vld [vmem:[#allocation5 + $0x920] sm:$0xff]
    %v420 = vld [vmem:[#allocation5 + $0x928] sm:$0xff]
    %v421 = vld [vmem:[#allocation5 + $0x930] sm:$0xff]
    %v422 = vld [vmem:[#allocation5 + $0x938] sm:$0xff]
    %v423 = vld [vmem:[#allocation5 + $0x940] sm:$0xff]
    %v424 = vld [vmem:[#allocation5 + $0x948] sm:$0xff]
    %v425 = vld [vmem:[#allocation5 + $0x950] sm:$0xff]
    %v426 = vld [vmem:[#allocation5 + $0x958] sm:$0xff]
    %v427 = vld [vmem:[#allocation5 + $0x960] sm:$0xff]
    %v428 = vld [vmem:[#allocation5 + $0x968] sm:$0xff]
    %v429 = vld [vmem:[#allocation5 + $0x970] sm:$0xff]
    %v430 = vld [vmem:[#allocation5 + $0x978] sm:$0xff]
    %v431 = vld [vmem:[#allocation5 + $0x980] sm:$0xff]
    %v432 = vld [vmem:[#allocation5 + $0x988] sm:$0xff]
    %v433 = vld [vmem:[#allocation5 + $0x990] sm:$0xff]
    %v434 = vld [vmem:[#allocation5 + $0x998] sm:$0xff]
    %v435 = vld [vmem:[#allocation5 + $0x9a0] sm:$0xff]
    %v436 = vld [vmem:[#allocation5 + $0x9a8] sm:$0xff]
    %v437 = vld [vmem:[#allocation5 + $0x9b0] sm:$0xff]
    %v438 = vld [vmem:[#allocation5 + $0x9b8] sm:$0xff]
    %v439 = vld [vmem:[#allocation5 + $0x9c0] sm:$0xff]
    %v440 = vld [vmem:[#allocation5 + $0x9c8] sm:$0xff]
    %v441 = vld [vmem:[#allocation5 + $0x9d0] sm:$0xff]
    %v442 = vld [vmem:[#allocation5 + $0x9d8] sm:$0xff]
    %v443 = vld [vmem:[#allocation5 + $0x9e0] sm:$0xff]
    %v444 = vld [vmem:[#allocation5 + $0x9e8] sm:$0xff]
    %v445 = vld [vmem:[#allocation5 + $0x9f0] sm:$0xff]
    %v446 = vld [vmem:[#allocation5 + $0x9f8] sm:$0xff]
    %v447 = vld [vmem:[#allocation5 + $0xa00] sm:$0xff]
    %v448 = vld [vmem:[#allocation5 + $0xa08] sm:$0xff]
    %v449 = vld [vmem:[#allocation5 + $0xa10] sm:$0xff]
    %v450 = vld [vmem:[#allocation5 + $0xa18] sm:$0xff]
    %v451 = vld [vmem:[#allocation5 + $0xa20] sm:$0xff]
    %v452 = vld [vmem:[#allocation5 + $0xa28] sm:$0xff]
    %v453 = vld [vmem:[#allocation5 + $0xa30] sm:$0xff]
    %v454 = vld [vmem:[#allocation5 + $0xa38] sm:$0xff]
    %v455 = vld [vmem:[#allocation5 + $0xa40] sm:$0xff]
    %v456 = vld [vmem:[#allocation5 + $0xa48] sm:$0xff]
    %v457 = vld [vmem:[#allocation5 + $0xa50] sm:$0xff]
    %v458 = vld [vmem:[#allocation5 + $0xa58] sm:$0xff]
    %v459 = vld [vmem:[#allocation5 + $0xa60] sm:$0xff]
    %v460 = vld [vmem:[#allocation5 + $0xa68] sm:$0xff]
    %v461 = vld [vmem:[#allocation5 + $0xa70] sm:$0xff]
    %v462 = vld [vmem:[#allocation5 + $0xa78] sm:$0xff]
    %v463 = vld [vmem:[#allocation5 + $0xa80] sm:$0xff]
    %v464 = vld [vmem:[#allocation5 + $0xa88] sm:$0xff]
    %v465 = vld [vmem:[#allocation5 + $0xa90] sm:$0xff]
    %v466 = vld [vmem:[#allocation5 + $0xa98] sm:$0xff]
    %v467 = vld [vmem:[#allocation5 + $0xaa0] sm:$0xff]
    %v468 = vld [vmem:[#allocation5 + $0xaa8] sm:$0xff]
    %v469 = vld [vmem:[#allocation5 + $0xab0] sm:$0xff]
    %v470 = vld [vmem:[#allocation5 + $0xab8] sm:$0xff]
    %v471 = vld [vmem:[#allocation5 + $0xac0] sm:$0xff]
    %v472 = vld [vmem:[#allocation5 + $0xac8] sm:$0xff]
    %v473 = vld [vmem:[#allocation5 + $0xad0] sm:$0xff]
    %v474 = vld [vmem:[#allocation5 + $0xad8] sm:$0xff]
    %v475 = vld [vmem:[#allocation5 + $0xae0] sm:$0xff]
    %v476 = vld [vmem:[#allocation5 + $0xae8] sm:$0xff]
    %v477 = vld [vmem:[#allocation5 + $0xaf0] sm:$0xff]
    %v478 = vld [vmem:[#allocation5 + $0xaf8] sm:$0xff]
    %v479 = vld [vmem:[#allocation5 + $0xb00] sm:$0xff]
    %v480 = vld [vmem:[#allocation5 + $0xb08] sm:$0xff]
    %v481 = vld [vmem:[#allocation5 + $0xb10] sm:$0xff]
    %v482 = vld [vmem:[#allocation5 + $0xb18] sm:$0xff]
    %v483 = vld [vmem:[#allocation5 + $0xb20] sm:$0xff]
    %v484 = vld [vmem:[#allocation5 + $0xb28] sm:$0xff]
    %v485 = vld [vmem:[#allocation5 + $0xb30] sm:$0xff]
    %v486 = vld [vmem:[#allocation5 + $0xb38] sm:$0xff]
    %v487 = vld [vmem:[#allocation5 + $0xb40] sm:$0xff]
    %v488 = vld [vmem:[#allocation5 + $0xb48] sm:$0xff]
    %v489 = vld [vmem:[#allocation5 + $0xb50] sm:$0xff]
    %v490 = vld [vmem:[#allocation5 + $0xb58] sm:$0xff]
    %v491 = vld [vmem:[#allocation5 + $0xb60] sm:$0xff]
    %v492 = vld [vmem:[#allocation5 + $0xb68] sm:$0xff]
    %v493 = vld [vmem:[#allocation5 + $0xb70] sm:$0xff]
    %v494 = vld [vmem:[#allocation5 + $0xb78] sm:$0xff]
    %v495 = vld [vmem:[#allocation5 + $0xb80] sm:$0xff]
    %v496 = vld [vmem:[#allocation5 + $0xb88] sm:$0xff]
    %v497 = vld [vmem:[#allocation5 + $0xb90] sm:$0xff]
    %v498 = vld [vmem:[#allocation5 + $0xb98] sm:$0xff]
    %v499 = vld [vmem:[#allocation5 + $0xba0] sm:$0xff]
    %v500 = vld [vmem:[#allocation5 + $0xba8] sm:$0xff]
    %v501 = vld [vmem:[#allocation5 + $0xbb0] sm:$0xff]
    %v502 = vld [vmem:[#allocation5 + $0xbb8] sm:$0xff]
    %v503 = vld [vmem:[#allocation5 + $0xbc0] sm:$0xff]
    %v504 = vld [vmem:[#allocation5 + $0xbc8] sm:$0xff]
    %v505 = vld [vmem:[#allocation5 + $0xbd0] sm:$0xff]
    %v506 = vld [vmem:[#allocation5 + $0xbd8] sm:$0xff]
    %v507 = vld [vmem:[#allocation5 + $0xbe0] sm:$0xff]
    %v508 = vld [vmem:[#allocation5 + $0xbe8] sm:$0xff]
    %v509 = vld [vmem:[#allocation5 + $0xbf0] sm:$0xff]
    %v510 = vld [vmem:[#allocation5 + $0xbf8] sm:$0xff]
    %v511 = vld [vmem:[#allocation5 + $0xc00] sm:$0xff]
    %v512 = vld [vmem:[#allocation5 + $0xc08] sm:$0xff]
    %v513 = vld [vmem:[#allocation5 + $0xc10] sm:$0xff]
    %v514 = vld [vmem:[#allocation5 + $0xc18] sm:$0xff]
    %v515 = vld [vmem:[#allocation5 + $0xc20] sm:$0xff]
    %v516 = vld [vmem:[#allocation5 + $0xc28] sm:$0xff]
    %v517 = vld [vmem:[#allocation5 + $0xc30] sm:$0xff]
    %v518 = vld [vmem:[#allocation5 + $0xc38] sm:$0xff]
    %v519 = vld [vmem:[#allocation5 + $0xc40] sm:$0xff]
    %v520 = vld [vmem:[#allocation5 + $0xc48] sm:$0xff]
    %v521 = vld [vmem:[#allocation5 + $0xc50] sm:$0xff]
    %v522 = vld [vmem:[#allocation5 + $0xc58] sm:$0xff]
    %v523 = vld [vmem:[#allocation5 + $0xc60] sm:$0xff]
    %v524 = vld [vmem:[#allocation5 + $0xc68] sm:$0xff]
    %v525 = vld [vmem:[#allocation5 + $0xc70] sm:$0xff]
    %v526 = vld [vmem:[#allocation5 + $0xc78] sm:$0xff]
    %v527 = vld [vmem:[#allocation5 + $0xc80] sm:$0xff]
    %v528 = vld [vmem:[#allocation5 + $0xc88] sm:$0xff]
    %v529 = vld [vmem:[#allocation5 + $0xc90] sm:$0xff]
    %v530 = vld [vmem:[#allocation5 + $0xc98] sm:$0xff]
    %v531 = vld [vmem:[#allocation5 + $0xca0] sm:$0xff]
    %v532 = vld [vmem:[#allocation5 + $0xca8] sm:$0xff]
    %v533 = vld [vmem:[#allocation5 + $0xcb0] sm:$0xff]
    %v534 = vld [vmem:[#allocation5 + $0xcb8] sm:$0xff]
    %v535 = vld [vmem:[#allocation5 + $0xcc0] sm:$0xff]
    %v536 = vld [vmem:[#allocation5 + $0xcc8] sm:$0xff]
    %v537 = vld [vmem:[#allocation5 + $0xcd0] sm:$0xff]
    %v538 = vld [vmem:[#allocation5 + $0xcd8] sm:$0xff]
    %v539 = vld [vmem:[#allocation5 + $0xce0] sm:$0xff]
    %v540 = vld [vmem:[#allocation5 + $0xce8] sm:$0xff]
    %v541 = vld [vmem:[#allocation5 + $0xcf0] sm:$0xff]
    %v542 = vld [vmem:[#allocation5 + $0xcf8] sm:$0xff]
    %v543 = vld [vmem:[#allocation5 + $0xd00] sm:$0xff]
    %v544 = vld [vmem:[#allocation5 + $0xd08] sm:$0xff]
    %v545 = vld [vmem:[#allocation5 + $0xd10] sm:$0xff]
    %v546 = vld [vmem:[#allocation5 + $0xd18] sm:$0xff]
    %v547 = vld [vmem:[#allocation5 + $0xd20] sm:$0xff]
    %v548 = vld [vmem:[#allocation5 + $0xd28] sm:$0xff]
    %v549 = vld [vmem:[#allocation5 + $0xd30] sm:$0xff]
    %v550 = vld [vmem:[#allocation5 + $0xd38] sm:$0xff]
    %v551 = vld [vmem:[#allocation5 + $0xd40] sm:$0xff]
    %v552 = vld [vmem:[#allocation5 + $0xd48] sm:$0xff]
    %v553 = vld [vmem:[#allocation5 + $0xd50] sm:$0xff]
    %v554 = vld [vmem:[#allocation5 + $0xd58] sm:$0xff]
    %v555 = vld [vmem:[#allocation5 + $0xd60] sm:$0xff]
    %v556 = vld [vmem:[#allocation5 + $0xd68] sm:$0xff]
    %v557 = vld [vmem:[#allocation5 + $0xd70] sm:$0xff]
    %v558 = vld [vmem:[#allocation5 + $0xd78] sm:$0xff]
    %559 = vmatpush.msra.mxu0 %v262
    %560 = vmatpush.msra.mxu0 %v253
    %561 = vmatpush.msra.mxu0 %v244
    %562 = vmatpush.msra.mxu0 %v235
    %563 = vmatpush.msra.mxu0 %v226
    %564 = vmatpush.msra.mxu0 %v217
    %565 = vmatpush.msra.mxu0 %v208
    %566 = vmatpush.msra.mxu0 %v199
    %567 = vmatpush.msra.mxu0 %v190
    %568 = vmatpush.msra.mxu0 %v181
    %569 = vmatpush.msra.mxu0 %v172
    %570 = vmatpush.msra.mxu0 %v163
    %571 = vmatpush.msra.mxu0 %v154
    %572 = vmatpush.msra.mxu0 %v145
    %573 = vmatpush.msra.mxu0 %v136
    %574 = vmatpush.msra.mxu0 %v127
    %575 = vmatmul.f32.gmra.mxu0 %v79
    %v576 = vpop.f32.mrf.mxu0
    %v577 = vadd.f32 0.0, %v576
    %578 = vmatmul.f32.gmra.mxu0 %v82
    %v579 = vpop.f32.mrf.mxu0
    %v580 = vadd.f32 0.0, %v579
    %581 = vmatmul.f32.gmra.mxu0 %v85
    %v582 = vpop.f32.mrf.mxu0
    %v583 = vadd.f32 0.0, %v582
    %584 = vmatmul.f32.gmra.mxu0 %v88
    %v585 = vpop.f32.mrf.mxu0
    %v586 = vadd.f32 0.0, %v585
    %587 = vmatmul.f32.gmra.mxu0 %v91
    %v588 = vpop.f32.mrf.mxu0
    %v589 = vadd.f32 0.0, %v588
    %590 = vmatmul.f32.gmra.mxu0 %v94
    %v591 = vpop.f32.mrf.mxu0
    %v592 = vadd.f32 0.0, %v591
    %593 = vmatmul.f32.gmra.mxu0 %v97
    %v594 = vpop.f32.mrf.mxu0
    %v595 = vadd.f32 0.0, %v594
    %596 = vmatmul.f32.gmra.mxu0 %v100
    %v597 = vpop.f32.mrf.mxu0
    %v598 = vadd.f32 0.0, %v597
    %599 = vmatmul.f32.gmra.mxu0 %v103
    %v600 = vpop.f32.mrf.mxu0
    %v601 = vadd.f32 0.0, %v600
    %602 = vmatmul.f32.gmra.mxu0 %v106
    %v603 = vpop.f32.mrf.mxu0
    %v604 = vadd.f32 0.0, %v603
    %605 = vmatmul.f32.gmra.mxu0 %v109
    %v606 = vpop.f32.mrf.mxu0
    %v607 = vadd.f32 0.0, %v606
    %608 = vmatmul.f32.gmra.mxu0 %v112
    %v609 = vpop.f32.mrf.mxu0
    %v610 = vadd.f32 0.0, %v609
    %611 = vmatmul.f32.gmra.mxu0 %v115
    %v612 = vpop.f32.mrf.mxu0
    %v613 = vadd.f32 0.0, %v612
    %614 = vmatmul.f32.gmra.mxu0 %v118
    %v615 = vpop.f32.mrf.mxu0
    %v616 = vadd.f32 0.0, %v615
    %617 = vmatmul.f32.gmra.mxu0 %v121
    %v618 = vpop.f32.mrf.mxu0
    %v619 = vadd.f32 0.0, %v618
    %620 = vmatmul.f32.gmra.mxu0 %v124
    %v621 = vpop.f32.mrf.mxu0
    %v622 = vadd.f32 0.0, %v621
    %623 = vdwg.mxu0
    %624 = vmatpush.msra.mxu0 %v406
    %625 = vmatpush.msra.mxu0 %v397
    %626 = vmatpush.msra.mxu0 %v388
    %627 = vmatpush.msra.mxu0 %v379
    %628 = vmatpush.msra.mxu0 %v370
    %629 = vmatpush.msra.mxu0 %v361
    %630 = vmatpush.msra.mxu0 %v352
    %631 = vmatpush.msra.mxu0 %v343
    %632 = vmatpush.msra.mxu0 %v334
    %633 = vmatpush.msra.mxu0 %v325
    %634 = vmatpush.msra.mxu0 %v316
    %635 = vmatpush.msra.mxu0 %v307
    %636 = vmatpush.msra.mxu0 %v298
    %637 = vmatpush.msra.mxu0 %v289
    %638 = vmatpush.msra.mxu0 %v280
    %639 = vmatpush.msra.mxu0 %v271
    %640 = vmatmul.f32.gmra.mxu0 %v80
    %v641 = vpop.f32.mrf.mxu0
    %v642 = vadd.f32 %v577, %v641
    %643 = vmatmul.f32.gmra.mxu0 %v83
    %v644 = vpop.f32.mrf.mxu0
    %v645 = vadd.f32 %v580, %v644
    %646 = vmatmul.f32.gmra.mxu0 %v86
    %v647 = vpop.f32.mrf.mxu0
    %v648 = vadd.f32 %v583, %v647
    %649 = vmatmul.f32.gmra.mxu0 %v89
    %v650 = vpop.f32.mrf.mxu0
    %v651 = vadd.f32 %v586, %v650
    %652 = vmatmul.f32.gmra.mxu0 %v92
    %v653 = vpop.f32.mrf.mxu0
    %v654 = vadd.f32 %v589, %v653
    %655 = vmatmul.f32.gmra.mxu0 %v95
    %v656 = vpop.f32.mrf.mxu0
    %v657 = vadd.f32 %v592, %v656
    %658 = vmatmul.f32.gmra.mxu0 %v98
    %v659 = vpop.f32.mrf.mxu0
    %v660 = vadd.f32 %v595, %v659
    %661 = vmatmul.f32.gmra.mxu0 %v101
    %v662 = vpop.f32.mrf.mxu0
    %v663 = vadd.f32 %v598, %v662
    %664 = vmatmul.f32.gmra.mxu0 %v104
    %v665 = vpop.f32.mrf.mxu0
    %v666 = vadd.f32 %v601, %v665
    %667 = vmatmul.f32.gmra.mxu0 %v107
    %v668 = vpop.f32.mrf.mxu0
    %v669 = vadd.f32 %v604, %v668
    %670 = vmatmul.f32.gmra.mxu0 %v110
    %v671 = vpop.f32.mrf.mxu0
    %v672 = vadd.f32 %v607, %v671
    %673 = vmatmul.f32.gmra.mxu0 %v113
    %v674 = vpop.f32.mrf.mxu0
    %v675 = vadd.f32 %v610, %v674
    %676 = vmatmul.f32.gmra.mxu0 %v116
    %v677 = vpop.f32.mrf.mxu0
    %v678 = vadd.f32 %v613, %v677
    %679 = vmatmul.f32.gmra.mxu0 %v119
    %v680 = vpop.f32.mrf.mxu0
    %v681 = vadd.f32 %v616, %v680
    %682 = vmatmul.f32.gmra.mxu0 %v122
    %v683 = vpop.f32.mrf.mxu0
    %v684 = vadd.f32 %v619, %v683
    %685 = vmatmul.f32.gmra.mxu0 %v125
    %v686 = vpop.f32.mrf.mxu0
    %v687 = vadd.f32 %v622, %v686
    %688 = vdwg.mxu0
    %689 = vmatpush.msra.mxu0 %v550
    %690 = vmatpush.msra.mxu0 %v541
    %691 = vmatpush.msra.mxu0 %v532
    %692 = vmatpush.msra.mxu0 %v523
    %693 = vmatpush.msra.mxu0 %v514
    %694 = vmatpush.msra.mxu0 %v505
    %695 = vmatpush.msra.mxu0 %v496
    %696 = vmatpush.msra.mxu0 %v487
    %697 = vmatpush.msra.mxu0 %v478
    %698 = vmatpush.msra.mxu0 %v469
    %699 = vmatpush.msra.mxu0 %v460
    %700 = vmatpush.msra.mxu0 %v451
    %701 = vmatpush.msra.mxu0 %v442
    %702 = vmatpush.msra.mxu0 %v433
    %703 = vmatpush.msra.mxu0 %v424
    %704 = vmatpush.msra.mxu0 %v415
    %705 = vmatmul.f32.gmra.mxu0 %v81
    %v706 = vpop.f32.mrf.mxu0
    %v707 = vadd.f32 %v642, %v706
    %708 = vmatmul.f32.gmra.mxu0 %v84
    %v709 = vpop.f32.mrf.mxu0
    %v710 = vadd.f32 %v645, %v709
    %711 = vmatmul.f32.gmra.mxu0 %v87
    %v712 = vpop.f32.mrf.mxu0
    %v713 = vadd.f32 %v648, %v712
    %714 = vmatmul.f32.gmra.mxu0 %v90
    %v715 = vpop.f32.mrf.mxu0
    %v716 = vadd.f32 %v651, %v715
    %717 = vmatmul.f32.gmra.mxu0 %v93
    %v718 = vpop.f32.mrf.mxu0
    %v719 = vadd.f32 %v654, %v718
    %720 = vmatmul.f32.gmra.mxu0 %v96
    %v721 = vpop.f32.mrf.mxu0
    %v722 = vadd.f32 %v657, %v721
    %723 = vmatmul.f32.gmra.mxu0 %v99
    %v724 = vpop.f32.mrf.mxu0
    %v725 = vadd.f32 %v660, %v724
    %726 = vmatmul.f32.gmra.mxu0 %v102
    %v727 = vpop.f32.mrf.mxu0
    %v728 = vadd.f32 %v663, %v727
    %729 = vmatmul.f32.gmra.mxu0 %v105
    %v730 = vpop.f32.mrf.mxu0
    %v731 = vadd.f32 %v666, %v730
    %732 = vmatmul.f32.gmra.mxu0 %v108
    %v733 = vpop.f32.mrf.mxu0
    %v734 = vadd.f32 %v669, %v733
    %735 = vmatmul.f32.gmra.mxu0 %v111
    %v736 = vpop.f32.mrf.mxu0
    %v737 = vadd.f32 %v672, %v736
    %738 = vmatmul.f32.gmra.mxu0 %v114
    %v739 = vpop.f32.mrf.mxu0
    %v740 = vadd.f32 %v675, %v739
    %741 = vmatmul.f32.gmra.mxu0 %v117
    %v742 = vpop.f32.mrf.mxu0
    %v743 = vadd.f32 %v678, %v742
    %744 = vmatmul.f32.gmra.mxu0 %v120
    %v745 = vpop.f32.mrf.mxu0
    %v746 = vadd.f32 %v681, %v745
    %747 = vmatmul.f32.gmra.mxu0 %v123
    %v748 = vpop.f32.mrf.mxu0
    %v749 = vadd.f32 %v684, %v748
    %750 = vmatmul.f32.gmra.mxu0 %v126
    %v751 = vpop.f32.mrf.mxu0
    %v752 = vadd.f32 %v687, %v751
    %753 = vdwg.mxu0
    %754 = vmatpush.msra.mxu0 %v263
    %755 = vmatpush.msra.mxu0 %v254
    %756 = vmatpush.msra.mxu0 %v245
    %757 = vmatpush.msra.mxu0 %v236
    %758 = vmatpush.msra.mxu0 %v227
    %759 = vmatpush.msra.mxu0 %v218
    %760 = vmatpush.msra.mxu0 %v209
    %761 = vmatpush.msra.mxu0 %v200
    %762 = vmatpush.msra.mxu0 %v191
    %763 = vmatpush.msra.mxu0 %v182
    %764 = vmatpush.msra.mxu0 %v173
    %765 = vmatpush.msra.mxu0 %v164
    %766 = vmatpush.msra.mxu0 %v155
    %767 = vmatpush.msra.mxu0 %v146
    %768 = vmatpush.msra.mxu0 %v137
    %769 = vmatpush.msra.mxu0 %v128
    %770 = vmatmul.f32.gmra.mxu0 %v79
    %v771 = vpop.f32.mrf.mxu0
    %v772 = vadd.f32 0.0, %v771
    %773 = vmatmul.f32.gmra.mxu0 %v82
    %v774 = vpop.f32.mrf.mxu0
    %v775 = vadd.f32 0.0, %v774
    %776 = vmatmul.f32.gmra.mxu0 %v85
    %v777 = vpop.f32.mrf.mxu0
    %v778 = vadd.f32 0.0, %v777
    %779 = vmatmul.f32.gmra.mxu0 %v88
    %v780 = vpop.f32.mrf.mxu0
    %v781 = vadd.f32 0.0, %v780
    %782 = vmatmul.f32.gmra.mxu0 %v91
    %v783 = vpop.f32.mrf.mxu0
    %v784 = vadd.f32 0.0, %v783
    %785 = vmatmul.f32.gmra.mxu0 %v94
    %v786 = vpop.f32.mrf.mxu0
    %v787 = vadd.f32 0.0, %v786
    %788 = vmatmul.f32.gmra.mxu0 %v97
    %v789 = vpop.f32.mrf.mxu0
    %v790 = vadd.f32 0.0, %v789
    %791 = vmatmul.f32.gmra.mxu0 %v100
    %v792 = vpop.f32.mrf.mxu0
    %v793 = vadd.f32 0.0, %v792
    %794 = vmatmul.f32.gmra.mxu0 %v103
    %v795 = vpop.f32.mrf.mxu0
    %v796 = vadd.f32 0.0, %v795
    %797 = vmatmul.f32.gmra.mxu0 %v106
    %v798 = vpop.f32.mrf.mxu0
    %v799 = vadd.f32 0.0, %v798
    %800 = vmatmul.f32.gmra.mxu0 %v109
    %v801 = vpop.f32.mrf.mxu0
    %v802 = vadd.f32 0.0, %v801
    %803 = vmatmul.f32.gmra.mxu0 %v112
    %v804 = vpop.f32.mrf.mxu0
    %v805 = vadd.f32 0.0, %v804
    %806 = vmatmul.f32.gmra.mxu0 %v115
    %v807 = vpop.f32.mrf.mxu0
    %v808 = vadd.f32 0.0, %v807
    %809 = vmatmul.f32.gmra.mxu0 %v118
    %v810 = vpop.f32.mrf.mxu0
    %v811 = vadd.f32 0.0, %v810
    %812 = vmatmul.f32.gmra.mxu0 %v121
    %v813 = vpop.f32.mrf.mxu0
    %v814 = vadd.f32 0.0, %v813
    %815 = vmatmul.f32.gmra.mxu0 %v124
    %v816 = vpop.f32.mrf.mxu0
    %v817 = vadd.f32 0.0, %v816
    %818 = vdwg.mxu0
    %819 = vmatpush.msra.mxu0 %v407
    %820 = vmatpush.msra.mxu0 %v398
    %821 = vmatpush.msra.mxu0 %v389
    %822 = vmatpush.msra.mxu0 %v380
    %823 = vmatpush.msra.mxu0 %v371
    %824 = vmatpush.msra.mxu0 %v362
    %825 = vmatpush.msra.mxu0 %v353
    %826 = vmatpush.msra.mxu0 %v344
    %827 = vmatpush.msra.mxu0 %v335
    %828 = vmatpush.msra.mxu0 %v326
    %829 = vmatpush.msra.mxu0 %v317
    %830 = vmatpush.msra.mxu0 %v308
    %831 = vmatpush.msra.mxu0 %v299
    %832 = vmatpush.msra.mxu0 %v290
    %833 = vmatpush.msra.mxu0 %v281
    %834 = vmatpush.msra.mxu0 %v272
    %835 = vmatmul.f32.gmra.mxu0 %v80
    %v836 = vpop.f32.mrf.mxu0
    %v837 = vadd.f32 %v772, %v836
    %838 = vmatmul.f32.gmra.mxu0 %v83
    %v839 = vpop.f32.mrf.mxu0
    %v840 = vadd.f32 %v775, %v839
    %841 = vmatmul.f32.gmra.mxu0 %v86
    %v842 = vpop.f32.mrf.mxu0
    %v843 = vadd.f32 %v778, %v842
    %844 = vmatmul.f32.gmra.mxu0 %v89
    %v845 = vpop.f32.mrf.mxu0
    %v846 = vadd.f32 %v781, %v845
    %847 = vmatmul.f32.gmra.mxu0 %v92
    %v848 = vpop.f32.mrf.mxu0
    %v849 = vadd.f32 %v784, %v848
    %850 = vmatmul.f32.gmra.mxu0 %v95
    %v851 = vpop.f32.mrf.mxu0
    %v852 = vadd.f32 %v787, %v851
    %853 = vmatmul.f32.gmra.mxu0 %v98
    %v854 = vpop.f32.mrf.mxu0
    %v855 = vadd.f32 %v790, %v854
    %856 = vmatmul.f32.gmra.mxu0 %v101
    %v857 = vpop.f32.mrf.mxu0
    %v858 = vadd.f32 %v793, %v857
    %859 = vmatmul.f32.gmra.mxu0 %v104
    %v860 = vpop.f32.mrf.mxu0
    %v861 = vadd.f32 %v796, %v860
    %862 = vmatmul.f32.gmra.mxu0 %v107
    %v863 = vpop.f32.mrf.mxu0
    %v864 = vadd.f32 %v799, %v863
    %865 = vmatmul.f32.gmra.mxu0 %v110
    %v866 = vpop.f32.mrf.mxu0
    %v867 = vadd.f32 %v802, %v866
    %868 = vmatmul.f32.gmra.mxu0 %v113
    %v869 = vpop.f32.mrf.mxu0
    %v870 = vadd.f32 %v805, %v869
    %871 = vmatmul.f32.gmra.mxu0 %v116
    %v872 = vpop.f32.mrf.mxu0
    %v873 = vadd.f32 %v808, %v872
    %874 = vmatmul.f32.gmra.mxu0 %v119
    %v875 = vpop.f32.mrf.mxu0
    %v876 = vadd.f32 %v811, %v875
    %877 = vmatmul.f32.gmra.mxu0 %v122
    %v878 = vpop.f32.mrf.mxu0
    %v879 = vadd.f32 %v814, %v878
    %880 = vmatmul.f32.gmra.mxu0 %v125
    %v881 = vpop.f32.mrf.mxu0
    %v882 = vadd.f32 %v817, %v881
    %883 = vdwg.mxu0
    %884 = vmatpush.msra.mxu0 %v551
    %885 = vmatpush.msra.mxu0 %v542
    %886 = vmatpush.msra.mxu0 %v533
    %887 = vmatpush.msra.mxu0 %v524
    %888 = vmatpush.msra.mxu0 %v515
    %889 = vmatpush.msra.mxu0 %v506
    %890 = vmatpush.msra.mxu0 %v497
    %891 = vmatpush.msra.mxu0 %v488
    %892 = vmatpush.msra.mxu0 %v479
    %893 = vmatpush.msra.mxu0 %v470
    %894 = vmatpush.msra.mxu0 %v461
    %895 = vmatpush.msra.mxu0 %v452
    %896 = vmatpush.msra.mxu0 %v443
    %897 = vmatpush.msra.mxu0 %v434
    %898 = vmatpush.msra.mxu0 %v425
    %899 = vmatpush.msra.mxu0 %v416
    %900 = vmatmul.f32.gmra.mxu0 %v81
    %v901 = vpop.f32.mrf.mxu0
    %v902 = vadd.f32 %v837, %v901
    %903 = vmatmul.f32.gmra.mxu0 %v84
    %v904 = vpop.f32.mrf.mxu0
    %v905 = vadd.f32 %v840, %v904
    %906 = vmatmul.f32.gmra.mxu0 %v87
    %v907 = vpop.f32.mrf.mxu0
    %v908 = vadd.f32 %v843, %v907
    %909 = vmatmul.f32.gmra.mxu0 %v90
    %v910 = vpop.f32.mrf.mxu0
    %v911 = vadd.f32 %v846, %v910
    %912 = vmatmul.f32.gmra.mxu0 %v93
    %v913 = vpop.f32.mrf.mxu0
    %v914 = vadd.f32 %v849, %v913
    %915 = vmatmul.f32.gmra.mxu0 %v96
    %v916 = vpop.f32.mrf.mxu0
    %v917 = vadd.f32 %v852, %v916
    %918 = vmatmul.f32.gmra.mxu0 %v99
    %v919 = vpop.f32.mrf.mxu0
    %v920 = vadd.f32 %v855, %v919
    %921 = vmatmul.f32.gmra.mxu0 %v102
    %v922 = vpop.f32.mrf.mxu0
    %v923 = vadd.f32 %v858, %v922
    %924 = vmatmul.f32.gmra.mxu0 %v105
    %v925 = vpop.f32.mrf.mxu0
    %v926 = vadd.f32 %v861, %v925
    %927 = vmatmul.f32.gmra.mxu0 %v108
    %v928 = vpop.f32.mrf.mxu0
    %v929 = vadd.f32 %v864, %v928
    %930 = vmatmul.f32.gmra.mxu0 %v111
    %v931 = vpop.f32.mrf.mxu0
    %v932 = vadd.f32 %v867, %v931
    %933 = vmatmul.f32.gmra.mxu0 %v114
    %v934 = vpop.f32.mrf.mxu0
    %v935 = vadd.f32 %v870, %v934
    %936 = vmatmul.f32.gmra.mxu0 %v117
    %v937 = vpop.f32.mrf.mxu0
    %v938 = vadd.f32 %v873, %v937
    %939 = vmatmul.f32.gmra.mxu0 %v120
    %v940 = vpop.f32.mrf.mxu0
    %v941 = vadd.f32 %v876, %v940
    %942 = vmatmul.f32.gmra.mxu0 %v123
    %v943 = vpop.f32.mrf.mxu0
    %v944 = vadd.f32 %v879, %v943
    %945 = vmatmul.f32.gmra.mxu0 %v126
    %v946 = vpop.f32.mrf.mxu0
    %v947 = vadd.f32 %v882, %v946
    %948 = vdwg.mxu0
    %949 = vmatpush.msra.mxu0 %v264
    %950 = vmatpush.msra.mxu0 %v255
    %951 = vmatpush.msra.mxu0 %v246
    %952 = vmatpush.msra.mxu0 %v237
    %953 = vmatpush.msra.mxu0 %v228
    %954 = vmatpush.msra.mxu0 %v219
    %955 = vmatpush.msra.mxu0 %v210
    %956 = vmatpush.msra.mxu0 %v201
    %957 = vmatpush.msra.mxu0 %v192
    %958 = vmatpush.msra.mxu0 %v183
    %959 = vmatpush.msra.mxu0 %v174
    %960 = vmatpush.msra.mxu0 %v165
    %961 = vmatpush.msra.mxu0 %v156
    %962 = vmatpush.msra.mxu0 %v147
    %963 = vmatpush.msra.mxu0 %v138
    %964 = vmatpush.msra.mxu0 %v129
    %965 = vmatmul.f32.gmra.mxu0 %v79
    %v966 = vpop.f32.mrf.mxu0
    %v967 = vadd.f32 0.0, %v966
    %968 = vmatmul.f32.gmra.mxu0 %v82
    %v969 = vpop.f32.mrf.mxu0
    %v970 = vadd.f32 0.0, %v969
    %971 = vmatmul.f32.gmra.mxu0 %v85
    %v972 = vpop.f32.mrf.mxu0
    %v973 = vadd.f32 0.0, %v972
    %974 = vmatmul.f32.gmra.mxu0 %v88
    %v975 = vpop.f32.mrf.mxu0
    %v976 = vadd.f32 0.0, %v975
    %977 = vmatmul.f32.gmra.mxu0 %v91
    %v978 = vpop.f32.mrf.mxu0
    %v979 = vadd.f32 0.0, %v978
    %980 = vmatmul.f32.gmra.mxu0 %v94
    %v981 = vpop.f32.mrf.mxu0
    %v982 = vadd.f32 0.0, %v981
    %983 = vmatmul.f32.gmra.mxu0 %v97
    %v984 = vpop.f32.mrf.mxu0
    %v985 = vadd.f32 0.0, %v984
    %986 = vmatmul.f32.gmra.mxu0 %v100
    %v987 = vpop.f32.mrf.mxu0
    %v988 = vadd.f32 0.0, %v987
    %989 = vmatmul.f32.gmra.mxu0 %v103
    %v990 = vpop.f32.mrf.mxu0
    %v991 = vadd.f32 0.0, %v990
    %992 = vmatmul.f32.gmra.mxu0 %v106
    %v993 = vpop.f32.mrf.mxu0
    %v994 = vadd.f32 0.0, %v993
    %995 = vmatmul.f32.gmra.mxu0 %v109
    %v996 = vpop.f32.mrf.mxu0
    %v997 = vadd.f32 0.0, %v996
    %998 = vmatmul.f32.gmra.mxu0 %v112
    %v999 = vpop.f32.mrf.mxu0
    %v1000 = vadd.f32 0.0, %v999
    %1001 = vmatmul.f32.gmra.mxu0 %v115
    %v1002 = vpop.f32.mrf.mxu0
    %v1003 = vadd.f32 0.0, %v1002
    %1004 = vmatmul.f32.gmra.mxu0 %v118
    %v1005 = vpop.f32.mrf.mxu0
    %v1006 = vadd.f32 0.0, %v1005
    %1007 = vmatmul.f32.gmra.mxu0 %v121
    %v1008 = vpop.f32.mrf.mxu0
    %v1009 = vadd.f32 0.0, %v1008
    %1010 = vmatmul.f32.gmra.mxu0 %v124
    %v1011 = vpop.f32.mrf.mxu0
    %v1012 = vadd.f32 0.0, %v1011
    %1013 = vdwg.mxu0
    %1014 = vmatpush.msra.mxu0 %v408
    %1015 = vmatpush.msra.mxu0 %v399
    %1016 = vmatpush.msra.mxu0 %v390
    %1017 = vmatpush.msra.mxu0 %v381
    %1018 = vmatpush.msra.mxu0 %v372
    %1019 = vmatpush.msra.mxu0 %v363
    %1020 = vmatpush.msra.mxu0 %v354
    %1021 = vmatpush.msra.mxu0 %v345
    %1022 = vmatpush.msra.mxu0 %v336
    %1023 = vmatpush.msra.mxu0 %v327
    %1024 = vmatpush.msra.mxu0 %v318
    %1025 = vmatpush.msra.mxu0 %v309
    %1026 = vmatpush.msra.mxu0 %v300
    %1027 = vmatpush.msra.mxu0 %v291
    %1028 = vmatpush.msra.mxu0 %v282
    %1029 = vmatpush.msra.mxu0 %v273
    %1030 = vmatmul.f32.gmra.mxu0 %v80
    %v1031 = vpop.f32.mrf.mxu0
    %v1032 = vadd.f32 %v967, %v1031
    %1033 = vmatmul.f32.gmra.mxu0 %v83
    %v1034 = vpop.f32.mrf.mxu0
    %v1035 = vadd.f32 %v970, %v1034
    %1036 = vmatmul.f32.gmra.mxu0 %v86
    %v1037 = vpop.f32.mrf.mxu0
    %v1038 = vadd.f32 %v973, %v1037
    %1039 = vmatmul.f32.gmra.mxu0 %v89
    %v1040 = vpop.f32.mrf.mxu0
    %v1041 = vadd.f32 %v976, %v1040
    %1042 = vmatmul.f32.gmra.mxu0 %v92
    %v1043 = vpop.f32.mrf.mxu0
    %v1044 = vadd.f32 %v979, %v1043
    %1045 = vmatmul.f32.gmra.mxu0 %v95
    %v1046 = vpop.f32.mrf.mxu0
    %v1047 = vadd.f32 %v982, %v1046
    %1048 = vmatmul.f32.gmra.mxu0 %v98
    %v1049 = vpop.f32.mrf.mxu0
    %v1050 = vadd.f32 %v985, %v1049
    %1051 = vmatmul.f32.gmra.mxu0 %v101
    %v1052 = vpop.f32.mrf.mxu0
    %v1053 = vadd.f32 %v988, %v1052
    %1054 = vmatmul.f32.gmra.mxu0 %v104
    %v1055 = vpop.f32.mrf.mxu0
    %v1056 = vadd.f32 %v991, %v1055
    %1057 = vmatmul.f32.gmra.mxu0 %v107
    %v1058 = vpop.f32.mrf.mxu0
    %v1059 = vadd.f32 %v994, %v1058
    %1060 = vmatmul.f32.gmra.mxu0 %v110
    %v1061 = vpop.f32.mrf.mxu0
    %v1062 = vadd.f32 %v997, %v1061
    %1063 = vmatmul.f32.gmra.mxu0 %v113
    %v1064 = vpop.f32.mrf.mxu0
    %v1065 = vadd.f32 %v1000, %v1064
    %1066 = vmatmul.f32.gmra.mxu0 %v116
    %v1067 = vpop.f32.mrf.mxu0
    %v1068 = vadd.f32 %v1003, %v1067
    %1069 = vmatmul.f32.gmra.mxu0 %v119
    %v1070 = vpop.f32.mrf.mxu0
    %v1071 = vadd.f32 %v1006, %v1070
    %1072 = vmatmul.f32.gmra.mxu0 %v122
    %v1073 = vpop.f32.mrf.mxu0
    %v1074 = vadd.f32 %v1009, %v1073
    %1075 = vmatmul.f32.gmra.mxu0 %v125
    %v1076 = vpop.f32.mrf.mxu0
    %v1077 = vadd.f32 %v1012, %v1076
    %1078 = vdwg.mxu0
    %1079 = vmatpush.msra.mxu0 %v552
    %1080 = vmatpush.msra.mxu0 %v543
    %1081 = vmatpush.msra.mxu0 %v534
    %1082 = vmatpush.msra.mxu0 %v525
    %1083 = vmatpush.msra.mxu0 %v516
    %1084 = vmatpush.msra.mxu0 %v507
    %1085 = vmatpush.msra.mxu0 %v498
    %1086 = vmatpush.msra.mxu0 %v489
    %1087 = vmatpush.msra.mxu0 %v480
    %1088 = vmatpush.msra.mxu0 %v471
    %1089 = vmatpush.msra.mxu0 %v462
    %1090 = vmatpush.msra.mxu0 %v453
    %1091 = vmatpush.msra.mxu0 %v444
    %1092 = vmatpush.msra.mxu0 %v435
    %1093 = vmatpush.msra.mxu0 %v426
    %1094 = vmatpush.msra.mxu0 %v417
    %1095 = vmatmul.f32.gmra.mxu0 %v81
    %v1096 = vpop.f32.mrf.mxu0
    %v1097 = vadd.f32 %v1032, %v1096
    %1098 = vmatmul.f32.gmra.mxu0 %v84
    %v1099 = vpop.f32.mrf.mxu0
    %v1100 = vadd.f32 %v1035, %v1099
    %1101 = vmatmul.f32.gmra.mxu0 %v87
    %v1102 = vpop.f32.mrf.mxu0
    %v1103 = vadd.f32 %v1038, %v1102
    %1104 = vmatmul.f32.gmra.mxu0 %v90
    %v1105 = vpop.f32.mrf.mxu0
    %v1106 = vadd.f32 %v1041, %v1105
    %1107 = vmatmul.f32.gmra.mxu0 %v93
    %v1108 = vpop.f32.mrf.mxu0
    %v1109 = vadd.f32 %v1044, %v1108
    %1110 = vmatmul.f32.gmra.mxu0 %v96
    %v1111 = vpop.f32.mrf.mxu0
    %v1112 = vadd.f32 %v1047, %v1111
    %1113 = vmatmul.f32.gmra.mxu0 %v99
    %v1114 = vpop.f32.mrf.mxu0
    %v1115 = vadd.f32 %v1050, %v1114
    %1116 = vmatmul.f32.gmra.mxu0 %v102
    %v1117 = vpop.f32.mrf.mxu0
    %v1118 = vadd.f32 %v1053, %v1117
    %1119 = vmatmul.f32.gmra.mxu0 %v105
    %v1120 = vpop.f32.mrf.mxu0
    %v1121 = vadd.f32 %v1056, %v1120
    %1122 = vmatmul.f32.gmra.mxu0 %v108
    %v1123 = vpop.f32.mrf.mxu0
    %v1124 = vadd.f32 %v1059, %v1123
    %1125 = vmatmul.f32.gmra.mxu0 %v111
    %v1126 = vpop.f32.mrf.mxu0
    %v1127 = vadd.f32 %v1062, %v1126
    %1128 = vmatmul.f32.gmra.mxu0 %v114
    %v1129 = vpop.f32.mrf.mxu0
    %v1130 = vadd.f32 %v1065, %v1129
    %1131 = vmatmul.f32.gmra.mxu0 %v117
    %v1132 = vpop.f32.mrf.mxu0
    %v1133 = vadd.f32 %v1068, %v1132
    %1134 = vmatmul.f32.gmra.mxu0 %v120
    %v1135 = vpop.f32.mrf.mxu0
    %v1136 = vadd.f32 %v1071, %v1135
    %1137 = vmatmul.f32.gmra.mxu0 %v123
    %v1138 = vpop.f32.mrf.mxu0
    %v1139 = vadd.f32 %v1074, %v1138
    %1140 = vmatmul.f32.gmra.mxu0 %v126
    %v1141 = vpop.f32.mrf.mxu0
    %v1142 = vadd.f32 %v1077, %v1141
    %1143 = vdwg.mxu0
    %1144 = vmatpush.msra.mxu0 %v265
    %1145 = vmatpush.msra.mxu0 %v256
    %1146 = vmatpush.msra.mxu0 %v247
    %1147 = vmatpush.msra.mxu0 %v238
    %1148 = vmatpush.msra.mxu0 %v229
    %1149 = vmatpush.msra.mxu0 %v220
    %1150 = vmatpush.msra.mxu0 %v211
    %1151 = vmatpush.msra.mxu0 %v202
    %1152 = vmatpush.msra.mxu0 %v193
    %1153 = vmatpush.msra.mxu0 %v184
    %1154 = vmatpush.msra.mxu0 %v175
    %1155 = vmatpush.msra.mxu0 %v166
    %1156 = vmatpush.msra.mxu0 %v157
    %1157 = vmatpush.msra.mxu0 %v148
    %1158 = vmatpush.msra.mxu0 %v139
    %1159 = vmatpush.msra.mxu0 %v130
    %1160 = vmatmul.f32.gmra.mxu0 %v79
    %v1161 = vpop.f32.mrf.mxu0
    %v1162 = vadd.f32 0.0, %v1161
    %1163 = vmatmul.f32.gmra.mxu0 %v82
    %v1164 = vpop.f32.mrf.mxu0
    %v1165 = vadd.f32 0.0, %v1164
    %1166 = vmatmul.f32.gmra.mxu0 %v85
    %v1167 = vpop.f32.mrf.mxu0
    %v1168 = vadd.f32 0.0, %v1167
    %1169 = vmatmul.f32.gmra.mxu0 %v88
    %v1170 = vpop.f32.mrf.mxu0
    %v1171 = vadd.f32 0.0, %v1170
    %1172 = vmatmul.f32.gmra.mxu0 %v91
    %v1173 = vpop.f32.mrf.mxu0
    %v1174 = vadd.f32 0.0, %v1173
    %1175 = vmatmul.f32.gmra.mxu0 %v94
    %v1176 = vpop.f32.mrf.mxu0
    %v1177 = vadd.f32 0.0, %v1176
    %1178 = vmatmul.f32.gmra.mxu0 %v97
    %v1179 = vpop.f32.mrf.mxu0
    %v1180 = vadd.f32 0.0, %v1179
    %1181 = vmatmul.f32.gmra.mxu0 %v100
    %v1182 = vpop.f32.mrf.mxu0
    %v1183 = vadd.f32 0.0, %v1182
    %1184 = vmatmul.f32.gmra.mxu0 %v103
    %v1185 = vpop.f32.mrf.mxu0
    %v1186 = vadd.f32 0.0, %v1185
    %1187 = vmatmul.f32.gmra.mxu0 %v106
    %v1188 = vpop.f32.mrf.mxu0
    %v1189 = vadd.f32 0.0, %v1188
    %1190 = vmatmul.f32.gmra.mxu0 %v109
    %v1191 = vpop.f32.mrf.mxu0
    %v1192 = vadd.f32 0.0, %v1191
    %1193 = vmatmul.f32.gmra.mxu0 %v112
    %v1194 = vpop.f32.mrf.mxu0
    %v1195 = vadd.f32 0.0, %v1194
    %1196 = vmatmul.f32.gmra.mxu0 %v115
    %v1197 = vpop.f32.mrf.mxu0
    %v1198 = vadd.f32 0.0, %v1197
    %1199 = vmatmul.f32.gmra.mxu0 %v118
    %v1200 = vpop.f32.mrf.mxu0
    %v1201 = vadd.f32 0.0, %v1200
    %1202 = vmatmul.f32.gmra.mxu0 %v121
    %v1203 = vpop.f32.mrf.mxu0
    %v1204 = vadd.f32 0.0, %v1203
    %1205 = vmatmul.f32.gmra.mxu0 %v124
    %v1206 = vpop.f32.mrf.mxu0
    %v1207 = vadd.f32 0.0, %v1206
    %1208 = vdwg.mxu0
    %1209 = vmatpush.msra.mxu0 %v409
    %1210 = vmatpush.msra.mxu0 %v400
    %1211 = vmatpush.msra.mxu0 %v391
    %1212 = vmatpush.msra.mxu0 %v382
    %1213 = vmatpush.msra.mxu0 %v373
    %1214 = vmatpush.msra.mxu0 %v364
    %1215 = vmatpush.msra.mxu0 %v355
    %1216 = vmatpush.msra.mxu0 %v346
    %1217 = vmatpush.msra.mxu0 %v337
    %1218 = vmatpush.msra.mxu0 %v328
    %1219 = vmatpush.msra.mxu0 %v319
    %1220 = vmatpush.msra.mxu0 %v310
    %1221 = vmatpush.msra.mxu0 %v301
    %1222 = vmatpush.msra.mxu0 %v292
    %1223 = vmatpush.msra.mxu0 %v283
    %1224 = vmatpush.msra.mxu0 %v274
    %1225 = vmatmul.f32.gmra.mxu0 %v80
    %v1226 = vpop.f32.mrf.mxu0
    %v1227 = vadd.f32 %v1162, %v1226
    %1228 = vmatmul.f32.gmra.mxu0 %v83
    %v1229 = vpop.f32.mrf.mxu0
    %v1230 = vadd.f32 %v1165, %v1229
    %1231 = vmatmul.f32.gmra.mxu0 %v86
    %v1232 = vpop.f32.mrf.mxu0
    %v1233 = vadd.f32 %v1168, %v1232
    %1234 = vmatmul.f32.gmra.mxu0 %v89
    %v1235 = vpop.f32.mrf.mxu0
    %v1236 = vadd.f32 %v1171, %v1235
    %1237 = vmatmul.f32.gmra.mxu0 %v92
    %v1238 = vpop.f32.mrf.mxu0
    %v1239 = vadd.f32 %v1174, %v1238
    %1240 = vmatmul.f32.gmra.mxu0 %v95
    %v1241 = vpop.f32.mrf.mxu0
    %v1242 = vadd.f32 %v1177, %v1241
    %1243 = vmatmul.f32.gmra.mxu0 %v98
    %v1244 = vpop.f32.mrf.mxu0
    %v1245 = vadd.f32 %v1180, %v1244
    %1246 = vmatmul.f32.gmra.mxu0 %v101
    %v1247 = vpop.f32.mrf.mxu0
    %v1248 = vadd.f32 %v1183, %v1247
    %1249 = vmatmul.f32.gmra.mxu0 %v104
    %v1250 = vpop.f32.mrf.mxu0
    %v1251 = vadd.f32 %v1186, %v1250
    %1252 = vmatmul.f32.gmra.mxu0 %v107
    %v1253 = vpop.f32.mrf.mxu0
    %v1254 = vadd.f32 %v1189, %v1253
    %1255 = vmatmul.f32.gmra.mxu0 %v110
    %v1256 = vpop.f32.mrf.mxu0
    %v1257 = vadd.f32 %v1192, %v1256
    %1258 = vmatmul.f32.gmra.mxu0 %v113
    %v1259 = vpop.f32.mrf.mxu0
    %v1260 = vadd.f32 %v1195, %v1259
    %1261 = vmatmul.f32.gmra.mxu0 %v116
    %v1262 = vpop.f32.mrf.mxu0
    %v1263 = vadd.f32 %v1198, %v1262
    %1264 = vmatmul.f32.gmra.mxu0 %v119
    %v1265 = vpop.f32.mrf.mxu0
    %v1266 = vadd.f32 %v1201, %v1265
    %1267 = vmatmul.f32.gmra.mxu0 %v122
    %v1268 = vpop.f32.mrf.mxu0
    %v1269 = vadd.f32 %v1204, %v1268
    %1270 = vmatmul.f32.gmra.mxu0 %v125
    %v1271 = vpop.f32.mrf.mxu0
    %v1272 = vadd.f32 %v1207, %v1271
    %1273 = vdwg.mxu0
    %1274 = vmatpush.msra.mxu0 %v553
    %1275 = vmatpush.msra.mxu0 %v544
    %1276 = vmatpush.msra.mxu0 %v535
    %1277 = vmatpush.msra.mxu0 %v526
    %1278 = vmatpush.msra.mxu0 %v517
    %1279 = vmatpush.msra.mxu0 %v508
    %1280 = vmatpush.msra.mxu0 %v499
    %1281 = vmatpush.msra.mxu0 %v490
    %1282 = vmatpush.msra.mxu0 %v481
    %1283 = vmatpush.msra.mxu0 %v472
    %1284 = vmatpush.msra.mxu0 %v463
    %1285 = vmatpush.msra.mxu0 %v454
    %1286 = vmatpush.msra.mxu0 %v445
    %1287 = vmatpush.msra.mxu0 %v436
    %1288 = vmatpush.msra.mxu0 %v427
    %1289 = vmatpush.msra.mxu0 %v418
    %1290 = vmatmul.f32.gmra.mxu0 %v81
    %v1291 = vpop.f32.mrf.mxu0
    %v1292 = vadd.f32 %v1227, %v1291
    %1293 = vmatmul.f32.gmra.mxu0 %v84
    %v1294 = vpop.f32.mrf.mxu0
    %v1295 = vadd.f32 %v1230, %v1294
    %1296 = vmatmul.f32.gmra.mxu0 %v87
    %v1297 = vpop.f32.mrf.mxu0
    %v1298 = vadd.f32 %v1233, %v1297
    %1299 = vmatmul.f32.gmra.mxu0 %v90
    %v1300 = vpop.f32.mrf.mxu0
    %v1301 = vadd.f32 %v1236, %v1300
    %1302 = vmatmul.f32.gmra.mxu0 %v93
    %v1303 = vpop.f32.mrf.mxu0
    %v1304 = vadd.f32 %v1239, %v1303
    %1305 = vmatmul.f32.gmra.mxu0 %v96
    %v1306 = vpop.f32.mrf.mxu0
    %v1307 = vadd.f32 %v1242, %v1306
    %1308 = vmatmul.f32.gmra.mxu0 %v99
    %v1309 = vpop.f32.mrf.mxu0
    %v1310 = vadd.f32 %v1245, %v1309
    %1311 = vmatmul.f32.gmra.mxu0 %v102
    %v1312 = vpop.f32.mrf.mxu0
    %v1313 = vadd.f32 %v1248, %v1312
    %1314 = vmatmul.f32.gmra.mxu0 %v105
    %v1315 = vpop.f32.mrf.mxu0
    %v1316 = vadd.f32 %v1251, %v1315
    %1317 = vmatmul.f32.gmra.mxu0 %v108
    %v1318 = vpop.f32.mrf.mxu0
    %v1319 = vadd.f32 %v1254, %v1318
    %1320 = vmatmul.f32.gmra.mxu0 %v111
    %v1321 = vpop.f32.mrf.mxu0
    %v1322 = vadd.f32 %v1257, %v1321
    %1323 = vmatmul.f32.gmra.mxu0 %v114
    %v1324 = vpop.f32.mrf.mxu0
    %v1325 = vadd.f32 %v1260, %v1324
    %1326 = vmatmul.f32.gmra.mxu0 %v117
    %v1327 = vpop.f32.mrf.mxu0
    %v1328 = vadd.f32 %v1263, %v1327
    %1329 = vmatmul.f32.gmra.mxu0 %v120
    %v1330 = vpop.f32.mrf.mxu0
    %v1331 = vadd.f32 %v1266, %v1330
    %1332 = vmatmul.f32.gmra.mxu0 %v123
    %v1333 = vpop.f32.mrf.mxu0
    %v1334 = vadd.f32 %v1269, %v1333
    %1335 = vmatmul.f32.gmra.mxu0 %v126
    %v1336 = vpop.f32.mrf.mxu0
    %v1337 = vadd.f32 %v1272, %v1336
    %1338 = vdwg.mxu0
    %1339 = vmatpush.msra.mxu0 %v266
    %1340 = vmatpush.msra.mxu0 %v257
    %1341 = vmatpush.msra.mxu0 %v248
    %1342 = vmatpush.msra.mxu0 %v239
    %1343 = vmatpush.msra.mxu0 %v230
    %1344 = vmatpush.msra.mxu0 %v221
    %1345 = vmatpush.msra.mxu0 %v212
    %1346 = vmatpush.msra.mxu0 %v203
    %1347 = vmatpush.msra.mxu0 %v194
    %1348 = vmatpush.msra.mxu0 %v185
    %1349 = vmatpush.msra.mxu0 %v176
    %1350 = vmatpush.msra.mxu0 %v167
    %1351 = vmatpush.msra.mxu0 %v158
    %1352 = vmatpush.msra.mxu0 %v149
    %1353 = vmatpush.msra.mxu0 %v140
    %1354 = vmatpush.msra.mxu0 %v131
    %1355 = vmatmul.f32.gmra.mxu0 %v79
    %v1356 = vpop.f32.mrf.mxu0
    %v1357 = vadd.f32 0.0, %v1356
    %1358 = vmatmul.f32.gmra.mxu0 %v82
    %v1359 = vpop.f32.mrf.mxu0
    %v1360 = vadd.f32 0.0, %v1359
    %1361 = vmatmul.f32.gmra.mxu0 %v85
    %v1362 = vpop.f32.mrf.mxu0
    %v1363 = vadd.f32 0.0, %v1362
    %1364 = vmatmul.f32.gmra.mxu0 %v88
    %v1365 = vpop.f32.mrf.mxu0
    %v1366 = vadd.f32 0.0, %v1365
    %1367 = vmatmul.f32.gmra.mxu0 %v91
    %v1368 = vpop.f32.mrf.mxu0
    %v1369 = vadd.f32 0.0, %v1368
    %1370 = vmatmul.f32.gmra.mxu0 %v94
    %v1371 = vpop.f32.mrf.mxu0
    %v1372 = vadd.f32 0.0, %v1371
    %1373 = vmatmul.f32.gmra.mxu0 %v97
    %v1374 = vpop.f32.mrf.mxu0
    %v1375 = vadd.f32 0.0, %v1374
    %1376 = vmatmul.f32.gmra.mxu0 %v100
    %v1377 = vpop.f32.mrf.mxu0
    %v1378 = vadd.f32 0.0, %v1377
    %1379 = vmatmul.f32.gmra.mxu0 %v103
    %v1380 = vpop.f32.mrf.mxu0
    %v1381 = vadd.f32 0.0, %v1380
    %1382 = vmatmul.f32.gmra.mxu0 %v106
    %v1383 = vpop.f32.mrf.mxu0
    %v1384 = vadd.f32 0.0, %v1383
    %1385 = vmatmul.f32.gmra.mxu0 %v109
    %v1386 = vpop.f32.mrf.mxu0
    %v1387 = vadd.f32 0.0, %v1386
    %1388 = vmatmul.f32.gmra.mxu0 %v112
    %v1389 = vpop.f32.mrf.mxu0
    %v1390 = vadd.f32 0.0, %v1389
    %1391 = vmatmul.f32.gmra.mxu0 %v115
    %v1392 = vpop.f32.mrf.mxu0
    %v1393 = vadd.f32 0.0, %v1392
    %1394 = vmatmul.f32.gmra.mxu0 %v118
    %v1395 = vpop.f32.mrf.mxu0
    %v1396 = vadd.f32 0.0, %v1395
    %1397 = vmatmul.f32.gmra.mxu0 %v121
    %v1398 = vpop.f32.mrf.mxu0
    %v1399 = vadd.f32 0.0, %v1398
    %1400 = vmatmul.f32.gmra.mxu0 %v124
    %v1401 = vpop.f32.mrf.mxu0
    %v1402 = vadd.f32 0.0, %v1401
    %1403 = vdwg.mxu0
    %1404 = vmatpush.msra.mxu0 %v410
    %1405 = vmatpush.msra.mxu0 %v401
    %1406 = vmatpush.msra.mxu0 %v392
    %1407 = vmatpush.msra.mxu0 %v383
    %1408 = vmatpush.msra.mxu0 %v374
    %1409 = vmatpush.msra.mxu0 %v365
    %1410 = vmatpush.msra.mxu0 %v356
    %1411 = vmatpush.msra.mxu0 %v347
    %1412 = vmatpush.msra.mxu0 %v338
    %1413 = vmatpush.msra.mxu0 %v329
    %1414 = vmatpush.msra.mxu0 %v320
    %1415 = vmatpush.msra.mxu0 %v311
    %1416 = vmatpush.msra.mxu0 %v302
    %1417 = vmatpush.msra.mxu0 %v293
    %1418 = vmatpush.msra.mxu0 %v284
    %1419 = vmatpush.msra.mxu0 %v275
    %1420 = vmatmul.f32.gmra.mxu0 %v80
    %v1421 = vpop.f32.mrf.mxu0
    %v1422 = vadd.f32 %v1357, %v1421
    %1423 = vmatmul.f32.gmra.mxu0 %v83
    %v1424 = vpop.f32.mrf.mxu0
    %v1425 = vadd.f32 %v1360, %v1424
    %1426 = vmatmul.f32.gmra.mxu0 %v86
    %v1427 = vpop.f32.mrf.mxu0
    %v1428 = vadd.f32 %v1363, %v1427
    %1429 = vmatmul.f32.gmra.mxu0 %v89
    %v1430 = vpop.f32.mrf.mxu0
    %v1431 = vadd.f32 %v1366, %v1430
    %1432 = vmatmul.f32.gmra.mxu0 %v92
    %v1433 = vpop.f32.mrf.mxu0
    %v1434 = vadd.f32 %v1369, %v1433
    %1435 = vmatmul.f32.gmra.mxu0 %v95
    %v1436 = vpop.f32.mrf.mxu0
    %v1437 = vadd.f32 %v1372, %v1436
    %1438 = vmatmul.f32.gmra.mxu0 %v98
    %v1439 = vpop.f32.mrf.mxu0
    %v1440 = vadd.f32 %v1375, %v1439
    %1441 = vmatmul.f32.gmra.mxu0 %v101
    %v1442 = vpop.f32.mrf.mxu0
    %v1443 = vadd.f32 %v1378, %v1442
    %1444 = vmatmul.f32.gmra.mxu0 %v104
    %v1445 = vpop.f32.mrf.mxu0
    %v1446 = vadd.f32 %v1381, %v1445
    %1447 = vmatmul.f32.gmra.mxu0 %v107
    %v1448 = vpop.f32.mrf.mxu0
    %v1449 = vadd.f32 %v1384, %v1448
    %1450 = vmatmul.f32.gmra.mxu0 %v110
    %v1451 = vpop.f32.mrf.mxu0
    %v1452 = vadd.f32 %v1387, %v1451
    %1453 = vmatmul.f32.gmra.mxu0 %v113
    %v1454 = vpop.f32.mrf.mxu0
    %v1455 = vadd.f32 %v1390, %v1454
    %1456 = vmatmul.f32.gmra.mxu0 %v116
    %v1457 = vpop.f32.mrf.mxu0
    %v1458 = vadd.f32 %v1393, %v1457
    %1459 = vmatmul.f32.gmra.mxu0 %v119
    %v1460 = vpop.f32.mrf.mxu0
    %v1461 = vadd.f32 %v1396, %v1460
    %1462 = vmatmul.f32.gmra.mxu0 %v122
    %v1463 = vpop.f32.mrf.mxu0
    %v1464 = vadd.f32 %v1399, %v1463
    %1465 = vmatmul.f32.gmra.mxu0 %v125
    %v1466 = vpop.f32.mrf.mxu0
    %v1467 = vadd.f32 %v1402, %v1466
    %1468 = vdwg.mxu0
    %1469 = vmatpush.msra.mxu0 %v554
    %1470 = vmatpush.msra.mxu0 %v545
    %1471 = vmatpush.msra.mxu0 %v536
    %1472 = vmatpush.msra.mxu0 %v527
    %1473 = vmatpush.msra.mxu0 %v518
    %1474 = vmatpush.msra.mxu0 %v509
    %1475 = vmatpush.msra.mxu0 %v500
    %1476 = vmatpush.msra.mxu0 %v491
    %1477 = vmatpush.msra.mxu0 %v482
    %1478 = vmatpush.msra.mxu0 %v473
    %1479 = vmatpush.msra.mxu0 %v464
    %1480 = vmatpush.msra.mxu0 %v455
    %1481 = vmatpush.msra.mxu0 %v446
    %1482 = vmatpush.msra.mxu0 %v437
    %1483 = vmatpush.msra.mxu0 %v428
    %1484 = vmatpush.msra.mxu0 %v419
    %1485 = vmatmul.f32.gmra.mxu0 %v81
    %v1486 = vpop.f32.mrf.mxu0
    %v1487 = vadd.f32 %v1422, %v1486
    %1488 = vmatmul.f32.gmra.mxu0 %v84
    %v1489 = vpop.f32.mrf.mxu0
    %v1490 = vadd.f32 %v1425, %v1489
    %1491 = vmatmul.f32.gmra.mxu0 %v87
    %v1492 = vpop.f32.mrf.mxu0
    %v1493 = vadd.f32 %v1428, %v1492
    %1494 = vmatmul.f32.gmra.mxu0 %v90
    %v1495 = vpop.f32.mrf.mxu0
    %v1496 = vadd.f32 %v1431, %v1495
    %1497 = vmatmul.f32.gmra.mxu0 %v93
    %v1498 = vpop.f32.mrf.mxu0
    %v1499 = vadd.f32 %v1434, %v1498
    %1500 = vmatmul.f32.gmra.mxu0 %v96
    %v1501 = vpop.f32.mrf.mxu0
    %v1502 = vadd.f32 %v1437, %v1501
    %1503 = vmatmul.f32.gmra.mxu0 %v99
    %v1504 = vpop.f32.mrf.mxu0
    %v1505 = vadd.f32 %v1440, %v1504
    %1506 = vmatmul.f32.gmra.mxu0 %v102
    %v1507 = vpop.f32.mrf.mxu0
    %v1508 = vadd.f32 %v1443, %v1507
    %1509 = vmatmul.f32.gmra.mxu0 %v105
    %v1510 = vpop.f32.mrf.mxu0
    %v1511 = vadd.f32 %v1446, %v1510
    %1512 = vmatmul.f32.gmra.mxu0 %v108
    %v1513 = vpop.f32.mrf.mxu0
    %v1514 = vadd.f32 %v1449, %v1513
    %1515 = vmatmul.f32.gmra.mxu0 %v111
    %v1516 = vpop.f32.mrf.mxu0
    %v1517 = vadd.f32 %v1452, %v1516
    %1518 = vmatmul.f32.gmra.mxu0 %v114
    %v1519 = vpop.f32.mrf.mxu0
    %v1520 = vadd.f32 %v1455, %v1519
    %1521 = vmatmul.f32.gmra.mxu0 %v117
    %v1522 = vpop.f32.mrf.mxu0
    %v1523 = vadd.f32 %v1458, %v1522
    %1524 = vmatmul.f32.gmra.mxu0 %v120
    %v1525 = vpop.f32.mrf.mxu0
    %v1526 = vadd.f32 %v1461, %v1525
    %1527 = vmatmul.f32.gmra.mxu0 %v123
    %v1528 = vpop.f32.mrf.mxu0
    %v1529 = vadd.f32 %v1464, %v1528
    %1530 = vmatmul.f32.gmra.mxu0 %v126
    %v1531 = vpop.f32.mrf.mxu0
    %v1532 = vadd.f32 %v1467, %v1531
    %1533 = vdwg.mxu0
    %1534 = vmatpush.msra.mxu0 %v267
    %1535 = vmatpush.msra.mxu0 %v258
    %1536 = vmatpush.msra.mxu0 %v249
    %1537 = vmatpush.msra.mxu0 %v240
    %1538 = vmatpush.msra.mxu0 %v231
    %1539 = vmatpush.msra.mxu0 %v222
    %1540 = vmatpush.msra.mxu0 %v213
    %1541 = vmatpush.msra.mxu0 %v204
    %1542 = vmatpush.msra.mxu0 %v195
    %1543 = vmatpush.msra.mxu0 %v186
    %1544 = vmatpush.msra.mxu0 %v177
    %1545 = vmatpush.msra.mxu0 %v168
    %1546 = vmatpush.msra.mxu0 %v159
    %1547 = vmatpush.msra.mxu0 %v150
    %1548 = vmatpush.msra.mxu0 %v141
    %1549 = vmatpush.msra.mxu0 %v132
    %1550 = vmatmul.f32.gmra.mxu0 %v79
    %v1551 = vpop.f32.mrf.mxu0
    %v1552 = vadd.f32 0.0, %v1551
    %1553 = vmatmul.f32.gmra.mxu0 %v82
    %v1554 = vpop.f32.mrf.mxu0
    %v1555 = vadd.f32 0.0, %v1554
    %1556 = vmatmul.f32.gmra.mxu0 %v85
    %v1557 = vpop.f32.mrf.mxu0
    %v1558 = vadd.f32 0.0, %v1557
    %1559 = vmatmul.f32.gmra.mxu0 %v88
    %v1560 = vpop.f32.mrf.mxu0
    %v1561 = vadd.f32 0.0, %v1560
    %1562 = vmatmul.f32.gmra.mxu0 %v91
    %v1563 = vpop.f32.mrf.mxu0
    %v1564 = vadd.f32 0.0, %v1563
    %1565 = vmatmul.f32.gmra.mxu0 %v94
    %v1566 = vpop.f32.mrf.mxu0
    %v1567 = vadd.f32 0.0, %v1566
    %1568 = vmatmul.f32.gmra.mxu0 %v97
    %v1569 = vpop.f32.mrf.mxu0
    %v1570 = vadd.f32 0.0, %v1569
    %1571 = vmatmul.f32.gmra.mxu0 %v100
    %v1572 = vpop.f32.mrf.mxu0
    %v1573 = vadd.f32 0.0, %v1572
    %1574 = vmatmul.f32.gmra.mxu0 %v103
    %v1575 = vpop.f32.mrf.mxu0
    %v1576 = vadd.f32 0.0, %v1575
    %1577 = vmatmul.f32.gmra.mxu0 %v106
    %v1578 = vpop.f32.mrf.mxu0
    %v1579 = vadd.f32 0.0, %v1578
    %1580 = vmatmul.f32.gmra.mxu0 %v109
    %v1581 = vpop.f32.mrf.mxu0
    %v1582 = vadd.f32 0.0, %v1581
    %1583 = vmatmul.f32.gmra.mxu0 %v112
    %v1584 = vpop.f32.mrf.mxu0
    %v1585 = vadd.f32 0.0, %v1584
    %1586 = vmatmul.f32.gmra.mxu0 %v115
    %v1587 = vpop.f32.mrf.mxu0
    %v1588 = vadd.f32 0.0, %v1587
    %1589 = vmatmul.f32.gmra.mxu0 %v118
    %v1590 = vpop.f32.mrf.mxu0
    %v1591 = vadd.f32 0.0, %v1590
    %1592 = vmatmul.f32.gmra.mxu0 %v121
    %v1593 = vpop.f32.mrf.mxu0
    %v1594 = vadd.f32 0.0, %v1593
    %1595 = vmatmul.f32.gmra.mxu0 %v124
    %v1596 = vpop.f32.mrf.mxu0
    %v1597 = vadd.f32 0.0, %v1596
    %1598 = vdwg.mxu0
    %1599 = vmatpush.msra.mxu0 %v411
    %1600 = vmatpush.msra.mxu0 %v402
    %1601 = vmatpush.msra.mxu0 %v393
    %1602 = vmatpush.msra.mxu0 %v384
    %1603 = vmatpush.msra.mxu0 %v375
    %1604 = vmatpush.msra.mxu0 %v366
    %1605 = vmatpush.msra.mxu0 %v357
    %1606 = vmatpush.msra.mxu0 %v348
    %1607 = vmatpush.msra.mxu0 %v339
    %1608 = vmatpush.msra.mxu0 %v330
    %1609 = vmatpush.msra.mxu0 %v321
    %1610 = vmatpush.msra.mxu0 %v312
    %1611 = vmatpush.msra.mxu0 %v303
    %1612 = vmatpush.msra.mxu0 %v294
    %1613 = vmatpush.msra.mxu0 %v285
    %1614 = vmatpush.msra.mxu0 %v276
    %1615 = vmatmul.f32.gmra.mxu0 %v80
    %v1616 = vpop.f32.mrf.mxu0
    %v1617 = vadd.f32 %v1552, %v1616
    %1618 = vmatmul.f32.gmra.mxu0 %v83
    %v1619 = vpop.f32.mrf.mxu0
    %v1620 = vadd.f32 %v1555, %v1619
    %1621 = vmatmul.f32.gmra.mxu0 %v86
    %v1622 = vpop.f32.mrf.mxu0
    %v1623 = vadd.f32 %v1558, %v1622
    %1624 = vmatmul.f32.gmra.mxu0 %v89
    %v1625 = vpop.f32.mrf.mxu0
    %v1626 = vadd.f32 %v1561, %v1625
    %1627 = vmatmul.f32.gmra.mxu0 %v92
    %v1628 = vpop.f32.mrf.mxu0
    %v1629 = vadd.f32 %v1564, %v1628
    %1630 = vmatmul.f32.gmra.mxu0 %v95
    %v1631 = vpop.f32.mrf.mxu0
    %v1632 = vadd.f32 %v1567, %v1631
    %1633 = vmatmul.f32.gmra.mxu0 %v98
    %v1634 = vpop.f32.mrf.mxu0
    %v1635 = vadd.f32 %v1570, %v1634
    %1636 = vmatmul.f32.gmra.mxu0 %v101
    %v1637 = vpop.f32.mrf.mxu0
    %v1638 = vadd.f32 %v1573, %v1637
    %1639 = vmatmul.f32.gmra.mxu0 %v104
    %v1640 = vpop.f32.mrf.mxu0
    %v1641 = vadd.f32 %v1576, %v1640
    %1642 = vmatmul.f32.gmra.mxu0 %v107
    %v1643 = vpop.f32.mrf.mxu0
    %v1644 = vadd.f32 %v1579, %v1643
    %1645 = vmatmul.f32.gmra.mxu0 %v110
    %v1646 = vpop.f32.mrf.mxu0
    %v1647 = vadd.f32 %v1582, %v1646
    %1648 = vmatmul.f32.gmra.mxu0 %v113
    %v1649 = vpop.f32.mrf.mxu0
    %v1650 = vadd.f32 %v1585, %v1649
    %1651 = vmatmul.f32.gmra.mxu0 %v116
    %v1652 = vpop.f32.mrf.mxu0
    %v1653 = vadd.f32 %v1588, %v1652
    %1654 = vmatmul.f32.gmra.mxu0 %v119
    %v1655 = vpop.f32.mrf.mxu0
    %v1656 = vadd.f32 %v1591, %v1655
    %1657 = vmatmul.f32.gmra.mxu0 %v122
    %v1658 = vpop.f32.mrf.mxu0
    %v1659 = vadd.f32 %v1594, %v1658
    %1660 = vmatmul.f32.gmra.mxu0 %v125
    %v1661 = vpop.f32.mrf.mxu0
    %v1662 = vadd.f32 %v1597, %v1661
    %1663 = vdwg.mxu0
    %1664 = vmatpush.msra.mxu0 %v555
    %1665 = vmatpush.msra.mxu0 %v546
    %1666 = vmatpush.msra.mxu0 %v537
    %1667 = vmatpush.msra.mxu0 %v528
    %1668 = vmatpush.msra.mxu0 %v519
    %1669 = vmatpush.msra.mxu0 %v510
    %1670 = vmatpush.msra.mxu0 %v501
    %1671 = vmatpush.msra.mxu0 %v492
    %1672 = vmatpush.msra.mxu0 %v483
    %1673 = vmatpush.msra.mxu0 %v474
    %1674 = vmatpush.msra.mxu0 %v465
    %1675 = vmatpush.msra.mxu0 %v456
    %1676 = vmatpush.msra.mxu0 %v447
    %1677 = vmatpush.msra.mxu0 %v438
    %1678 = vmatpush.msra.mxu0 %v429
    %1679 = vmatpush.msra.mxu0 %v420
    %1680 = vmatmul.f32.gmra.mxu0 %v81
    %v1681 = vpop.f32.mrf.mxu0
    %v1682 = vadd.f32 %v1617, %v1681
    %1683 = vmatmul.f32.gmra.mxu0 %v84
    %v1684 = vpop.f32.mrf.mxu0
    %v1685 = vadd.f32 %v1620, %v1684
    %1686 = vmatmul.f32.gmra.mxu0 %v87
    %v1687 = vpop.f32.mrf.mxu0
    %v1688 = vadd.f32 %v1623, %v1687
    %1689 = vmatmul.f32.gmra.mxu0 %v90
    %v1690 = vpop.f32.mrf.mxu0
    %v1691 = vadd.f32 %v1626, %v1690
    %1692 = vmatmul.f32.gmra.mxu0 %v93
    %v1693 = vpop.f32.mrf.mxu0
    %v1694 = vadd.f32 %v1629, %v1693
    %1695 = vmatmul.f32.gmra.mxu0 %v96
    %v1696 = vpop.f32.mrf.mxu0
    %v1697 = vadd.f32 %v1632, %v1696
    %1698 = vmatmul.f32.gmra.mxu0 %v99
    %v1699 = vpop.f32.mrf.mxu0
    %v1700 = vadd.f32 %v1635, %v1699
    %1701 = vmatmul.f32.gmra.mxu0 %v102
    %v1702 = vpop.f32.mrf.mxu0
    %v1703 = vadd.f32 %v1638, %v1702
    %1704 = vmatmul.f32.gmra.mxu0 %v105
    %v1705 = vpop.f32.mrf.mxu0
    %v1706 = vadd.f32 %v1641, %v1705
    %1707 = vmatmul.f32.gmra.mxu0 %v108
    %v1708 = vpop.f32.mrf.mxu0
    %v1709 = vadd.f32 %v1644, %v1708
    %1710 = vmatmul.f32.gmra.mxu0 %v111
    %v1711 = vpop.f32.mrf.mxu0
    %v1712 = vadd.f32 %v1647, %v1711
    %1713 = vmatmul.f32.gmra.mxu0 %v114
    %v1714 = vpop.f32.mrf.mxu0
    %v1715 = vadd.f32 %v1650, %v1714
    %1716 = vmatmul.f32.gmra.mxu0 %v117
    %v1717 = vpop.f32.mrf.mxu0
    %v1718 = vadd.f32 %v1653, %v1717
    %1719 = vmatmul.f32.gmra.mxu0 %v120
    %v1720 = vpop.f32.mrf.mxu0
    %v1721 = vadd.f32 %v1656, %v1720
    %1722 = vmatmul.f32.gmra.mxu0 %v123
    %v1723 = vpop.f32.mrf.mxu0
    %v1724 = vadd.f32 %v1659, %v1723
    %1725 = vmatmul.f32.gmra.mxu0 %v126
    %v1726 = vpop.f32.mrf.mxu0
    %v1727 = vadd.f32 %v1662, %v1726
    %1728 = vdwg.mxu0
    %1729 = vmatpush.msra.mxu0 %v268
    %1730 = vmatpush.msra.mxu0 %v259
    %1731 = vmatpush.msra.mxu0 %v250
    %1732 = vmatpush.msra.mxu0 %v241
    %1733 = vmatpush.msra.mxu0 %v232
    %1734 = vmatpush.msra.mxu0 %v223
    %1735 = vmatpush.msra.mxu0 %v214
    %1736 = vmatpush.msra.mxu0 %v205
    %1737 = vmatpush.msra.mxu0 %v196
    %1738 = vmatpush.msra.mxu0 %v187
    %1739 = vmatpush.msra.mxu0 %v178
    %1740 = vmatpush.msra.mxu0 %v169
    %1741 = vmatpush.msra.mxu0 %v160
    %1742 = vmatpush.msra.mxu0 %v151
    %1743 = vmatpush.msra.mxu0 %v142
    %1744 = vmatpush.msra.mxu0 %v133
    %1745 = vmatmul.f32.gmra.mxu0 %v79
    %v1746 = vpop.f32.mrf.mxu0
    %v1747 = vadd.f32 0.0, %v1746
    %1748 = vmatmul.f32.gmra.mxu0 %v82
    %v1749 = vpop.f32.mrf.mxu0
    %v1750 = vadd.f32 0.0, %v1749
    %1751 = vmatmul.f32.gmra.mxu0 %v85
    %v1752 = vpop.f32.mrf.mxu0
    %v1753 = vadd.f32 0.0, %v1752
    %1754 = vmatmul.f32.gmra.mxu0 %v88
    %v1755 = vpop.f32.mrf.mxu0
    %v1756 = vadd.f32 0.0, %v1755
    %1757 = vmatmul.f32.gmra.mxu0 %v91
    %v1758 = vpop.f32.mrf.mxu0
    %v1759 = vadd.f32 0.0, %v1758
    %1760 = vmatmul.f32.gmra.mxu0 %v94
    %v1761 = vpop.f32.mrf.mxu0
    %v1762 = vadd.f32 0.0, %v1761
    %1763 = vmatmul.f32.gmra.mxu0 %v97
    %v1764 = vpop.f32.mrf.mxu0
    %v1765 = vadd.f32 0.0, %v1764
    %1766 = vmatmul.f32.gmra.mxu0 %v100
    %v1767 = vpop.f32.mrf.mxu0
    %v1768 = vadd.f32 0.0, %v1767
    %1769 = vmatmul.f32.gmra.mxu0 %v103
    %v1770 = vpop.f32.mrf.mxu0
    %v1771 = vadd.f32 0.0, %v1770
    %1772 = vmatmul.f32.gmra.mxu0 %v106
    %v1773 = vpop.f32.mrf.mxu0
    %v1774 = vadd.f32 0.0, %v1773
    %1775 = vmatmul.f32.gmra.mxu0 %v109
    %v1776 = vpop.f32.mrf.mxu0
    %v1777 = vadd.f32 0.0, %v1776
    %1778 = vmatmul.f32.gmra.mxu0 %v112
    %v1779 = vpop.f32.mrf.mxu0
    %v1780 = vadd.f32 0.0, %v1779
    %1781 = vmatmul.f32.gmra.mxu0 %v115
    %v1782 = vpop.f32.mrf.mxu0
    %v1783 = vadd.f32 0.0, %v1782
    %1784 = vmatmul.f32.gmra.mxu0 %v118
    %v1785 = vpop.f32.mrf.mxu0
    %v1786 = vadd.f32 0.0, %v1785
    %1787 = vmatmul.f32.gmra.mxu0 %v121
    %v1788 = vpop.f32.mrf.mxu0
    %v1789 = vadd.f32 0.0, %v1788
    %1790 = vmatmul.f32.gmra.mxu0 %v124
    %v1791 = vpop.f32.mrf.mxu0
    %v1792 = vadd.f32 0.0, %v1791
    %1793 = vdwg.mxu0
    %1794 = vmatpush.msra.mxu0 %v412
    %1795 = vmatpush.msra.mxu0 %v403
    %1796 = vmatpush.msra.mxu0 %v394
    %1797 = vmatpush.msra.mxu0 %v385
    %1798 = vmatpush.msra.mxu0 %v376
    %1799 = vmatpush.msra.mxu0 %v367
    %1800 = vmatpush.msra.mxu0 %v358
    %1801 = vmatpush.msra.mxu0 %v349
    %1802 = vmatpush.msra.mxu0 %v340
    %1803 = vmatpush.msra.mxu0 %v331
    %1804 = vmatpush.msra.mxu0 %v322
    %1805 = vmatpush.msra.mxu0 %v313
    %1806 = vmatpush.msra.mxu0 %v304
    %1807 = vmatpush.msra.mxu0 %v295
    %1808 = vmatpush.msra.mxu0 %v286
    %1809 = vmatpush.msra.mxu0 %v277
    %1810 = vmatmul.f32.gmra.mxu0 %v80
    %v1811 = vpop.f32.mrf.mxu0
    %v1812 = vadd.f32 %v1747, %v1811
    %1813 = vmatmul.f32.gmra.mxu0 %v83
    %v1814 = vpop.f32.mrf.mxu0
    %v1815 = vadd.f32 %v1750, %v1814
    %1816 = vmatmul.f32.gmra.mxu0 %v86
    %v1817 = vpop.f32.mrf.mxu0
    %v1818 = vadd.f32 %v1753, %v1817
    %1819 = vmatmul.f32.gmra.mxu0 %v89
    %v1820 = vpop.f32.mrf.mxu0
    %v1821 = vadd.f32 %v1756, %v1820
    %1822 = vmatmul.f32.gmra.mxu0 %v92
    %v1823 = vpop.f32.mrf.mxu0
    %v1824 = vadd.f32 %v1759, %v1823
    %1825 = vmatmul.f32.gmra.mxu0 %v95
    %v1826 = vpop.f32.mrf.mxu0
    %v1827 = vadd.f32 %v1762, %v1826
    %1828 = vmatmul.f32.gmra.mxu0 %v98
    %v1829 = vpop.f32.mrf.mxu0
    %v1830 = vadd.f32 %v1765, %v1829
    %1831 = vmatmul.f32.gmra.mxu0 %v101
    %v1832 = vpop.f32.mrf.mxu0
    %v1833 = vadd.f32 %v1768, %v1832
    %1834 = vmatmul.f32.gmra.mxu0 %v104
    %v1835 = vpop.f32.mrf.mxu0
    %v1836 = vadd.f32 %v1771, %v1835
    %1837 = vmatmul.f32.gmra.mxu0 %v107
    %v1838 = vpop.f32.mrf.mxu0
    %v1839 = vadd.f32 %v1774, %v1838
    %1840 = vmatmul.f32.gmra.mxu0 %v110
    %v1841 = vpop.f32.mrf.mxu0
    %v1842 = vadd.f32 %v1777, %v1841
    %1843 = vmatmul.f32.gmra.mxu0 %v113
    %v1844 = vpop.f32.mrf.mxu0
    %v1845 = vadd.f32 %v1780, %v1844
    %1846 = vmatmul.f32.gmra.mxu0 %v116
    %v1847 = vpop.f32.mrf.mxu0
    %v1848 = vadd.f32 %v1783, %v1847
    %1849 = vmatmul.f32.gmra.mxu0 %v119
    %v1850 = vpop.f32.mrf.mxu0
    %v1851 = vadd.f32 %v1786, %v1850
    %1852 = vmatmul.f32.gmra.mxu0 %v122
    %v1853 = vpop.f32.mrf.mxu0
    %v1854 = vadd.f32 %v1789, %v1853
    %1855 = vmatmul.f32.gmra.mxu0 %v125
    %v1856 = vpop.f32.mrf.mxu0
    %v1857 = vadd.f32 %v1792, %v1856
    %1858 = vdwg.mxu0
    %1859 = vmatpush.msra.mxu0 %v556
    %1860 = vmatpush.msra.mxu0 %v547
    %1861 = vmatpush.msra.mxu0 %v538
    %1862 = vmatpush.msra.mxu0 %v529
    %1863 = vmatpush.msra.mxu0 %v520
    %1864 = vmatpush.msra.mxu0 %v511
    %1865 = vmatpush.msra.mxu0 %v502
    %1866 = vmatpush.msra.mxu0 %v493
    %1867 = vmatpush.msra.mxu0 %v484
    %1868 = vmatpush.msra.mxu0 %v475
    %1869 = vmatpush.msra.mxu0 %v466
    %1870 = vmatpush.msra.mxu0 %v457
    %1871 = vmatpush.msra.mxu0 %v448
    %1872 = vmatpush.msra.mxu0 %v439
    %1873 = vmatpush.msra.mxu0 %v430
    %1874 = vmatpush.msra.mxu0 %v421
    %1875 = vmatmul.f32.gmra.mxu0 %v81
    %v1876 = vpop.f32.mrf.mxu0
    %v1877 = vadd.f32 %v1812, %v1876
    %1878 = vmatmul.f32.gmra.mxu0 %v84
    %v1879 = vpop.f32.mrf.mxu0
    %v1880 = vadd.f32 %v1815, %v1879
    %1881 = vmatmul.f32.gmra.mxu0 %v87
    %v1882 = vpop.f32.mrf.mxu0
    %v1883 = vadd.f32 %v1818, %v1882
    %1884 = vmatmul.f32.gmra.mxu0 %v90
    %v1885 = vpop.f32.mrf.mxu0
    %v1886 = vadd.f32 %v1821, %v1885
    %1887 = vmatmul.f32.gmra.mxu0 %v93
    %v1888 = vpop.f32.mrf.mxu0
    %v1889 = vadd.f32 %v1824, %v1888
    %1890 = vmatmul.f32.gmra.mxu0 %v96
    %v1891 = vpop.f32.mrf.mxu0
    %v1892 = vadd.f32 %v1827, %v1891
    %1893 = vmatmul.f32.gmra.mxu0 %v99
    %v1894 = vpop.f32.mrf.mxu0
    %v1895 = vadd.f32 %v1830, %v1894
    %1896 = vmatmul.f32.gmra.mxu0 %v102
    %v1897 = vpop.f32.mrf.mxu0
    %v1898 = vadd.f32 %v1833, %v1897
    %1899 = vmatmul.f32.gmra.mxu0 %v105
    %v1900 = vpop.f32.mrf.mxu0
    %v1901 = vadd.f32 %v1836, %v1900
    %1902 = vmatmul.f32.gmra.mxu0 %v108
    %v1903 = vpop.f32.mrf.mxu0
    %v1904 = vadd.f32 %v1839, %v1903
    %1905 = vmatmul.f32.gmra.mxu0 %v111
    %v1906 = vpop.f32.mrf.mxu0
    %v1907 = vadd.f32 %v1842, %v1906
    %1908 = vmatmul.f32.gmra.mxu0 %v114
    %v1909 = vpop.f32.mrf.mxu0
    %v1910 = vadd.f32 %v1845, %v1909
    %1911 = vmatmul.f32.gmra.mxu0 %v117
    %v1912 = vpop.f32.mrf.mxu0
    %v1913 = vadd.f32 %v1848, %v1912
    %1914 = vmatmul.f32.gmra.mxu0 %v120
    %v1915 = vpop.f32.mrf.mxu0
    %v1916 = vadd.f32 %v1851, %v1915
    %1917 = vmatmul.f32.gmra.mxu0 %v123
    %v1918 = vpop.f32.mrf.mxu0
    %v1919 = vadd.f32 %v1854, %v1918
    %1920 = vmatmul.f32.gmra.mxu0 %v126
    %v1921 = vpop.f32.mrf.mxu0
    %v1922 = vadd.f32 %v1857, %v1921
    %1923 = vdwg.mxu0
    %1924 = vmatpush.msra.mxu0 %v269
    %1925 = vmatpush.msra.mxu0 %v260
    %1926 = vmatpush.msra.mxu0 %v251
    %1927 = vmatpush.msra.mxu0 %v242
    %1928 = vmatpush.msra.mxu0 %v233
    %1929 = vmatpush.msra.mxu0 %v224
    %1930 = vmatpush.msra.mxu0 %v215
    %1931 = vmatpush.msra.mxu0 %v206
    %1932 = vmatpush.msra.mxu0 %v197
    %1933 = vmatpush.msra.mxu0 %v188
    %1934 = vmatpush.msra.mxu0 %v179
    %1935 = vmatpush.msra.mxu0 %v170
    %1936 = vmatpush.msra.mxu0 %v161
    %1937 = vmatpush.msra.mxu0 %v152
    %1938 = vmatpush.msra.mxu0 %v143
    %1939 = vmatpush.msra.mxu0 %v134
    %1940 = vmatmul.f32.gmra.mxu0 %v79
    %v1941 = vpop.f32.mrf.mxu0
    %v1942 = vadd.f32 0.0, %v1941
    %1943 = vmatmul.f32.gmra.mxu0 %v82
    %v1944 = vpop.f32.mrf.mxu0
    %v1945 = vadd.f32 0.0, %v1944
    %1946 = vmatmul.f32.gmra.mxu0 %v85
    %v1947 = vpop.f32.mrf.mxu0
    %v1948 = vadd.f32 0.0, %v1947
    %1949 = vmatmul.f32.gmra.mxu0 %v88
    %v1950 = vpop.f32.mrf.mxu0
    %v1951 = vadd.f32 0.0, %v1950
    %1952 = vmatmul.f32.gmra.mxu0 %v91
    %v1953 = vpop.f32.mrf.mxu0
    %v1954 = vadd.f32 0.0, %v1953
    %1955 = vmatmul.f32.gmra.mxu0 %v94
    %v1956 = vpop.f32.mrf.mxu0
    %v1957 = vadd.f32 0.0, %v1956
    %1958 = vmatmul.f32.gmra.mxu0 %v97
    %v1959 = vpop.f32.mrf.mxu0
    %v1960 = vadd.f32 0.0, %v1959
    %1961 = vmatmul.f32.gmra.mxu0 %v100
    %v1962 = vpop.f32.mrf.mxu0
    %v1963 = vadd.f32 0.0, %v1962
    %1964 = vmatmul.f32.gmra.mxu0 %v103
    %v1965 = vpop.f32.mrf.mxu0
    %v1966 = vadd.f32 0.0, %v1965
    %1967 = vmatmul.f32.gmra.mxu0 %v106
    %v1968 = vpop.f32.mrf.mxu0
    %v1969 = vadd.f32 0.0, %v1968
    %1970 = vmatmul.f32.gmra.mxu0 %v109
    %v1971 = vpop.f32.mrf.mxu0
    %v1972 = vadd.f32 0.0, %v1971
    %1973 = vmatmul.f32.gmra.mxu0 %v112
    %v1974 = vpop.f32.mrf.mxu0
    %v1975 = vadd.f32 0.0, %v1974
    %1976 = vmatmul.f32.gmra.mxu0 %v115
    %v1977 = vpop.f32.mrf.mxu0
    %v1978 = vadd.f32 0.0, %v1977
    %1979 = vmatmul.f32.gmra.mxu0 %v118
    %v1980 = vpop.f32.mrf.mxu0
    %v1981 = vadd.f32 0.0, %v1980
    %1982 = vmatmul.f32.gmra.mxu0 %v121
    %v1983 = vpop.f32.mrf.mxu0
    %v1984 = vadd.f32 0.0, %v1983
    %1985 = vmatmul.f32.gmra.mxu0 %v124
    %v1986 = vpop.f32.mrf.mxu0
    %v1987 = vadd.f32 0.0, %v1986
    %1988 = vdwg.mxu0
    %1989 = vmatpush.msra.mxu0 %v413
    %1990 = vmatpush.msra.mxu0 %v404
    %1991 = vmatpush.msra.mxu0 %v395
    %1992 = vmatpush.msra.mxu0 %v386
    %1993 = vmatpush.msra.mxu0 %v377
    %1994 = vmatpush.msra.mxu0 %v368
    %1995 = vmatpush.msra.mxu0 %v359
    %1996 = vmatpush.msra.mxu0 %v350
    %1997 = vmatpush.msra.mxu0 %v341
    %1998 = vmatpush.msra.mxu0 %v332
    %1999 = vmatpush.msra.mxu0 %v323
    %2000 = vmatpush.msra.mxu0 %v314
    %2001 = vmatpush.msra.mxu0 %v305
    %2002 = vmatpush.msra.mxu0 %v296
    %2003 = vmatpush.msra.mxu0 %v287
    %2004 = vmatpush.msra.mxu0 %v278
    %2005 = vmatmul.f32.gmra.mxu0 %v80
    %v2006 = vpop.f32.mrf.mxu0
    %v2007 = vadd.f32 %v1942, %v2006
    %2008 = vmatmul.f32.gmra.mxu0 %v83
    %v2009 = vpop.f32.mrf.mxu0
    %v2010 = vadd.f32 %v1945, %v2009
    %2011 = vmatmul.f32.gmra.mxu0 %v86
    %v2012 = vpop.f32.mrf.mxu0
    %v2013 = vadd.f32 %v1948, %v2012
    %2014 = vmatmul.f32.gmra.mxu0 %v89
    %v2015 = vpop.f32.mrf.mxu0
    %v2016 = vadd.f32 %v1951, %v2015
    %2017 = vmatmul.f32.gmra.mxu0 %v92
    %v2018 = vpop.f32.mrf.mxu0
    %v2019 = vadd.f32 %v1954, %v2018
    %2020 = vmatmul.f32.gmra.mxu0 %v95
    %v2021 = vpop.f32.mrf.mxu0
    %v2022 = vadd.f32 %v1957, %v2021
    %2023 = vmatmul.f32.gmra.mxu0 %v98
    %v2024 = vpop.f32.mrf.mxu0
    %v2025 = vadd.f32 %v1960, %v2024
    %2026 = vmatmul.f32.gmra.mxu0 %v101
    %v2027 = vpop.f32.mrf.mxu0
    %v2028 = vadd.f32 %v1963, %v2027
    %2029 = vmatmul.f32.gmra.mxu0 %v104
    %v2030 = vpop.f32.mrf.mxu0
    %v2031 = vadd.f32 %v1966, %v2030
    %2032 = vmatmul.f32.gmra.mxu0 %v107
    %v2033 = vpop.f32.mrf.mxu0
    %v2034 = vadd.f32 %v1969, %v2033
    %2035 = vmatmul.f32.gmra.mxu0 %v110
    %v2036 = vpop.f32.mrf.mxu0
    %v2037 = vadd.f32 %v1972, %v2036
    %2038 = vmatmul.f32.gmra.mxu0 %v113
    %v2039 = vpop.f32.mrf.mxu0
    %v2040 = vadd.f32 %v1975, %v2039
    %2041 = vmatmul.f32.gmra.mxu0 %v116
    %v2042 = vpop.f32.mrf.mxu0
    %v2043 = vadd.f32 %v1978, %v2042
    %2044 = vmatmul.f32.gmra.mxu0 %v119
    %v2045 = vpop.f32.mrf.mxu0
    %v2046 = vadd.f32 %v1981, %v2045
    %2047 = vmatmul.f32.gmra.mxu0 %v122
    %v2048 = vpop.f32.mrf.mxu0
    %v2049 = vadd.f32 %v1984, %v2048
    %2050 = vmatmul.f32.gmra.mxu0 %v125
    %v2051 = vpop.f32.mrf.mxu0
    %v2052 = vadd.f32 %v1987, %v2051
    %2053 = vdwg.mxu0
    %2054 = vmatpush.msra.mxu0 %v557
    %2055 = vmatpush.msra.mxu0 %v548
    %2056 = vmatpush.msra.mxu0 %v539
    %2057 = vmatpush.msra.mxu0 %v530
    %2058 = vmatpush.msra.mxu0 %v521
    %2059 = vmatpush.msra.mxu0 %v512
    %2060 = vmatpush.msra.mxu0 %v503
    %2061 = vmatpush.msra.mxu0 %v494
    %2062 = vmatpush.msra.mxu0 %v485
    %2063 = vmatpush.msra.mxu0 %v476
    %2064 = vmatpush.msra.mxu0 %v467
    %2065 = vmatpush.msra.mxu0 %v458
    %2066 = vmatpush.msra.mxu0 %v449
    %2067 = vmatpush.msra.mxu0 %v440
    %2068 = vmatpush.msra.mxu0 %v431
    %2069 = vmatpush.msra.mxu0 %v422
    %2070 = vmatmul.f32.gmra.mxu0 %v81
    %v2071 = vpop.f32.mrf.mxu0
    %v2072 = vadd.f32 %v2007, %v2071
    %2073 = vmatmul.f32.gmra.mxu0 %v84
    %v2074 = vpop.f32.mrf.mxu0
    %v2075 = vadd.f32 %v2010, %v2074
    %2076 = vmatmul.f32.gmra.mxu0 %v87
    %v2077 = vpop.f32.mrf.mxu0
    %v2078 = vadd.f32 %v2013, %v2077
    %2079 = vmatmul.f32.gmra.mxu0 %v90
    %v2080 = vpop.f32.mrf.mxu0
    %v2081 = vadd.f32 %v2016, %v2080
    %2082 = vmatmul.f32.gmra.mxu0 %v93
    %v2083 = vpop.f32.mrf.mxu0
    %v2084 = vadd.f32 %v2019, %v2083
    %2085 = vmatmul.f32.gmra.mxu0 %v96
    %v2086 = vpop.f32.mrf.mxu0
    %v2087 = vadd.f32 %v2022, %v2086
    %2088 = vmatmul.f32.gmra.mxu0 %v99
    %v2089 = vpop.f32.mrf.mxu0
    %v2090 = vadd.f32 %v2025, %v2089
    %2091 = vmatmul.f32.gmra.mxu0 %v102
    %v2092 = vpop.f32.mrf.mxu0
    %v2093 = vadd.f32 %v2028, %v2092
    %2094 = vmatmul.f32.gmra.mxu0 %v105
    %v2095 = vpop.f32.mrf.mxu0
    %v2096 = vadd.f32 %v2031, %v2095
    %2097 = vmatmul.f32.gmra.mxu0 %v108
    %v2098 = vpop.f32.mrf.mxu0
    %v2099 = vadd.f32 %v2034, %v2098
    %2100 = vmatmul.f32.gmra.mxu0 %v111
    %v2101 = vpop.f32.mrf.mxu0
    %v2102 = vadd.f32 %v2037, %v2101
    %2103 = vmatmul.f32.gmra.mxu0 %v114
    %v2104 = vpop.f32.mrf.mxu0
    %v2105 = vadd.f32 %v2040, %v2104
    %2106 = vmatmul.f32.gmra.mxu0 %v117
    %v2107 = vpop.f32.mrf.mxu0
    %v2108 = vadd.f32 %v2043, %v2107
    %2109 = vmatmul.f32.gmra.mxu0 %v120
    %v2110 = vpop.f32.mrf.mxu0
    %v2111 = vadd.f32 %v2046, %v2110
    %2112 = vmatmul.f32.gmra.mxu0 %v123
    %v2113 = vpop.f32.mrf.mxu0
    %v2114 = vadd.f32 %v2049, %v2113
    %2115 = vmatmul.f32.gmra.mxu0 %v126
    %v2116 = vpop.f32.mrf.mxu0
    %v2117 = vadd.f32 %v2052, %v2116
    %2118 = vdwg.mxu0
    %2119 = vmatpush.msra.mxu0 %v270
    %2120 = vmatpush.msra.mxu0 %v261
    %2121 = vmatpush.msra.mxu0 %v252
    %2122 = vmatpush.msra.mxu0 %v243
    %2123 = vmatpush.msra.mxu0 %v234
    %2124 = vmatpush.msra.mxu0 %v225
    %2125 = vmatpush.msra.mxu0 %v216
    %2126 = vmatpush.msra.mxu0 %v207
    %2127 = vmatpush.msra.mxu0 %v198
    %2128 = vmatpush.msra.mxu0 %v189
    %2129 = vmatpush.msra.mxu0 %v180
    %2130 = vmatpush.msra.mxu0 %v171
    %2131 = vmatpush.msra.mxu0 %v162
    %2132 = vmatpush.msra.mxu0 %v153
    %2133 = vmatpush.msra.mxu0 %v144
    %2134 = vmatpush.msra.mxu0 %v135
    %2135 = vmatmul.f32.gmra.mxu0 %v79
    %v2136 = vpop.f32.mrf.mxu0
    %v2137 = vadd.f32 0.0, %v2136
    %2138 = vmatmul.f32.gmra.mxu0 %v82
    %v2139 = vpop.f32.mrf.mxu0
    %v2140 = vadd.f32 0.0, %v2139
    %2141 = vmatmul.f32.gmra.mxu0 %v85
    %v2142 = vpop.f32.mrf.mxu0
    %v2143 = vadd.f32 0.0, %v2142
    %2144 = vmatmul.f32.gmra.mxu0 %v88
    %v2145 = vpop.f32.mrf.mxu0
    %v2146 = vadd.f32 0.0, %v2145
    %2147 = vmatmul.f32.gmra.mxu0 %v91
    %v2148 = vpop.f32.mrf.mxu0
    %v2149 = vadd.f32 0.0, %v2148
    %2150 = vmatmul.f32.gmra.mxu0 %v94
    %v2151 = vpop.f32.mrf.mxu0
    %v2152 = vadd.f32 0.0, %v2151
    %2153 = vmatmul.f32.gmra.mxu0 %v97
    %v2154 = vpop.f32.mrf.mxu0
    %v2155 = vadd.f32 0.0, %v2154
    %2156 = vmatmul.f32.gmra.mxu0 %v100
    %v2157 = vpop.f32.mrf.mxu0
    %v2158 = vadd.f32 0.0, %v2157
    %2159 = vmatmul.f32.gmra.mxu0 %v103
    %v2160 = vpop.f32.mrf.mxu0
    %v2161 = vadd.f32 0.0, %v2160
    %2162 = vmatmul.f32.gmra.mxu0 %v106
    %v2163 = vpop.f32.mrf.mxu0
    %v2164 = vadd.f32 0.0, %v2163
    %2165 = vmatmul.f32.gmra.mxu0 %v109
    %v2166 = vpop.f32.mrf.mxu0
    %v2167 = vadd.f32 0.0, %v2166
    %2168 = vmatmul.f32.gmra.mxu0 %v112
    %v2169 = vpop.f32.mrf.mxu0
    %v2170 = vadd.f32 0.0, %v2169
    %2171 = vmatmul.f32.gmra.mxu0 %v115
    %v2172 = vpop.f32.mrf.mxu0
    %v2173 = vadd.f32 0.0, %v2172
    %2174 = vmatmul.f32.gmra.mxu0 %v118
    %v2175 = vpop.f32.mrf.mxu0
    %v2176 = vadd.f32 0.0, %v2175
    %2177 = vmatmul.f32.gmra.mxu0 %v121
    %v2178 = vpop.f32.mrf.mxu0
    %v2179 = vadd.f32 0.0, %v2178
    %2180 = vmatmul.f32.gmra.mxu0 %v124
    %v2181 = vpop.f32.mrf.mxu0
    %v2182 = vadd.f32 0.0, %v2181
    %2183 = vdwg.mxu0
    %2184 = vmatpush.msra.mxu0 %v414
    %2185 = vmatpush.msra.mxu0 %v405
    %2186 = vmatpush.msra.mxu0 %v396
    %2187 = vmatpush.msra.mxu0 %v387
    %2188 = vmatpush.msra.mxu0 %v378
    %2189 = vmatpush.msra.mxu0 %v369
    %2190 = vmatpush.msra.mxu0 %v360
    %2191 = vmatpush.msra.mxu0 %v351
    %2192 = vmatpush.msra.mxu0 %v342
    %2193 = vmatpush.msra.mxu0 %v333
    %2194 = vmatpush.msra.mxu0 %v324
    %2195 = vmatpush.msra.mxu0 %v315
    %2196 = vmatpush.msra.mxu0 %v306
    %2197 = vmatpush.msra.mxu0 %v297
    %2198 = vmatpush.msra.mxu0 %v288
    %2199 = vmatpush.msra.mxu0 %v279
    %2200 = vmatmul.f32.gmra.mxu0 %v80
    %v2201 = vpop.f32.mrf.mxu0
    %v2202 = vadd.f32 %v2137, %v2201
    %2203 = vmatmul.f32.gmra.mxu0 %v83
    %v2204 = vpop.f32.mrf.mxu0
    %v2205 = vadd.f32 %v2140, %v2204
    %2206 = vmatmul.f32.gmra.mxu0 %v86
    %v2207 = vpop.f32.mrf.mxu0
    %v2208 = vadd.f32 %v2143, %v2207
    %2209 = vmatmul.f32.gmra.mxu0 %v89
    %v2210 = vpop.f32.mrf.mxu0
    %v2211 = vadd.f32 %v2146, %v2210
    %2212 = vmatmul.f32.gmra.mxu0 %v92
    %v2213 = vpop.f32.mrf.mxu0
    %v2214 = vadd.f32 %v2149, %v2213
    %2215 = vmatmul.f32.gmra.mxu0 %v95
    %v2216 = vpop.f32.mrf.mxu0
    %v2217 = vadd.f32 %v2152, %v2216
    %2218 = vmatmul.f32.gmra.mxu0 %v98
    %v2219 = vpop.f32.mrf.mxu0
    %v2220 = vadd.f32 %v2155, %v2219
    %2221 = vmatmul.f32.gmra.mxu0 %v101
    %v2222 = vpop.f32.mrf.mxu0
    %v2223 = vadd.f32 %v2158, %v2222
    %2224 = vmatmul.f32.gmra.mxu0 %v104
    %v2225 = vpop.f32.mrf.mxu0
    %v2226 = vadd.f32 %v2161, %v2225
    %2227 = vmatmul.f32.gmra.mxu0 %v107
    %v2228 = vpop.f32.mrf.mxu0
    %v2229 = vadd.f32 %v2164, %v2228
    %2230 = vmatmul.f32.gmra.mxu0 %v110
    %v2231 = vpop.f32.mrf.mxu0
    %v2232 = vadd.f32 %v2167, %v2231
    %2233 = vmatmul.f32.gmra.mxu0 %v113
    %v2234 = vpop.f32.mrf.mxu0
    %v2235 = vadd.f32 %v2170, %v2234
    %2236 = vmatmul.f32.gmra.mxu0 %v116
    %v2237 = vpop.f32.mrf.mxu0
    %v2238 = vadd.f32 %v2173, %v2237
    %2239 = vmatmul.f32.gmra.mxu0 %v119
    %v2240 = vpop.f32.mrf.mxu0
    %v2241 = vadd.f32 %v2176, %v2240
    %2242 = vmatmul.f32.gmra.mxu0 %v122
    %v2243 = vpop.f32.mrf.mxu0
    %v2244 = vadd.f32 %v2179, %v2243
    %2245 = vmatmul.f32.gmra.mxu0 %v125
    %v2246 = vpop.f32.mrf.mxu0
    %v2247 = vadd.f32 %v2182, %v2246
    %2248 = vdwg.mxu0
    %2249 = vmatpush.msra.mxu0 %v558
    %2250 = vmatpush.msra.mxu0 %v549
    %2251 = vmatpush.msra.mxu0 %v540
    %2252 = vmatpush.msra.mxu0 %v531
    %2253 = vmatpush.msra.mxu0 %v522
    %2254 = vmatpush.msra.mxu0 %v513
    %2255 = vmatpush.msra.mxu0 %v504
    %2256 = vmatpush.msra.mxu0 %v495
    %2257 = vmatpush.msra.mxu0 %v486
    %2258 = vmatpush.msra.mxu0 %v477
    %2259 = vmatpush.msra.mxu0 %v468
    %2260 = vmatpush.msra.mxu0 %v459
    %2261 = vmatpush.msra.mxu0 %v450
    %2262 = vmatpush.msra.mxu0 %v441
    %2263 = vmatpush.msra.mxu0 %v432
    %2264 = vmatpush.msra.mxu0 %v423
    %2265 = vmatmul.f32.gmra.mxu0 %v81
    %v2266 = vpop.f32.mrf.mxu0
    %v2267 = vadd.f32 %v2202, %v2266
    %2268 = vmatmul.f32.gmra.mxu0 %v84
    %v2269 = vpop.f32.mrf.mxu0
    %v2270 = vadd.f32 %v2205, %v2269
    %2271 = vmatmul.f32.gmra.mxu0 %v87
    %v2272 = vpop.f32.mrf.mxu0
    %v2273 = vadd.f32 %v2208, %v2272
    %2274 = vmatmul.f32.gmra.mxu0 %v90
    %v2275 = vpop.f32.mrf.mxu0
    %v2276 = vadd.f32 %v2211, %v2275
    %2277 = vmatmul.f32.gmra.mxu0 %v93
    %v2278 = vpop.f32.mrf.mxu0
    %v2279 = vadd.f32 %v2214, %v2278
    %2280 = vmatmul.f32.gmra.mxu0 %v96
    %v2281 = vpop.f32.mrf.mxu0
    %v2282 = vadd.f32 %v2217, %v2281
    %2283 = vmatmul.f32.gmra.mxu0 %v99
    %v2284 = vpop.f32.mrf.mxu0
    %v2285 = vadd.f32 %v2220, %v2284
    %2286 = vmatmul.f32.gmra.mxu0 %v102
    %v2287 = vpop.f32.mrf.mxu0
    %v2288 = vadd.f32 %v2223, %v2287
    %2289 = vmatmul.f32.gmra.mxu0 %v105
    %v2290 = vpop.f32.mrf.mxu0
    %v2291 = vadd.f32 %v2226, %v2290
    %2292 = vmatmul.f32.gmra.mxu0 %v108
    %v2293 = vpop.f32.mrf.mxu0
    %v2294 = vadd.f32 %v2229, %v2293
    %2295 = vmatmul.f32.gmra.mxu0 %v111
    %v2296 = vpop.f32.mrf.mxu0
    %v2297 = vadd.f32 %v2232, %v2296
    %2298 = vmatmul.f32.gmra.mxu0 %v114
    %v2299 = vpop.f32.mrf.mxu0
    %v2300 = vadd.f32 %v2235, %v2299
    %2301 = vmatmul.f32.gmra.mxu0 %v117
    %v2302 = vpop.f32.mrf.mxu0
    %v2303 = vadd.f32 %v2238, %v2302
    %2304 = vmatmul.f32.gmra.mxu0 %v120
    %v2305 = vpop.f32.mrf.mxu0
    %v2306 = vadd.f32 %v2241, %v2305
    %2307 = vmatmul.f32.gmra.mxu0 %v123
    %v2308 = vpop.f32.mrf.mxu0
    %v2309 = vadd.f32 %v2244, %v2308
    %2310 = vmatmul.f32.gmra.mxu0 %v126
    %v2311 = vpop.f32.mrf.mxu0
    %v2312 = vadd.f32 %v2247, %v2311
    %2313 = vdwg.mxu0
    %v2314 = vld [vmem:[#allocation7] sm:$0xff]
    %v2315 = vld [vmem:[#allocation7 + $0x8] sm:$0xff]
    %v2316 = vld [vmem:[#allocation7 + $0x10] sm:$0xff]
    %v2317 = vld [vmem:[#allocation7 + $0x18] sm:$0xff]
    %v2318 = vld [vmem:[#allocation7 + $0x20] sm:$0xff]
    %v2319 = vld [vmem:[#allocation7 + $0x28] sm:$0xff]
    %v2320 = vld [vmem:[#allocation7 + $0x30] sm:$0xff]
    %v2321 = vld [vmem:[#allocation7 + $0x38] sm:$0xff]
    %v2322 = vld [vmem:[#allocation7 + $0x40] sm:$0xff]
    %v2323 = vld [vmem:[#allocation7 + $0x48] sm:$0xff]
    %v2324 = vld [vmem:[#allocation7 + $0x50] sm:$0xff]
    %v2325 = vld [vmem:[#allocation7 + $0x58] sm:$0xff]
    %v2326 = vld [vmem:[#allocation7 + $0x60] sm:$0xff]
    %v2327 = vld [vmem:[#allocation7 + $0x68] sm:$0xff]
    %v2328 = vld [vmem:[#allocation7 + $0x70] sm:$0xff]
    %v2329 = vld [vmem:[#allocation7 + $0x78] sm:$0xff]
    %v2330 = vld [vmem:[#allocation7 + $0x80] sm:$0xff]
    %v2331 = vld [vmem:[#allocation7 + $0x88] sm:$0xff]
    %v2332 = vld [vmem:[#allocation7 + $0x90] sm:$0xff]
    %v2333 = vld [vmem:[#allocation7 + $0x98] sm:$0xff]
    %v2334 = vld [vmem:[#allocation7 + $0xa0] sm:$0xff]
    %v2335 = vld [vmem:[#allocation7 + $0xa8] sm:$0xff]
    %v2336 = vld [vmem:[#allocation7 + $0xb0] sm:$0xff]
    %v2337 = vld [vmem:[#allocation7 + $0xb8] sm:$0xff]
    %v2338 = vld [vmem:[#allocation7 + $0xc0] sm:$0xff]
    %v2339 = vld [vmem:[#allocation7 + $0xc8] sm:$0xff]
    %v2340 = vld [vmem:[#allocation7 + $0xd0] sm:$0xff]
    %v2341 = vld [vmem:[#allocation7 + $0xd8] sm:$0xff]
    %v2342 = vld [vmem:[#allocation7 + $0xe0] sm:$0xff]
    %v2343 = vld [vmem:[#allocation7 + $0xe8] sm:$0xff]
    %v2344 = vld [vmem:[#allocation7 + $0xf0] sm:$0xff]
    %v2345 = vld [vmem:[#allocation7 + $0xf8] sm:$0xff]
    %v2346 = vld [vmem:[#allocation7 + $0x100] sm:$0xff]
    %v2347 = vld [vmem:[#allocation7 + $0x108] sm:$0xff]
    %v2348 = vld [vmem:[#allocation7 + $0x110] sm:$0xff]
    %v2349 = vld [vmem:[#allocation7 + $0x118] sm:$0xff]
    %v2350 = vld [vmem:[#allocation7 + $0x120] sm:$0xff]
    %v2351 = vld [vmem:[#allocation7 + $0x128] sm:$0xff]
    %v2352 = vld [vmem:[#allocation7 + $0x130] sm:$0xff]
    %v2353 = vld [vmem:[#allocation7 + $0x138] sm:$0xff]
    %v2354 = vld [vmem:[#allocation7 + $0x140] sm:$0xff]
    %v2355 = vld [vmem:[#allocation7 + $0x148] sm:$0xff]
    %v2356 = vld [vmem:[#allocation7 + $0x150] sm:$0xff]
    %v2357 = vld [vmem:[#allocation7 + $0x158] sm:$0xff]
    %v2358 = vld [vmem:[#allocation7 + $0x160] sm:$0xff]
    %v2359 = vld [vmem:[#allocation7 + $0x168] sm:$0xff]
    %v2360 = vld [vmem:[#allocation7 + $0x170] sm:$0xff]
    %v2361 = vld [vmem:[#allocation7 + $0x178] sm:$0xff]
    %v2362 = vld [vmem:[#allocation7 + $0x180] sm:$0xff]
    %v2363 = vld [vmem:[#allocation7 + $0x188] sm:$0xff]
    %v2364 = vld [vmem:[#allocation7 + $0x190] sm:$0xff]
    %v2365 = vld [vmem:[#allocation7 + $0x198] sm:$0xff]
    %v2366 = vld [vmem:[#allocation7 + $0x1a0] sm:$0xff]
    %v2367 = vld [vmem:[#allocation7 + $0x1a8] sm:$0xff]
    %v2368 = vld [vmem:[#allocation7 + $0x1b0] sm:$0xff]
    %v2369 = vld [vmem:[#allocation7 + $0x1b8] sm:$0xff]
    %v2370 = vld [vmem:[#allocation7 + $0x1c0] sm:$0xff]
    %v2371 = vld [vmem:[#allocation7 + $0x1c8] sm:$0xff]
    %v2372 = vld [vmem:[#allocation7 + $0x1d0] sm:$0xff]
    %v2373 = vld [vmem:[#allocation7 + $0x1d8] sm:$0xff]
    %v2374 = vld [vmem:[#allocation7 + $0x1e0] sm:$0xff]
    %v2375 = vld [vmem:[#allocation7 + $0x1e8] sm:$0xff]
    %v2376 = vld [vmem:[#allocation7 + $0x1f0] sm:$0xff]
    %v2377 = vld [vmem:[#allocation7 + $0x1f8] sm:$0xff]
    %v2378 = vld [vmem:[#allocation7 + $0x200] sm:$0xff]
    %v2379 = vld [vmem:[#allocation7 + $0x208] sm:$0xff]
    %v2380 = vld [vmem:[#allocation7 + $0x210] sm:$0xff]
    %v2381 = vld [vmem:[#allocation7 + $0x218] sm:$0xff]
    %v2382 = vld [vmem:[#allocation7 + $0x220] sm:$0xff]
    %v2383 = vld [vmem:[#allocation7 + $0x228] sm:$0xff]
    %v2384 = vld [vmem:[#allocation7 + $0x230] sm:$0xff]
    %v2385 = vld [vmem:[#allocation7 + $0x238] sm:$0xff]
    %v2386 = vld [vmem:[#allocation7 + $0x240] sm:$0xff]
    %v2387 = vld [vmem:[#allocation7 + $0x248] sm:$0xff]
    %v2388 = vld [vmem:[#allocation7 + $0x250] sm:$0xff]
    %v2389 = vld [vmem:[#allocation7 + $0x258] sm:$0xff]
    %v2390 = vld [vmem:[#allocation7 + $0x260] sm:$0xff]
    %v2391 = vld [vmem:[#allocation7 + $0x268] sm:$0xff]
    %v2392 = vld [vmem:[#allocation7 + $0x270] sm:$0xff]
    %v2393 = vld [vmem:[#allocation7 + $0x278] sm:$0xff]
    %v2394 = vld [vmem:[#allocation7 + $0x280] sm:$0xff]
    %v2395 = vld [vmem:[#allocation7 + $0x288] sm:$0xff]
    %v2396 = vld [vmem:[#allocation7 + $0x290] sm:$0xff]
    %v2397 = vld [vmem:[#allocation7 + $0x298] sm:$0xff]
    %v2398 = vld [vmem:[#allocation7 + $0x2a0] sm:$0xff]
    %v2399 = vld [vmem:[#allocation7 + $0x2a8] sm:$0xff]
    %v2400 = vld [vmem:[#allocation7 + $0x2b0] sm:$0xff]
    %v2401 = vld [vmem:[#allocation7 + $0x2b8] sm:$0xff]
    %v2402 = vld [vmem:[#allocation7 + $0x2c0] sm:$0xff]
    %v2403 = vld [vmem:[#allocation7 + $0x2c8] sm:$0xff]
    %v2404 = vld [vmem:[#allocation7 + $0x2d0] sm:$0xff]
    %v2405 = vld [vmem:[#allocation7 + $0x2d8] sm:$0xff]
    %v2406 = vld [vmem:[#allocation7 + $0x2e0] sm:$0xff]
    %v2407 = vld [vmem:[#allocation7 + $0x2e8] sm:$0xff]
    %v2408 = vld [vmem:[#allocation7 + $0x2f0] sm:$0xff]
    %v2409 = vld [vmem:[#allocation7 + $0x2f8] sm:$0xff]
    %v2410 = vld [vmem:[#allocation7 + $0x300] sm:$0xff]
    %v2411 = vld [vmem:[#allocation7 + $0x308] sm:$0xff]
    %v2412 = vld [vmem:[#allocation7 + $0x310] sm:$0xff]
    %v2413 = vld [vmem:[#allocation7 + $0x318] sm:$0xff]
    %v2414 = vld [vmem:[#allocation7 + $0x320] sm:$0xff]
    %v2415 = vld [vmem:[#allocation7 + $0x328] sm:$0xff]
    %v2416 = vld [vmem:[#allocation7 + $0x330] sm:$0xff]
    %v2417 = vld [vmem:[#allocation7 + $0x338] sm:$0xff]
    %v2418 = vld [vmem:[#allocation7 + $0x340] sm:$0xff]
    %v2419 = vld [vmem:[#allocation7 + $0x348] sm:$0xff]
    %v2420 = vld [vmem:[#allocation7 + $0x350] sm:$0xff]
    %v2421 = vld [vmem:[#allocation7 + $0x358] sm:$0xff]
    %v2422 = vld [vmem:[#allocation7 + $0x360] sm:$0xff]
    %v2423 = vld [vmem:[#allocation7 + $0x368] sm:$0xff]
    %v2424 = vld [vmem:[#allocation7 + $0x370] sm:$0xff]
    %v2425 = vld [vmem:[#allocation7 + $0x378] sm:$0xff]
    %v2426 = vld [vmem:[#allocation7 + $0x380] sm:$0xff]
    %v2427 = vld [vmem:[#allocation7 + $0x388] sm:$0xff]
    %v2428 = vld [vmem:[#allocation7 + $0x390] sm:$0xff]
    %v2429 = vld [vmem:[#allocation7 + $0x398] sm:$0xff]
    %v2430 = vld [vmem:[#allocation7 + $0x3a0] sm:$0xff]
    %v2431 = vld [vmem:[#allocation7 + $0x3a8] sm:$0xff]
    %v2432 = vld [vmem:[#allocation7 + $0x3b0] sm:$0xff]
    %v2433 = vld [vmem:[#allocation7 + $0x3b8] sm:$0xff]
    %v2434 = vld [vmem:[#allocation7 + $0x3c0] sm:$0xff]
    %v2435 = vld [vmem:[#allocation7 + $0x3c8] sm:$0xff]
    %v2436 = vld [vmem:[#allocation7 + $0x3d0] sm:$0xff]
    %v2437 = vld [vmem:[#allocation7 + $0x3d8] sm:$0xff]
    %v2438 = vld [vmem:[#allocation7 + $0x3e0] sm:$0xff]
    %v2439 = vld [vmem:[#allocation7 + $0x3e8] sm:$0xff]
    %v2440 = vld [vmem:[#allocation7 + $0x3f0] sm:$0xff]
    %v2441 = vld [vmem:[#allocation7 + $0x3f8] sm:$0xff]
    %v2442 = vld [vmem:[#allocation7 + $0x400] sm:$0xff]
    %v2443 = vld [vmem:[#allocation7 + $0x408] sm:$0xff]
    %v2444 = vld [vmem:[#allocation7 + $0x410] sm:$0xff]
    %v2445 = vld [vmem:[#allocation7 + $0x418] sm:$0xff]
    %v2446 = vld [vmem:[#allocation7 + $0x420] sm:$0xff]
    %v2447 = vld [vmem:[#allocation7 + $0x428] sm:$0xff]
    %v2448 = vld [vmem:[#allocation7 + $0x430] sm:$0xff]
    %v2449 = vld [vmem:[#allocation7 + $0x438] sm:$0xff]
    %v2450 = vld [vmem:[#allocation7 + $0x440] sm:$0xff]
    %v2451 = vld [vmem:[#allocation7 + $0x448] sm:$0xff]
    %v2452 = vld [vmem:[#allocation7 + $0x450] sm:$0xff]
    %v2453 = vld [vmem:[#allocation7 + $0x458] sm:$0xff]
    %v2454 = vld [vmem:[#allocation7 + $0x460] sm:$0xff]
    %v2455 = vld [vmem:[#allocation7 + $0x468] sm:$0xff]
    %v2456 = vld [vmem:[#allocation7 + $0x470] sm:$0xff]
    %v2457 = vld [vmem:[#allocation7 + $0x478] sm:$0xff]
    %v2458 = vld [vmem:[#allocation8] sm:$0x7]
    %v2459 = vlaneseq
    %v2460 = vshrl.u32 %v2459, 7
    %v2461 = vadd.s32 %v2460, 8
    %v2462 = vadd.s32 %v2460, 16
    %v2463 = vadd.s32 %v2460, 24
    %v2464 = vadd.s32 %v2460, 32
    %v2465 = vadd.s32 %v2460, 40
    %v2466 = vadd.s32 %v2460, 48
    %v2467 = vadd.s32 %v2460, 56
    %v2468 = vlaneseq
    %v2469 = vand.u32 %v2468, 127
    %vm2470 = vcmp.le.s32.totalorder %v2469, %v2460
    %vm2471 = vcmp.le.s32.totalorder %v2469, %v2461
    %vm2472 = vcmp.le.s32.totalorder %v2469, %v2462
    %vm2473 = vcmp.le.s32.totalorder %v2469, %v2463
    %vm2474 = vcmp.le.s32.totalorder %v2469, %v2464
    %vm2475 = vcmp.le.s32.totalorder %v2469, %v2465
    %vm2476 = vcmp.le.s32.totalorder %v2469, %v2466
    %vm2477 = vcmp.le.s32.totalorder %v2469, %v2467
    %vm2478 = vcmask 523264
    %v2480 = vsel %vm2478, %v707, 0
    %v2483 = vsel %vm2478, %v710, 0
    %v2486 = vsel %vm2478, %v713, 0
    %v2489 = vsel %vm2478, %v716, 0
    %v2492 = vsel %vm2478, %v719, 0
    %v2495 = vsel %vm2478, %v722, 0
    %v2498 = vsel %vm2478, %v725, 0
    %v2501 = vsel %vm2478, %v728, 0
    %v2504 = vsel %vm2478, %v1292, 0
    %v2507 = vsel %vm2478, %v1295, 0
    %v2510 = vsel %vm2478, %v1298, 0
    %v2513 = vsel %vm2478, %v1301, 0
    %v2516 = vsel %vm2478, %v1304, 0
    %v2519 = vsel %vm2478, %v1307, 0
    %v2522 = vsel %vm2478, %v1310, 0
    %v2525 = vsel %vm2478, %v1313, 0
    %2527 = vmatpush.xpose.msra.mxu0 0.0
    %2528 = vmatpush.xpose.msra.mxu0 0.0
    %2529 = vmatpush.xpose.msra.mxu0 0.0
    %2530 = vmatpush.xpose.msra.mxu0 0.0
    %2531 = vmatpush.xpose.msra.mxu0 0.0
    %2532 = vmatpush.xpose.msra.mxu0 0.0
    %2533 = vmatpush.xpose.msra.mxu0 0.0
    %2534 = vmatpush.xpose.msra.mxu0 0.0
    %2535 = vmatpush.xpose.msra.mxu0 %v2525
    %2536 = vmatpush.xpose.msra.mxu0 %v2522
    %2537 = vmatpush.xpose.msra.mxu0 %v2519
    %2538 = vmatpush.xpose.msra.mxu0 %v2516
    %2539 = vmatpush.xpose.msra.mxu0 %v2513
    %2540 = vmatpush.xpose.msra.mxu0 %v2510
    %2541 = vmatpush.xpose.msra.mxu0 %v2507
    %2542 = vmatpush.xpose.msra.mxu0 %v2504
    %2543 = vmatmul.f32.gmra.mxu0 %v2480
    %v2544 = vpop.f32.mrf.mxu0
    %v2545 = vadd.f32 0.0, %v2544
    %2546 = vmatmul.f32.gmra.mxu0 %v2483
    %v2547 = vpop.f32.mrf.mxu0
    %v2548 = vadd.f32 0.0, %v2547
    %2549 = vmatmul.f32.gmra.mxu0 %v2486
    %v2550 = vpop.f32.mrf.mxu0
    %v2551 = vadd.f32 0.0, %v2550
    %2552 = vmatmul.f32.gmra.mxu0 %v2489
    %v2553 = vpop.f32.mrf.mxu0
    %v2554 = vadd.f32 0.0, %v2553
    %2555 = vmatmul.f32.gmra.mxu0 %v2492
    %v2556 = vpop.f32.mrf.mxu0
    %v2557 = vadd.f32 0.0, %v2556
    %2558 = vmatmul.f32.gmra.mxu0 %v2495
    %v2559 = vpop.f32.mrf.mxu0
    %v2560 = vadd.f32 0.0, %v2559
    %2561 = vmatmul.f32.gmra.mxu0 %v2498
    %v2562 = vpop.f32.mrf.mxu0
    %v2563 = vadd.f32 0.0, %v2562
    %2564 = vmatmul.f32.gmra.mxu0 %v2501
    %v2565 = vpop.f32.mrf.mxu0
    %v2566 = vadd.f32 0.0, %v2565
    %2567 = vdwg.mxu0
    %v2568 = vsel %vm2470, %v2545, -inf
    %v2569 = vsel %vm2471, %v2548, -inf
    %v2570 = vsel %vm2472, %v2551, -inf
    %v2571 = vsel %vm2473, %v2554, -inf
    %v2572 = vsel %vm2474, %v2557, -inf
    %v2573 = vsel %vm2475, %v2560, -inf
    %v2574 = vsel %vm2476, %v2563, -inf
    %v2575 = vsel %vm2477, %v2566, -inf
    %v2576 = vsel %vm2478, %v2568, -inf
    %2577 = vmax.xlane.f32.xlu0 %v2576
    %v2578 = vpop.xlane.xlu0 %2577
    %v2579 = vsel %vm2478, %v2569, -inf
    %2580 = vmax.xlane.f32.xlu0 %v2579
    %v2581 = vpop.xlane.xlu0 %2580
    %v2582 = vsel %vm2478, %v2570, -inf
    %2583 = vmax.xlane.f32.xlu0 %v2582
    %v2584 = vpop.xlane.xlu0 %2583
    %v2585 = vsel %vm2478, %v2571, -inf
    %2586 = vmax.xlane.f32.xlu0 %v2585
    %v2587 = vpop.xlane.xlu0 %2586
    %v2588 = vsel %vm2478, %v2572, -inf
    %2589 = vmax.xlane.f32.xlu0 %v2588
    %v2590 = vpop.xlane.xlu0 %2589
    %v2591 = vsel %vm2478, %v2573, -inf
    %2592 = vmax.xlane.f32.xlu0 %v2591
    %v2593 = vpop.xlane.xlu0 %2592
    %v2594 = vsel %vm2478, %v2574, -inf
    %2595 = vmax.xlane.f32.xlu0 %v2594
    %v2596 = vpop.xlane.xlu0 %2595
    %v2597 = vsel %vm2478, %v2575, -inf
    %2598 = vmax.xlane.f32.xlu0 %v2597
    %v2599 = vpop.xlane.xlu0 %2598
    %v2600 = vsub.f32 %v2568, %v2578
    %v2601 = vsub.f32 %v2569, %v2581
    %v2602 = vsub.f32 %v2570, %v2584
    %v2603 = vsub.f32 %v2571, %v2587
    %v2604 = vsub.f32 %v2572, %v2590
    %v2605 = vsub.f32 %v2573, %v2593
    %v2606 = vsub.f32 %v2574, %v2596
    %v2607 = vsub.f32 %v2575, %v2599
    %v2608 = vmul.f32 %v2600, 1.442695
    %v2609 = vpow.pop %v2608
    %v2610 = vmul.f32 %v2601, 1.442695
    %v2611 = vpow.pop %v2610
    %v2612 = vmul.f32 %v2602, 1.442695
    %v2613 = vpow.pop %v2612
    %v2614 = vmul.f32 %v2603, 1.442695
    %v2615 = vpow.pop %v2614
    %v2616 = vmul.f32 %v2604, 1.442695
    %v2617 = vpow.pop %v2616
    %v2618 = vmul.f32 %v2605, 1.442695
    %v2619 = vpow.pop %v2618
    %v2620 = vmul.f32 %v2606, 1.442695
    %v2621 = vpow.pop %v2620
    %v2622 = vmul.f32 %v2607, 1.442695
    %v2623 = vpow.pop %v2622
    %v2624 = vsel %vm2478, %v2609, 0.0
    %2625 = vadd.xlane.f32.xlu0 %v2624
    %v2626 = vpop.xlane.xlu0 %2625
    %v2627 = vsel %vm2478, %v2611, 0.0
    %2628 = vadd.xlane.f32.xlu0 %v2627
    %v2629 = vpop.xlane.xlu0 %2628
    %v2630 = vsel %vm2478, %v2613, 0.0
    %2631 = vadd.xlane.f32.xlu0 %v2630
    %v2632 = vpop.xlane.xlu0 %2631
    %v2633 = vsel %vm2478, %v2615, 0.0
    %2634 = vadd.xlane.f32.xlu0 %v2633
    %v2635 = vpop.xlane.xlu0 %2634
    %v2636 = vsel %vm2478, %v2617, 0.0
    %2637 = vadd.xlane.f32.xlu0 %v2636
    %v2638 = vpop.xlane.xlu0 %2637
    %v2639 = vsel %vm2478, %v2619, 0.0
    %2640 = vadd.xlane.f32.xlu0 %v2639
    %v2641 = vpop.xlane.xlu0 %2640
    %v2642 = vsel %vm2478, %v2621, 0.0
    %2643 = vadd.xlane.f32.xlu0 %v2642
    %v2644 = vpop.xlane.xlu0 %2643
    %v2645 = vsel %vm2478, %v2623, 0.0
    %2646 = vadd.xlane.f32.xlu0 %v2645
    %v2647 = vpop.xlane.xlu0 %2646
    %v2648 = vrcp.pop %v2626
    %v2649 = vmul.f32 %v2626, %v2648
    %v2650 = vsub.f32 1.0, %v2649
    %v2651 = vmul.f32 %v2648, %v2650
    %v2652 = vadd.f32 %v2648, %v2651
    %vm2653 = vweird.f32 %v2626
    %vm2654 = vweird.f32 %v2648
    %vm2655 = vmor %vm2653, %vm2654
    %v2656 = vsel %vm2655, %v2648, %v2652
    %v2657 = vand.u32 2147483647, %v2626
    %vm2658 = vcmp.eq.f32.partialorder %v2657, 8.507059e+37
    %v2659 = vand.u32 %v2626, 2147483648
    %v2660 = vor.u32 1.1754944e-38, %v2659
    %v2661 = vsel %vm2658, %v2660, %v2656
    %v2662 = vmul.f32 %v2609, %v2661
    %v2663 = vrcp.pop %v2629
    %v2664 = vmul.f32 %v2629, %v2663
    %v2665 = vsub.f32 1.0, %v2664
    %v2666 = vmul.f32 %v2663, %v2665
    %v2667 = vadd.f32 %v2663, %v2666
    %vm2668 = vweird.f32 %v2629
    %vm2669 = vweird.f32 %v2663
    %vm2670 = vmor %vm2668, %vm2669
    %v2671 = vsel %vm2670, %v2663, %v2667
    %v2672 = vand.u32 2147483647, %v2629
    %vm2673 = vcmp.eq.f32.partialorder %v2672, 8.507059e+37
    %v2674 = vand.u32 %v2629, 2147483648
    %v2675 = vor.u32 1.1754944e-38, %v2674
    %v2676 = vsel %vm2673, %v2675, %v2671
    %v2677 = vmul.f32 %v2611, %v2676
    %v2678 = vrcp.pop %v2632
    %v2679 = vmul.f32 %v2632, %v2678
    %v2680 = vsub.f32 1.0, %v2679
    %v2681 = vmul.f32 %v2678, %v2680
    %v2682 = vadd.f32 %v2678, %v2681
    %vm2683 = vweird.f32 %v2632
    %vm2684 = vweird.f32 %v2678
    %vm2685 = vmor %vm2683, %vm2684
    %v2686 = vsel %vm2685, %v2678, %v2682
    %v2687 = vand.u32 2147483647, %v2632
    %vm2688 = vcmp.eq.f32.partialorder %v2687, 8.507059e+37
    %v2689 = vand.u32 %v2632, 2147483648
    %v2690 = vor.u32 1.1754944e-38, %v2689
    %v2691 = vsel %vm2688, %v2690, %v2686
    %v2692 = vmul.f32 %v2613, %v2691
    %v2693 = vrcp.pop %v2635
    %v2694 = vmul.f32 %v2635, %v2693
    %v2695 = vsub.f32 1.0, %v2694
    %v2696 = vmul.f32 %v2693, %v2695
    %v2697 = vadd.f32 %v2693, %v2696
    %vm2698 = vweird.f32 %v2635
    %vm2699 = vweird.f32 %v2693
    %vm2700 = vmor %vm2698, %vm2699
    %v2701 = vsel %vm2700, %v2693, %v2697
    %v2702 = vand.u32 2147483647, %v2635
    %vm2703 = vcmp.eq.f32.partialorder %v2702, 8.507059e+37
    %v2704 = vand.u32 %v2635, 2147483648
    %v2705 = vor.u32 1.1754944e-38, %v2704
    %v2706 = vsel %vm2703, %v2705, %v2701
    %v2707 = vmul.f32 %v2615, %v2706
    %v2708 = vrcp.pop %v2638
    %v2709 = vmul.f32 %v2638, %v2708
    %v2710 = vsub.f32 1.0, %v2709
    %v2711 = vmul.f32 %v2708, %v2710
    %v2712 = vadd.f32 %v2708, %v2711
    %vm2713 = vweird.f32 %v2638
    %vm2714 = vweird.f32 %v2708
    %vm2715 = vmor %vm2713, %vm2714
    %v2716 = vsel %vm2715, %v2708, %v2712
    %v2717 = vand.u32 2147483647, %v2638
    %vm2718 = vcmp.eq.f32.partialorder %v2717, 8.507059e+37
    %v2719 = vand.u32 %v2638, 2147483648
    %v2720 = vor.u32 1.1754944e-38, %v2719
    %v2721 = vsel %vm2718, %v2720, %v2716
    %v2722 = vmul.f32 %v2617, %v2721
    %v2723 = vrcp.pop %v2641
    %v2724 = vmul.f32 %v2641, %v2723
    %v2725 = vsub.f32 1.0, %v2724
    %v2726 = vmul.f32 %v2723, %v2725
    %v2727 = vadd.f32 %v2723, %v2726
    %vm2728 = vweird.f32 %v2641
    %vm2729 = vweird.f32 %v2723
    %vm2730 = vmor %vm2728, %vm2729
    %v2731 = vsel %vm2730, %v2723, %v2727
    %v2732 = vand.u32 2147483647, %v2641
    %vm2733 = vcmp.eq.f32.partialorder %v2732, 8.507059e+37
    %v2734 = vand.u32 %v2641, 2147483648
    %v2735 = vor.u32 1.1754944e-38, %v2734
    %v2736 = vsel %vm2733, %v2735, %v2731
    %v2737 = vmul.f32 %v2619, %v2736
    %v2738 = vrcp.pop %v2644
    %v2739 = vmul.f32 %v2644, %v2738
    %v2740 = vsub.f32 1.0, %v2739
    %v2741 = vmul.f32 %v2738, %v2740
    %v2742 = vadd.f32 %v2738, %v2741
    %vm2743 = vweird.f32 %v2644
    %vm2744 = vweird.f32 %v2738
    %vm2745 = vmor %vm2743, %vm2744
    %v2746 = vsel %vm2745, %v2738, %v2742
    %v2747 = vand.u32 2147483647, %v2644
    %vm2748 = vcmp.eq.f32.partialorder %v2747, 8.507059e+37
    %v2749 = vand.u32 %v2644, 2147483648
    %v2750 = vor.u32 1.1754944e-38, %v2749
    %v2751 = vsel %vm2748, %v2750, %v2746
    %v2752 = vmul.f32 %v2621, %v2751
    %v2753 = vrcp.pop %v2647
    %v2754 = vmul.f32 %v2647, %v2753
    %v2755 = vsub.f32 1.0, %v2754
    %v2756 = vmul.f32 %v2753, %v2755
    %v2757 = vadd.f32 %v2753, %v2756
    %vm2758 = vweird.f32 %v2647
    %vm2759 = vweird.f32 %v2753
    %vm2760 = vmor %vm2758, %vm2759
    %v2761 = vsel %vm2760, %v2753, %v2757
    %v2762 = vand.u32 2147483647, %v2647
    %vm2763 = vcmp.eq.f32.partialorder %v2762, 8.507059e+37
    %v2764 = vand.u32 %v2647, 2147483648
    %v2765 = vor.u32 1.1754944e-38, %v2764
    %v2766 = vsel %vm2763, %v2765, %v2761
    %v2767 = vmul.f32 %v2623, %v2766
    %v2769 = vsel %vm2478, %v2662, 0
    %v2772 = vsel %vm2478, %v2677, 0
    %v2775 = vsel %vm2478, %v2692, 0
    %v2778 = vsel %vm2478, %v2707, 0
    %v2781 = vsel %vm2478, %v2722, 0
    %v2784 = vsel %vm2478, %v2737, 0
    %v2787 = vsel %vm2478, %v2752, 0
    %v2790 = vsel %vm2478, %v2767, 0
    %2792 = vmatpush.msra.mxu0 0.0
    %2793 = vmatpush.msra.mxu0 0.0
    %2794 = vmatpush.msra.mxu0 0.0
    %2795 = vmatpush.msra.mxu0 0.0
    %2796 = vmatpush.msra.mxu0 0.0
    %2797 = vmatpush.msra.mxu0 0.0
    %2798 = vmatpush.msra.mxu0 0.0
    %2799 = vmatpush.msra.mxu0 0.0
    %2800 = vmatpush.msra.mxu0 %v1898
    %2801 = vmatpush.msra.mxu0 %v1895
    %2802 = vmatpush.msra.mxu0 %v1892
    %2803 = vmatpush.msra.mxu0 %v1889
    %2804 = vmatpush.msra.mxu0 %v1886
    %2805 = vmatpush.msra.mxu0 %v1883
    %2806 = vmatpush.msra.mxu0 %v1880
    %2807 = vmatpush.msra.mxu0 %v1877
    %2808 = vmatmul.f32.gmra.mxu0 %v2769
    %v2809 = vpop.f32.mrf.mxu0
    %v2810 = vadd.f32 0.0, %v2809
    %2811 = vmatmul.f32.gmra.mxu0 %v2772
    %v2812 = vpop.f32.mrf.mxu0
    %v2813 = vadd.f32 0.0, %v2812
    %2814 = vmatmul.f32.gmra.mxu0 %v2775
    %v2815 = vpop.f32.mrf.mxu0
    %v2816 = vadd.f32 0.0, %v2815
    %2817 = vmatmul.f32.gmra.mxu0 %v2778
    %v2818 = vpop.f32.mrf.mxu0
    %v2819 = vadd.f32 0.0, %v2818
    %2820 = vmatmul.f32.gmra.mxu0 %v2781
    %v2821 = vpop.f32.mrf.mxu0
    %v2822 = vadd.f32 0.0, %v2821
    %2823 = vmatmul.f32.gmra.mxu0 %v2784
    %v2824 = vpop.f32.mrf.mxu0
    %v2825 = vadd.f32 0.0, %v2824
    %2826 = vmatmul.f32.gmra.mxu0 %v2787
    %v2827 = vpop.f32.mrf.mxu0
    %v2828 = vadd.f32 0.0, %v2827
    %2829 = vmatmul.f32.gmra.mxu0 %v2790
    %v2830 = vpop.f32.mrf.mxu0
    %v2831 = vadd.f32 0.0, %v2830
    %2832 = vdwg.mxu0
    %2833 = vrot.lane.b32.xlu0 %v707, 64
    %v2834 = vpop.permute.xlu0 %2833
    %2835 = vrot.lane.b32.xlu0 %v710, 64
    %v2836 = vpop.permute.xlu0 %2835
    %2837 = vrot.lane.b32.xlu0 %v713, 64
    %v2838 = vpop.permute.xlu0 %2837
    %2839 = vrot.lane.b32.xlu0 %v716, 64
    %v2840 = vpop.permute.xlu0 %2839
    %2841 = vrot.lane.b32.xlu0 %v719, 64
    %v2842 = vpop.permute.xlu0 %2841
    %2843 = vrot.lane.b32.xlu0 %v722, 64
    %v2844 = vpop.permute.xlu0 %2843
    %2845 = vrot.lane.b32.xlu0 %v725, 64
    %v2846 = vpop.permute.xlu0 %2845
    %2847 = vrot.lane.b32.xlu0 %v728, 64
    %v2848 = vpop.permute.xlu0 %2847
    %2849 = vrot.lane.b32.xlu0 %v1292, 64
    %v2850 = vpop.permute.xlu0 %2849
    %2851 = vrot.lane.b32.xlu0 %v1295, 64
    %v2852 = vpop.permute.xlu0 %2851
    %2853 = vrot.lane.b32.xlu0 %v1298, 64
    %v2854 = vpop.permute.xlu0 %2853
    %2855 = vrot.lane.b32.xlu0 %v1301, 64
    %v2856 = vpop.permute.xlu0 %2855
    %2857 = vrot.lane.b32.xlu0 %v1304, 64
    %v2858 = vpop.permute.xlu0 %2857
    %2859 = vrot.lane.b32.xlu0 %v1307, 64
    %v2860 = vpop.permute.xlu0 %2859
    %2861 = vrot.lane.b32.xlu0 %v1310, 64
    %v2862 = vpop.permute.xlu0 %2861
    %2863 = vrot.lane.b32.xlu0 %v1313, 64
    %v2864 = vpop.permute.xlu0 %2863
    %v2865 = vsel %vm2478, %v2834, 0
    %v2867 = vsel %vm2478, %v2836, 0
    %v2869 = vsel %vm2478, %v2838, 0
    %v2871 = vsel %vm2478, %v2840, 0
    %v2873 = vsel %vm2478, %v2842, 0
    %v2875 = vsel %vm2478, %v2844, 0
    %v2877 = vsel %vm2478, %v2846, 0
    %v2879 = vsel %vm2478, %v2848, 0
    %v2881 = vsel %vm2478, %v2850, 0
    %v2883 = vsel %vm2478, %v2852, 0
    %v2885 = vsel %vm2478, %v2854, 0
    %v2887 = vsel %vm2478, %v2856, 0
    %v2889 = vsel %vm2478, %v2858, 0
    %v2891 = vsel %vm2478, %v2860, 0
    %v2893 = vsel %vm2478, %v2862, 0
    %v2895 = vsel %vm2478, %v2864, 0
    %2897 = vmatpush.xpose.msra.mxu0 0.0
    %2898 = vmatpush.xpose.msra.mxu0 0.0
    %2899 = vmatpush.xpose.msra.mxu0 0.0
    %2900 = vmatpush.xpose.msra.mxu0 0.0
    %2901 = vmatpush.xpose.msra.mxu0 0.0
    %2902 = vmatpush.xpose.msra.mxu0 0.0
    %2903 = vmatpush.xpose.msra.mxu0 0.0
    %2904 = vmatpush.xpose.msra.mxu0 0.0
    %2905 = vmatpush.xpose.msra.mxu0 %v2895
    %2906 = vmatpush.xpose.msra.mxu0 %v2893
    %2907 = vmatpush.xpose.msra.mxu0 %v2891
    %2908 = vmatpush.xpose.msra.mxu0 %v2889
    %2909 = vmatpush.xpose.msra.mxu0 %v2887
    %2910 = vmatpush.xpose.msra.mxu0 %v2885
    %2911 = vmatpush.xpose.msra.mxu0 %v2883
    %2912 = vmatpush.xpose.msra.mxu0 %v2881
    %2913 = vmatmul.f32.gmra.mxu0 %v2865
    %v2914 = vpop.f32.mrf.mxu0
    %v2915 = vadd.f32 0.0, %v2914
    %2916 = vmatmul.f32.gmra.mxu0 %v2867
    %v2917 = vpop.f32.mrf.mxu0
    %v2918 = vadd.f32 0.0, %v2917
    %2919 = vmatmul.f32.gmra.mxu0 %v2869
    %v2920 = vpop.f32.mrf.mxu0
    %v2921 = vadd.f32 0.0, %v2920
    %2922 = vmatmul.f32.gmra.mxu0 %v2871
    %v2923 = vpop.f32.mrf.mxu0
    %v2924 = vadd.f32 0.0, %v2923
    %2925 = vmatmul.f32.gmra.mxu0 %v2873
    %v2926 = vpop.f32.mrf.mxu0
    %v2927 = vadd.f32 0.0, %v2926
    %2928 = vmatmul.f32.gmra.mxu0 %v2875
    %v2929 = vpop.f32.mrf.mxu0
    %v2930 = vadd.f32 0.0, %v2929
    %2931 = vmatmul.f32.gmra.mxu0 %v2877
    %v2932 = vpop.f32.mrf.mxu0
    %v2933 = vadd.f32 0.0, %v2932
    %2934 = vmatmul.f32.gmra.mxu0 %v2879
    %v2935 = vpop.f32.mrf.mxu0
    %v2936 = vadd.f32 0.0, %v2935
    %2937 = vdwg.mxu0
    %v2938 = vsel %vm2470, %v2915, -inf
    %v2939 = vsel %vm2471, %v2918, -inf
    %v2940 = vsel %vm2472, %v2921, -inf
    %v2941 = vsel %vm2473, %v2924, -inf
    %v2942 = vsel %vm2474, %v2927, -inf
    %v2943 = vsel %vm2475, %v2930, -inf
    %v2944 = vsel %vm2476, %v2933, -inf
    %v2945 = vsel %vm2477, %v2936, -inf
    %v2946 = vsel %vm2478, %v2938, -inf
    %2947 = vmax.xlane.f32.xlu0 %v2946
    %v2948 = vpop.xlane.xlu0 %2947
    %v2949 = vsel %vm2478, %v2939, -inf
    %2950 = vmax.xlane.f32.xlu0 %v2949
    %v2951 = vpop.xlane.xlu0 %2950
    %v2952 = vsel %vm2478, %v2940, -inf
    %2953 = vmax.xlane.f32.xlu0 %v2952
    %v2954 = vpop.xlane.xlu0 %2953
    %v2955 = vsel %vm2478, %v2941, -inf
    %2956 = vmax.xlane.f32.xlu0 %v2955
    %v2957 = vpop.xlane.xlu0 %2956
    %v2958 = vsel %vm2478, %v2942, -inf
    %2959 = vmax.xlane.f32.xlu0 %v2958
    %v2960 = vpop.xlane.xlu0 %2959
    %v2961 = vsel %vm2478, %v2943, -inf
    %2962 = vmax.xlane.f32.xlu0 %v2961
    %v2963 = vpop.xlane.xlu0 %2962
    %v2964 = vsel %vm2478, %v2944, -inf
    %2965 = vmax.xlane.f32.xlu0 %v2964
    %v2966 = vpop.xlane.xlu0 %2965
    %v2967 = vsel %vm2478, %v2945, -inf
    %2968 = vmax.xlane.f32.xlu0 %v2967
    %v2969 = vpop.xlane.xlu0 %2968
    %v2970 = vsub.f32 %v2938, %v2948
    %v2971 = vsub.f32 %v2939, %v2951
    %v2972 = vsub.f32 %v2940, %v2954
    %v2973 = vsub.f32 %v2941, %v2957
    %v2974 = vsub.f32 %v2942, %v2960
    %v2975 = vsub.f32 %v2943, %v2963
    %v2976 = vsub.f32 %v2944, %v2966
    %v2977 = vsub.f32 %v2945, %v2969
    %v2978 = vmul.f32 %v2970, 1.442695
    %v2979 = vpow.pop %v2978
    %v2980 = vmul.f32 %v2971, 1.442695
    %v2981 = vpow.pop %v2980
    %v2982 = vmul.f32 %v2972, 1.442695
    %v2983 = vpow.pop %v2982
    %v2984 = vmul.f32 %v2973, 1.442695
    %v2985 = vpow.pop %v2984
    %v2986 = vmul.f32 %v2974, 1.442695
    %v2987 = vpow.pop %v2986
    %v2988 = vmul.f32 %v2975, 1.442695
    %v2989 = vpow.pop %v2988
    %v2990 = vmul.f32 %v2976, 1.442695
    %v2991 = vpow.pop %v2990
    %v2992 = vmul.f32 %v2977, 1.442695
    %v2993 = vpow.pop %v2992
    %v2994 = vsel %vm2478, %v2979, 0.0
    %2995 = vadd.xlane.f32.xlu0 %v2994
    %v2996 = vpop.xlane.xlu0 %2995
    %v2997 = vsel %vm2478, %v2981, 0.0
    %2998 = vadd.xlane.f32.xlu0 %v2997
    %v2999 = vpop.xlane.xlu0 %2998
    %v3000 = vsel %vm2478, %v2983, 0.0
    %3001 = vadd.xlane.f32.xlu0 %v3000
    %v3002 = vpop.xlane.xlu0 %3001
    %v3003 = vsel %vm2478, %v2985, 0.0
    %3004 = vadd.xlane.f32.xlu0 %v3003
    %v3005 = vpop.xlane.xlu0 %3004
    %v3006 = vsel %vm2478, %v2987, 0.0
    %3007 = vadd.xlane.f32.xlu0 %v3006
    %v3008 = vpop.xlane.xlu0 %3007
    %v3009 = vsel %vm2478, %v2989, 0.0
    %3010 = vadd.xlane.f32.xlu0 %v3009
    %v3011 = vpop.xlane.xlu0 %3010
    %v3012 = vsel %vm2478, %v2991, 0.0
    %3013 = vadd.xlane.f32.xlu0 %v3012
    %v3014 = vpop.xlane.xlu0 %3013
    %v3015 = vsel %vm2478, %v2993, 0.0
    %3016 = vadd.xlane.f32.xlu0 %v3015
    %v3017 = vpop.xlane.xlu0 %3016
    %v3018 = vrcp.pop %v2996
    %v3019 = vmul.f32 %v2996, %v3018
    %v3020 = vsub.f32 1.0, %v3019
    %v3021 = vmul.f32 %v3018, %v3020
    %v3022 = vadd.f32 %v3018, %v3021
    %vm3023 = vweird.f32 %v2996
    %vm3024 = vweird.f32 %v3018
    %vm3025 = vmor %vm3023, %vm3024
    %v3026 = vsel %vm3025, %v3018, %v3022
    %v3027 = vand.u32 2147483647, %v2996
    %vm3028 = vcmp.eq.f32.partialorder %v3027, 8.507059e+37
    %v3029 = vand.u32 %v2996, 2147483648
    %v3030 = vor.u32 1.1754944e-38, %v3029
    %v3031 = vsel %vm3028, %v3030, %v3026
    %v3032 = vmul.f32 %v2979, %v3031
    %v3033 = vrcp.pop %v2999
    %v3034 = vmul.f32 %v2999, %v3033
    %v3035 = vsub.f32 1.0, %v3034
    %v3036 = vmul.f32 %v3033, %v3035
    %v3037 = vadd.f32 %v3033, %v3036
    %vm3038 = vweird.f32 %v2999
    %vm3039 = vweird.f32 %v3033
    %vm3040 = vmor %vm3038, %vm3039
    %v3041 = vsel %vm3040, %v3033, %v3037
    %v3042 = vand.u32 2147483647, %v2999
    %vm3043 = vcmp.eq.f32.partialorder %v3042, 8.507059e+37
    %v3044 = vand.u32 %v2999, 2147483648
    %v3045 = vor.u32 1.1754944e-38, %v3044
    %v3046 = vsel %vm3043, %v3045, %v3041
    %v3047 = vmul.f32 %v2981, %v3046
    %v3048 = vrcp.pop %v3002
    %v3049 = vmul.f32 %v3002, %v3048
    %v3050 = vsub.f32 1.0, %v3049
    %v3051 = vmul.f32 %v3048, %v3050
    %v3052 = vadd.f32 %v3048, %v3051
    %vm3053 = vweird.f32 %v3002
    %vm3054 = vweird.f32 %v3048
    %vm3055 = vmor %vm3053, %vm3054
    %v3056 = vsel %vm3055, %v3048, %v3052
    %v3057 = vand.u32 2147483647, %v3002
    %vm3058 = vcmp.eq.f32.partialorder %v3057, 8.507059e+37
    %v3059 = vand.u32 %v3002, 2147483648
    %v3060 = vor.u32 1.1754944e-38, %v3059
    %v3061 = vsel %vm3058, %v3060, %v3056
    %v3062 = vmul.f32 %v2983, %v3061
    %v3063 = vrcp.pop %v3005
    %v3064 = vmul.f32 %v3005, %v3063
    %v3065 = vsub.f32 1.0, %v3064
    %v3066 = vmul.f32 %v3063, %v3065
    %v3067 = vadd.f32 %v3063, %v3066
    %vm3068 = vweird.f32 %v3005
    %vm3069 = vweird.f32 %v3063
    %vm3070 = vmor %vm3068, %vm3069
    %v3071 = vsel %vm3070, %v3063, %v3067
    %v3072 = vand.u32 2147483647, %v3005
    %vm3073 = vcmp.eq.f32.partialorder %v3072, 8.507059e+37
    %v3074 = vand.u32 %v3005, 2147483648
    %v3075 = vor.u32 1.1754944e-38, %v3074
    %v3076 = vsel %vm3073, %v3075, %v3071
    %v3077 = vmul.f32 %v2985, %v3076
    %v3078 = vrcp.pop %v3008
    %v3079 = vmul.f32 %v3008, %v3078
    %v3080 = vsub.f32 1.0, %v3079
    %v3081 = vmul.f32 %v3078, %v3080
    %v3082 = vadd.f32 %v3078, %v3081
    %vm3083 = vweird.f32 %v3008
    %vm3084 = vweird.f32 %v3078
    %vm3085 = vmor %vm3083, %vm3084
    %v3086 = vsel %vm3085, %v3078, %v3082
    %v3087 = vand.u32 2147483647, %v3008
    %vm3088 = vcmp.eq.f32.partialorder %v3087, 8.507059e+37
    %v3089 = vand.u32 %v3008, 2147483648
    %v3090 = vor.u32 1.1754944e-38, %v3089
    %v3091 = vsel %vm3088, %v3090, %v3086
    %v3092 = vmul.f32 %v2987, %v3091
    %v3093 = vrcp.pop %v3011
    %v3094 = vmul.f32 %v3011, %v3093
    %v3095 = vsub.f32 1.0, %v3094
    %v3096 = vmul.f32 %v3093, %v3095
    %v3097 = vadd.f32 %v3093, %v3096
    %vm3098 = vweird.f32 %v3011
    %vm3099 = vweird.f32 %v3093
    %vm3100 = vmor %vm3098, %vm3099
    %v3101 = vsel %vm3100, %v3093, %v3097
    %v3102 = vand.u32 2147483647, %v3011
    %vm3103 = vcmp.eq.f32.partialorder %v3102, 8.507059e+37
    %v3104 = vand.u32 %v3011, 2147483648
    %v3105 = vor.u32 1.1754944e-38, %v3104
    %v3106 = vsel %vm3103, %v3105, %v3101
    %v3107 = vmul.f32 %v2989, %v3106
    %v3108 = vrcp.pop %v3014
    %v3109 = vmul.f32 %v3014, %v3108
    %v3110 = vsub.f32 1.0, %v3109
    %v3111 = vmul.f32 %v3108, %v3110
    %v3112 = vadd.f32 %v3108, %v3111
    %vm3113 = vweird.f32 %v3014
    %vm3114 = vweird.f32 %v3108
    %vm3115 = vmor %vm3113, %vm3114
    %v3116 = vsel %vm3115, %v3108, %v3112
    %v3117 = vand.u32 2147483647, %v3014
    %vm3118 = vcmp.eq.f32.partialorder %v3117, 8.507059e+37
    %v3119 = vand.u32 %v3014, 2147483648
    %v3120 = vor.u32 1.1754944e-38, %v3119
    %v3121 = vsel %vm3118, %v3120, %v3116
    %v3122 = vmul.f32 %v2991, %v3121
    %v3123 = vrcp.pop %v3017
    %v3124 = vmul.f32 %v3017, %v3123
    %v3125 = vsub.f32 1.0, %v3124
    %v3126 = vmul.f32 %v3123, %v3125
    %v3127 = vadd.f32 %v3123, %v3126
    %vm3128 = vweird.f32 %v3017
    %vm3129 = vweird.f32 %v3123
    %vm3130 = vmor %vm3128, %vm3129
    %v3131 = vsel %vm3130, %v3123, %v3127
    %v3132 = vand.u32 2147483647, %v3017
    %vm3133 = vcmp.eq.f32.partialorder %v3132, 8.507059e+37
    %v3134 = vand.u32 %v3017, 2147483648
    %v3135 = vor.u32 1.1754944e-38, %v3134
    %v3136 = vsel %vm3133, %v3135, %v3131
    %v3137 = vmul.f32 %v2993, %v3136
    %3146 = vrot.lane.b32.xlu0 %v1877, 64
    %v3147 = vpop.permute.xlu0 %3146
    %3148 = vrot.lane.b32.xlu0 %v1880, 64
    %v3149 = vpop.permute.xlu0 %3148
    %3150 = vrot.lane.b32.xlu0 %v1883, 64
    %v3151 = vpop.permute.xlu0 %3150
    %3152 = vrot.lane.b32.xlu0 %v1886, 64
    %v3153 = vpop.permute.xlu0 %3152
    %3154 = vrot.lane.b32.xlu0 %v1889, 64
    %v3155 = vpop.permute.xlu0 %3154
    %3156 = vrot.lane.b32.xlu0 %v1892, 64
    %v3157 = vpop.permute.xlu0 %3156
    %3158 = vrot.lane.b32.xlu0 %v1895, 64
    %v3159 = vpop.permute.xlu0 %3158
    %3160 = vrot.lane.b32.xlu0 %v1898, 64
    %v3161 = vpop.permute.xlu0 %3160
    %v3171 = vsel %vm2478, %v3032, 0
    %v3174 = vsel %vm2478, %v3047, 0
    %v3177 = vsel %vm2478, %v3062, 0
    %v3180 = vsel %vm2478, %v3077, 0
    %v3183 = vsel %vm2478, %v3092, 0
    %v3186 = vsel %vm2478, %v3107, 0
    %v3189 = vsel %vm2478, %v3122, 0
    %v3192 = vsel %vm2478, %v3137, 0
    %3194 = vmatpush.msra.mxu0 0.0
    %3195 = vmatpush.msra.mxu0 0.0
    %3196 = vmatpush.msra.mxu0 0.0
    %3197 = vmatpush.msra.mxu0 0.0
    %3198 = vmatpush.msra.mxu0 0.0
    %3199 = vmatpush.msra.mxu0 0.0
    %3200 = vmatpush.msra.mxu0 0.0
    %3201 = vmatpush.msra.mxu0 0.0
    %3202 = vmatpush.msra.mxu0 %v3161
    %3203 = vmatpush.msra.mxu0 %v3159
    %3204 = vmatpush.msra.mxu0 %v3157
    %3205 = vmatpush.msra.mxu0 %v3155
    %3206 = vmatpush.msra.mxu0 %v3153
    %3207 = vmatpush.msra.mxu0 %v3151
    %3208 = vmatpush.msra.mxu0 %v3149
    %3209 = vmatpush.msra.mxu0 %v3147
    %3210 = vmatmul.f32.gmra.mxu0 %v3171
    %v3211 = vpop.f32.mrf.mxu0
    %v3212 = vadd.f32 0.0, %v3211
    %3213 = vmatmul.f32.gmra.mxu0 %v3174
    %v3214 = vpop.f32.mrf.mxu0
    %v3215 = vadd.f32 0.0, %v3214
    %3216 = vmatmul.f32.gmra.mxu0 %v3177
    %v3217 = vpop.f32.mrf.mxu0
    %v3218 = vadd.f32 0.0, %v3217
    %3219 = vmatmul.f32.gmra.mxu0 %v3180
    %v3220 = vpop.f32.mrf.mxu0
    %v3221 = vadd.f32 0.0, %v3220
    %3222 = vmatmul.f32.gmra.mxu0 %v3183
    %v3223 = vpop.f32.mrf.mxu0
    %v3224 = vadd.f32 0.0, %v3223
    %3225 = vmatmul.f32.gmra.mxu0 %v3186
    %v3226 = vpop.f32.mrf.mxu0
    %v3227 = vadd.f32 0.0, %v3226
    %3228 = vmatmul.f32.gmra.mxu0 %v3189
    %v3229 = vpop.f32.mrf.mxu0
    %v3230 = vadd.f32 0.0, %v3229
    %3231 = vmatmul.f32.gmra.mxu0 %v3192
    %v3232 = vpop.f32.mrf.mxu0
    %v3233 = vadd.f32 0.0, %v3232
    %3234 = vdwg.mxu0
    %v3236 = vsel %vm2478, %v902, 0
    %v3239 = vsel %vm2478, %v905, 0
    %v3242 = vsel %vm2478, %v908, 0
    %v3245 = vsel %vm2478, %v911, 0
    %v3248 = vsel %vm2478, %v914, 0
    %v3251 = vsel %vm2478, %v917, 0
    %v3254 = vsel %vm2478, %v920, 0
    %v3257 = vsel %vm2478, %v923, 0
    %v3260 = vsel %vm2478, %v1487, 0
    %v3263 = vsel %vm2478, %v1490, 0
    %v3266 = vsel %vm2478, %v1493, 0
    %v3269 = vsel %vm2478, %v1496, 0
    %v3272 = vsel %vm2478, %v1499, 0
    %v3275 = vsel %vm2478, %v1502, 0
    %v3278 = vsel %vm2478, %v1505, 0
    %v3281 = vsel %vm2478, %v1508, 0
    %3283 = vmatpush.xpose.msra.mxu0 0.0
    %3284 = vmatpush.xpose.msra.mxu0 0.0
    %3285 = vmatpush.xpose.msra.mxu0 0.0
    %3286 = vmatpush.xpose.msra.mxu0 0.0
    %3287 = vmatpush.xpose.msra.mxu0 0.0
    %3288 = vmatpush.xpose.msra.mxu0 0.0
    %3289 = vmatpush.xpose.msra.mxu0 0.0
    %3290 = vmatpush.xpose.msra.mxu0 0.0
    %3291 = vmatpush.xpose.msra.mxu0 %v3281
    %3292 = vmatpush.xpose.msra.mxu0 %v3278
    %3293 = vmatpush.xpose.msra.mxu0 %v3275
    %3294 = vmatpush.xpose.msra.mxu0 %v3272
    %3295 = vmatpush.xpose.msra.mxu0 %v3269
    %3296 = vmatpush.xpose.msra.mxu0 %v3266
    %3297 = vmatpush.xpose.msra.mxu0 %v3263
    %3298 = vmatpush.xpose.msra.mxu0 %v3260
    %3299 = vmatmul.f32.gmra.mxu0 %v3236
    %v3300 = vpop.f32.mrf.mxu0
    %v3301 = vadd.f32 0.0, %v3300
    %3302 = vmatmul.f32.gmra.mxu0 %v3239
    %v3303 = vpop.f32.mrf.mxu0
    %v3304 = vadd.f32 0.0, %v3303
    %3305 = vmatmul.f32.gmra.mxu0 %v3242
    %v3306 = vpop.f32.mrf.mxu0
    %v3307 = vadd.f32 0.0, %v3306
    %3308 = vmatmul.f32.gmra.mxu0 %v3245
    %v3309 = vpop.f32.mrf.mxu0
    %v3310 = vadd.f32 0.0, %v3309
    %3311 = vmatmul.f32.gmra.mxu0 %v3248
    %v3312 = vpop.f32.mrf.mxu0
    %v3313 = vadd.f32 0.0, %v3312
    %3314 = vmatmul.f32.gmra.mxu0 %v3251
    %v3315 = vpop.f32.mrf.mxu0
    %v3316 = vadd.f32 0.0, %v3315
    %3317 = vmatmul.f32.gmra.mxu0 %v3254
    %v3318 = vpop.f32.mrf.mxu0
    %v3319 = vadd.f32 0.0, %v3318
    %3320 = vmatmul.f32.gmra.mxu0 %v3257
    %v3321 = vpop.f32.mrf.mxu0
    %v3322 = vadd.f32 0.0, %v3321
    %3323 = vdwg.mxu0
    %v3324 = vsel %vm2470, %v3301, -inf
    %v3325 = vsel %vm2471, %v3304, -inf
    %v3326 = vsel %vm2472, %v3307, -inf
    %v3327 = vsel %vm2473, %v3310, -inf
    %v3328 = vsel %vm2474, %v3313, -inf
    %v3329 = vsel %vm2475, %v3316, -inf
    %v3330 = vsel %vm2476, %v3319, -inf
    %v3331 = vsel %vm2477, %v3322, -inf
    %v3332 = vsel %vm2478, %v3324, -inf
    %3333 = vmax.xlane.f32.xlu0 %v3332
    %v3334 = vpop.xlane.xlu0 %3333
    %v3335 = vsel %vm2478, %v3325, -inf
    %3336 = vmax.xlane.f32.xlu0 %v3335
    %v3337 = vpop.xlane.xlu0 %3336
    %v3338 = vsel %vm2478, %v3326, -inf
    %3339 = vmax.xlane.f32.xlu0 %v3338
    %v3340 = vpop.xlane.xlu0 %3339
    %v3341 = vsel %vm2478, %v3327, -inf
    %3342 = vmax.xlane.f32.xlu0 %v3341
    %v3343 = vpop.xlane.xlu0 %3342
    %v3344 = vsel %vm2478, %v3328, -inf
    %3345 = vmax.xlane.f32.xlu0 %v3344
    %v3346 = vpop.xlane.xlu0 %3345
    %v3347 = vsel %vm2478, %v3329, -inf
    %3348 = vmax.xlane.f32.xlu0 %v3347
    %v3349 = vpop.xlane.xlu0 %3348
    %v3350 = vsel %vm2478, %v3330, -inf
    %3351 = vmax.xlane.f32.xlu0 %v3350
    %v3352 = vpop.xlane.xlu0 %3351
    %v3353 = vsel %vm2478, %v3331, -inf
    %3354 = vmax.xlane.f32.xlu0 %v3353
    %v3355 = vpop.xlane.xlu0 %3354
    %v3356 = vsub.f32 %v3324, %v3334
    %v3357 = vsub.f32 %v3325, %v3337
    %v3358 = vsub.f32 %v3326, %v3340
    %v3359 = vsub.f32 %v3327, %v3343
    %v3360 = vsub.f32 %v3328, %v3346
    %v3361 = vsub.f32 %v3329, %v3349
    %v3362 = vsub.f32 %v3330, %v3352
    %v3363 = vsub.f32 %v3331, %v3355
    %v3364 = vmul.f32 %v3356, 1.442695
    %v3365 = vpow.pop %v3364
    %v3366 = vmul.f32 %v3357, 1.442695
    %v3367 = vpow.pop %v3366
    %v3368 = vmul.f32 %v3358, 1.442695
    %v3369 = vpow.pop %v3368
    %v3370 = vmul.f32 %v3359, 1.442695
    %v3371 = vpow.pop %v3370
    %v3372 = vmul.f32 %v3360, 1.442695
    %v3373 = vpow.pop %v3372
    %v3374 = vmul.f32 %v3361, 1.442695
    %v3375 = vpow.pop %v3374
    %v3376 = vmul.f32 %v3362, 1.442695
    %v3377 = vpow.pop %v3376
    %v3378 = vmul.f32 %v3363, 1.442695
    %v3379 = vpow.pop %v3378
    %v3380 = vsel %vm2478, %v3365, 0.0
    %3381 = vadd.xlane.f32.xlu0 %v3380
    %v3382 = vpop.xlane.xlu0 %3381
    %v3383 = vsel %vm2478, %v3367, 0.0
    %3384 = vadd.xlane.f32.xlu0 %v3383
    %v3385 = vpop.xlane.xlu0 %3384
    %v3386 = vsel %vm2478, %v3369, 0.0
    %3387 = vadd.xlane.f32.xlu0 %v3386
    %v3388 = vpop.xlane.xlu0 %3387
    %v3389 = vsel %vm2478, %v3371, 0.0
    %3390 = vadd.xlane.f32.xlu0 %v3389
    %v3391 = vpop.xlane.xlu0 %3390
    %v3392 = vsel %vm2478, %v3373, 0.0
    %3393 = vadd.xlane.f32.xlu0 %v3392
    %v3394 = vpop.xlane.xlu0 %3393
    %v3395 = vsel %vm2478, %v3375, 0.0
    %3396 = vadd.xlane.f32.xlu0 %v3395
    %v3397 = vpop.xlane.xlu0 %3396
    %v3398 = vsel %vm2478, %v3377, 0.0
    %3399 = vadd.xlane.f32.xlu0 %v3398
    %v3400 = vpop.xlane.xlu0 %3399
    %v3401 = vsel %vm2478, %v3379, 0.0
    %3402 = vadd.xlane.f32.xlu0 %v3401
    %v3403 = vpop.xlane.xlu0 %3402
    %v3404 = vrcp.pop %v3382
    %v3405 = vmul.f32 %v3382, %v3404
    %v3406 = vsub.f32 1.0, %v3405
    %v3407 = vmul.f32 %v3404, %v3406
    %v3408 = vadd.f32 %v3404, %v3407
    %vm3409 = vweird.f32 %v3382
    %vm3410 = vweird.f32 %v3404
    %vm3411 = vmor %vm3409, %vm3410
    %v3412 = vsel %vm3411, %v3404, %v3408
    %v3413 = vand.u32 2147483647, %v3382
    %vm3414 = vcmp.eq.f32.partialorder %v3413, 8.507059e+37
    %v3415 = vand.u32 %v3382, 2147483648
    %v3416 = vor.u32 1.1754944e-38, %v3415
    %v3417 = vsel %vm3414, %v3416, %v3412
    %v3418 = vmul.f32 %v3365, %v3417
    %v3419 = vrcp.pop %v3385
    %v3420 = vmul.f32 %v3385, %v3419
    %v3421 = vsub.f32 1.0, %v3420
    %v3422 = vmul.f32 %v3419, %v3421
    %v3423 = vadd.f32 %v3419, %v3422
    %vm3424 = vweird.f32 %v3385
    %vm3425 = vweird.f32 %v3419
    %vm3426 = vmor %vm3424, %vm3425
    %v3427 = vsel %vm3426, %v3419, %v3423
    %v3428 = vand.u32 2147483647, %v3385
    %vm3429 = vcmp.eq.f32.partialorder %v3428, 8.507059e+37
    %v3430 = vand.u32 %v3385, 2147483648
    %v3431 = vor.u32 1.1754944e-38, %v3430
    %v3432 = vsel %vm3429, %v3431, %v3427
    %v3433 = vmul.f32 %v3367, %v3432
    %v3434 = vrcp.pop %v3388
    %v3435 = vmul.f32 %v3388, %v3434
    %v3436 = vsub.f32 1.0, %v3435
    %v3437 = vmul.f32 %v3434, %v3436
    %v3438 = vadd.f32 %v3434, %v3437
    %vm3439 = vweird.f32 %v3388
    %vm3440 = vweird.f32 %v3434
    %vm3441 = vmor %vm3439, %vm3440
    %v3442 = vsel %vm3441, %v3434, %v3438
    %v3443 = vand.u32 2147483647, %v3388
    %vm3444 = vcmp.eq.f32.partialorder %v3443, 8.507059e+37
    %v3445 = vand.u32 %v3388, 2147483648
    %v3446 = vor.u32 1.1754944e-38, %v3445
    %v3447 = vsel %vm3444, %v3446, %v3442
    %v3448 = vmul.f32 %v3369, %v3447
    %v3449 = vrcp.pop %v3391
    %v3450 = vmul.f32 %v3391, %v3449
    %v3451 = vsub.f32 1.0, %v3450
    %v3452 = vmul.f32 %v3449, %v3451
    %v3453 = vadd.f32 %v3449, %v3452
    %vm3454 = vweird.f32 %v3391
    %vm3455 = vweird.f32 %v3449
    %vm3456 = vmor %vm3454, %vm3455
    %v3457 = vsel %vm3456, %v3449, %v3453
    %v3458 = vand.u32 2147483647, %v3391
    %vm3459 = vcmp.eq.f32.partialorder %v3458, 8.507059e+37
    %v3460 = vand.u32 %v3391, 2147483648
    %v3461 = vor.u32 1.1754944e-38, %v3460
    %v3462 = vsel %vm3459, %v3461, %v3457
    %v3463 = vmul.f32 %v3371, %v3462
    %v3464 = vrcp.pop %v3394
    %v3465 = vmul.f32 %v3394, %v3464
    %v3466 = vsub.f32 1.0, %v3465
    %v3467 = vmul.f32 %v3464, %v3466
    %v3468 = vadd.f32 %v3464, %v3467
    %vm3469 = vweird.f32 %v3394
    %vm3470 = vweird.f32 %v3464
    %vm3471 = vmor %vm3469, %vm3470
    %v3472 = vsel %vm3471, %v3464, %v3468
    %v3473 = vand.u32 2147483647, %v3394
    %vm3474 = vcmp.eq.f32.partialorder %v3473, 8.507059e+37
    %v3475 = vand.u32 %v3394, 2147483648
    %v3476 = vor.u32 1.1754944e-38, %v3475
    %v3477 = vsel %vm3474, %v3476, %v3472
    %v3478 = vmul.f32 %v3373, %v3477
    %v3479 = vrcp.pop %v3397
    %v3480 = vmul.f32 %v3397, %v3479
    %v3481 = vsub.f32 1.0, %v3480
    %v3482 = vmul.f32 %v3479, %v3481
    %v3483 = vadd.f32 %v3479, %v3482
    %vm3484 = vweird.f32 %v3397
    %vm3485 = vweird.f32 %v3479
    %vm3486 = vmor %vm3484, %vm3485
    %v3487 = vsel %vm3486, %v3479, %v3483
    %v3488 = vand.u32 2147483647, %v3397
    %vm3489 = vcmp.eq.f32.partialorder %v3488, 8.507059e+37
    %v3490 = vand.u32 %v3397, 2147483648
    %v3491 = vor.u32 1.1754944e-38, %v3490
    %v3492 = vsel %vm3489, %v3491, %v3487
    %v3493 = vmul.f32 %v3375, %v3492
    %v3494 = vrcp.pop %v3400
    %v3495 = vmul.f32 %v3400, %v3494
    %v3496 = vsub.f32 1.0, %v3495
    %v3497 = vmul.f32 %v3494, %v3496
    %v3498 = vadd.f32 %v3494, %v3497
    %vm3499 = vweird.f32 %v3400
    %vm3500 = vweird.f32 %v3494
    %vm3501 = vmor %vm3499, %vm3500
    %v3502 = vsel %vm3501, %v3494, %v3498
    %v3503 = vand.u32 2147483647, %v3400
    %vm3504 = vcmp.eq.f32.partialorder %v3503, 8.507059e+37
    %v3505 = vand.u32 %v3400, 2147483648
    %v3506 = vor.u32 1.1754944e-38, %v3505
    %v3507 = vsel %vm3504, %v3506, %v3502
    %v3508 = vmul.f32 %v3377, %v3507
    %v3509 = vrcp.pop %v3403
    %v3510 = vmul.f32 %v3403, %v3509
    %v3511 = vsub.f32 1.0, %v3510
    %v3512 = vmul.f32 %v3509, %v3511
    %v3513 = vadd.f32 %v3509, %v3512
    %vm3514 = vweird.f32 %v3403
    %vm3515 = vweird.f32 %v3509
    %vm3516 = vmor %vm3514, %vm3515
    %v3517 = vsel %vm3516, %v3509, %v3513
    %v3518 = vand.u32 2147483647, %v3403
    %vm3519 = vcmp.eq.f32.partialorder %v3518, 8.507059e+37
    %v3520 = vand.u32 %v3403, 2147483648
    %v3521 = vor.u32 1.1754944e-38, %v3520
    %v3522 = vsel %vm3519, %v3521, %v3517
    %v3523 = vmul.f32 %v3379, %v3522
    %v3525 = vsel %vm2478, %v3418, 0
    %v3528 = vsel %vm2478, %v3433, 0
    %v3531 = vsel %vm2478, %v3448, 0
    %v3534 = vsel %vm2478, %v3463, 0
    %v3537 = vsel %vm2478, %v3478, 0
    %v3540 = vsel %vm2478, %v3493, 0
    %v3543 = vsel %vm2478, %v3508, 0
    %v3546 = vsel %vm2478, %v3523, 0
    %3548 = vmatpush.msra.mxu0 0.0
    %3549 = vmatpush.msra.mxu0 0.0
    %3550 = vmatpush.msra.mxu0 0.0
    %3551 = vmatpush.msra.mxu0 0.0
    %3552 = vmatpush.msra.mxu0 0.0
    %3553 = vmatpush.msra.mxu0 0.0
    %3554 = vmatpush.msra.mxu0 0.0
    %3555 = vmatpush.msra.mxu0 0.0
    %3556 = vmatpush.msra.mxu0 %v2093
    %3557 = vmatpush.msra.mxu0 %v2090
    %3558 = vmatpush.msra.mxu0 %v2087
    %3559 = vmatpush.msra.mxu0 %v2084
    %3560 = vmatpush.msra.mxu0 %v2081
    %3561 = vmatpush.msra.mxu0 %v2078
    %3562 = vmatpush.msra.mxu0 %v2075
    %3563 = vmatpush.msra.mxu0 %v2072
    %3564 = vmatmul.f32.gmra.mxu0 %v3525
    %v3565 = vpop.f32.mrf.mxu0
    %v3566 = vadd.f32 0.0, %v3565
    %3567 = vmatmul.f32.gmra.mxu0 %v3528
    %v3568 = vpop.f32.mrf.mxu0
    %v3569 = vadd.f32 0.0, %v3568
    %3570 = vmatmul.f32.gmra.mxu0 %v3531
    %v3571 = vpop.f32.mrf.mxu0
    %v3572 = vadd.f32 0.0, %v3571
    %3573 = vmatmul.f32.gmra.mxu0 %v3534
    %v3574 = vpop.f32.mrf.mxu0
    %v3575 = vadd.f32 0.0, %v3574
    %3576 = vmatmul.f32.gmra.mxu0 %v3537
    %v3577 = vpop.f32.mrf.mxu0
    %v3578 = vadd.f32 0.0, %v3577
    %3579 = vmatmul.f32.gmra.mxu0 %v3540
    %v3580 = vpop.f32.mrf.mxu0
    %v3581 = vadd.f32 0.0, %v3580
    %3582 = vmatmul.f32.gmra.mxu0 %v3543
    %v3583 = vpop.f32.mrf.mxu0
    %v3584 = vadd.f32 0.0, %v3583
    %3585 = vmatmul.f32.gmra.mxu0 %v3546
    %v3586 = vpop.f32.mrf.mxu0
    %v3587 = vadd.f32 0.0, %v3586
    %3588 = vdwg.mxu0
    %3589 = vrot.lane.b32.xlu0 %v902, 64
    %v3590 = vpop.permute.xlu0 %3589
    %3591 = vrot.lane.b32.xlu0 %v905, 64
    %v3592 = vpop.permute.xlu0 %3591
    %3593 = vrot.lane.b32.xlu0 %v908, 64
    %v3594 = vpop.permute.xlu0 %3593
    %3595 = vrot.lane.b32.xlu0 %v911, 64
    %v3596 = vpop.permute.xlu0 %3595
    %3597 = vrot.lane.b32.xlu0 %v914, 64
    %v3598 = vpop.permute.xlu0 %3597
    %3599 = vrot.lane.b32.xlu0 %v917, 64
    %v3600 = vpop.permute.xlu0 %3599
    %3601 = vrot.lane.b32.xlu0 %v920, 64
    %v3602 = vpop.permute.xlu0 %3601
    %3603 = vrot.lane.b32.xlu0 %v923, 64
    %v3604 = vpop.permute.xlu0 %3603
    %3605 = vrot.lane.b32.xlu0 %v1487, 64
    %v3606 = vpop.permute.xlu0 %3605
    %3607 = vrot.lane.b32.xlu0 %v1490, 64
    %v3608 = vpop.permute.xlu0 %3607
    %3609 = vrot.lane.b32.xlu0 %v1493, 64
    %v3610 = vpop.permute.xlu0 %3609
    %3611 = vrot.lane.b32.xlu0 %v1496, 64
    %v3612 = vpop.permute.xlu0 %3611
    %3613 = vrot.lane.b32.xlu0 %v1499, 64
    %v3614 = vpop.permute.xlu0 %3613
    %3615 = vrot.lane.b32.xlu0 %v1502, 64
    %v3616 = vpop.permute.xlu0 %3615
    %3617 = vrot.lane.b32.xlu0 %v1505, 64
    %v3618 = vpop.permute.xlu0 %3617
    %3619 = vrot.lane.b32.xlu0 %v1508, 64
    %v3620 = vpop.permute.xlu0 %3619
    %v3621 = vsel %vm2478, %v3590, 0
    %v3623 = vsel %vm2478, %v3592, 0
    %v3625 = vsel %vm2478, %v3594, 0
    %v3627 = vsel %vm2478, %v3596, 0
    %v3629 = vsel %vm2478, %v3598, 0
    %v3631 = vsel %vm2478, %v3600, 0
    %v3633 = vsel %vm2478, %v3602, 0
    %v3635 = vsel %vm2478, %v3604, 0
    %v3637 = vsel %vm2478, %v3606, 0
    %v3639 = vsel %vm2478, %v3608, 0
    %v3641 = vsel %vm2478, %v3610, 0
    %v3643 = vsel %vm2478, %v3612, 0
    %v3645 = vsel %vm2478, %v3614, 0
    %v3647 = vsel %vm2478, %v3616, 0
    %v3649 = vsel %vm2478, %v3618, 0
    %v3651 = vsel %vm2478, %v3620, 0
    %3653 = vmatpush.xpose.msra.mxu0 0.0
    %3654 = vmatpush.xpose.msra.mxu0 0.0
    %3655 = vmatpush.xpose.msra.mxu0 0.0
    %3656 = vmatpush.xpose.msra.mxu0 0.0
    %3657 = vmatpush.xpose.msra.mxu0 0.0
    %3658 = vmatpush.xpose.msra.mxu0 0.0
    %3659 = vmatpush.xpose.msra.mxu0 0.0
    %3660 = vmatpush.xpose.msra.mxu0 0.0
    %3661 = vmatpush.xpose.msra.mxu0 %v3651
    %3662 = vmatpush.xpose.msra.mxu0 %v3649
    %3663 = vmatpush.xpose.msra.mxu0 %v3647
    %3664 = vmatpush.xpose.msra.mxu0 %v3645
    %3665 = vmatpush.xpose.msra.mxu0 %v3643
    %3666 = vmatpush.xpose.msra.mxu0 %v3641
    %3667 = vmatpush.xpose.msra.mxu0 %v3639
    %3668 = vmatpush.xpose.msra.mxu0 %v3637
    %3669 = vmatmul.f32.gmra.mxu0 %v3621
    %v3670 = vpop.f32.mrf.mxu0
    %v3671 = vadd.f32 0.0, %v3670
    %3672 = vmatmul.f32.gmra.mxu0 %v3623
    %v3673 = vpop.f32.mrf.mxu0
    %v3674 = vadd.f32 0.0, %v3673
    %3675 = vmatmul.f32.gmra.mxu0 %v3625
    %v3676 = vpop.f32.mrf.mxu0
    %v3677 = vadd.f32 0.0, %v3676
    %3678 = vmatmul.f32.gmra.mxu0 %v3627
    %v3679 = vpop.f32.mrf.mxu0
    %v3680 = vadd.f32 0.0, %v3679
    %3681 = vmatmul.f32.gmra.mxu0 %v3629
    %v3682 = vpop.f32.mrf.mxu0
    %v3683 = vadd.f32 0.0, %v3682
    %3684 = vmatmul.f32.gmra.mxu0 %v3631
    %v3685 = vpop.f32.mrf.mxu0
    %v3686 = vadd.f32 0.0, %v3685
    %3687 = vmatmul.f32.gmra.mxu0 %v3633
    %v3688 = vpop.f32.mrf.mxu0
    %v3689 = vadd.f32 0.0, %v3688
    %3690 = vmatmul.f32.gmra.mxu0 %v3635
    %v3691 = vpop.f32.mrf.mxu0
    %v3692 = vadd.f32 0.0, %v3691
    %3693 = vdwg.mxu0
    %v3694 = vsel %vm2470, %v3671, -inf
    %v3695 = vsel %vm2471, %v3674, -inf
    %v3696 = vsel %vm2472, %v3677, -inf
    %v3697 = vsel %vm2473, %v3680, -inf
    %v3698 = vsel %vm2474, %v3683, -inf
    %v3699 = vsel %vm2475, %v3686, -inf
    %v3700 = vsel %vm2476, %v3689, -inf
    %v3701 = vsel %vm2477, %v3692, -inf
    %v3702 = vsel %vm2478, %v3694, -inf
    %3703 = vmax.xlane.f32.xlu0 %v3702
    %v3704 = vpop.xlane.xlu0 %3703
    %v3705 = vsel %vm2478, %v3695, -inf
    %3706 = vmax.xlane.f32.xlu0 %v3705
    %v3707 = vpop.xlane.xlu0 %3706
    %v3708 = vsel %vm2478, %v3696, -inf
    %3709 = vmax.xlane.f32.xlu0 %v3708
    %v3710 = vpop.xlane.xlu0 %3709
    %v3711 = vsel %vm2478, %v3697, -inf
    %3712 = vmax.xlane.f32.xlu0 %v3711
    %v3713 = vpop.xlane.xlu0 %3712
    %v3714 = vsel %vm2478, %v3698, -inf
    %3715 = vmax.xlane.f32.xlu0 %v3714
    %v3716 = vpop.xlane.xlu0 %3715
    %v3717 = vsel %vm2478, %v3699, -inf
    %3718 = vmax.xlane.f32.xlu0 %v3717
    %v3719 = vpop.xlane.xlu0 %3718
    %v3720 = vsel %vm2478, %v3700, -inf
    %3721 = vmax.xlane.f32.xlu0 %v3720
    %v3722 = vpop.xlane.xlu0 %3721
    %v3723 = vsel %vm2478, %v3701, -inf
    %3724 = vmax.xlane.f32.xlu0 %v3723
    %v3725 = vpop.xlane.xlu0 %3724
    %v3726 = vsub.f32 %v3694, %v3704
    %v3727 = vsub.f32 %v3695, %v3707
    %v3728 = vsub.f32 %v3696, %v3710
    %v3729 = vsub.f32 %v3697, %v3713
    %v3730 = vsub.f32 %v3698, %v3716
    %v3731 = vsub.f32 %v3699, %v3719
    %v3732 = vsub.f32 %v3700, %v3722
    %v3733 = vsub.f32 %v3701, %v3725
    %v3734 = vmul.f32 %v3726, 1.442695
    %v3735 = vpow.pop %v3734
    %v3736 = vmul.f32 %v3727, 1.442695
    %v3737 = vpow.pop %v3736
    %v3738 = vmul.f32 %v3728, 1.442695
    %v3739 = vpow.pop %v3738
    %v3740 = vmul.f32 %v3729, 1.442695
    %v3741 = vpow.pop %v3740
    %v3742 = vmul.f32 %v3730, 1.442695
    %v3743 = vpow.pop %v3742
    %v3744 = vmul.f32 %v3731, 1.442695
    %v3745 = vpow.pop %v3744
    %v3746 = vmul.f32 %v3732, 1.442695
    %v3747 = vpow.pop %v3746
    %v3748 = vmul.f32 %v3733, 1.442695
    %v3749 = vpow.pop %v3748
    %v3750 = vsel %vm2478, %v3735, 0.0
    %3751 = vadd.xlane.f32.xlu0 %v3750
    %v3752 = vpop.xlane.xlu0 %3751
    %v3753 = vsel %vm2478, %v3737, 0.0
    %3754 = vadd.xlane.f32.xlu0 %v3753
    %v3755 = vpop.xlane.xlu0 %3754
    %v3756 = vsel %vm2478, %v3739, 0.0
    %3757 = vadd.xlane.f32.xlu0 %v3756
    %v3758 = vpop.xlane.xlu0 %3757
    %v3759 = vsel %vm2478, %v3741, 0.0
    %3760 = vadd.xlane.f32.xlu0 %v3759
    %v3761 = vpop.xlane.xlu0 %3760
    %v3762 = vsel %vm2478, %v3743, 0.0
    %3763 = vadd.xlane.f32.xlu0 %v3762
    %v3764 = vpop.xlane.xlu0 %3763
    %v3765 = vsel %vm2478, %v3745, 0.0
    %3766 = vadd.xlane.f32.xlu0 %v3765
    %v3767 = vpop.xlane.xlu0 %3766
    %v3768 = vsel %vm2478, %v3747, 0.0
    %3769 = vadd.xlane.f32.xlu0 %v3768
    %v3770 = vpop.xlane.xlu0 %3769
    %v3771 = vsel %vm2478, %v3749, 0.0
    %3772 = vadd.xlane.f32.xlu0 %v3771
    %v3773 = vpop.xlane.xlu0 %3772
    %v3774 = vrcp.pop %v3752
    %v3775 = vmul.f32 %v3752, %v3774
    %v3776 = vsub.f32 1.0, %v3775
    %v3777 = vmul.f32 %v3774, %v3776
    %v3778 = vadd.f32 %v3774, %v3777
    %vm3779 = vweird.f32 %v3752
    %vm3780 = vweird.f32 %v3774
    %vm3781 = vmor %vm3779, %vm3780
    %v3782 = vsel %vm3781, %v3774, %v3778
    %v3783 = vand.u32 2147483647, %v3752
    %vm3784 = vcmp.eq.f32.partialorder %v3783, 8.507059e+37
    %v3785 = vand.u32 %v3752, 2147483648
    %v3786 = vor.u32 1.1754944e-38, %v3785
    %v3787 = vsel %vm3784, %v3786, %v3782
    %v3788 = vmul.f32 %v3735, %v3787
    %v3789 = vrcp.pop %v3755
    %v3790 = vmul.f32 %v3755, %v3789
    %v3791 = vsub.f32 1.0, %v3790
    %v3792 = vmul.f32 %v3789, %v3791
    %v3793 = vadd.f32 %v3789, %v3792
    %vm3794 = vweird.f32 %v3755
    %vm3795 = vweird.f32 %v3789
    %vm3796 = vmor %vm3794, %vm3795
    %v3797 = vsel %vm3796, %v3789, %v3793
    %v3798 = vand.u32 2147483647, %v3755
    %vm3799 = vcmp.eq.f32.partialorder %v3798, 8.507059e+37
    %v3800 = vand.u32 %v3755, 2147483648
    %v3801 = vor.u32 1.1754944e-38, %v3800
    %v3802 = vsel %vm3799, %v3801, %v3797
    %v3803 = vmul.f32 %v3737, %v3802
    %v3804 = vrcp.pop %v3758
    %v3805 = vmul.f32 %v3758, %v3804
    %v3806 = vsub.f32 1.0, %v3805
    %v3807 = vmul.f32 %v3804, %v3806
    %v3808 = vadd.f32 %v3804, %v3807
    %vm3809 = vweird.f32 %v3758
    %vm3810 = vweird.f32 %v3804
    %vm3811 = vmor %vm3809, %vm3810
    %v3812 = vsel %vm3811, %v3804, %v3808
    %v3813 = vand.u32 2147483647, %v3758
    %vm3814 = vcmp.eq.f32.partialorder %v3813, 8.507059e+37
    %v3815 = vand.u32 %v3758, 2147483648
    %v3816 = vor.u32 1.1754944e-38, %v3815
    %v3817 = vsel %vm3814, %v3816, %v3812
    %v3818 = vmul.f32 %v3739, %v3817
    %v3819 = vrcp.pop %v3761
    %v3820 = vmul.f32 %v3761, %v3819
    %v3821 = vsub.f32 1.0, %v3820
    %v3822 = vmul.f32 %v3819, %v3821
    %v3823 = vadd.f32 %v3819, %v3822
    %vm3824 = vweird.f32 %v3761
    %vm3825 = vweird.f32 %v3819
    %vm3826 = vmor %vm3824, %vm3825
    %v3827 = vsel %vm3826, %v3819, %v3823
    %v3828 = vand.u32 2147483647, %v3761
    %vm3829 = vcmp.eq.f32.partialorder %v3828, 8.507059e+37
    %v3830 = vand.u32 %v3761, 2147483648
    %v3831 = vor.u32 1.1754944e-38, %v3830
    %v3832 = vsel %vm3829, %v3831, %v3827
    %v3833 = vmul.f32 %v3741, %v3832
    %v3834 = vrcp.pop %v3764
    %v3835 = vmul.f32 %v3764, %v3834
    %v3836 = vsub.f32 1.0, %v3835
    %v3837 = vmul.f32 %v3834, %v3836
    %v3838 = vadd.f32 %v3834, %v3837
    %vm3839 = vweird.f32 %v3764
    %vm3840 = vweird.f32 %v3834
    %vm3841 = vmor %vm3839, %vm3840
    %v3842 = vsel %vm3841, %v3834, %v3838
    %v3843 = vand.u32 2147483647, %v3764
    %vm3844 = vcmp.eq.f32.partialorder %v3843, 8.507059e+37
    %v3845 = vand.u32 %v3764, 2147483648
    %v3846 = vor.u32 1.1754944e-38, %v3845
    %v3847 = vsel %vm3844, %v3846, %v3842
    %v3848 = vmul.f32 %v3743, %v3847
    %v3849 = vrcp.pop %v3767
    %v3850 = vmul.f32 %v3767, %v3849
    %v3851 = vsub.f32 1.0, %v3850
    %v3852 = vmul.f32 %v3849, %v3851
    %v3853 = vadd.f32 %v3849, %v3852
    %vm3854 = vweird.f32 %v3767
    %vm3855 = vweird.f32 %v3849
    %vm3856 = vmor %vm3854, %vm3855
    %v3857 = vsel %vm3856, %v3849, %v3853
    %v3858 = vand.u32 2147483647, %v3767
    %vm3859 = vcmp.eq.f32.partialorder %v3858, 8.507059e+37
    %v3860 = vand.u32 %v3767, 2147483648
    %v3861 = vor.u32 1.1754944e-38, %v3860
    %v3862 = vsel %vm3859, %v3861, %v3857
    %v3863 = vmul.f32 %v3745, %v3862
    %v3864 = vrcp.pop %v3770
    %v3865 = vmul.f32 %v3770, %v3864
    %v3866 = vsub.f32 1.0, %v3865
    %v3867 = vmul.f32 %v3864, %v3866
    %v3868 = vadd.f32 %v3864, %v3867
    %vm3869 = vweird.f32 %v3770
    %vm3870 = vweird.f32 %v3864
    %vm3871 = vmor %vm3869, %vm3870
    %v3872 = vsel %vm3871, %v3864, %v3868
    %v3873 = vand.u32 2147483647, %v3770
    %vm3874 = vcmp.eq.f32.partialorder %v3873, 8.507059e+37
    %v3875 = vand.u32 %v3770, 2147483648
    %v3876 = vor.u32 1.1754944e-38, %v3875
    %v3877 = vsel %vm3874, %v3876, %v3872
    %v3878 = vmul.f32 %v3747, %v3877
    %v3879 = vrcp.pop %v3773
    %v3880 = vmul.f32 %v3773, %v3879
    %v3881 = vsub.f32 1.0, %v3880
    %v3882 = vmul.f32 %v3879, %v3881
    %v3883 = vadd.f32 %v3879, %v3882
    %vm3884 = vweird.f32 %v3773
    %vm3885 = vweird.f32 %v3879
    %vm3886 = vmor %vm3884, %vm3885
    %v3887 = vsel %vm3886, %v3879, %v3883
    %v3888 = vand.u32 2147483647, %v3773
    %vm3889 = vcmp.eq.f32.partialorder %v3888, 8.507059e+37
    %v3890 = vand.u32 %v3773, 2147483648
    %v3891 = vor.u32 1.1754944e-38, %v3890
    %v3892 = vsel %vm3889, %v3891, %v3887
    %v3893 = vmul.f32 %v3749, %v3892
    %3902 = vrot.lane.b32.xlu0 %v2072, 64
    %v3903 = vpop.permute.xlu0 %3902
    %3904 = vrot.lane.b32.xlu0 %v2075, 64
    %v3905 = vpop.permute.xlu0 %3904
    %3906 = vrot.lane.b32.xlu0 %v2078, 64
    %v3907 = vpop.permute.xlu0 %3906
    %3908 = vrot.lane.b32.xlu0 %v2081, 64
    %v3909 = vpop.permute.xlu0 %3908
    %3910 = vrot.lane.b32.xlu0 %v2084, 64
    %v3911 = vpop.permute.xlu0 %3910
    %3912 = vrot.lane.b32.xlu0 %v2087, 64
    %v3913 = vpop.permute.xlu0 %3912
    %3914 = vrot.lane.b32.xlu0 %v2090, 64
    %v3915 = vpop.permute.xlu0 %3914
    %3916 = vrot.lane.b32.xlu0 %v2093, 64
    %v3917 = vpop.permute.xlu0 %3916
    %v3927 = vsel %vm2478, %v3788, 0
    %v3930 = vsel %vm2478, %v3803, 0
    %v3933 = vsel %vm2478, %v3818, 0
    %v3936 = vsel %vm2478, %v3833, 0
    %v3939 = vsel %vm2478, %v3848, 0
    %v3942 = vsel %vm2478, %v3863, 0
    %v3945 = vsel %vm2478, %v3878, 0
    %v3948 = vsel %vm2478, %v3893, 0
    %3950 = vmatpush.msra.mxu0 0.0
    %3951 = vmatpush.msra.mxu0 0.0
    %3952 = vmatpush.msra.mxu0 0.0
    %3953 = vmatpush.msra.mxu0 0.0
    %3954 = vmatpush.msra.mxu0 0.0
    %3955 = vmatpush.msra.mxu0 0.0
    %3956 = vmatpush.msra.mxu0 0.0
    %3957 = vmatpush.msra.mxu0 0.0
    %3958 = vmatpush.msra.mxu0 %v3917
    %3959 = vmatpush.msra.mxu0 %v3915
    %3960 = vmatpush.msra.mxu0 %v3913
    %3961 = vmatpush.msra.mxu0 %v3911
    %3962 = vmatpush.msra.mxu0 %v3909
    %3963 = vmatpush.msra.mxu0 %v3907
    %3964 = vmatpush.msra.mxu0 %v3905
    %3965 = vmatpush.msra.mxu0 %v3903
    %3966 = vmatmul.f32.gmra.mxu0 %v3927
    %v3967 = vpop.f32.mrf.mxu0
    %v3968 = vadd.f32 0.0, %v3967
    %3969 = vmatmul.f32.gmra.mxu0 %v3930
    %v3970 = vpop.f32.mrf.mxu0
    %v3971 = vadd.f32 0.0, %v3970
    %3972 = vmatmul.f32.gmra.mxu0 %v3933
    %v3973 = vpop.f32.mrf.mxu0
    %v3974 = vadd.f32 0.0, %v3973
    %3975 = vmatmul.f32.gmra.mxu0 %v3936
    %v3976 = vpop.f32.mrf.mxu0
    %v3977 = vadd.f32 0.0, %v3976
    %3978 = vmatmul.f32.gmra.mxu0 %v3939
    %v3979 = vpop.f32.mrf.mxu0
    %v3980 = vadd.f32 0.0, %v3979
    %3981 = vmatmul.f32.gmra.mxu0 %v3942
    %v3982 = vpop.f32.mrf.mxu0
    %v3983 = vadd.f32 0.0, %v3982
    %3984 = vmatmul.f32.gmra.mxu0 %v3945
    %v3985 = vpop.f32.mrf.mxu0
    %v3986 = vadd.f32 0.0, %v3985
    %3987 = vmatmul.f32.gmra.mxu0 %v3948
    %v3988 = vpop.f32.mrf.mxu0
    %v3989 = vadd.f32 0.0, %v3988
    %3990 = vdwg.mxu0
    %v3992 = vsel %vm2478, %v1097, 0
    %v3995 = vsel %vm2478, %v1100, 0
    %v3998 = vsel %vm2478, %v1103, 0
    %v4001 = vsel %vm2478, %v1106, 0
    %v4004 = vsel %vm2478, %v1109, 0
    %v4007 = vsel %vm2478, %v1112, 0
    %v4010 = vsel %vm2478, %v1115, 0
    %v4013 = vsel %vm2478, %v1118, 0
    %v4016 = vsel %vm2478, %v1682, 0
    %v4019 = vsel %vm2478, %v1685, 0
    %v4022 = vsel %vm2478, %v1688, 0
    %v4025 = vsel %vm2478, %v1691, 0
    %v4028 = vsel %vm2478, %v1694, 0
    %v4031 = vsel %vm2478, %v1697, 0
    %v4034 = vsel %vm2478, %v1700, 0
    %v4037 = vsel %vm2478, %v1703, 0
    %4039 = vmatpush.xpose.msra.mxu0 0.0
    %4040 = vmatpush.xpose.msra.mxu0 0.0
    %4041 = vmatpush.xpose.msra.mxu0 0.0
    %4042 = vmatpush.xpose.msra.mxu0 0.0
    %4043 = vmatpush.xpose.msra.mxu0 0.0
    %4044 = vmatpush.xpose.msra.mxu0 0.0
    %4045 = vmatpush.xpose.msra.mxu0 0.0
    %4046 = vmatpush.xpose.msra.mxu0 0.0
    %4047 = vmatpush.xpose.msra.mxu0 %v4037
    %4048 = vmatpush.xpose.msra.mxu0 %v4034
    %4049 = vmatpush.xpose.msra.mxu0 %v4031
    %4050 = vmatpush.xpose.msra.mxu0 %v4028
    %4051 = vmatpush.xpose.msra.mxu0 %v4025
    %4052 = vmatpush.xpose.msra.mxu0 %v4022
    %4053 = vmatpush.xpose.msra.mxu0 %v4019
    %4054 = vmatpush.xpose.msra.mxu0 %v4016
    %4055 = vmatmul.f32.gmra.mxu0 %v3992
    %v4056 = vpop.f32.mrf.mxu0
    %v4057 = vadd.f32 0.0, %v4056
    %4058 = vmatmul.f32.gmra.mxu0 %v3995
    %v4059 = vpop.f32.mrf.mxu0
    %v4060 = vadd.f32 0.0, %v4059
    %4061 = vmatmul.f32.gmra.mxu0 %v3998
    %v4062 = vpop.f32.mrf.mxu0
    %v4063 = vadd.f32 0.0, %v4062
    %4064 = vmatmul.f32.gmra.mxu0 %v4001
    %v4065 = vpop.f32.mrf.mxu0
    %v4066 = vadd.f32 0.0, %v4065
    %4067 = vmatmul.f32.gmra.mxu0 %v4004
    %v4068 = vpop.f32.mrf.mxu0
    %v4069 = vadd.f32 0.0, %v4068
    %4070 = vmatmul.f32.gmra.mxu0 %v4007
    %v4071 = vpop.f32.mrf.mxu0
    %v4072 = vadd.f32 0.0, %v4071
    %4073 = vmatmul.f32.gmra.mxu0 %v4010
    %v4074 = vpop.f32.mrf.mxu0
    %v4075 = vadd.f32 0.0, %v4074
    %4076 = vmatmul.f32.gmra.mxu0 %v4013
    %v4077 = vpop.f32.mrf.mxu0
    %v4078 = vadd.f32 0.0, %v4077
    %4079 = vdwg.mxu0
    %v4080 = vsel %vm2470, %v4057, -inf
    %v4081 = vsel %vm2471, %v4060, -inf
    %v4082 = vsel %vm2472, %v4063, -inf
    %v4083 = vsel %vm2473, %v4066, -inf
    %v4084 = vsel %vm2474, %v4069, -inf
    %v4085 = vsel %vm2475, %v4072, -inf
    %v4086 = vsel %vm2476, %v4075, -inf
    %v4087 = vsel %vm2477, %v4078, -inf
    %v4088 = vsel %vm2478, %v4080, -inf
    %4089 = vmax.xlane.f32.xlu0 %v4088
    %v4090 = vpop.xlane.xlu0 %4089
    %v4091 = vsel %vm2478, %v4081, -inf
    %4092 = vmax.xlane.f32.xlu0 %v4091
    %v4093 = vpop.xlane.xlu0 %4092
    %v4094 = vsel %vm2478, %v4082, -inf
    %4095 = vmax.xlane.f32.xlu0 %v4094
    %v4096 = vpop.xlane.xlu0 %4095
    %v4097 = vsel %vm2478, %v4083, -inf
    %4098 = vmax.xlane.f32.xlu0 %v4097
    %v4099 = vpop.xlane.xlu0 %4098
    %v4100 = vsel %vm2478, %v4084, -inf
    %4101 = vmax.xlane.f32.xlu0 %v4100
    %v4102 = vpop.xlane.xlu0 %4101
    %v4103 = vsel %vm2478, %v4085, -inf
    %4104 = vmax.xlane.f32.xlu0 %v4103
    %v4105 = vpop.xlane.xlu0 %4104
    %v4106 = vsel %vm2478, %v4086, -inf
    %4107 = vmax.xlane.f32.xlu0 %v4106
    %v4108 = vpop.xlane.xlu0 %4107
    %v4109 = vsel %vm2478, %v4087, -inf
    %4110 = vmax.xlane.f32.xlu0 %v4109
    %v4111 = vpop.xlane.xlu0 %4110
    %v4112 = vsub.f32 %v4080, %v4090
    %v4113 = vsub.f32 %v4081, %v4093
    %v4114 = vsub.f32 %v4082, %v4096
    %v4115 = vsub.f32 %v4083, %v4099
    %v4116 = vsub.f32 %v4084, %v4102
    %v4117 = vsub.f32 %v4085, %v4105
    %v4118 = vsub.f32 %v4086, %v4108
    %v4119 = vsub.f32 %v4087, %v4111
    %v4120 = vmul.f32 %v4112, 1.442695
    %v4121 = vpow.pop %v4120
    %v4122 = vmul.f32 %v4113, 1.442695
    %v4123 = vpow.pop %v4122
    %v4124 = vmul.f32 %v4114, 1.442695
    %v4125 = vpow.pop %v4124
    %v4126 = vmul.f32 %v4115, 1.442695
    %v4127 = vpow.pop %v4126
    %v4128 = vmul.f32 %v4116, 1.442695
    %v4129 = vpow.pop %v4128
    %v4130 = vmul.f32 %v4117, 1.442695
    %v4131 = vpow.pop %v4130
    %v4132 = vmul.f32 %v4118, 1.442695
    %v4133 = vpow.pop %v4132
    %v4134 = vmul.f32 %v4119, 1.442695
    %v4135 = vpow.pop %v4134
    %v4136 = vsel %vm2478, %v4121, 0.0
    %4137 = vadd.xlane.f32.xlu0 %v4136
    %v4138 = vpop.xlane.xlu0 %4137
    %v4139 = vsel %vm2478, %v4123, 0.0
    %4140 = vadd.xlane.f32.xlu0 %v4139
    %v4141 = vpop.xlane.xlu0 %4140
    %v4142 = vsel %vm2478, %v4125, 0.0
    %4143 = vadd.xlane.f32.xlu0 %v4142
    %v4144 = vpop.xlane.xlu0 %4143
    %v4145 = vsel %vm2478, %v4127, 0.0
    %4146 = vadd.xlane.f32.xlu0 %v4145
    %v4147 = vpop.xlane.xlu0 %4146
    %v4148 = vsel %vm2478, %v4129, 0.0
    %4149 = vadd.xlane.f32.xlu0 %v4148
    %v4150 = vpop.xlane.xlu0 %4149
    %v4151 = vsel %vm2478, %v4131, 0.0
    %4152 = vadd.xlane.f32.xlu0 %v4151
    %v4153 = vpop.xlane.xlu0 %4152
    %v4154 = vsel %vm2478, %v4133, 0.0
    %4155 = vadd.xlane.f32.xlu0 %v4154
    %v4156 = vpop.xlane.xlu0 %4155
    %v4157 = vsel %vm2478, %v4135, 0.0
    %4158 = vadd.xlane.f32.xlu0 %v4157
    %v4159 = vpop.xlane.xlu0 %4158
    %v4160 = vrcp.pop %v4138
    %v4161 = vmul.f32 %v4138, %v4160
    %v4162 = vsub.f32 1.0, %v4161
    %v4163 = vmul.f32 %v4160, %v4162
    %v4164 = vadd.f32 %v4160, %v4163
    %vm4165 = vweird.f32 %v4138
    %vm4166 = vweird.f32 %v4160
    %vm4167 = vmor %vm4165, %vm4166
    %v4168 = vsel %vm4167, %v4160, %v4164
    %v4169 = vand.u32 2147483647, %v4138
    %vm4170 = vcmp.eq.f32.partialorder %v4169, 8.507059e+37
    %v4171 = vand.u32 %v4138, 2147483648
    %v4172 = vor.u32 1.1754944e-38, %v4171
    %v4173 = vsel %vm4170, %v4172, %v4168
    %v4174 = vmul.f32 %v4121, %v4173
    %v4175 = vrcp.pop %v4141
    %v4176 = vmul.f32 %v4141, %v4175
    %v4177 = vsub.f32 1.0, %v4176
    %v4178 = vmul.f32 %v4175, %v4177
    %v4179 = vadd.f32 %v4175, %v4178
    %vm4180 = vweird.f32 %v4141
    %vm4181 = vweird.f32 %v4175
    %vm4182 = vmor %vm4180, %vm4181
    %v4183 = vsel %vm4182, %v4175, %v4179
    %v4184 = vand.u32 2147483647, %v4141
    %vm4185 = vcmp.eq.f32.partialorder %v4184, 8.507059e+37
    %v4186 = vand.u32 %v4141, 2147483648
    %v4187 = vor.u32 1.1754944e-38, %v4186
    %v4188 = vsel %vm4185, %v4187, %v4183
    %v4189 = vmul.f32 %v4123, %v4188
    %v4190 = vrcp.pop %v4144
    %v4191 = vmul.f32 %v4144, %v4190
    %v4192 = vsub.f32 1.0, %v4191
    %v4193 = vmul.f32 %v4190, %v4192
    %v4194 = vadd.f32 %v4190, %v4193
    %vm4195 = vweird.f32 %v4144
    %vm4196 = vweird.f32 %v4190
    %vm4197 = vmor %vm4195, %vm4196
    %v4198 = vsel %vm4197, %v4190, %v4194
    %v4199 = vand.u32 2147483647, %v4144
    %vm4200 = vcmp.eq.f32.partialorder %v4199, 8.507059e+37
    %v4201 = vand.u32 %v4144, 2147483648
    %v4202 = vor.u32 1.1754944e-38, %v4201
    %v4203 = vsel %vm4200, %v4202, %v4198
    %v4204 = vmul.f32 %v4125, %v4203
    %v4205 = vrcp.pop %v4147
    %v4206 = vmul.f32 %v4147, %v4205
    %v4207 = vsub.f32 1.0, %v4206
    %v4208 = vmul.f32 %v4205, %v4207
    %v4209 = vadd.f32 %v4205, %v4208
    %vm4210 = vweird.f32 %v4147
    %vm4211 = vweird.f32 %v4205
    %vm4212 = vmor %vm4210, %vm4211
    %v4213 = vsel %vm4212, %v4205, %v4209
    %v4214 = vand.u32 2147483647, %v4147
    %vm4215 = vcmp.eq.f32.partialorder %v4214, 8.507059e+37
    %v4216 = vand.u32 %v4147, 2147483648
    %v4217 = vor.u32 1.1754944e-38, %v4216
    %v4218 = vsel %vm4215, %v4217, %v4213
    %v4219 = vmul.f32 %v4127, %v4218
    %v4220 = vrcp.pop %v4150
    %v4221 = vmul.f32 %v4150, %v4220
    %v4222 = vsub.f32 1.0, %v4221
    %v4223 = vmul.f32 %v4220, %v4222
    %v4224 = vadd.f32 %v4220, %v4223
    %vm4225 = vweird.f32 %v4150
    %vm4226 = vweird.f32 %v4220
    %vm4227 = vmor %vm4225, %vm4226
    %v4228 = vsel %vm4227, %v4220, %v4224
    %v4229 = vand.u32 2147483647, %v4150
    %vm4230 = vcmp.eq.f32.partialorder %v4229, 8.507059e+37
    %v4231 = vand.u32 %v4150, 2147483648
    %v4232 = vor.u32 1.1754944e-38, %v4231
    %v4233 = vsel %vm4230, %v4232, %v4228
    %v4234 = vmul.f32 %v4129, %v4233
    %v4235 = vrcp.pop %v4153
    %v4236 = vmul.f32 %v4153, %v4235
    %v4237 = vsub.f32 1.0, %v4236
    %v4238 = vmul.f32 %v4235, %v4237
    %v4239 = vadd.f32 %v4235, %v4238
    %vm4240 = vweird.f32 %v4153
    %vm4241 = vweird.f32 %v4235
    %vm4242 = vmor %vm4240, %vm4241
    %v4243 = vsel %vm4242, %v4235, %v4239
    %v4244 = vand.u32 2147483647, %v4153
    %vm4245 = vcmp.eq.f32.partialorder %v4244, 8.507059e+37
    %v4246 = vand.u32 %v4153, 2147483648
    %v4247 = vor.u32 1.1754944e-38, %v4246
    %v4248 = vsel %vm4245, %v4247, %v4243
    %v4249 = vmul.f32 %v4131, %v4248
    %v4250 = vrcp.pop %v4156
    %v4251 = vmul.f32 %v4156, %v4250
    %v4252 = vsub.f32 1.0, %v4251
    %v4253 = vmul.f32 %v4250, %v4252
    %v4254 = vadd.f32 %v4250, %v4253
    %vm4255 = vweird.f32 %v4156
    %vm4256 = vweird.f32 %v4250
    %vm4257 = vmor %vm4255, %vm4256
    %v4258 = vsel %vm4257, %v4250, %v4254
    %v4259 = vand.u32 2147483647, %v4156
    %vm4260 = vcmp.eq.f32.partialorder %v4259, 8.507059e+37
    %v4261 = vand.u32 %v4156, 2147483648
    %v4262 = vor.u32 1.1754944e-38, %v4261
    %v4263 = vsel %vm4260, %v4262, %v4258
    %v4264 = vmul.f32 %v4133, %v4263
    %v4265 = vrcp.pop %v4159
    %v4266 = vmul.f32 %v4159, %v4265
    %v4267 = vsub.f32 1.0, %v4266
    %v4268 = vmul.f32 %v4265, %v4267
    %v4269 = vadd.f32 %v4265, %v4268
    %vm4270 = vweird.f32 %v4159
    %vm4271 = vweird.f32 %v4265
    %vm4272 = vmor %vm4270, %vm4271
    %v4273 = vsel %vm4272, %v4265, %v4269
    %v4274 = vand.u32 2147483647, %v4159
    %vm4275 = vcmp.eq.f32.partialorder %v4274, 8.507059e+37
    %v4276 = vand.u32 %v4159, 2147483648
    %v4277 = vor.u32 1.1754944e-38, %v4276
    %v4278 = vsel %vm4275, %v4277, %v4273
    %v4279 = vmul.f32 %v4135, %v4278
    %v4281 = vsel %vm2478, %v4174, 0
    %v4284 = vsel %vm2478, %v4189, 0
    %v4287 = vsel %vm2478, %v4204, 0
    %v4290 = vsel %vm2478, %v4219, 0
    %v4293 = vsel %vm2478, %v4234, 0
    %v4296 = vsel %vm2478, %v4249, 0
    %v4299 = vsel %vm2478, %v4264, 0
    %v4302 = vsel %vm2478, %v4279, 0
    %4304 = vmatpush.msra.mxu0 0.0
    %4305 = vmatpush.msra.mxu0 0.0
    %4306 = vmatpush.msra.mxu0 0.0
    %4307 = vmatpush.msra.mxu0 0.0
    %4308 = vmatpush.msra.mxu0 0.0
    %4309 = vmatpush.msra.mxu0 0.0
    %4310 = vmatpush.msra.mxu0 0.0
    %4311 = vmatpush.msra.mxu0 0.0
    %4312 = vmatpush.msra.mxu0 %v2288
    %4313 = vmatpush.msra.mxu0 %v2285
    %4314 = vmatpush.msra.mxu0 %v2282
    %4315 = vmatpush.msra.mxu0 %v2279
    %4316 = vmatpush.msra.mxu0 %v2276
    %4317 = vmatpush.msra.mxu0 %v2273
    %4318 = vmatpush.msra.mxu0 %v2270
    %4319 = vmatpush.msra.mxu0 %v2267
    %4320 = vmatmul.f32.gmra.mxu0 %v4281
    %v4321 = vpop.f32.mrf.mxu0
    %v4322 = vadd.f32 0.0, %v4321
    %4323 = vmatmul.f32.gmra.mxu0 %v4284
    %v4324 = vpop.f32.mrf.mxu0
    %v4325 = vadd.f32 0.0, %v4324
    %4326 = vmatmul.f32.gmra.mxu0 %v4287
    %v4327 = vpop.f32.mrf.mxu0
    %v4328 = vadd.f32 0.0, %v4327
    %4329 = vmatmul.f32.gmra.mxu0 %v4290
    %v4330 = vpop.f32.mrf.mxu0
    %v4331 = vadd.f32 0.0, %v4330
    %4332 = vmatmul.f32.gmra.mxu0 %v4293
    %v4333 = vpop.f32.mrf.mxu0
    %v4334 = vadd.f32 0.0, %v4333
    %4335 = vmatmul.f32.gmra.mxu0 %v4296
    %v4336 = vpop.f32.mrf.mxu0
    %v4337 = vadd.f32 0.0, %v4336
    %4338 = vmatmul.f32.gmra.mxu0 %v4299
    %v4339 = vpop.f32.mrf.mxu0
    %v4340 = vadd.f32 0.0, %v4339
    %4341 = vmatmul.f32.gmra.mxu0 %v4302
    %v4342 = vpop.f32.mrf.mxu0
    %v4343 = vadd.f32 0.0, %v4342
    %4344 = vdwg.mxu0
    %4345 = vrot.lane.b32.xlu0 %v1097, 64
    %v4346 = vpop.permute.xlu0 %4345
    %4347 = vrot.lane.b32.xlu0 %v1100, 64
    %v4348 = vpop.permute.xlu0 %4347
    %4349 = vrot.lane.b32.xlu0 %v1103, 64
    %v4350 = vpop.permute.xlu0 %4349
    %4351 = vrot.lane.b32.xlu0 %v1106, 64
    %v4352 = vpop.permute.xlu0 %4351
    %4353 = vrot.lane.b32.xlu0 %v1109, 64
    %v4354 = vpop.permute.xlu0 %4353
    %4355 = vrot.lane.b32.xlu0 %v1112, 64
    %v4356 = vpop.permute.xlu0 %4355
    %4357 = vrot.lane.b32.xlu0 %v1115, 64
    %v4358 = vpop.permute.xlu0 %4357
    %4359 = vrot.lane.b32.xlu0 %v1118, 64
    %v4360 = vpop.permute.xlu0 %4359
    %4361 = vrot.lane.b32.xlu0 %v1682, 64
    %v4362 = vpop.permute.xlu0 %4361
    %4363 = vrot.lane.b32.xlu0 %v1685, 64
    %v4364 = vpop.permute.xlu0 %4363
    %4365 = vrot.lane.b32.xlu0 %v1688, 64
    %v4366 = vpop.permute.xlu0 %4365
    %4367 = vrot.lane.b32.xlu0 %v1691, 64
    %v4368 = vpop.permute.xlu0 %4367
    %4369 = vrot.lane.b32.xlu0 %v1694, 64
    %v4370 = vpop.permute.xlu0 %4369
    %4371 = vrot.lane.b32.xlu0 %v1697, 64
    %v4372 = vpop.permute.xlu0 %4371
    %4373 = vrot.lane.b32.xlu0 %v1700, 64
    %v4374 = vpop.permute.xlu0 %4373
    %4375 = vrot.lane.b32.xlu0 %v1703, 64
    %v4376 = vpop.permute.xlu0 %4375
    %v4377 = vsel %vm2478, %v4346, 0
    %v4379 = vsel %vm2478, %v4348, 0
    %v4381 = vsel %vm2478, %v4350, 0
    %v4383 = vsel %vm2478, %v4352, 0
    %v4385 = vsel %vm2478, %v4354, 0
    %v4387 = vsel %vm2478, %v4356, 0
    %v4389 = vsel %vm2478, %v4358, 0
    %v4391 = vsel %vm2478, %v4360, 0
    %v4393 = vsel %vm2478, %v4362, 0
    %v4395 = vsel %vm2478, %v4364, 0
    %v4397 = vsel %vm2478, %v4366, 0
    %v4399 = vsel %vm2478, %v4368, 0
    %v4401 = vsel %vm2478, %v4370, 0
    %v4403 = vsel %vm2478, %v4372, 0
    %v4405 = vsel %vm2478, %v4374, 0
    %v4407 = vsel %vm2478, %v4376, 0
    %4409 = vmatpush.xpose.msra.mxu0 0.0
    %4410 = vmatpush.xpose.msra.mxu0 0.0
    %4411 = vmatpush.xpose.msra.mxu0 0.0
    %4412 = vmatpush.xpose.msra.mxu0 0.0
    %4413 = vmatpush.xpose.msra.mxu0 0.0
    %4414 = vmatpush.xpose.msra.mxu0 0.0
    %4415 = vmatpush.xpose.msra.mxu0 0.0
    %4416 = vmatpush.xpose.msra.mxu0 0.0
    %4417 = vmatpush.xpose.msra.mxu0 %v4407
    %4418 = vmatpush.xpose.msra.mxu0 %v4405
    %4419 = vmatpush.xpose.msra.mxu0 %v4403
    %4420 = vmatpush.xpose.msra.mxu0 %v4401
    %4421 = vmatpush.xpose.msra.mxu0 %v4399
    %4422 = vmatpush.xpose.msra.mxu0 %v4397
    %4423 = vmatpush.xpose.msra.mxu0 %v4395
    %4424 = vmatpush.xpose.msra.mxu0 %v4393
    %4425 = vmatmul.f32.gmra.mxu0 %v4377
    %v4426 = vpop.f32.mrf.mxu0
    %v4427 = vadd.f32 0.0, %v4426
    %4428 = vmatmul.f32.gmra.mxu0 %v4379
    %v4429 = vpop.f32.mrf.mxu0
    %v4430 = vadd.f32 0.0, %v4429
    %4431 = vmatmul.f32.gmra.mxu0 %v4381
    %v4432 = vpop.f32.mrf.mxu0
    %v4433 = vadd.f32 0.0, %v4432
    %4434 = vmatmul.f32.gmra.mxu0 %v4383
    %v4435 = vpop.f32.mrf.mxu0
    %v4436 = vadd.f32 0.0, %v4435
    %4437 = vmatmul.f32.gmra.mxu0 %v4385
    %v4438 = vpop.f32.mrf.mxu0
    %v4439 = vadd.f32 0.0, %v4438
    %4440 = vmatmul.f32.gmra.mxu0 %v4387
    %v4441 = vpop.f32.mrf.mxu0
    %v4442 = vadd.f32 0.0, %v4441
    %4443 = vmatmul.f32.gmra.mxu0 %v4389
    %v4444 = vpop.f32.mrf.mxu0
    %v4445 = vadd.f32 0.0, %v4444
    %4446 = vmatmul.f32.gmra.mxu0 %v4391
    %v4447 = vpop.f32.mrf.mxu0
    %v4448 = vadd.f32 0.0, %v4447
    %4449 = vdwg.mxu0
    %v4450 = vsel %vm2470, %v4427, -inf
    %v4451 = vsel %vm2471, %v4430, -inf
    %v4452 = vsel %vm2472, %v4433, -inf
    %v4453 = vsel %vm2473, %v4436, -inf
    %v4454 = vsel %vm2474, %v4439, -inf
    %v4455 = vsel %vm2475, %v4442, -inf
    %v4456 = vsel %vm2476, %v4445, -inf
    %v4457 = vsel %vm2477, %v4448, -inf
    %v4458 = vsel %vm2478, %v4450, -inf
    %4459 = vmax.xlane.f32.xlu0 %v4458
    %v4460 = vpop.xlane.xlu0 %4459
    %v4461 = vsel %vm2478, %v4451, -inf
    %4462 = vmax.xlane.f32.xlu0 %v4461
    %v4463 = vpop.xlane.xlu0 %4462
    %v4464 = vsel %vm2478, %v4452, -inf
    %4465 = vmax.xlane.f32.xlu0 %v4464
    %v4466 = vpop.xlane.xlu0 %4465
    %v4467 = vsel %vm2478, %v4453, -inf
    %4468 = vmax.xlane.f32.xlu0 %v4467
    %v4469 = vpop.xlane.xlu0 %4468
    %v4470 = vsel %vm2478, %v4454, -inf
    %4471 = vmax.xlane.f32.xlu0 %v4470
    %v4472 = vpop.xlane.xlu0 %4471
    %v4473 = vsel %vm2478, %v4455, -inf
    %4474 = vmax.xlane.f32.xlu0 %v4473
    %v4475 = vpop.xlane.xlu0 %4474
    %v4476 = vsel %vm2478, %v4456, -inf
    %4477 = vmax.xlane.f32.xlu0 %v4476
    %v4478 = vpop.xlane.xlu0 %4477
    %v4479 = vsel %vm2478, %v4457, -inf
    %4480 = vmax.xlane.f32.xlu0 %v4479
    %v4481 = vpop.xlane.xlu0 %4480
    %v4482 = vsub.f32 %v4450, %v4460
    %v4483 = vsub.f32 %v4451, %v4463
    %v4484 = vsub.f32 %v4452, %v4466
    %v4485 = vsub.f32 %v4453, %v4469
    %v4486 = vsub.f32 %v4454, %v4472
    %v4487 = vsub.f32 %v4455, %v4475
    %v4488 = vsub.f32 %v4456, %v4478
    %v4489 = vsub.f32 %v4457, %v4481
    %v4490 = vmul.f32 %v4482, 1.442695
    %v4491 = vpow.pop %v4490
    %v4492 = vmul.f32 %v4483, 1.442695
    %v4493 = vpow.pop %v4492
    %v4494 = vmul.f32 %v4484, 1.442695
    %v4495 = vpow.pop %v4494
    %v4496 = vmul.f32 %v4485, 1.442695
    %v4497 = vpow.pop %v4496
    %v4498 = vmul.f32 %v4486, 1.442695
    %v4499 = vpow.pop %v4498
    %v4500 = vmul.f32 %v4487, 1.442695
    %v4501 = vpow.pop %v4500
    %v4502 = vmul.f32 %v4488, 1.442695
    %v4503 = vpow.pop %v4502
    %v4504 = vmul.f32 %v4489, 1.442695
    %v4505 = vpow.pop %v4504
    %v4506 = vsel %vm2478, %v4491, 0.0
    %4507 = vadd.xlane.f32.xlu0 %v4506
    %v4508 = vpop.xlane.xlu0 %4507
    %v4509 = vsel %vm2478, %v4493, 0.0
    %4510 = vadd.xlane.f32.xlu0 %v4509
    %v4511 = vpop.xlane.xlu0 %4510
    %v4512 = vsel %vm2478, %v4495, 0.0
    %4513 = vadd.xlane.f32.xlu0 %v4512
    %v4514 = vpop.xlane.xlu0 %4513
    %v4515 = vsel %vm2478, %v4497, 0.0
    %4516 = vadd.xlane.f32.xlu0 %v4515
    %v4517 = vpop.xlane.xlu0 %4516
    %v4518 = vsel %vm2478, %v4499, 0.0
    %4519 = vadd.xlane.f32.xlu0 %v4518
    %v4520 = vpop.xlane.xlu0 %4519
    %v4521 = vsel %vm2478, %v4501, 0.0
    %4522 = vadd.xlane.f32.xlu0 %v4521
    %v4523 = vpop.xlane.xlu0 %4522
    %v4524 = vsel %vm2478, %v4503, 0.0
    %4525 = vadd.xlane.f32.xlu0 %v4524
    %v4526 = vpop.xlane.xlu0 %4525
    %v4527 = vsel %vm2478, %v4505, 0.0
    %4528 = vadd.xlane.f32.xlu0 %v4527
    %v4529 = vpop.xlane.xlu0 %4528
    %v4530 = vrcp.pop %v4508
    %v4531 = vmul.f32 %v4508, %v4530
    %v4532 = vsub.f32 1.0, %v4531
    %v4533 = vmul.f32 %v4530, %v4532
    %v4534 = vadd.f32 %v4530, %v4533
    %vm4535 = vweird.f32 %v4508
    %vm4536 = vweird.f32 %v4530
    %vm4537 = vmor %vm4535, %vm4536
    %v4538 = vsel %vm4537, %v4530, %v4534
    %v4539 = vand.u32 2147483647, %v4508
    %vm4540 = vcmp.eq.f32.partialorder %v4539, 8.507059e+37
    %v4541 = vand.u32 %v4508, 2147483648
    %v4542 = vor.u32 1.1754944e-38, %v4541
    %v4543 = vsel %vm4540, %v4542, %v4538
    %v4544 = vmul.f32 %v4491, %v4543
    %v4545 = vrcp.pop %v4511
    %v4546 = vmul.f32 %v4511, %v4545
    %v4547 = vsub.f32 1.0, %v4546
    %v4548 = vmul.f32 %v4545, %v4547
    %v4549 = vadd.f32 %v4545, %v4548
    %vm4550 = vweird.f32 %v4511
    %vm4551 = vweird.f32 %v4545
    %vm4552 = vmor %vm4550, %vm4551
    %v4553 = vsel %vm4552, %v4545, %v4549
    %v4554 = vand.u32 2147483647, %v4511
    %vm4555 = vcmp.eq.f32.partialorder %v4554, 8.507059e+37
    %v4556 = vand.u32 %v4511, 2147483648
    %v4557 = vor.u32 1.1754944e-38, %v4556
    %v4558 = vsel %vm4555, %v4557, %v4553
    %v4559 = vmul.f32 %v4493, %v4558
    %v4560 = vrcp.pop %v4514
    %v4561 = vmul.f32 %v4514, %v4560
    %v4562 = vsub.f32 1.0, %v4561
    %v4563 = vmul.f32 %v4560, %v4562
    %v4564 = vadd.f32 %v4560, %v4563
    %vm4565 = vweird.f32 %v4514
    %vm4566 = vweird.f32 %v4560
    %vm4567 = vmor %vm4565, %vm4566
    %v4568 = vsel %vm4567, %v4560, %v4564
    %v4569 = vand.u32 2147483647, %v4514
    %vm4570 = vcmp.eq.f32.partialorder %v4569, 8.507059e+37
    %v4571 = vand.u32 %v4514, 2147483648
    %v4572 = vor.u32 1.1754944e-38, %v4571
    %v4573 = vsel %vm4570, %v4572, %v4568
    %v4574 = vmul.f32 %v4495, %v4573
    %v4575 = vrcp.pop %v4517
    %v4576 = vmul.f32 %v4517, %v4575
    %v4577 = vsub.f32 1.0, %v4576
    %v4578 = vmul.f32 %v4575, %v4577
    %v4579 = vadd.f32 %v4575, %v4578
    %vm4580 = vweird.f32 %v4517
    %vm4581 = vweird.f32 %v4575
    %vm4582 = vmor %vm4580, %vm4581
    %v4583 = vsel %vm4582, %v4575, %v4579
    %v4584 = vand.u32 2147483647, %v4517
    %vm4585 = vcmp.eq.f32.partialorder %v4584, 8.507059e+37
    %v4586 = vand.u32 %v4517, 2147483648
    %v4587 = vor.u32 1.1754944e-38, %v4586
    %v4588 = vsel %vm4585, %v4587, %v4583
    %v4589 = vmul.f32 %v4497, %v4588
    %v4590 = vrcp.pop %v4520
    %v4591 = vmul.f32 %v4520, %v4590
    %v4592 = vsub.f32 1.0, %v4591
    %v4593 = vmul.f32 %v4590, %v4592
    %v4594 = vadd.f32 %v4590, %v4593
    %vm4595 = vweird.f32 %v4520
    %vm4596 = vweird.f32 %v4590
    %vm4597 = vmor %vm4595, %vm4596
    %v4598 = vsel %vm4597, %v4590, %v4594
    %v4599 = vand.u32 2147483647, %v4520
    %vm4600 = vcmp.eq.f32.partialorder %v4599, 8.507059e+37
    %v4601 = vand.u32 %v4520, 2147483648
    %v4602 = vor.u32 1.1754944e-38, %v4601
    %v4603 = vsel %vm4600, %v4602, %v4598
    %v4604 = vmul.f32 %v4499, %v4603
    %v4605 = vrcp.pop %v4523
    %v4606 = vmul.f32 %v4523, %v4605
    %v4607 = vsub.f32 1.0, %v4606
    %v4608 = vmul.f32 %v4605, %v4607
    %v4609 = vadd.f32 %v4605, %v4608
    %vm4610 = vweird.f32 %v4523
    %vm4611 = vweird.f32 %v4605
    %vm4612 = vmor %vm4610, %vm4611
    %v4613 = vsel %vm4612, %v4605, %v4609
    %v4614 = vand.u32 2147483647, %v4523
    %vm4615 = vcmp.eq.f32.partialorder %v4614, 8.507059e+37
    %v4616 = vand.u32 %v4523, 2147483648
    %v4617 = vor.u32 1.1754944e-38, %v4616
    %v4618 = vsel %vm4615, %v4617, %v4613
    %v4619 = vmul.f32 %v4501, %v4618
    %v4620 = vrcp.pop %v4526
    %v4621 = vmul.f32 %v4526, %v4620
    %v4622 = vsub.f32 1.0, %v4621
    %v4623 = vmul.f32 %v4620, %v4622
    %v4624 = vadd.f32 %v4620, %v4623
    %vm4625 = vweird.f32 %v4526
    %vm4626 = vweird.f32 %v4620
    %vm4627 = vmor %vm4625, %vm4626
    %v4628 = vsel %vm4627, %v4620, %v4624
    %v4629 = vand.u32 2147483647, %v4526
    %vm4630 = vcmp.eq.f32.partialorder %v4629, 8.507059e+37
    %v4631 = vand.u32 %v4526, 2147483648
    %v4632 = vor.u32 1.1754944e-38, %v4631
    %v4633 = vsel %vm4630, %v4632, %v4628
    %v4634 = vmul.f32 %v4503, %v4633
    %v4635 = vrcp.pop %v4529
    %v4636 = vmul.f32 %v4529, %v4635
    %v4637 = vsub.f32 1.0, %v4636
    %v4638 = vmul.f32 %v4635, %v4637
    %v4639 = vadd.f32 %v4635, %v4638
    %vm4640 = vweird.f32 %v4529
    %vm4641 = vweird.f32 %v4635
    %vm4642 = vmor %vm4640, %vm4641
    %v4643 = vsel %vm4642, %v4635, %v4639
    %v4644 = vand.u32 2147483647, %v4529
    %vm4645 = vcmp.eq.f32.partialorder %v4644, 8.507059e+37
    %v4646 = vand.u32 %v4529, 2147483648
    %v4647 = vor.u32 1.1754944e-38, %v4646
    %v4648 = vsel %vm4645, %v4647, %v4643
    %v4649 = vmul.f32 %v4505, %v4648
    %4658 = vrot.lane.b32.xlu0 %v2267, 64
    %v4659 = vpop.permute.xlu0 %4658
    %4660 = vrot.lane.b32.xlu0 %v2270, 64
    %v4661 = vpop.permute.xlu0 %4660
    %4662 = vrot.lane.b32.xlu0 %v2273, 64
    %v4663 = vpop.permute.xlu0 %4662
    %4664 = vrot.lane.b32.xlu0 %v2276, 64
    %v4665 = vpop.permute.xlu0 %4664
    %4666 = vrot.lane.b32.xlu0 %v2279, 64
    %v4667 = vpop.permute.xlu0 %4666
    %4668 = vrot.lane.b32.xlu0 %v2282, 64
    %v4669 = vpop.permute.xlu0 %4668
    %4670 = vrot.lane.b32.xlu0 %v2285, 64
    %v4671 = vpop.permute.xlu0 %4670
    %4672 = vrot.lane.b32.xlu0 %v2288, 64
    %v4673 = vpop.permute.xlu0 %4672
    %v4683 = vsel %vm2478, %v4544, 0
    %v4686 = vsel %vm2478, %v4559, 0
    %v4689 = vsel %vm2478, %v4574, 0
    %v4692 = vsel %vm2478, %v4589, 0
    %v4695 = vsel %vm2478, %v4604, 0
    %v4698 = vsel %vm2478, %v4619, 0
    %v4701 = vsel %vm2478, %v4634, 0
    %v4704 = vsel %vm2478, %v4649, 0
    %4706 = vmatpush.msra.mxu0 0.0
    %4707 = vmatpush.msra.mxu0 0.0
    %4708 = vmatpush.msra.mxu0 0.0
    %4709 = vmatpush.msra.mxu0 0.0
    %4710 = vmatpush.msra.mxu0 0.0
    %4711 = vmatpush.msra.mxu0 0.0
    %4712 = vmatpush.msra.mxu0 0.0
    %4713 = vmatpush.msra.mxu0 0.0
    %4714 = vmatpush.msra.mxu0 %v4673
    %4715 = vmatpush.msra.mxu0 %v4671
    %4716 = vmatpush.msra.mxu0 %v4669
    %4717 = vmatpush.msra.mxu0 %v4667
    %4718 = vmatpush.msra.mxu0 %v4665
    %4719 = vmatpush.msra.mxu0 %v4663
    %4720 = vmatpush.msra.mxu0 %v4661
    %4721 = vmatpush.msra.mxu0 %v4659
    %4722 = vmatmul.f32.gmra.mxu0 %v4683
    %v4723 = vpop.f32.mrf.mxu0
    %v4724 = vadd.f32 0.0, %v4723
    %4725 = vmatmul.f32.gmra.mxu0 %v4686
    %v4726 = vpop.f32.mrf.mxu0
    %v4727 = vadd.f32 0.0, %v4726
    %4728 = vmatmul.f32.gmra.mxu0 %v4689
    %v4729 = vpop.f32.mrf.mxu0
    %v4730 = vadd.f32 0.0, %v4729
    %4731 = vmatmul.f32.gmra.mxu0 %v4692
    %v4732 = vpop.f32.mrf.mxu0
    %v4733 = vadd.f32 0.0, %v4732
    %4734 = vmatmul.f32.gmra.mxu0 %v4695
    %v4735 = vpop.f32.mrf.mxu0
    %v4736 = vadd.f32 0.0, %v4735
    %4737 = vmatmul.f32.gmra.mxu0 %v4698
    %v4738 = vpop.f32.mrf.mxu0
    %v4739 = vadd.f32 0.0, %v4738
    %4740 = vmatmul.f32.gmra.mxu0 %v4701
    %v4741 = vpop.f32.mrf.mxu0
    %v4742 = vadd.f32 0.0, %v4741
    %4743 = vmatmul.f32.gmra.mxu0 %v4704
    %v4744 = vpop.f32.mrf.mxu0
    %v4745 = vadd.f32 0.0, %v4744
    %4746 = vdwg.mxu0
    %4755 = vrot.lane.b32.xlu0 %v3212, 64
    %v4756 = vpop.permute.xlu0 %4755
    %4757 = vrot.lane.b32.xlu0 %v3215, 64
    %v4758 = vpop.permute.xlu0 %4757
    %4759 = vrot.lane.b32.xlu0 %v3218, 64
    %v4760 = vpop.permute.xlu0 %4759
    %4761 = vrot.lane.b32.xlu0 %v3221, 64
    %v4762 = vpop.permute.xlu0 %4761
    %4763 = vrot.lane.b32.xlu0 %v3224, 64
    %v4764 = vpop.permute.xlu0 %4763
    %4765 = vrot.lane.b32.xlu0 %v3227, 64
    %v4766 = vpop.permute.xlu0 %4765
    %4767 = vrot.lane.b32.xlu0 %v3230, 64
    %v4768 = vpop.permute.xlu0 %4767
    %4769 = vrot.lane.b32.xlu0 %v3233, 64
    %v4770 = vpop.permute.xlu0 %4769
    %4787 = vrot.lane.b32.xlu0 %v3968, 64
    %v4788 = vpop.permute.xlu0 %4787
    %4789 = vrot.lane.b32.xlu0 %v3971, 64
    %v4790 = vpop.permute.xlu0 %4789
    %4791 = vrot.lane.b32.xlu0 %v3974, 64
    %v4792 = vpop.permute.xlu0 %4791
    %4793 = vrot.lane.b32.xlu0 %v3977, 64
    %v4794 = vpop.permute.xlu0 %4793
    %4795 = vrot.lane.b32.xlu0 %v3980, 64
    %v4796 = vpop.permute.xlu0 %4795
    %4797 = vrot.lane.b32.xlu0 %v3983, 64
    %v4798 = vpop.permute.xlu0 %4797
    %4799 = vrot.lane.b32.xlu0 %v3986, 64
    %v4800 = vpop.permute.xlu0 %4799
    %4801 = vrot.lane.b32.xlu0 %v3989, 64
    %v4802 = vpop.permute.xlu0 %4801
    %4819 = vrot.lane.b32.xlu0 %v4724, 64
    %v4820 = vpop.permute.xlu0 %4819
    %4821 = vrot.lane.b32.xlu0 %v4727, 64
    %v4822 = vpop.permute.xlu0 %4821
    %4823 = vrot.lane.b32.xlu0 %v4730, 64
    %v4824 = vpop.permute.xlu0 %4823
    %4825 = vrot.lane.b32.xlu0 %v4733, 64
    %v4826 = vpop.permute.xlu0 %4825
    %4827 = vrot.lane.b32.xlu0 %v4736, 64
    %v4828 = vpop.permute.xlu0 %4827
    %4829 = vrot.lane.b32.xlu0 %v4739, 64
    %v4830 = vpop.permute.xlu0 %4829
    %4831 = vrot.lane.b32.xlu0 %v4742, 64
    %v4832 = vpop.permute.xlu0 %4831
    %4833 = vrot.lane.b32.xlu0 %v4745, 64
    %v4834 = vpop.permute.xlu0 %4833
    %v4843 = vsel %vm2478, %v2810, %v4756
    %v4844 = vsel %vm2478, %v2813, %v4758
    %v4845 = vsel %vm2478, %v2816, %v4760
    %v4846 = vsel %vm2478, %v2819, %v4762
    %v4847 = vsel %vm2478, %v2822, %v4764
    %v4848 = vsel %vm2478, %v2825, %v4766
    %v4849 = vsel %vm2478, %v2828, %v4768
    %v4850 = vsel %vm2478, %v2831, %v4770
    %v4851 = vsel %vm2478, %v3566, %v4788
    %v4852 = vsel %vm2478, %v3569, %v4790
    %v4853 = vsel %vm2478, %v3572, %v4792
    %v4854 = vsel %vm2478, %v3575, %v4794
    %v4855 = vsel %vm2478, %v3578, %v4796
    %v4856 = vsel %vm2478, %v3581, %v4798
    %v4857 = vsel %vm2478, %v3584, %v4800
    %v4858 = vsel %vm2478, %v3587, %v4802
    %v4859 = vsel %vm2478, %v4322, %v4820
    %v4860 = vsel %vm2478, %v4325, %v4822
    %v4861 = vsel %vm2478, %v4328, %v4824
    %v4862 = vsel %vm2478, %v4331, %v4826
    %v4863 = vsel %vm2478, %v4334, %v4828
    %v4864 = vsel %vm2478, %v4337, %v4830
    %v4865 = vsel %vm2478, %v4340, %v4832
    %v4866 = vsel %vm2478, %v4343, %v4834
    %v4868 = vperm.slane %v2458, 0
    %v4869 = vperm.slane %v2458, 1
    %v4870 = vperm.slane %v2458, 2
    %4874 = vmatpush.msra.mxu0 %v2359
    %4875 = vmatpush.msra.mxu0 %v2356
    %4876 = vmatpush.msra.mxu0 %v2353
    %4877 = vmatpush.msra.mxu0 %v2350
    %4878 = vmatpush.msra.mxu0 %v2347
    %4879 = vmatpush.msra.mxu0 %v2344
    %4880 = vmatpush.msra.mxu0 %v2341
    %4881 = vmatpush.msra.mxu0 %v2338
    %4882 = vmatpush.msra.mxu0 %v2335
    %4883 = vmatpush.msra.mxu0 %v2332
    %4884 = vmatpush.msra.mxu0 %v2329
    %4885 = vmatpush.msra.mxu0 %v2326
    %4886 = vmatpush.msra.mxu0 %v2323
    %4887 = vmatpush.msra.mxu0 %v2320
    %4888 = vmatpush.msra.mxu0 %v2317
    %4889 = vmatpush.msra.mxu0 %v2314
    %4890 = vmatmul.f32.gmra.mxu0 %v4843
    %v4891 = vpop.f32.mrf.mxu0
    %v4892 = vadd.f32 %v4868, %v4891
    %4893 = vmatmul.f32.gmra.mxu0 %v4844
    %v4894 = vpop.f32.mrf.mxu0
    %v4895 = vadd.f32 %v4868, %v4894
    %4896 = vmatmul.f32.gmra.mxu0 %v4845
    %v4897 = vpop.f32.mrf.mxu0
    %v4898 = vadd.f32 %v4868, %v4897
    %4899 = vmatmul.f32.gmra.mxu0 %v4846
    %v4900 = vpop.f32.mrf.mxu0
    %v4901 = vadd.f32 %v4868, %v4900
    %4902 = vmatmul.f32.gmra.mxu0 %v4847
    %v4903 = vpop.f32.mrf.mxu0
    %v4904 = vadd.f32 %v4868, %v4903
    %4905 = vmatmul.f32.gmra.mxu0 %v4848
    %v4906 = vpop.f32.mrf.mxu0
    %v4907 = vadd.f32 %v4868, %v4906
    %4908 = vmatmul.f32.gmra.mxu0 %v4849
    %v4909 = vpop.f32.mrf.mxu0
    %v4910 = vadd.f32 %v4868, %v4909
    %4911 = vmatmul.f32.gmra.mxu0 %v4850
    %v4912 = vpop.f32.mrf.mxu0
    %v4913 = vadd.f32 %v4868, %v4912
    %4914 = vdwg.mxu0
    %4915 = vmatpush.msra.mxu0 %v2407
    %4916 = vmatpush.msra.mxu0 %v2404
    %4917 = vmatpush.msra.mxu0 %v2401
    %4918 = vmatpush.msra.mxu0 %v2398
    %4919 = vmatpush.msra.mxu0 %v2395
    %4920 = vmatpush.msra.mxu0 %v2392
    %4921 = vmatpush.msra.mxu0 %v2389
    %4922 = vmatpush.msra.mxu0 %v2386
    %4923 = vmatpush.msra.mxu0 %v2383
    %4924 = vmatpush.msra.mxu0 %v2380
    %4925 = vmatpush.msra.mxu0 %v2377
    %4926 = vmatpush.msra.mxu0 %v2374
    %4927 = vmatpush.msra.mxu0 %v2371
    %4928 = vmatpush.msra.mxu0 %v2368
    %4929 = vmatpush.msra.mxu0 %v2365
    %4930 = vmatpush.msra.mxu0 %v2362
    %4931 = vmatmul.f32.gmra.mxu0 %v4851
    %v4932 = vpop.f32.mrf.mxu0
    %v4933 = vadd.f32 %v4892, %v4932
    %4934 = vmatmul.f32.gmra.mxu0 %v4852
    %v4935 = vpop.f32.mrf.mxu0
    %v4936 = vadd.f32 %v4895, %v4935
    %4937 = vmatmul.f32.gmra.mxu0 %v4853
    %v4938 = vpop.f32.mrf.mxu0
    %v4939 = vadd.f32 %v4898, %v4938
    %4940 = vmatmul.f32.gmra.mxu0 %v4854
    %v4941 = vpop.f32.mrf.mxu0
    %v4942 = vadd.f32 %v4901, %v4941
    %4943 = vmatmul.f32.gmra.mxu0 %v4855
    %v4944 = vpop.f32.mrf.mxu0
    %v4945 = vadd.f32 %v4904, %v4944
    %4946 = vmatmul.f32.gmra.mxu0 %v4856
    %v4947 = vpop.f32.mrf.mxu0
    %v4948 = vadd.f32 %v4907, %v4947
    %4949 = vmatmul.f32.gmra.mxu0 %v4857
    %v4950 = vpop.f32.mrf.mxu0
    %v4951 = vadd.f32 %v4910, %v4950
    %4952 = vmatmul.f32.gmra.mxu0 %v4858
    %v4953 = vpop.f32.mrf.mxu0
    %v4954 = vadd.f32 %v4913, %v4953
    %4955 = vdwg.mxu0
    %4956 = vmatpush.msra.mxu0 %v2455
    %4957 = vmatpush.msra.mxu0 %v2452
    %4958 = vmatpush.msra.mxu0 %v2449
    %4959 = vmatpush.msra.mxu0 %v2446
    %4960 = vmatpush.msra.mxu0 %v2443
    %4961 = vmatpush.msra.mxu0 %v2440
    %4962 = vmatpush.msra.mxu0 %v2437
    %4963 = vmatpush.msra.mxu0 %v2434
    %4964 = vmatpush.msra.mxu0 %v2431
    %4965 = vmatpush.msra.mxu0 %v2428
    %4966 = vmatpush.msra.mxu0 %v2425
    %4967 = vmatpush.msra.mxu0 %v2422
    %4968 = vmatpush.msra.mxu0 %v2419
    %4969 = vmatpush.msra.mxu0 %v2416
    %4970 = vmatpush.msra.mxu0 %v2413
    %4971 = vmatpush.msra.mxu0 %v2410
    %4972 = vmatmul.f32.gmra.mxu0 %v4859
    %v4973 = vpop.f32.mrf.mxu0
    %v4974 = vadd.f32 %v4933, %v4973
    %4975 = vmatmul.f32.gmra.mxu0 %v4860
    %v4976 = vpop.f32.mrf.mxu0
    %v4977 = vadd.f32 %v4936, %v4976
    %4978 = vmatmul.f32.gmra.mxu0 %v4861
    %v4979 = vpop.f32.mrf.mxu0
    %v4980 = vadd.f32 %v4939, %v4979
    %4981 = vmatmul.f32.gmra.mxu0 %v4862
    %v4982 = vpop.f32.mrf.mxu0
    %v4983 = vadd.f32 %v4942, %v4982
    %4984 = vmatmul.f32.gmra.mxu0 %v4863
    %v4985 = vpop.f32.mrf.mxu0
    %v4986 = vadd.f32 %v4945, %v4985
    %4987 = vmatmul.f32.gmra.mxu0 %v4864
    %v4988 = vpop.f32.mrf.mxu0
    %v4989 = vadd.f32 %v4948, %v4988
    %4990 = vmatmul.f32.gmra.mxu0 %v4865
    %v4991 = vpop.f32.mrf.mxu0
    %v4992 = vadd.f32 %v4951, %v4991
    %4993 = vmatmul.f32.gmra.mxu0 %v4866
    %v4994 = vpop.f32.mrf.mxu0
    %v4995 = vadd.f32 %v4954, %v4994
    %4996 = vdwg.mxu0
    %4997 = vmatpush.msra.mxu0 %v2360
    %4998 = vmatpush.msra.mxu0 %v2357
    %4999 = vmatpush.msra.mxu0 %v2354
    %5000 = vmatpush.msra.mxu0 %v2351
    %5001 = vmatpush.msra.mxu0 %v2348
    %5002 = vmatpush.msra.mxu0 %v2345
    %5003 = vmatpush.msra.mxu0 %v2342
    %5004 = vmatpush.msra.mxu0 %v2339
    %5005 = vmatpush.msra.mxu0 %v2336
    %5006 = vmatpush.msra.mxu0 %v2333
    %5007 = vmatpush.msra.mxu0 %v2330
    %5008 = vmatpush.msra.mxu0 %v2327
    %5009 = vmatpush.msra.mxu0 %v2324
    %5010 = vmatpush.msra.mxu0 %v2321
    %5011 = vmatpush.msra.mxu0 %v2318
    %5012 = vmatpush.msra.mxu0 %v2315
    %5013 = vmatmul.f32.gmra.mxu0 %v4843
    %v5014 = vpop.f32.mrf.mxu0
    %v5015 = vadd.f32 %v4869, %v5014
    %5016 = vmatmul.f32.gmra.mxu0 %v4844
    %v5017 = vpop.f32.mrf.mxu0
    %v5018 = vadd.f32 %v4869, %v5017
    %5019 = vmatmul.f32.gmra.mxu0 %v4845
    %v5020 = vpop.f32.mrf.mxu0
    %v5021 = vadd.f32 %v4869, %v5020
    %5022 = vmatmul.f32.gmra.mxu0 %v4846
    %v5023 = vpop.f32.mrf.mxu0
    %v5024 = vadd.f32 %v4869, %v5023
    %5025 = vmatmul.f32.gmra.mxu0 %v4847
    %v5026 = vpop.f32.mrf.mxu0
    %v5027 = vadd.f32 %v4869, %v5026
    %5028 = vmatmul.f32.gmra.mxu0 %v4848
    %v5029 = vpop.f32.mrf.mxu0
    %v5030 = vadd.f32 %v4869, %v5029
    %5031 = vmatmul.f32.gmra.mxu0 %v4849
    %v5032 = vpop.f32.mrf.mxu0
    %v5033 = vadd.f32 %v4869, %v5032
    %5034 = vmatmul.f32.gmra.mxu0 %v4850
    %v5035 = vpop.f32.mrf.mxu0
    %v5036 = vadd.f32 %v4869, %v5035
    %5037 = vdwg.mxu0
    %5038 = vmatpush.msra.mxu0 %v2408
    %5039 = vmatpush.msra.mxu0 %v2405
    %5040 = vmatpush.msra.mxu0 %v2402
    %5041 = vmatpush.msra.mxu0 %v2399
    %5042 = vmatpush.msra.mxu0 %v2396
    %5043 = vmatpush.msra.mxu0 %v2393
    %5044 = vmatpush.msra.mxu0 %v2390
    %5045 = vmatpush.msra.mxu0 %v2387
    %5046 = vmatpush.msra.mxu0 %v2384
    %5047 = vmatpush.msra.mxu0 %v2381
    %5048 = vmatpush.msra.mxu0 %v2378
    %5049 = vmatpush.msra.mxu0 %v2375
    %5050 = vmatpush.msra.mxu0 %v2372
    %5051 = vmatpush.msra.mxu0 %v2369
    %5052 = vmatpush.msra.mxu0 %v2366
    %5053 = vmatpush.msra.mxu0 %v2363
    %5054 = vmatmul.f32.gmra.mxu0 %v4851
    %v5055 = vpop.f32.mrf.mxu0
    %v5056 = vadd.f32 %v5015, %v5055
    %5057 = vmatmul.f32.gmra.mxu0 %v4852
    %v5058 = vpop.f32.mrf.mxu0
    %v5059 = vadd.f32 %v5018, %v5058
    %5060 = vmatmul.f32.gmra.mxu0 %v4853
    %v5061 = vpop.f32.mrf.mxu0
    %v5062 = vadd.f32 %v5021, %v5061
    %5063 = vmatmul.f32.gmra.mxu0 %v4854
    %v5064 = vpop.f32.mrf.mxu0
    %v5065 = vadd.f32 %v5024, %v5064
    %5066 = vmatmul.f32.gmra.mxu0 %v4855
    %v5067 = vpop.f32.mrf.mxu0
    %v5068 = vadd.f32 %v5027, %v5067
    %5069 = vmatmul.f32.gmra.mxu0 %v4856
    %v5070 = vpop.f32.mrf.mxu0
    %v5071 = vadd.f32 %v5030, %v5070
    %5072 = vmatmul.f32.gmra.mxu0 %v4857
    %v5073 = vpop.f32.mrf.mxu0
    %v5074 = vadd.f32 %v5033, %v5073
    %5075 = vmatmul.f32.gmra.mxu0 %v4858
    %v5076 = vpop.f32.mrf.mxu0
    %v5077 = vadd.f32 %v5036, %v5076
    %5078 = vdwg.mxu0
    %5079 = vmatpush.msra.mxu0 %v2456
    %5080 = vmatpush.msra.mxu0 %v2453
    %5081 = vmatpush.msra.mxu0 %v2450
    %5082 = vmatpush.msra.mxu0 %v2447
    %5083 = vmatpush.msra.mxu0 %v2444
    %5084 = vmatpush.msra.mxu0 %v2441
    %5085 = vmatpush.msra.mxu0 %v2438
    %5086 = vmatpush.msra.mxu0 %v2435
    %5087 = vmatpush.msra.mxu0 %v2432
    %5088 = vmatpush.msra.mxu0 %v2429
    %5089 = vmatpush.msra.mxu0 %v2426
    %5090 = vmatpush.msra.mxu0 %v2423
    %5091 = vmatpush.msra.mxu0 %v2420
    %5092 = vmatpush.msra.mxu0 %v2417
    %5093 = vmatpush.msra.mxu0 %v2414
    %5094 = vmatpush.msra.mxu0 %v2411
    %5095 = vmatmul.f32.gmra.mxu0 %v4859
    %v5096 = vpop.f32.mrf.mxu0
    %v5097 = vadd.f32 %v5056, %v5096
    %5098 = vmatmul.f32.gmra.mxu0 %v4860
    %v5099 = vpop.f32.mrf.mxu0
    %v5100 = vadd.f32 %v5059, %v5099
    %5101 = vmatmul.f32.gmra.mxu0 %v4861
    %v5102 = vpop.f32.mrf.mxu0
    %v5103 = vadd.f32 %v5062, %v5102
    %5104 = vmatmul.f32.gmra.mxu0 %v4862
    %v5105 = vpop.f32.mrf.mxu0
    %v5106 = vadd.f32 %v5065, %v5105
    %5107 = vmatmul.f32.gmra.mxu0 %v4863
    %v5108 = vpop.f32.mrf.mxu0
    %v5109 = vadd.f32 %v5068, %v5108
    %5110 = vmatmul.f32.gmra.mxu0 %v4864
    %v5111 = vpop.f32.mrf.mxu0
    %v5112 = vadd.f32 %v5071, %v5111
    %5113 = vmatmul.f32.gmra.mxu0 %v4865
    %v5114 = vpop.f32.mrf.mxu0
    %v5115 = vadd.f32 %v5074, %v5114
    %5116 = vmatmul.f32.gmra.mxu0 %v4866
    %v5117 = vpop.f32.mrf.mxu0
    %v5118 = vadd.f32 %v5077, %v5117
    %5119 = vdwg.mxu0
    %5120 = vmatpush.msra.mxu0 %v2361
    %5121 = vmatpush.msra.mxu0 %v2358
    %5122 = vmatpush.msra.mxu0 %v2355
    %5123 = vmatpush.msra.mxu0 %v2352
    %5124 = vmatpush.msra.mxu0 %v2349
    %5125 = vmatpush.msra.mxu0 %v2346
    %5126 = vmatpush.msra.mxu0 %v2343
    %5127 = vmatpush.msra.mxu0 %v2340
    %5128 = vmatpush.msra.mxu0 %v2337
    %5129 = vmatpush.msra.mxu0 %v2334
    %5130 = vmatpush.msra.mxu0 %v2331
    %5131 = vmatpush.msra.mxu0 %v2328
    %5132 = vmatpush.msra.mxu0 %v2325
    %5133 = vmatpush.msra.mxu0 %v2322
    %5134 = vmatpush.msra.mxu0 %v2319
    %5135 = vmatpush.msra.mxu0 %v2316
    %5136 = vmatmul.f32.gmra.mxu0 %v4843
    %v5137 = vpop.f32.mrf.mxu0
    %v5138 = vadd.f32 %v4870, %v5137
    %5139 = vmatmul.f32.gmra.mxu0 %v4844
    %v5140 = vpop.f32.mrf.mxu0
    %v5141 = vadd.f32 %v4870, %v5140
    %5142 = vmatmul.f32.gmra.mxu0 %v4845
    %v5143 = vpop.f32.mrf.mxu0
    %v5144 = vadd.f32 %v4870, %v5143
    %5145 = vmatmul.f32.gmra.mxu0 %v4846
    %v5146 = vpop.f32.mrf.mxu0
    %v5147 = vadd.f32 %v4870, %v5146
    %5148 = vmatmul.f32.gmra.mxu0 %v4847
    %v5149 = vpop.f32.mrf.mxu0
    %v5150 = vadd.f32 %v4870, %v5149
    %5151 = vmatmul.f32.gmra.mxu0 %v4848
    %v5152 = vpop.f32.mrf.mxu0
    %v5153 = vadd.f32 %v4870, %v5152
    %5154 = vmatmul.f32.gmra.mxu0 %v4849
    %v5155 = vpop.f32.mrf.mxu0
    %v5156 = vadd.f32 %v4870, %v5155
    %5157 = vmatmul.f32.gmra.mxu0 %v4850
    %v5158 = vpop.f32.mrf.mxu0
    %v5159 = vadd.f32 %v4870, %v5158
    %5160 = vdwg.mxu0
    %5161 = vmatpush.msra.mxu0 %v2409
    %5162 = vmatpush.msra.mxu0 %v2406
    %5163 = vmatpush.msra.mxu0 %v2403
    %5164 = vmatpush.msra.mxu0 %v2400
    %5165 = vmatpush.msra.mxu0 %v2397
    %5166 = vmatpush.msra.mxu0 %v2394
    %5167 = vmatpush.msra.mxu0 %v2391
    %5168 = vmatpush.msra.mxu0 %v2388
    %5169 = vmatpush.msra.mxu0 %v2385
    %5170 = vmatpush.msra.mxu0 %v2382
    %5171 = vmatpush.msra.mxu0 %v2379
    %5172 = vmatpush.msra.mxu0 %v2376
    %5173 = vmatpush.msra.mxu0 %v2373
    %5174 = vmatpush.msra.mxu0 %v2370
    %5175 = vmatpush.msra.mxu0 %v2367
    %5176 = vmatpush.msra.mxu0 %v2364
    %5177 = vmatmul.f32.gmra.mxu0 %v4851
    %v5178 = vpop.f32.mrf.mxu0
    %v5179 = vadd.f32 %v5138, %v5178
    %5180 = vmatmul.f32.gmra.mxu0 %v4852
    %v5181 = vpop.f32.mrf.mxu0
    %v5182 = vadd.f32 %v5141, %v5181
    %5183 = vmatmul.f32.gmra.mxu0 %v4853
    %v5184 = vpop.f32.mrf.mxu0
    %v5185 = vadd.f32 %v5144, %v5184
    %5186 = vmatmul.f32.gmra.mxu0 %v4854
    %v5187 = vpop.f32.mrf.mxu0
    %v5188 = vadd.f32 %v5147, %v5187
    %5189 = vmatmul.f32.gmra.mxu0 %v4855
    %v5190 = vpop.f32.mrf.mxu0
    %v5191 = vadd.f32 %v5150, %v5190
    %5192 = vmatmul.f32.gmra.mxu0 %v4856
    %v5193 = vpop.f32.mrf.mxu0
    %v5194 = vadd.f32 %v5153, %v5193
    %5195 = vmatmul.f32.gmra.mxu0 %v4857
    %v5196 = vpop.f32.mrf.mxu0
    %v5197 = vadd.f32 %v5156, %v5196
    %5198 = vmatmul.f32.gmra.mxu0 %v4858
    %v5199 = vpop.f32.mrf.mxu0
    %v5200 = vadd.f32 %v5159, %v5199
    %5201 = vdwg.mxu0
    %5202 = vmatpush.msra.mxu0 %v2457
    %5203 = vmatpush.msra.mxu0 %v2454
    %5204 = vmatpush.msra.mxu0 %v2451
    %5205 = vmatpush.msra.mxu0 %v2448
    %5206 = vmatpush.msra.mxu0 %v2445
    %5207 = vmatpush.msra.mxu0 %v2442
    %5208 = vmatpush.msra.mxu0 %v2439
    %5209 = vmatpush.msra.mxu0 %v2436
    %5210 = vmatpush.msra.mxu0 %v2433
    %5211 = vmatpush.msra.mxu0 %v2430
    %5212 = vmatpush.msra.mxu0 %v2427
    %5213 = vmatpush.msra.mxu0 %v2424
    %5214 = vmatpush.msra.mxu0 %v2421
    %5215 = vmatpush.msra.mxu0 %v2418
    %5216 = vmatpush.msra.mxu0 %v2415
    %5217 = vmatpush.msra.mxu0 %v2412
    %5218 = vmatmul.f32.gmra.mxu0 %v4859
    %v5219 = vpop.f32.mrf.mxu0
    %v5220 = vadd.f32 %v5179, %v5219
    %5221 = vmatmul.f32.gmra.mxu0 %v4860
    %v5222 = vpop.f32.mrf.mxu0
    %v5223 = vadd.f32 %v5182, %v5222
    %5224 = vmatmul.f32.gmra.mxu0 %v4861
    %v5225 = vpop.f32.mrf.mxu0
    %v5226 = vadd.f32 %v5185, %v5225
    %5227 = vmatmul.f32.gmra.mxu0 %v4862
    %v5228 = vpop.f32.mrf.mxu0
    %v5229 = vadd.f32 %v5188, %v5228
    %5230 = vmatmul.f32.gmra.mxu0 %v4863
    %v5231 = vpop.f32.mrf.mxu0
    %v5232 = vadd.f32 %v5191, %v5231
    %5233 = vmatmul.f32.gmra.mxu0 %v4864
    %v5234 = vpop.f32.mrf.mxu0
    %v5235 = vadd.f32 %v5194, %v5234
    %5236 = vmatmul.f32.gmra.mxu0 %v4865
    %v5237 = vpop.f32.mrf.mxu0
    %v5238 = vadd.f32 %v5197, %v5237
    %5239 = vmatmul.f32.gmra.mxu0 %v4866
    %v5240 = vpop.f32.mrf.mxu0
    %v5241 = vadd.f32 %v5200, %v5240
    %5242 = vdwg.mxu0
    %5243 = vst [vmem:[#allocation10] sm:$0xff] %v4974
    %5244 = vst [vmem:[#allocation10 + $0x8] sm:$0xff] %v5097
    %5245 = vst [vmem:[#allocation10 + $0x10] sm:$0xff] %v5220
    %5246 = vst [vmem:[#allocation10 + $0x18] sm:$0xff] %v4977
    %5247 = vst [vmem:[#allocation10 + $0x20] sm:$0xff] %v5100
    %5248 = vst [vmem:[#allocation10 + $0x28] sm:$0xff] %v5223
    %5249 = vst [vmem:[#allocation10 + $0x30] sm:$0xff] %v4980
    %5250 = vst [vmem:[#allocation10 + $0x38] sm:$0xff] %v5103
    %5251 = vst [vmem:[#allocation10 + $0x40] sm:$0xff] %v5226
    %5252 = vst [vmem:[#allocation10 + $0x48] sm:$0xff] %v4983
    %5253 = vst [vmem:[#allocation10 + $0x50] sm:$0xff] %v5106
    %5254 = vst [vmem:[#allocation10 + $0x58] sm:$0xff] %v5229
    %5255 = vst [vmem:[#allocation10 + $0x60] sm:$0xff] %v4986
    %5256 = vst [vmem:[#allocation10 + $0x68] sm:$0xff] %v5109
    %5257 = vst [vmem:[#allocation10 + $0x70] sm:$0xff] %v5232
    %5258 = vst [vmem:[#allocation10 + $0x78] sm:$0xff] %v4989
    %5259 = vst [vmem:[#allocation10 + $0x80] sm:$0xff] %v5112
    %5260 = vst [vmem:[#allocation10 + $0x88] sm:$0xff] %v5235
    %5261 = vst [vmem:[#allocation10 + $0x90] sm:$0xff] %v4992
    %5262 = vst [vmem:[#allocation10 + $0x98] sm:$0xff] %v5115
    %5263 = vst [vmem:[#allocation10 + $0xa0] sm:$0xff] %v5238
    %5264 = vst [vmem:[#allocation10 + $0xa8] sm:$0xff] %v4995
    %5265 = vst [vmem:[#allocation10 + $0xb0] sm:$0xff] %v5118
    %5266 = vst [vmem:[#allocation10 + $0xb8] sm:$0xff] %v5241
    %v5268 = vsel %vm2478, %v731, 0
    %v5271 = vsel %vm2478, %v734, 0
    %v5274 = vsel %vm2478, %v737, 0
    %v5277 = vsel %vm2478, %v740, 0
    %v5280 = vsel %vm2478, %v743, 0
    %v5283 = vsel %vm2478, %v746, 0
    %v5286 = vsel %vm2478, %v749, 0
    %v5289 = vsel %vm2478, %v752, 0
    %v5292 = vsel %vm2478, %v1316, 0
    %v5295 = vsel %vm2478, %v1319, 0
    %v5298 = vsel %vm2478, %v1322, 0
    %v5301 = vsel %vm2478, %v1325, 0
    %v5304 = vsel %vm2478, %v1328, 0
    %v5307 = vsel %vm2478, %v1331, 0
    %v5310 = vsel %vm2478, %v1334, 0
    %v5313 = vsel %vm2478, %v1337, 0
    %5315 = vmatpush.xpose.msra.mxu0 0.0
    %5316 = vmatpush.xpose.msra.mxu0 0.0
    %5317 = vmatpush.xpose.msra.mxu0 0.0
    %5318 = vmatpush.xpose.msra.mxu0 0.0
    %5319 = vmatpush.xpose.msra.mxu0 0.0
    %5320 = vmatpush.xpose.msra.mxu0 0.0
    %5321 = vmatpush.xpose.msra.mxu0 0.0
    %5322 = vmatpush.xpose.msra.mxu0 0.0
    %5323 = vmatpush.xpose.msra.mxu0 %v5313
    %5324 = vmatpush.xpose.msra.mxu0 %v5310
    %5325 = vmatpush.xpose.msra.mxu0 %v5307
    %5326 = vmatpush.xpose.msra.mxu0 %v5304
    %5327 = vmatpush.xpose.msra.mxu0 %v5301
    %5328 = vmatpush.xpose.msra.mxu0 %v5298
    %5329 = vmatpush.xpose.msra.mxu0 %v5295
    %5330 = vmatpush.xpose.msra.mxu0 %v5292
    %5331 = vmatmul.f32.gmra.mxu0 %v5268
    %v5332 = vpop.f32.mrf.mxu0
    %v5333 = vadd.f32 0.0, %v5332
    %5334 = vmatmul.f32.gmra.mxu0 %v5271
    %v5335 = vpop.f32.mrf.mxu0
    %v5336 = vadd.f32 0.0, %v5335
    %5337 = vmatmul.f32.gmra.mxu0 %v5274
    %v5338 = vpop.f32.mrf.mxu0
    %v5339 = vadd.f32 0.0, %v5338
    %5340 = vmatmul.f32.gmra.mxu0 %v5277
    %v5341 = vpop.f32.mrf.mxu0
    %v5342 = vadd.f32 0.0, %v5341
    %5343 = vmatmul.f32.gmra.mxu0 %v5280
    %v5344 = vpop.f32.mrf.mxu0
    %v5345 = vadd.f32 0.0, %v5344
    %5346 = vmatmul.f32.gmra.mxu0 %v5283
    %v5347 = vpop.f32.mrf.mxu0
    %v5348 = vadd.f32 0.0, %v5347
    %5349 = vmatmul.f32.gmra.mxu0 %v5286
    %v5350 = vpop.f32.mrf.mxu0
    %v5351 = vadd.f32 0.0, %v5350
    %5352 = vmatmul.f32.gmra.mxu0 %v5289
    %v5353 = vpop.f32.mrf.mxu0
    %v5354 = vadd.f32 0.0, %v5353
    %5355 = vdwg.mxu0
    %v5356 = vsel %vm2470, %v5333, -inf
    %v5357 = vsel %vm2471, %v5336, -inf
    %v5358 = vsel %vm2472, %v5339, -inf
    %v5359 = vsel %vm2473, %v5342, -inf
    %v5360 = vsel %vm2474, %v5345, -inf
    %v5361 = vsel %vm2475, %v5348, -inf
    %v5362 = vsel %vm2476, %v5351, -inf
    %v5363 = vsel %vm2477, %v5354, -inf
    %v5364 = vsel %vm2478, %v5356, -inf
    %5365 = vmax.xlane.f32.xlu0 %v5364
    %v5366 = vpop.xlane.xlu0 %5365
    %v5367 = vsel %vm2478, %v5357, -inf
    %5368 = vmax.xlane.f32.xlu0 %v5367
    %v5369 = vpop.xlane.xlu0 %5368
    %v5370 = vsel %vm2478, %v5358, -inf
    %5371 = vmax.xlane.f32.xlu0 %v5370
    %v5372 = vpop.xlane.xlu0 %5371
    %v5373 = vsel %vm2478, %v5359, -inf
    %5374 = vmax.xlane.f32.xlu0 %v5373
    %v5375 = vpop.xlane.xlu0 %5374
    %v5376 = vsel %vm2478, %v5360, -inf
    %5377 = vmax.xlane.f32.xlu0 %v5376
    %v5378 = vpop.xlane.xlu0 %5377
    %v5379 = vsel %vm2478, %v5361, -inf
    %5380 = vmax.xlane.f32.xlu0 %v5379
    %v5381 = vpop.xlane.xlu0 %5380
    %v5382 = vsel %vm2478, %v5362, -inf
    %5383 = vmax.xlane.f32.xlu0 %v5382
    %v5384 = vpop.xlane.xlu0 %5383
    %v5385 = vsel %vm2478, %v5363, -inf
    %5386 = vmax.xlane.f32.xlu0 %v5385
    %v5387 = vpop.xlane.xlu0 %5386
    %v5388 = vsub.f32 %v5356, %v5366
    %v5389 = vsub.f32 %v5357, %v5369
    %v5390 = vsub.f32 %v5358, %v5372
    %v5391 = vsub.f32 %v5359, %v5375
    %v5392 = vsub.f32 %v5360, %v5378
    %v5393 = vsub.f32 %v5361, %v5381
    %v5394 = vsub.f32 %v5362, %v5384
    %v5395 = vsub.f32 %v5363, %v5387
    %v5396 = vmul.f32 %v5388, 1.442695
    %v5397 = vpow.pop %v5396
    %v5398 = vmul.f32 %v5389, 1.442695
    %v5399 = vpow.pop %v5398
    %v5400 = vmul.f32 %v5390, 1.442695
    %v5401 = vpow.pop %v5400
    %v5402 = vmul.f32 %v5391, 1.442695
    %v5403 = vpow.pop %v5402
    %v5404 = vmul.f32 %v5392, 1.442695
    %v5405 = vpow.pop %v5404
    %v5406 = vmul.f32 %v5393, 1.442695
    %v5407 = vpow.pop %v5406
    %v5408 = vmul.f32 %v5394, 1.442695
    %v5409 = vpow.pop %v5408
    %v5410 = vmul.f32 %v5395, 1.442695
    %v5411 = vpow.pop %v5410
    %v5412 = vsel %vm2478, %v5397, 0.0
    %5413 = vadd.xlane.f32.xlu0 %v5412
    %v5414 = vpop.xlane.xlu0 %5413
    %v5415 = vsel %vm2478, %v5399, 0.0
    %5416 = vadd.xlane.f32.xlu0 %v5415
    %v5417 = vpop.xlane.xlu0 %5416
    %v5418 = vsel %vm2478, %v5401, 0.0
    %5419 = vadd.xlane.f32.xlu0 %v5418
    %v5420 = vpop.xlane.xlu0 %5419
    %v5421 = vsel %vm2478, %v5403, 0.0
    %5422 = vadd.xlane.f32.xlu0 %v5421
    %v5423 = vpop.xlane.xlu0 %5422
    %v5424 = vsel %vm2478, %v5405, 0.0
    %5425 = vadd.xlane.f32.xlu0 %v5424
    %v5426 = vpop.xlane.xlu0 %5425
    %v5427 = vsel %vm2478, %v5407, 0.0
    %5428 = vadd.xlane.f32.xlu0 %v5427
    %v5429 = vpop.xlane.xlu0 %5428
    %v5430 = vsel %vm2478, %v5409, 0.0
    %5431 = vadd.xlane.f32.xlu0 %v5430
    %v5432 = vpop.xlane.xlu0 %5431
    %v5433 = vsel %vm2478, %v5411, 0.0
    %5434 = vadd.xlane.f32.xlu0 %v5433
    %v5435 = vpop.xlane.xlu0 %5434
    %v5436 = vrcp.pop %v5414
    %v5437 = vmul.f32 %v5414, %v5436
    %v5438 = vsub.f32 1.0, %v5437
    %v5439 = vmul.f32 %v5436, %v5438
    %v5440 = vadd.f32 %v5436, %v5439
    %vm5441 = vweird.f32 %v5414
    %vm5442 = vweird.f32 %v5436
    %vm5443 = vmor %vm5441, %vm5442
    %v5444 = vsel %vm5443, %v5436, %v5440
    %v5445 = vand.u32 2147483647, %v5414
    %vm5446 = vcmp.eq.f32.partialorder %v5445, 8.507059e+37
    %v5447 = vand.u32 %v5414, 2147483648
    %v5448 = vor.u32 1.1754944e-38, %v5447
    %v5449 = vsel %vm5446, %v5448, %v5444
    %v5450 = vmul.f32 %v5397, %v5449
    %v5451 = vrcp.pop %v5417
    %v5452 = vmul.f32 %v5417, %v5451
    %v5453 = vsub.f32 1.0, %v5452
    %v5454 = vmul.f32 %v5451, %v5453
    %v5455 = vadd.f32 %v5451, %v5454
    %vm5456 = vweird.f32 %v5417
    %vm5457 = vweird.f32 %v5451
    %vm5458 = vmor %vm5456, %vm5457
    %v5459 = vsel %vm5458, %v5451, %v5455
    %v5460 = vand.u32 2147483647, %v5417
    %vm5461 = vcmp.eq.f32.partialorder %v5460, 8.507059e+37
    %v5462 = vand.u32 %v5417, 2147483648
    %v5463 = vor.u32 1.1754944e-38, %v5462
    %v5464 = vsel %vm5461, %v5463, %v5459
    %v5465 = vmul.f32 %v5399, %v5464
    %v5466 = vrcp.pop %v5420
    %v5467 = vmul.f32 %v5420, %v5466
    %v5468 = vsub.f32 1.0, %v5467
    %v5469 = vmul.f32 %v5466, %v5468
    %v5470 = vadd.f32 %v5466, %v5469
    %vm5471 = vweird.f32 %v5420
    %vm5472 = vweird.f32 %v5466
    %vm5473 = vmor %vm5471, %vm5472
    %v5474 = vsel %vm5473, %v5466, %v5470
    %v5475 = vand.u32 2147483647, %v5420
    %vm5476 = vcmp.eq.f32.partialorder %v5475, 8.507059e+37
    %v5477 = vand.u32 %v5420, 2147483648
    %v5478 = vor.u32 1.1754944e-38, %v5477
    %v5479 = vsel %vm5476, %v5478, %v5474
    %v5480 = vmul.f32 %v5401, %v5479
    %v5481 = vrcp.pop %v5423
    %v5482 = vmul.f32 %v5423, %v5481
    %v5483 = vsub.f32 1.0, %v5482
    %v5484 = vmul.f32 %v5481, %v5483
    %v5485 = vadd.f32 %v5481, %v5484
    %vm5486 = vweird.f32 %v5423
    %vm5487 = vweird.f32 %v5481
    %vm5488 = vmor %vm5486, %vm5487
    %v5489 = vsel %vm5488, %v5481, %v5485
    %v5490 = vand.u32 2147483647, %v5423
    %vm5491 = vcmp.eq.f32.partialorder %v5490, 8.507059e+37
    %v5492 = vand.u32 %v5423, 2147483648
    %v5493 = vor.u32 1.1754944e-38, %v5492
    %v5494 = vsel %vm5491, %v5493, %v5489
    %v5495 = vmul.f32 %v5403, %v5494
    %v5496 = vrcp.pop %v5426
    %v5497 = vmul.f32 %v5426, %v5496
    %v5498 = vsub.f32 1.0, %v5497
    %v5499 = vmul.f32 %v5496, %v5498
    %v5500 = vadd.f32 %v5496, %v5499
    %vm5501 = vweird.f32 %v5426
    %vm5502 = vweird.f32 %v5496
    %vm5503 = vmor %vm5501, %vm5502
    %v5504 = vsel %vm5503, %v5496, %v5500
    %v5505 = vand.u32 2147483647, %v5426
    %vm5506 = vcmp.eq.f32.partialorder %v5505, 8.507059e+37
    %v5507 = vand.u32 %v5426, 2147483648
    %v5508 = vor.u32 1.1754944e-38, %v5507
    %v5509 = vsel %vm5506, %v5508, %v5504
    %v5510 = vmul.f32 %v5405, %v5509
    %v5511 = vrcp.pop %v5429
    %v5512 = vmul.f32 %v5429, %v5511
    %v5513 = vsub.f32 1.0, %v5512
    %v5514 = vmul.f32 %v5511, %v5513
    %v5515 = vadd.f32 %v5511, %v5514
    %vm5516 = vweird.f32 %v5429
    %vm5517 = vweird.f32 %v5511
    %vm5518 = vmor %vm5516, %vm5517
    %v5519 = vsel %vm5518, %v5511, %v5515
    %v5520 = vand.u32 2147483647, %v5429
    %vm5521 = vcmp.eq.f32.partialorder %v5520, 8.507059e+37
    %v5522 = vand.u32 %v5429, 2147483648
    %v5523 = vor.u32 1.1754944e-38, %v5522
    %v5524 = vsel %vm5521, %v5523, %v5519
    %v5525 = vmul.f32 %v5407, %v5524
    %v5526 = vrcp.pop %v5432
    %v5527 = vmul.f32 %v5432, %v5526
    %v5528 = vsub.f32 1.0, %v5527
    %v5529 = vmul.f32 %v5526, %v5528
    %v5530 = vadd.f32 %v5526, %v5529
    %vm5531 = vweird.f32 %v5432
    %vm5532 = vweird.f32 %v5526
    %vm5533 = vmor %vm5531, %vm5532
    %v5534 = vsel %vm5533, %v5526, %v5530
    %v5535 = vand.u32 2147483647, %v5432
    %vm5536 = vcmp.eq.f32.partialorder %v5535, 8.507059e+37
    %v5537 = vand.u32 %v5432, 2147483648
    %v5538 = vor.u32 1.1754944e-38, %v5537
    %v5539 = vsel %vm5536, %v5538, %v5534
    %v5540 = vmul.f32 %v5409, %v5539
    %v5541 = vrcp.pop %v5435
    %v5542 = vmul.f32 %v5435, %v5541
    %v5543 = vsub.f32 1.0, %v5542
    %v5544 = vmul.f32 %v5541, %v5543
    %v5545 = vadd.f32 %v5541, %v5544
    %vm5546 = vweird.f32 %v5435
    %vm5547 = vweird.f32 %v5541
    %vm5548 = vmor %vm5546, %vm5547
    %v5549 = vsel %vm5548, %v5541, %v5545
    %v5550 = vand.u32 2147483647, %v5435
    %vm5551 = vcmp.eq.f32.partialorder %v5550, 8.507059e+37
    %v5552 = vand.u32 %v5435, 2147483648
    %v5553 = vor.u32 1.1754944e-38, %v5552
    %v5554 = vsel %vm5551, %v5553, %v5549
    %v5555 = vmul.f32 %v5411, %v5554
    %v5557 = vsel %vm2478, %v5450, 0
    %v5560 = vsel %vm2478, %v5465, 0
    %v5563 = vsel %vm2478, %v5480, 0
    %v5566 = vsel %vm2478, %v5495, 0
    %v5569 = vsel %vm2478, %v5510, 0
    %v5572 = vsel %vm2478, %v5525, 0
    %v5575 = vsel %vm2478, %v5540, 0
    %v5578 = vsel %vm2478, %v5555, 0
    %5580 = vmatpush.msra.mxu0 0.0
    %5581 = vmatpush.msra.mxu0 0.0
    %5582 = vmatpush.msra.mxu0 0.0
    %5583 = vmatpush.msra.mxu0 0.0
    %5584 = vmatpush.msra.mxu0 0.0
    %5585 = vmatpush.msra.mxu0 0.0
    %5586 = vmatpush.msra.mxu0 0.0
    %5587 = vmatpush.msra.mxu0 0.0
    %5588 = vmatpush.msra.mxu0 %v1922
    %5589 = vmatpush.msra.mxu0 %v1919
    %5590 = vmatpush.msra.mxu0 %v1916
    %5591 = vmatpush.msra.mxu0 %v1913
    %5592 = vmatpush.msra.mxu0 %v1910
    %5593 = vmatpush.msra.mxu0 %v1907
    %5594 = vmatpush.msra.mxu0 %v1904
    %5595 = vmatpush.msra.mxu0 %v1901
    %5596 = vmatmul.f32.gmra.mxu0 %v5557
    %v5597 = vpop.f32.mrf.mxu0
    %v5598 = vadd.f32 0.0, %v5597
    %5599 = vmatmul.f32.gmra.mxu0 %v5560
    %v5600 = vpop.f32.mrf.mxu0
    %v5601 = vadd.f32 0.0, %v5600
    %5602 = vmatmul.f32.gmra.mxu0 %v5563
    %v5603 = vpop.f32.mrf.mxu0
    %v5604 = vadd.f32 0.0, %v5603
    %5605 = vmatmul.f32.gmra.mxu0 %v5566
    %v5606 = vpop.f32.mrf.mxu0
    %v5607 = vadd.f32 0.0, %v5606
    %5608 = vmatmul.f32.gmra.mxu0 %v5569
    %v5609 = vpop.f32.mrf.mxu0
    %v5610 = vadd.f32 0.0, %v5609
    %5611 = vmatmul.f32.gmra.mxu0 %v5572
    %v5612 = vpop.f32.mrf.mxu0
    %v5613 = vadd.f32 0.0, %v5612
    %5614 = vmatmul.f32.gmra.mxu0 %v5575
    %v5615 = vpop.f32.mrf.mxu0
    %v5616 = vadd.f32 0.0, %v5615
    %5617 = vmatmul.f32.gmra.mxu0 %v5578
    %v5618 = vpop.f32.mrf.mxu0
    %v5619 = vadd.f32 0.0, %v5618
    %5620 = vdwg.mxu0
    %5621 = vrot.lane.b32.xlu0 %v731, 64
    %v5622 = vpop.permute.xlu0 %5621
    %5623 = vrot.lane.b32.xlu0 %v734, 64
    %v5624 = vpop.permute.xlu0 %5623
    %5625 = vrot.lane.b32.xlu0 %v737, 64
    %v5626 = vpop.permute.xlu0 %5625
    %5627 = vrot.lane.b32.xlu0 %v740, 64
    %v5628 = vpop.permute.xlu0 %5627
    %5629 = vrot.lane.b32.xlu0 %v743, 64
    %v5630 = vpop.permute.xlu0 %5629
    %5631 = vrot.lane.b32.xlu0 %v746, 64
    %v5632 = vpop.permute.xlu0 %5631
    %5633 = vrot.lane.b32.xlu0 %v749, 64
    %v5634 = vpop.permute.xlu0 %5633
    %5635 = vrot.lane.b32.xlu0 %v752, 64
    %v5636 = vpop.permute.xlu0 %5635
    %5637 = vrot.lane.b32.xlu0 %v1316, 64
    %v5638 = vpop.permute.xlu0 %5637
    %5639 = vrot.lane.b32.xlu0 %v1319, 64
    %v5640 = vpop.permute.xlu0 %5639
    %5641 = vrot.lane.b32.xlu0 %v1322, 64
    %v5642 = vpop.permute.xlu0 %5641
    %5643 = vrot.lane.b32.xlu0 %v1325, 64
    %v5644 = vpop.permute.xlu0 %5643
    %5645 = vrot.lane.b32.xlu0 %v1328, 64
    %v5646 = vpop.permute.xlu0 %5645
    %5647 = vrot.lane.b32.xlu0 %v1331, 64
    %v5648 = vpop.permute.xlu0 %5647
    %5649 = vrot.lane.b32.xlu0 %v1334, 64
    %v5650 = vpop.permute.xlu0 %5649
    %5651 = vrot.lane.b32.xlu0 %v1337, 64
    %v5652 = vpop.permute.xlu0 %5651
    %v5653 = vsel %vm2478, %v5622, 0
    %v5655 = vsel %vm2478, %v5624, 0
    %v5657 = vsel %vm2478, %v5626, 0
    %v5659 = vsel %vm2478, %v5628, 0
    %v5661 = vsel %vm2478, %v5630, 0
    %v5663 = vsel %vm2478, %v5632, 0
    %v5665 = vsel %vm2478, %v5634, 0
    %v5667 = vsel %vm2478, %v5636, 0
    %v5669 = vsel %vm2478, %v5638, 0
    %v5671 = vsel %vm2478, %v5640, 0
    %v5673 = vsel %vm2478, %v5642, 0
    %v5675 = vsel %vm2478, %v5644, 0
    %v5677 = vsel %vm2478, %v5646, 0
    %v5679 = vsel %vm2478, %v5648, 0
    %v5681 = vsel %vm2478, %v5650, 0
    %v5683 = vsel %vm2478, %v5652, 0
    %5685 = vmatpush.xpose.msra.mxu0 0.0
    %5686 = vmatpush.xpose.msra.mxu0 0.0
    %5687 = vmatpush.xpose.msra.mxu0 0.0
    %5688 = vmatpush.xpose.msra.mxu0 0.0
    %5689 = vmatpush.xpose.msra.mxu0 0.0
    %5690 = vmatpush.xpose.msra.mxu0 0.0
    %5691 = vmatpush.xpose.msra.mxu0 0.0
    %5692 = vmatpush.xpose.msra.mxu0 0.0
    %5693 = vmatpush.xpose.msra.mxu0 %v5683
    %5694 = vmatpush.xpose.msra.mxu0 %v5681
    %5695 = vmatpush.xpose.msra.mxu0 %v5679
    %5696 = vmatpush.xpose.msra.mxu0 %v5677
    %5697 = vmatpush.xpose.msra.mxu0 %v5675
    %5698 = vmatpush.xpose.msra.mxu0 %v5673
    %5699 = vmatpush.xpose.msra.mxu0 %v5671
    %5700 = vmatpush.xpose.msra.mxu0 %v5669
    %5701 = vmatmul.f32.gmra.mxu0 %v5653
    %v5702 = vpop.f32.mrf.mxu0
    %v5703 = vadd.f32 0.0, %v5702
    %5704 = vmatmul.f32.gmra.mxu0 %v5655
    %v5705 = vpop.f32.mrf.mxu0
    %v5706 = vadd.f32 0.0, %v5705
    %5707 = vmatmul.f32.gmra.mxu0 %v5657
    %v5708 = vpop.f32.mrf.mxu0
    %v5709 = vadd.f32 0.0, %v5708
    %5710 = vmatmul.f32.gmra.mxu0 %v5659
    %v5711 = vpop.f32.mrf.mxu0
    %v5712 = vadd.f32 0.0, %v5711
    %5713 = vmatmul.f32.gmra.mxu0 %v5661
    %v5714 = vpop.f32.mrf.mxu0
    %v5715 = vadd.f32 0.0, %v5714
    %5716 = vmatmul.f32.gmra.mxu0 %v5663
    %v5717 = vpop.f32.mrf.mxu0
    %v5718 = vadd.f32 0.0, %v5717
    %5719 = vmatmul.f32.gmra.mxu0 %v5665
    %v5720 = vpop.f32.mrf.mxu0
    %v5721 = vadd.f32 0.0, %v5720
    %5722 = vmatmul.f32.gmra.mxu0 %v5667
    %v5723 = vpop.f32.mrf.mxu0
    %v5724 = vadd.f32 0.0, %v5723
    %5725 = vdwg.mxu0
    %v5726 = vsel %vm2470, %v5703, -inf
    %v5727 = vsel %vm2471, %v5706, -inf
    %v5728 = vsel %vm2472, %v5709, -inf
    %v5729 = vsel %vm2473, %v5712, -inf
    %v5730 = vsel %vm2474, %v5715, -inf
    %v5731 = vsel %vm2475, %v5718, -inf
    %v5732 = vsel %vm2476, %v5721, -inf
    %v5733 = vsel %vm2477, %v5724, -inf
    %v5734 = vsel %vm2478, %v5726, -inf
    %5735 = vmax.xlane.f32.xlu0 %v5734
    %v5736 = vpop.xlane.xlu0 %5735
    %v5737 = vsel %vm2478, %v5727, -inf
    %5738 = vmax.xlane.f32.xlu0 %v5737
    %v5739 = vpop.xlane.xlu0 %5738
    %v5740 = vsel %vm2478, %v5728, -inf
    %5741 = vmax.xlane.f32.xlu0 %v5740
    %v5742 = vpop.xlane.xlu0 %5741
    %v5743 = vsel %vm2478, %v5729, -inf
    %5744 = vmax.xlane.f32.xlu0 %v5743
    %v5745 = vpop.xlane.xlu0 %5744
    %v5746 = vsel %vm2478, %v5730, -inf
    %5747 = vmax.xlane.f32.xlu0 %v5746
    %v5748 = vpop.xlane.xlu0 %5747
    %v5749 = vsel %vm2478, %v5731, -inf
    %5750 = vmax.xlane.f32.xlu0 %v5749
    %v5751 = vpop.xlane.xlu0 %5750
    %v5752 = vsel %vm2478, %v5732, -inf
    %5753 = vmax.xlane.f32.xlu0 %v5752
    %v5754 = vpop.xlane.xlu0 %5753
    %v5755 = vsel %vm2478, %v5733, -inf
    %5756 = vmax.xlane.f32.xlu0 %v5755
    %v5757 = vpop.xlane.xlu0 %5756
    %v5758 = vsub.f32 %v5726, %v5736
    %v5759 = vsub.f32 %v5727, %v5739
    %v5760 = vsub.f32 %v5728, %v5742
    %v5761 = vsub.f32 %v5729, %v5745
    %v5762 = vsub.f32 %v5730, %v5748
    %v5763 = vsub.f32 %v5731, %v5751
    %v5764 = vsub.f32 %v5732, %v5754
    %v5765 = vsub.f32 %v5733, %v5757
    %v5766 = vmul.f32 %v5758, 1.442695
    %v5767 = vpow.pop %v5766
    %v5768 = vmul.f32 %v5759, 1.442695
    %v5769 = vpow.pop %v5768
    %v5770 = vmul.f32 %v5760, 1.442695
    %v5771 = vpow.pop %v5770
    %v5772 = vmul.f32 %v5761, 1.442695
    %v5773 = vpow.pop %v5772
    %v5774 = vmul.f32 %v5762, 1.442695
    %v5775 = vpow.pop %v5774
    %v5776 = vmul.f32 %v5763, 1.442695
    %v5777 = vpow.pop %v5776
    %v5778 = vmul.f32 %v5764, 1.442695
    %v5779 = vpow.pop %v5778
    %v5780 = vmul.f32 %v5765, 1.442695
    %v5781 = vpow.pop %v5780
    %v5782 = vsel %vm2478, %v5767, 0.0
    %5783 = vadd.xlane.f32.xlu0 %v5782
    %v5784 = vpop.xlane.xlu0 %5783
    %v5785 = vsel %vm2478, %v5769, 0.0
    %5786 = vadd.xlane.f32.xlu0 %v5785
    %v5787 = vpop.xlane.xlu0 %5786
    %v5788 = vsel %vm2478, %v5771, 0.0
    %5789 = vadd.xlane.f32.xlu0 %v5788
    %v5790 = vpop.xlane.xlu0 %5789
    %v5791 = vsel %vm2478, %v5773, 0.0
    %5792 = vadd.xlane.f32.xlu0 %v5791
    %v5793 = vpop.xlane.xlu0 %5792
    %v5794 = vsel %vm2478, %v5775, 0.0
    %5795 = vadd.xlane.f32.xlu0 %v5794
    %v5796 = vpop.xlane.xlu0 %5795
    %v5797 = vsel %vm2478, %v5777, 0.0
    %5798 = vadd.xlane.f32.xlu0 %v5797
    %v5799 = vpop.xlane.xlu0 %5798
    %v5800 = vsel %vm2478, %v5779, 0.0
    %5801 = vadd.xlane.f32.xlu0 %v5800
    %v5802 = vpop.xlane.xlu0 %5801
    %v5803 = vsel %vm2478, %v5781, 0.0
    %5804 = vadd.xlane.f32.xlu0 %v5803
    %v5805 = vpop.xlane.xlu0 %5804
    %v5806 = vrcp.pop %v5784
    %v5807 = vmul.f32 %v5784, %v5806
    %v5808 = vsub.f32 1.0, %v5807
    %v5809 = vmul.f32 %v5806, %v5808
    %v5810 = vadd.f32 %v5806, %v5809
    %vm5811 = vweird.f32 %v5784
    %vm5812 = vweird.f32 %v5806
    %vm5813 = vmor %vm5811, %vm5812
    %v5814 = vsel %vm5813, %v5806, %v5810
    %v5815 = vand.u32 2147483647, %v5784
    %vm5816 = vcmp.eq.f32.partialorder %v5815, 8.507059e+37
    %v5817 = vand.u32 %v5784, 2147483648
    %v5818 = vor.u32 1.1754944e-38, %v5817
    %v5819 = vsel %vm5816, %v5818, %v5814
    %v5820 = vmul.f32 %v5767, %v5819
    %v5821 = vrcp.pop %v5787
    %v5822 = vmul.f32 %v5787, %v5821
    %v5823 = vsub.f32 1.0, %v5822
    %v5824 = vmul.f32 %v5821, %v5823
    %v5825 = vadd.f32 %v5821, %v5824
    %vm5826 = vweird.f32 %v5787
    %vm5827 = vweird.f32 %v5821
    %vm5828 = vmor %vm5826, %vm5827
    %v5829 = vsel %vm5828, %v5821, %v5825
    %v5830 = vand.u32 2147483647, %v5787
    %vm5831 = vcmp.eq.f32.partialorder %v5830, 8.507059e+37
    %v5832 = vand.u32 %v5787, 2147483648
    %v5833 = vor.u32 1.1754944e-38, %v5832
    %v5834 = vsel %vm5831, %v5833, %v5829
    %v5835 = vmul.f32 %v5769, %v5834
    %v5836 = vrcp.pop %v5790
    %v5837 = vmul.f32 %v5790, %v5836
    %v5838 = vsub.f32 1.0, %v5837
    %v5839 = vmul.f32 %v5836, %v5838
    %v5840 = vadd.f32 %v5836, %v5839
    %vm5841 = vweird.f32 %v5790
    %vm5842 = vweird.f32 %v5836
    %vm5843 = vmor %vm5841, %vm5842
    %v5844 = vsel %vm5843, %v5836, %v5840
    %v5845 = vand.u32 2147483647, %v5790
    %vm5846 = vcmp.eq.f32.partialorder %v5845, 8.507059e+37
    %v5847 = vand.u32 %v5790, 2147483648
    %v5848 = vor.u32 1.1754944e-38, %v5847
    %v5849 = vsel %vm5846, %v5848, %v5844
    %v5850 = vmul.f32 %v5771, %v5849
    %v5851 = vrcp.pop %v5793
    %v5852 = vmul.f32 %v5793, %v5851
    %v5853 = vsub.f32 1.0, %v5852
    %v5854 = vmul.f32 %v5851, %v5853
    %v5855 = vadd.f32 %v5851, %v5854
    %vm5856 = vweird.f32 %v5793
    %vm5857 = vweird.f32 %v5851
    %vm5858 = vmor %vm5856, %vm5857
    %v5859 = vsel %vm5858, %v5851, %v5855
    %v5860 = vand.u32 2147483647, %v5793
    %vm5861 = vcmp.eq.f32.partialorder %v5860, 8.507059e+37
    %v5862 = vand.u32 %v5793, 2147483648
    %v5863 = vor.u32 1.1754944e-38, %v5862
    %v5864 = vsel %vm5861, %v5863, %v5859
    %v5865 = vmul.f32 %v5773, %v5864
    %v5866 = vrcp.pop %v5796
    %v5867 = vmul.f32 %v5796, %v5866
    %v5868 = vsub.f32 1.0, %v5867
    %v5869 = vmul.f32 %v5866, %v5868
    %v5870 = vadd.f32 %v5866, %v5869
    %vm5871 = vweird.f32 %v5796
    %vm5872 = vweird.f32 %v5866
    %vm5873 = vmor %vm5871, %vm5872
    %v5874 = vsel %vm5873, %v5866, %v5870
    %v5875 = vand.u32 2147483647, %v5796
    %vm5876 = vcmp.eq.f32.partialorder %v5875, 8.507059e+37
    %v5877 = vand.u32 %v5796, 2147483648
    %v5878 = vor.u32 1.1754944e-38, %v5877
    %v5879 = vsel %vm5876, %v5878, %v5874
    %v5880 = vmul.f32 %v5775, %v5879
    %v5881 = vrcp.pop %v5799
    %v5882 = vmul.f32 %v5799, %v5881
    %v5883 = vsub.f32 1.0, %v5882
    %v5884 = vmul.f32 %v5881, %v5883
    %v5885 = vadd.f32 %v5881, %v5884
    %vm5886 = vweird.f32 %v5799
    %vm5887 = vweird.f32 %v5881
    %vm5888 = vmor %vm5886, %vm5887
    %v5889 = vsel %vm5888, %v5881, %v5885
    %v5890 = vand.u32 2147483647, %v5799
    %vm5891 = vcmp.eq.f32.partialorder %v5890, 8.507059e+37
    %v5892 = vand.u32 %v5799, 2147483648
    %v5893 = vor.u32 1.1754944e-38, %v5892
    %v5894 = vsel %vm5891, %v5893, %v5889
    %v5895 = vmul.f32 %v5777, %v5894
    %v5896 = vrcp.pop %v5802
    %v5897 = vmul.f32 %v5802, %v5896
    %v5898 = vsub.f32 1.0, %v5897
    %v5899 = vmul.f32 %v5896, %v5898
    %v5900 = vadd.f32 %v5896, %v5899
    %vm5901 = vweird.f32 %v5802
    %vm5902 = vweird.f32 %v5896
    %vm5903 = vmor %vm5901, %vm5902
    %v5904 = vsel %vm5903, %v5896, %v5900
    %v5905 = vand.u32 2147483647, %v5802
    %vm5906 = vcmp.eq.f32.partialorder %v5905, 8.507059e+37
    %v5907 = vand.u32 %v5802, 2147483648
    %v5908 = vor.u32 1.1754944e-38, %v5907
    %v5909 = vsel %vm5906, %v5908, %v5904
    %v5910 = vmul.f32 %v5779, %v5909
    %v5911 = vrcp.pop %v5805
    %v5912 = vmul.f32 %v5805, %v5911
    %v5913 = vsub.f32 1.0, %v5912
    %v5914 = vmul.f32 %v5911, %v5913
    %v5915 = vadd.f32 %v5911, %v5914
    %vm5916 = vweird.f32 %v5805
    %vm5917 = vweird.f32 %v5911
    %vm5918 = vmor %vm5916, %vm5917
    %v5919 = vsel %vm5918, %v5911, %v5915
    %v5920 = vand.u32 2147483647, %v5805
    %vm5921 = vcmp.eq.f32.partialorder %v5920, 8.507059e+37
    %v5922 = vand.u32 %v5805, 2147483648
    %v5923 = vor.u32 1.1754944e-38, %v5922
    %v5924 = vsel %vm5921, %v5923, %v5919
    %v5925 = vmul.f32 %v5781, %v5924
    %5934 = vrot.lane.b32.xlu0 %v1901, 64
    %v5935 = vpop.permute.xlu0 %5934
    %5936 = vrot.lane.b32.xlu0 %v1904, 64
    %v5937 = vpop.permute.xlu0 %5936
    %5938 = vrot.lane.b32.xlu0 %v1907, 64
    %v5939 = vpop.permute.xlu0 %5938
    %5940 = vrot.lane.b32.xlu0 %v1910, 64
    %v5941 = vpop.permute.xlu0 %5940
    %5942 = vrot.lane.b32.xlu0 %v1913, 64
    %v5943 = vpop.permute.xlu0 %5942
    %5944 = vrot.lane.b32.xlu0 %v1916, 64
    %v5945 = vpop.permute.xlu0 %5944
    %5946 = vrot.lane.b32.xlu0 %v1919, 64
    %v5947 = vpop.permute.xlu0 %5946
    %5948 = vrot.lane.b32.xlu0 %v1922, 64
    %v5949 = vpop.permute.xlu0 %5948
    %v5959 = vsel %vm2478, %v5820, 0
    %v5962 = vsel %vm2478, %v5835, 0
    %v5965 = vsel %vm2478, %v5850, 0
    %v5968 = vsel %vm2478, %v5865, 0
    %v5971 = vsel %vm2478, %v5880, 0
    %v5974 = vsel %vm2478, %v5895, 0
    %v5977 = vsel %vm2478, %v5910, 0
    %v5980 = vsel %vm2478, %v5925, 0
    %5982 = vmatpush.msra.mxu0 0.0
    %5983 = vmatpush.msra.mxu0 0.0
    %5984 = vmatpush.msra.mxu0 0.0
    %5985 = vmatpush.msra.mxu0 0.0
    %5986 = vmatpush.msra.mxu0 0.0
    %5987 = vmatpush.msra.mxu0 0.0
    %5988 = vmatpush.msra.mxu0 0.0
    %5989 = vmatpush.msra.mxu0 0.0
    %5990 = vmatpush.msra.mxu0 %v5949
    %5991 = vmatpush.msra.mxu0 %v5947
    %5992 = vmatpush.msra.mxu0 %v5945
    %5993 = vmatpush.msra.mxu0 %v5943
    %5994 = vmatpush.msra.mxu0 %v5941
    %5995 = vmatpush.msra.mxu0 %v5939
    %5996 = vmatpush.msra.mxu0 %v5937
    %5997 = vmatpush.msra.mxu0 %v5935
    %5998 = vmatmul.f32.gmra.mxu0 %v5959
    %v5999 = vpop.f32.mrf.mxu0
    %v6000 = vadd.f32 0.0, %v5999
    %6001 = vmatmul.f32.gmra.mxu0 %v5962
    %v6002 = vpop.f32.mrf.mxu0
    %v6003 = vadd.f32 0.0, %v6002
    %6004 = vmatmul.f32.gmra.mxu0 %v5965
    %v6005 = vpop.f32.mrf.mxu0
    %v6006 = vadd.f32 0.0, %v6005
    %6007 = vmatmul.f32.gmra.mxu0 %v5968
    %v6008 = vpop.f32.mrf.mxu0
    %v6009 = vadd.f32 0.0, %v6008
    %6010 = vmatmul.f32.gmra.mxu0 %v5971
    %v6011 = vpop.f32.mrf.mxu0
    %v6012 = vadd.f32 0.0, %v6011
    %6013 = vmatmul.f32.gmra.mxu0 %v5974
    %v6014 = vpop.f32.mrf.mxu0
    %v6015 = vadd.f32 0.0, %v6014
    %6016 = vmatmul.f32.gmra.mxu0 %v5977
    %v6017 = vpop.f32.mrf.mxu0
    %v6018 = vadd.f32 0.0, %v6017
    %6019 = vmatmul.f32.gmra.mxu0 %v5980
    %v6020 = vpop.f32.mrf.mxu0
    %v6021 = vadd.f32 0.0, %v6020
    %6022 = vdwg.mxu0
    %v6024 = vsel %vm2478, %v926, 0
    %v6027 = vsel %vm2478, %v929, 0
    %v6030 = vsel %vm2478, %v932, 0
    %v6033 = vsel %vm2478, %v935, 0
    %v6036 = vsel %vm2478, %v938, 0
    %v6039 = vsel %vm2478, %v941, 0
    %v6042 = vsel %vm2478, %v944, 0
    %v6045 = vsel %vm2478, %v947, 0
    %v6048 = vsel %vm2478, %v1511, 0
    %v6051 = vsel %vm2478, %v1514, 0
    %v6054 = vsel %vm2478, %v1517, 0
    %v6057 = vsel %vm2478, %v1520, 0
    %v6060 = vsel %vm2478, %v1523, 0
    %v6063 = vsel %vm2478, %v1526, 0
    %v6066 = vsel %vm2478, %v1529, 0
    %v6069 = vsel %vm2478, %v1532, 0
    %6071 = vmatpush.xpose.msra.mxu0 0.0
    %6072 = vmatpush.xpose.msra.mxu0 0.0
    %6073 = vmatpush.xpose.msra.mxu0 0.0
    %6074 = vmatpush.xpose.msra.mxu0 0.0
    %6075 = vmatpush.xpose.msra.mxu0 0.0
    %6076 = vmatpush.xpose.msra.mxu0 0.0
    %6077 = vmatpush.xpose.msra.mxu0 0.0
    %6078 = vmatpush.xpose.msra.mxu0 0.0
    %6079 = vmatpush.xpose.msra.mxu0 %v6069
    %6080 = vmatpush.xpose.msra.mxu0 %v6066
    %6081 = vmatpush.xpose.msra.mxu0 %v6063
    %6082 = vmatpush.xpose.msra.mxu0 %v6060
    %6083 = vmatpush.xpose.msra.mxu0 %v6057
    %6084 = vmatpush.xpose.msra.mxu0 %v6054
    %6085 = vmatpush.xpose.msra.mxu0 %v6051
    %6086 = vmatpush.xpose.msra.mxu0 %v6048
    %6087 = vmatmul.f32.gmra.mxu0 %v6024
    %v6088 = vpop.f32.mrf.mxu0
    %v6089 = vadd.f32 0.0, %v6088
    %6090 = vmatmul.f32.gmra.mxu0 %v6027
    %v6091 = vpop.f32.mrf.mxu0
    %v6092 = vadd.f32 0.0, %v6091
    %6093 = vmatmul.f32.gmra.mxu0 %v6030
    %v6094 = vpop.f32.mrf.mxu0
    %v6095 = vadd.f32 0.0, %v6094
    %6096 = vmatmul.f32.gmra.mxu0 %v6033
    %v6097 = vpop.f32.mrf.mxu0
    %v6098 = vadd.f32 0.0, %v6097
    %6099 = vmatmul.f32.gmra.mxu0 %v6036
    %v6100 = vpop.f32.mrf.mxu0
    %v6101 = vadd.f32 0.0, %v6100
    %6102 = vmatmul.f32.gmra.mxu0 %v6039
    %v6103 = vpop.f32.mrf.mxu0
    %v6104 = vadd.f32 0.0, %v6103
    %6105 = vmatmul.f32.gmra.mxu0 %v6042
    %v6106 = vpop.f32.mrf.mxu0
    %v6107 = vadd.f32 0.0, %v6106
    %6108 = vmatmul.f32.gmra.mxu0 %v6045
    %v6109 = vpop.f32.mrf.mxu0
    %v6110 = vadd.f32 0.0, %v6109
    %6111 = vdwg.mxu0
    %v6112 = vsel %vm2470, %v6089, -inf
    %v6113 = vsel %vm2471, %v6092, -inf
    %v6114 = vsel %vm2472, %v6095, -inf
    %v6115 = vsel %vm2473, %v6098, -inf
    %v6116 = vsel %vm2474, %v6101, -inf
    %v6117 = vsel %vm2475, %v6104, -inf
    %v6118 = vsel %vm2476, %v6107, -inf
    %v6119 = vsel %vm2477, %v6110, -inf
    %v6120 = vsel %vm2478, %v6112, -inf
    %6121 = vmax.xlane.f32.xlu0 %v6120
    %v6122 = vpop.xlane.xlu0 %6121
    %v6123 = vsel %vm2478, %v6113, -inf
    %6124 = vmax.xlane.f32.xlu0 %v6123
    %v6125 = vpop.xlane.xlu0 %6124
    %v6126 = vsel %vm2478, %v6114, -inf
    %6127 = vmax.xlane.f32.xlu0 %v6126
    %v6128 = vpop.xlane.xlu0 %6127
    %v6129 = vsel %vm2478, %v6115, -inf
    %6130 = vmax.xlane.f32.xlu0 %v6129
    %v6131 = vpop.xlane.xlu0 %6130
    %v6132 = vsel %vm2478, %v6116, -inf
    %6133 = vmax.xlane.f32.xlu0 %v6132
    %v6134 = vpop.xlane.xlu0 %6133
    %v6135 = vsel %vm2478, %v6117, -inf
    %6136 = vmax.xlane.f32.xlu0 %v6135
    %v6137 = vpop.xlane.xlu0 %6136
    %v6138 = vsel %vm2478, %v6118, -inf
    %6139 = vmax.xlane.f32.xlu0 %v6138
    %v6140 = vpop.xlane.xlu0 %6139
    %v6141 = vsel %vm2478, %v6119, -inf
    %6142 = vmax.xlane.f32.xlu0 %v6141
    %v6143 = vpop.xlane.xlu0 %6142
    %v6144 = vsub.f32 %v6112, %v6122
    %v6145 = vsub.f32 %v6113, %v6125
    %v6146 = vsub.f32 %v6114, %v6128
    %v6147 = vsub.f32 %v6115, %v6131
    %v6148 = vsub.f32 %v6116, %v6134
    %v6149 = vsub.f32 %v6117, %v6137
    %v6150 = vsub.f32 %v6118, %v6140
    %v6151 = vsub.f32 %v6119, %v6143
    %v6152 = vmul.f32 %v6144, 1.442695
    %v6153 = vpow.pop %v6152
    %v6154 = vmul.f32 %v6145, 1.442695
    %v6155 = vpow.pop %v6154
    %v6156 = vmul.f32 %v6146, 1.442695
    %v6157 = vpow.pop %v6156
    %v6158 = vmul.f32 %v6147, 1.442695
    %v6159 = vpow.pop %v6158
    %v6160 = vmul.f32 %v6148, 1.442695
    %v6161 = vpow.pop %v6160
    %v6162 = vmul.f32 %v6149, 1.442695
    %v6163 = vpow.pop %v6162
    %v6164 = vmul.f32 %v6150, 1.442695
    %v6165 = vpow.pop %v6164
    %v6166 = vmul.f32 %v6151, 1.442695
    %v6167 = vpow.pop %v6166
    %v6168 = vsel %vm2478, %v6153, 0.0
    %6169 = vadd.xlane.f32.xlu0 %v6168
    %v6170 = vpop.xlane.xlu0 %6169
    %v6171 = vsel %vm2478, %v6155, 0.0
    %6172 = vadd.xlane.f32.xlu0 %v6171
    %v6173 = vpop.xlane.xlu0 %6172
    %v6174 = vsel %vm2478, %v6157, 0.0
    %6175 = vadd.xlane.f32.xlu0 %v6174
    %v6176 = vpop.xlane.xlu0 %6175
    %v6177 = vsel %vm2478, %v6159, 0.0
    %6178 = vadd.xlane.f32.xlu0 %v6177
    %v6179 = vpop.xlane.xlu0 %6178
    %v6180 = vsel %vm2478, %v6161, 0.0
    %6181 = vadd.xlane.f32.xlu0 %v6180
    %v6182 = vpop.xlane.xlu0 %6181
    %v6183 = vsel %vm2478, %v6163, 0.0
    %6184 = vadd.xlane.f32.xlu0 %v6183
    %v6185 = vpop.xlane.xlu0 %6184
    %v6186 = vsel %vm2478, %v6165, 0.0
    %6187 = vadd.xlane.f32.xlu0 %v6186
    %v6188 = vpop.xlane.xlu0 %6187
    %v6189 = vsel %vm2478, %v6167, 0.0
    %6190 = vadd.xlane.f32.xlu0 %v6189
    %v6191 = vpop.xlane.xlu0 %6190
    %v6192 = vrcp.pop %v6170
    %v6193 = vmul.f32 %v6170, %v6192
    %v6194 = vsub.f32 1.0, %v6193
    %v6195 = vmul.f32 %v6192, %v6194
    %v6196 = vadd.f32 %v6192, %v6195
    %vm6197 = vweird.f32 %v6170
    %vm6198 = vweird.f32 %v6192
    %vm6199 = vmor %vm6197, %vm6198
    %v6200 = vsel %vm6199, %v6192, %v6196
    %v6201 = vand.u32 2147483647, %v6170
    %vm6202 = vcmp.eq.f32.partialorder %v6201, 8.507059e+37
    %v6203 = vand.u32 %v6170, 2147483648
    %v6204 = vor.u32 1.1754944e-38, %v6203
    %v6205 = vsel %vm6202, %v6204, %v6200
    %v6206 = vmul.f32 %v6153, %v6205
    %v6207 = vrcp.pop %v6173
    %v6208 = vmul.f32 %v6173, %v6207
    %v6209 = vsub.f32 1.0, %v6208
    %v6210 = vmul.f32 %v6207, %v6209
    %v6211 = vadd.f32 %v6207, %v6210
    %vm6212 = vweird.f32 %v6173
    %vm6213 = vweird.f32 %v6207
    %vm6214 = vmor %vm6212, %vm6213
    %v6215 = vsel %vm6214, %v6207, %v6211
    %v6216 = vand.u32 2147483647, %v6173
    %vm6217 = vcmp.eq.f32.partialorder %v6216, 8.507059e+37
    %v6218 = vand.u32 %v6173, 2147483648
    %v6219 = vor.u32 1.1754944e-38, %v6218
    %v6220 = vsel %vm6217, %v6219, %v6215
    %v6221 = vmul.f32 %v6155, %v6220
    %v6222 = vrcp.pop %v6176
    %v6223 = vmul.f32 %v6176, %v6222
    %v6224 = vsub.f32 1.0, %v6223
    %v6225 = vmul.f32 %v6222, %v6224
    %v6226 = vadd.f32 %v6222, %v6225
    %vm6227 = vweird.f32 %v6176
    %vm6228 = vweird.f32 %v6222
    %vm6229 = vmor %vm6227, %vm6228
    %v6230 = vsel %vm6229, %v6222, %v6226
    %v6231 = vand.u32 2147483647, %v6176
    %vm6232 = vcmp.eq.f32.partialorder %v6231, 8.507059e+37
    %v6233 = vand.u32 %v6176, 2147483648
    %v6234 = vor.u32 1.1754944e-38, %v6233
    %v6235 = vsel %vm6232, %v6234, %v6230
    %v6236 = vmul.f32 %v6157, %v6235
    %v6237 = vrcp.pop %v6179
    %v6238 = vmul.f32 %v6179, %v6237
    %v6239 = vsub.f32 1.0, %v6238
    %v6240 = vmul.f32 %v6237, %v6239
    %v6241 = vadd.f32 %v6237, %v6240
    %vm6242 = vweird.f32 %v6179
    %vm6243 = vweird.f32 %v6237
    %vm6244 = vmor %vm6242, %vm6243
    %v6245 = vsel %vm6244, %v6237, %v6241
    %v6246 = vand.u32 2147483647, %v6179
    %vm6247 = vcmp.eq.f32.partialorder %v6246, 8.507059e+37
    %v6248 = vand.u32 %v6179, 2147483648
    %v6249 = vor.u32 1.1754944e-38, %v6248
    %v6250 = vsel %vm6247, %v6249, %v6245
    %v6251 = vmul.f32 %v6159, %v6250
    %v6252 = vrcp.pop %v6182
    %v6253 = vmul.f32 %v6182, %v6252
    %v6254 = vsub.f32 1.0, %v6253
    %v6255 = vmul.f32 %v6252, %v6254
    %v6256 = vadd.f32 %v6252, %v6255
    %vm6257 = vweird.f32 %v6182
    %vm6258 = vweird.f32 %v6252
    %vm6259 = vmor %vm6257, %vm6258
    %v6260 = vsel %vm6259, %v6252, %v6256
    %v6261 = vand.u32 2147483647, %v6182
    %vm6262 = vcmp.eq.f32.partialorder %v6261, 8.507059e+37
    %v6263 = vand.u32 %v6182, 2147483648
    %v6264 = vor.u32 1.1754944e-38, %v6263
    %v6265 = vsel %vm6262, %v6264, %v6260
    %v6266 = vmul.f32 %v6161, %v6265
    %v6267 = vrcp.pop %v6185
    %v6268 = vmul.f32 %v6185, %v6267
    %v6269 = vsub.f32 1.0, %v6268
    %v6270 = vmul.f32 %v6267, %v6269
    %v6271 = vadd.f32 %v6267, %v6270
    %vm6272 = vweird.f32 %v6185
    %vm6273 = vweird.f32 %v6267
    %vm6274 = vmor %vm6272, %vm6273
    %v6275 = vsel %vm6274, %v6267, %v6271
    %v6276 = vand.u32 2147483647, %v6185
    %vm6277 = vcmp.eq.f32.partialorder %v6276, 8.507059e+37
    %v6278 = vand.u32 %v6185, 2147483648
    %v6279 = vor.u32 1.1754944e-38, %v6278
    %v6280 = vsel %vm6277, %v6279, %v6275
    %v6281 = vmul.f32 %v6163, %v6280
    %v6282 = vrcp.pop %v6188
    %v6283 = vmul.f32 %v6188, %v6282
    %v6284 = vsub.f32 1.0, %v6283
    %v6285 = vmul.f32 %v6282, %v6284
    %v6286 = vadd.f32 %v6282, %v6285
    %vm6287 = vweird.f32 %v6188
    %vm6288 = vweird.f32 %v6282
    %vm6289 = vmor %vm6287, %vm6288
    %v6290 = vsel %vm6289, %v6282, %v6286
    %v6291 = vand.u32 2147483647, %v6188
    %vm6292 = vcmp.eq.f32.partialorder %v6291, 8.507059e+37
    %v6293 = vand.u32 %v6188, 2147483648
    %v6294 = vor.u32 1.1754944e-38, %v6293
    %v6295 = vsel %vm6292, %v6294, %v6290
    %v6296 = vmul.f32 %v6165, %v6295
    %v6297 = vrcp.pop %v6191
    %v6298 = vmul.f32 %v6191, %v6297
    %v6299 = vsub.f32 1.0, %v6298
    %v6300 = vmul.f32 %v6297, %v6299
    %v6301 = vadd.f32 %v6297, %v6300
    %vm6302 = vweird.f32 %v6191
    %vm6303 = vweird.f32 %v6297
    %vm6304 = vmor %vm6302, %vm6303
    %v6305 = vsel %vm6304, %v6297, %v6301
    %v6306 = vand.u32 2147483647, %v6191
    %vm6307 = vcmp.eq.f32.partialorder %v6306, 8.507059e+37
    %v6308 = vand.u32 %v6191, 2147483648
    %v6309 = vor.u32 1.1754944e-38, %v6308
    %v6310 = vsel %vm6307, %v6309, %v6305
    %v6311 = vmul.f32 %v6167, %v6310
    %v6313 = vsel %vm2478, %v6206, 0
    %v6316 = vsel %vm2478, %v6221, 0
    %v6319 = vsel %vm2478, %v6236, 0
    %v6322 = vsel %vm2478, %v6251, 0
    %v6325 = vsel %vm2478, %v6266, 0
    %v6328 = vsel %vm2478, %v6281, 0
    %v6331 = vsel %vm2478, %v6296, 0
    %v6334 = vsel %vm2478, %v6311, 0
    %6336 = vmatpush.msra.mxu0 0.0
    %6337 = vmatpush.msra.mxu0 0.0
    %6338 = vmatpush.msra.mxu0 0.0
    %6339 = vmatpush.msra.mxu0 0.0
    %6340 = vmatpush.msra.mxu0 0.0
    %6341 = vmatpush.msra.mxu0 0.0
    %6342 = vmatpush.msra.mxu0 0.0
    %6343 = vmatpush.msra.mxu0 0.0
    %6344 = vmatpush.msra.mxu0 %v2117
    %6345 = vmatpush.msra.mxu0 %v2114
    %6346 = vmatpush.msra.mxu0 %v2111
    %6347 = vmatpush.msra.mxu0 %v2108
    %6348 = vmatpush.msra.mxu0 %v2105
    %6349 = vmatpush.msra.mxu0 %v2102
    %6350 = vmatpush.msra.mxu0 %v2099
    %6351 = vmatpush.msra.mxu0 %v2096
    %6352 = vmatmul.f32.gmra.mxu0 %v6313
    %v6353 = vpop.f32.mrf.mxu0
    %v6354 = vadd.f32 0.0, %v6353
    %6355 = vmatmul.f32.gmra.mxu0 %v6316
    %v6356 = vpop.f32.mrf.mxu0
    %v6357 = vadd.f32 0.0, %v6356
    %6358 = vmatmul.f32.gmra.mxu0 %v6319
    %v6359 = vpop.f32.mrf.mxu0
    %v6360 = vadd.f32 0.0, %v6359
    %6361 = vmatmul.f32.gmra.mxu0 %v6322
    %v6362 = vpop.f32.mrf.mxu0
    %v6363 = vadd.f32 0.0, %v6362
    %6364 = vmatmul.f32.gmra.mxu0 %v6325
    %v6365 = vpop.f32.mrf.mxu0
    %v6366 = vadd.f32 0.0, %v6365
    %6367 = vmatmul.f32.gmra.mxu0 %v6328
    %v6368 = vpop.f32.mrf.mxu0
    %v6369 = vadd.f32 0.0, %v6368
    %6370 = vmatmul.f32.gmra.mxu0 %v6331
    %v6371 = vpop.f32.mrf.mxu0
    %v6372 = vadd.f32 0.0, %v6371
    %6373 = vmatmul.f32.gmra.mxu0 %v6334
    %v6374 = vpop.f32.mrf.mxu0
    %v6375 = vadd.f32 0.0, %v6374
    %6376 = vdwg.mxu0
    %6377 = vrot.lane.b32.xlu0 %v926, 64
    %v6378 = vpop.permute.xlu0 %6377
    %6379 = vrot.lane.b32.xlu0 %v929, 64
    %v6380 = vpop.permute.xlu0 %6379
    %6381 = vrot.lane.b32.xlu0 %v932, 64
    %v6382 = vpop.permute.xlu0 %6381
    %6383 = vrot.lane.b32.xlu0 %v935, 64
    %v6384 = vpop.permute.xlu0 %6383
    %6385 = vrot.lane.b32.xlu0 %v938, 64
    %v6386 = vpop.permute.xlu0 %6385
    %6387 = vrot.lane.b32.xlu0 %v941, 64
    %v6388 = vpop.permute.xlu0 %6387
    %6389 = vrot.lane.b32.xlu0 %v944, 64
    %v6390 = vpop.permute.xlu0 %6389
    %6391 = vrot.lane.b32.xlu0 %v947, 64
    %v6392 = vpop.permute.xlu0 %6391
    %6393 = vrot.lane.b32.xlu0 %v1511, 64
    %v6394 = vpop.permute.xlu0 %6393
    %6395 = vrot.lane.b32.xlu0 %v1514, 64
    %v6396 = vpop.permute.xlu0 %6395
    %6397 = vrot.lane.b32.xlu0 %v1517, 64
    %v6398 = vpop.permute.xlu0 %6397
    %6399 = vrot.lane.b32.xlu0 %v1520, 64
    %v6400 = vpop.permute.xlu0 %6399
    %6401 = vrot.lane.b32.xlu0 %v1523, 64
    %v6402 = vpop.permute.xlu0 %6401
    %6403 = vrot.lane.b32.xlu0 %v1526, 64
    %v6404 = vpop.permute.xlu0 %6403
    %6405 = vrot.lane.b32.xlu0 %v1529, 64
    %v6406 = vpop.permute.xlu0 %6405
    %6407 = vrot.lane.b32.xlu0 %v1532, 64
    %v6408 = vpop.permute.xlu0 %6407
    %v6409 = vsel %vm2478, %v6378, 0
    %v6411 = vsel %vm2478, %v6380, 0
    %v6413 = vsel %vm2478, %v6382, 0
    %v6415 = vsel %vm2478, %v6384, 0
    %v6417 = vsel %vm2478, %v6386, 0
    %v6419 = vsel %vm2478, %v6388, 0
    %v6421 = vsel %vm2478, %v6390, 0
    %v6423 = vsel %vm2478, %v6392, 0
    %v6425 = vsel %vm2478, %v6394, 0
    %v6427 = vsel %vm2478, %v6396, 0
    %v6429 = vsel %vm2478, %v6398, 0
    %v6431 = vsel %vm2478, %v6400, 0
    %v6433 = vsel %vm2478, %v6402, 0
    %v6435 = vsel %vm2478, %v6404, 0
    %v6437 = vsel %vm2478, %v6406, 0
    %v6439 = vsel %vm2478, %v6408, 0
    %6441 = vmatpush.xpose.msra.mxu0 0.0
    %6442 = vmatpush.xpose.msra.mxu0 0.0
    %6443 = vmatpush.xpose.msra.mxu0 0.0
    %6444 = vmatpush.xpose.msra.mxu0 0.0
    %6445 = vmatpush.xpose.msra.mxu0 0.0
    %6446 = vmatpush.xpose.msra.mxu0 0.0
    %6447 = vmatpush.xpose.msra.mxu0 0.0
    %6448 = vmatpush.xpose.msra.mxu0 0.0
    %6449 = vmatpush.xpose.msra.mxu0 %v6439
    %6450 = vmatpush.xpose.msra.mxu0 %v6437
    %6451 = vmatpush.xpose.msra.mxu0 %v6435
    %6452 = vmatpush.xpose.msra.mxu0 %v6433
    %6453 = vmatpush.xpose.msra.mxu0 %v6431
    %6454 = vmatpush.xpose.msra.mxu0 %v6429
    %6455 = vmatpush.xpose.msra.mxu0 %v6427
    %6456 = vmatpush.xpose.msra.mxu0 %v6425
    %6457 = vmatmul.f32.gmra.mxu0 %v6409
    %v6458 = vpop.f32.mrf.mxu0
    %v6459 = vadd.f32 0.0, %v6458
    %6460 = vmatmul.f32.gmra.mxu0 %v6411
    %v6461 = vpop.f32.mrf.mxu0
    %v6462 = vadd.f32 0.0, %v6461
    %6463 = vmatmul.f32.gmra.mxu0 %v6413
    %v6464 = vpop.f32.mrf.mxu0
    %v6465 = vadd.f32 0.0, %v6464
    %6466 = vmatmul.f32.gmra.mxu0 %v6415
    %v6467 = vpop.f32.mrf.mxu0
    %v6468 = vadd.f32 0.0, %v6467
    %6469 = vmatmul.f32.gmra.mxu0 %v6417
    %v6470 = vpop.f32.mrf.mxu0
    %v6471 = vadd.f32 0.0, %v6470
    %6472 = vmatmul.f32.gmra.mxu0 %v6419
    %v6473 = vpop.f32.mrf.mxu0
    %v6474 = vadd.f32 0.0, %v6473
    %6475 = vmatmul.f32.gmra.mxu0 %v6421
    %v6476 = vpop.f32.mrf.mxu0
    %v6477 = vadd.f32 0.0, %v6476
    %6478 = vmatmul.f32.gmra.mxu0 %v6423
    %v6479 = vpop.f32.mrf.mxu0
    %v6480 = vadd.f32 0.0, %v6479
    %6481 = vdwg.mxu0
    %v6482 = vsel %vm2470, %v6459, -inf
    %v6483 = vsel %vm2471, %v6462, -inf
    %v6484 = vsel %vm2472, %v6465, -inf
    %v6485 = vsel %vm2473, %v6468, -inf
    %v6486 = vsel %vm2474, %v6471, -inf
    %v6487 = vsel %vm2475, %v6474, -inf
    %v6488 = vsel %vm2476, %v6477, -inf
    %v6489 = vsel %vm2477, %v6480, -inf
    %v6490 = vsel %vm2478, %v6482, -inf
    %6491 = vmax.xlane.f32.xlu0 %v6490
    %v6492 = vpop.xlane.xlu0 %6491
    %v6493 = vsel %vm2478, %v6483, -inf
    %6494 = vmax.xlane.f32.xlu0 %v6493
    %v6495 = vpop.xlane.xlu0 %6494
    %v6496 = vsel %vm2478, %v6484, -inf
    %6497 = vmax.xlane.f32.xlu0 %v6496
    %v6498 = vpop.xlane.xlu0 %6497
    %v6499 = vsel %vm2478, %v6485, -inf
    %6500 = vmax.xlane.f32.xlu0 %v6499
    %v6501 = vpop.xlane.xlu0 %6500
    %v6502 = vsel %vm2478, %v6486, -inf
    %6503 = vmax.xlane.f32.xlu0 %v6502
    %v6504 = vpop.xlane.xlu0 %6503
    %v6505 = vsel %vm2478, %v6487, -inf
    %6506 = vmax.xlane.f32.xlu0 %v6505
    %v6507 = vpop.xlane.xlu0 %6506
    %v6508 = vsel %vm2478, %v6488, -inf
    %6509 = vmax.xlane.f32.xlu0 %v6508
    %v6510 = vpop.xlane.xlu0 %6509
    %v6511 = vsel %vm2478, %v6489, -inf
    %6512 = vmax.xlane.f32.xlu0 %v6511
    %v6513 = vpop.xlane.xlu0 %6512
    %v6514 = vsub.f32 %v6482, %v6492
    %v6515 = vsub.f32 %v6483, %v6495
    %v6516 = vsub.f32 %v6484, %v6498
    %v6517 = vsub.f32 %v6485, %v6501
    %v6518 = vsub.f32 %v6486, %v6504
    %v6519 = vsub.f32 %v6487, %v6507
    %v6520 = vsub.f32 %v6488, %v6510
    %v6521 = vsub.f32 %v6489, %v6513
    %v6522 = vmul.f32 %v6514, 1.442695
    %v6523 = vpow.pop %v6522
    %v6524 = vmul.f32 %v6515, 1.442695
    %v6525 = vpow.pop %v6524
    %v6526 = vmul.f32 %v6516, 1.442695
    %v6527 = vpow.pop %v6526
    %v6528 = vmul.f32 %v6517, 1.442695
    %v6529 = vpow.pop %v6528
    %v6530 = vmul.f32 %v6518, 1.442695
    %v6531 = vpow.pop %v6530
    %v6532 = vmul.f32 %v6519, 1.442695
    %v6533 = vpow.pop %v6532
    %v6534 = vmul.f32 %v6520, 1.442695
    %v6535 = vpow.pop %v6534
    %v6536 = vmul.f32 %v6521, 1.442695
    %v6537 = vpow.pop %v6536
    %v6538 = vsel %vm2478, %v6523, 0.0
    %6539 = vadd.xlane.f32.xlu0 %v6538
    %v6540 = vpop.xlane.xlu0 %6539
    %v6541 = vsel %vm2478, %v6525, 0.0
    %6542 = vadd.xlane.f32.xlu0 %v6541
    %v6543 = vpop.xlane.xlu0 %6542
    %v6544 = vsel %vm2478, %v6527, 0.0
    %6545 = vadd.xlane.f32.xlu0 %v6544
    %v6546 = vpop.xlane.xlu0 %6545
    %v6547 = vsel %vm2478, %v6529, 0.0
    %6548 = vadd.xlane.f32.xlu0 %v6547
    %v6549 = vpop.xlane.xlu0 %6548
    %v6550 = vsel %vm2478, %v6531, 0.0
    %6551 = vadd.xlane.f32.xlu0 %v6550
    %v6552 = vpop.xlane.xlu0 %6551
    %v6553 = vsel %vm2478, %v6533, 0.0
    %6554 = vadd.xlane.f32.xlu0 %v6553
    %v6555 = vpop.xlane.xlu0 %6554
    %v6556 = vsel %vm2478, %v6535, 0.0
    %6557 = vadd.xlane.f32.xlu0 %v6556
    %v6558 = vpop.xlane.xlu0 %6557
    %v6559 = vsel %vm2478, %v6537, 0.0
    %6560 = vadd.xlane.f32.xlu0 %v6559
    %v6561 = vpop.xlane.xlu0 %6560
    %v6562 = vrcp.pop %v6540
    %v6563 = vmul.f32 %v6540, %v6562
    %v6564 = vsub.f32 1.0, %v6563
    %v6565 = vmul.f32 %v6562, %v6564
    %v6566 = vadd.f32 %v6562, %v6565
    %vm6567 = vweird.f32 %v6540
    %vm6568 = vweird.f32 %v6562
    %vm6569 = vmor %vm6567, %vm6568
    %v6570 = vsel %vm6569, %v6562, %v6566
    %v6571 = vand.u32 2147483647, %v6540
    %vm6572 = vcmp.eq.f32.partialorder %v6571, 8.507059e+37
    %v6573 = vand.u32 %v6540, 2147483648
    %v6574 = vor.u32 1.1754944e-38, %v6573
    %v6575 = vsel %vm6572, %v6574, %v6570
    %v6576 = vmul.f32 %v6523, %v6575
    %v6577 = vrcp.pop %v6543
    %v6578 = vmul.f32 %v6543, %v6577
    %v6579 = vsub.f32 1.0, %v6578
    %v6580 = vmul.f32 %v6577, %v6579
    %v6581 = vadd.f32 %v6577, %v6580
    %vm6582 = vweird.f32 %v6543
    %vm6583 = vweird.f32 %v6577
    %vm6584 = vmor %vm6582, %vm6583
    %v6585 = vsel %vm6584, %v6577, %v6581
    %v6586 = vand.u32 2147483647, %v6543
    %vm6587 = vcmp.eq.f32.partialorder %v6586, 8.507059e+37
    %v6588 = vand.u32 %v6543, 2147483648
    %v6589 = vor.u32 1.1754944e-38, %v6588
    %v6590 = vsel %vm6587, %v6589, %v6585
    %v6591 = vmul.f32 %v6525, %v6590
    %v6592 = vrcp.pop %v6546
    %v6593 = vmul.f32 %v6546, %v6592
    %v6594 = vsub.f32 1.0, %v6593
    %v6595 = vmul.f32 %v6592, %v6594
    %v6596 = vadd.f32 %v6592, %v6595
    %vm6597 = vweird.f32 %v6546
    %vm6598 = vweird.f32 %v6592
    %vm6599 = vmor %vm6597, %vm6598
    %v6600 = vsel %vm6599, %v6592, %v6596
    %v6601 = vand.u32 2147483647, %v6546
    %vm6602 = vcmp.eq.f32.partialorder %v6601, 8.507059e+37
    %v6603 = vand.u32 %v6546, 2147483648
    %v6604 = vor.u32 1.1754944e-38, %v6603
    %v6605 = vsel %vm6602, %v6604, %v6600
    %v6606 = vmul.f32 %v6527, %v6605
    %v6607 = vrcp.pop %v6549
    %v6608 = vmul.f32 %v6549, %v6607
    %v6609 = vsub.f32 1.0, %v6608
    %v6610 = vmul.f32 %v6607, %v6609
    %v6611 = vadd.f32 %v6607, %v6610
    %vm6612 = vweird.f32 %v6549
    %vm6613 = vweird.f32 %v6607
    %vm6614 = vmor %vm6612, %vm6613
    %v6615 = vsel %vm6614, %v6607, %v6611
    %v6616 = vand.u32 2147483647, %v6549
    %vm6617 = vcmp.eq.f32.partialorder %v6616, 8.507059e+37
    %v6618 = vand.u32 %v6549, 2147483648
    %v6619 = vor.u32 1.1754944e-38, %v6618
    %v6620 = vsel %vm6617, %v6619, %v6615
    %v6621 = vmul.f32 %v6529, %v6620
    %v6622 = vrcp.pop %v6552
    %v6623 = vmul.f32 %v6552, %v6622
    %v6624 = vsub.f32 1.0, %v6623
    %v6625 = vmul.f32 %v6622, %v6624
    %v6626 = vadd.f32 %v6622, %v6625
    %vm6627 = vweird.f32 %v6552
    %vm6628 = vweird.f32 %v6622
    %vm6629 = vmor %vm6627, %vm6628
    %v6630 = vsel %vm6629, %v6622, %v6626
    %v6631 = vand.u32 2147483647, %v6552
    %vm6632 = vcmp.eq.f32.partialorder %v6631, 8.507059e+37
    %v6633 = vand.u32 %v6552, 2147483648
    %v6634 = vor.u32 1.1754944e-38, %v6633
    %v6635 = vsel %vm6632, %v6634, %v6630
    %v6636 = vmul.f32 %v6531, %v6635
    %v6637 = vrcp.pop %v6555
    %v6638 = vmul.f32 %v6555, %v6637
    %v6639 = vsub.f32 1.0, %v6638
    %v6640 = vmul.f32 %v6637, %v6639
    %v6641 = vadd.f32 %v6637, %v6640
    %vm6642 = vweird.f32 %v6555
    %vm6643 = vweird.f32 %v6637
    %vm6644 = vmor %vm6642, %vm6643
    %v6645 = vsel %vm6644, %v6637, %v6641
    %v6646 = vand.u32 2147483647, %v6555
    %vm6647 = vcmp.eq.f32.partialorder %v6646, 8.507059e+37
    %v6648 = vand.u32 %v6555, 2147483648
    %v6649 = vor.u32 1.1754944e-38, %v6648
    %v6650 = vsel %vm6647, %v6649, %v6645
    %v6651 = vmul.f32 %v6533, %v6650
    %v6652 = vrcp.pop %v6558
    %v6653 = vmul.f32 %v6558, %v6652
    %v6654 = vsub.f32 1.0, %v6653
    %v6655 = vmul.f32 %v6652, %v6654
    %v6656 = vadd.f32 %v6652, %v6655
    %vm6657 = vweird.f32 %v6558
    %vm6658 = vweird.f32 %v6652
    %vm6659 = vmor %vm6657, %vm6658
    %v6660 = vsel %vm6659, %v6652, %v6656
    %v6661 = vand.u32 2147483647, %v6558
    %vm6662 = vcmp.eq.f32.partialorder %v6661, 8.507059e+37
    %v6663 = vand.u32 %v6558, 2147483648
    %v6664 = vor.u32 1.1754944e-38, %v6663
    %v6665 = vsel %vm6662, %v6664, %v6660
    %v6666 = vmul.f32 %v6535, %v6665
    %v6667 = vrcp.pop %v6561
    %v6668 = vmul.f32 %v6561, %v6667
    %v6669 = vsub.f32 1.0, %v6668
    %v6670 = vmul.f32 %v6667, %v6669
    %v6671 = vadd.f32 %v6667, %v6670
    %vm6672 = vweird.f32 %v6561
    %vm6673 = vweird.f32 %v6667
    %vm6674 = vmor %vm6672, %vm6673
    %v6675 = vsel %vm6674, %v6667, %v6671
    %v6676 = vand.u32 2147483647, %v6561
    %vm6677 = vcmp.eq.f32.partialorder %v6676, 8.507059e+37
    %v6678 = vand.u32 %v6561, 2147483648
    %v6679 = vor.u32 1.1754944e-38, %v6678
    %v6680 = vsel %vm6677, %v6679, %v6675
    %v6681 = vmul.f32 %v6537, %v6680
    %6690 = vrot.lane.b32.xlu0 %v2096, 64
    %v6691 = vpop.permute.xlu0 %6690
    %6692 = vrot.lane.b32.xlu0 %v2099, 64
    %v6693 = vpop.permute.xlu0 %6692
    %6694 = vrot.lane.b32.xlu0 %v2102, 64
    %v6695 = vpop.permute.xlu0 %6694
    %6696 = vrot.lane.b32.xlu0 %v2105, 64
    %v6697 = vpop.permute.xlu0 %6696
    %6698 = vrot.lane.b32.xlu0 %v2108, 64
    %v6699 = vpop.permute.xlu0 %6698
    %6700 = vrot.lane.b32.xlu0 %v2111, 64
    %v6701 = vpop.permute.xlu0 %6700
    %6702 = vrot.lane.b32.xlu0 %v2114, 64
    %v6703 = vpop.permute.xlu0 %6702
    %6704 = vrot.lane.b32.xlu0 %v2117, 64
    %v6705 = vpop.permute.xlu0 %6704
    %v6715 = vsel %vm2478, %v6576, 0
    %v6718 = vsel %vm2478, %v6591, 0
    %v6721 = vsel %vm2478, %v6606, 0
    %v6724 = vsel %vm2478, %v6621, 0
    %v6727 = vsel %vm2478, %v6636, 0
    %v6730 = vsel %vm2478, %v6651, 0
    %v6733 = vsel %vm2478, %v6666, 0
    %v6736 = vsel %vm2478, %v6681, 0
    %6738 = vmatpush.msra.mxu0 0.0
    %6739 = vmatpush.msra.mxu0 0.0
    %6740 = vmatpush.msra.mxu0 0.0
    %6741 = vmatpush.msra.mxu0 0.0
    %6742 = vmatpush.msra.mxu0 0.0
    %6743 = vmatpush.msra.mxu0 0.0
    %6744 = vmatpush.msra.mxu0 0.0
    %6745 = vmatpush.msra.mxu0 0.0
    %6746 = vmatpush.msra.mxu0 %v6705
    %6747 = vmatpush.msra.mxu0 %v6703
    %6748 = vmatpush.msra.mxu0 %v6701
    %6749 = vmatpush.msra.mxu0 %v6699
    %6750 = vmatpush.msra.mxu0 %v6697
    %6751 = vmatpush.msra.mxu0 %v6695
    %6752 = vmatpush.msra.mxu0 %v6693
    %6753 = vmatpush.msra.mxu0 %v6691
    %6754 = vmatmul.f32.gmra.mxu0 %v6715
    %v6755 = vpop.f32.mrf.mxu0
    %v6756 = vadd.f32 0.0, %v6755
    %6757 = vmatmul.f32.gmra.mxu0 %v6718
    %v6758 = vpop.f32.mrf.mxu0
    %v6759 = vadd.f32 0.0, %v6758
    %6760 = vmatmul.f32.gmra.mxu0 %v6721
    %v6761 = vpop.f32.mrf.mxu0
    %v6762 = vadd.f32 0.0, %v6761
    %6763 = vmatmul.f32.gmra.mxu0 %v6724
    %v6764 = vpop.f32.mrf.mxu0
    %v6765 = vadd.f32 0.0, %v6764
    %6766 = vmatmul.f32.gmra.mxu0 %v6727
    %v6767 = vpop.f32.mrf.mxu0
    %v6768 = vadd.f32 0.0, %v6767
    %6769 = vmatmul.f32.gmra.mxu0 %v6730
    %v6770 = vpop.f32.mrf.mxu0
    %v6771 = vadd.f32 0.0, %v6770
    %6772 = vmatmul.f32.gmra.mxu0 %v6733
    %v6773 = vpop.f32.mrf.mxu0
    %v6774 = vadd.f32 0.0, %v6773
    %6775 = vmatmul.f32.gmra.mxu0 %v6736
    %v6776 = vpop.f32.mrf.mxu0
    %v6777 = vadd.f32 0.0, %v6776
    %6778 = vdwg.mxu0
    %v6780 = vsel %vm2478, %v1121, 0
    %v6783 = vsel %vm2478, %v1124, 0
    %v6786 = vsel %vm2478, %v1127, 0
    %v6789 = vsel %vm2478, %v1130, 0
    %v6792 = vsel %vm2478, %v1133, 0
    %v6795 = vsel %vm2478, %v1136, 0
    %v6798 = vsel %vm2478, %v1139, 0
    %v6801 = vsel %vm2478, %v1142, 0
    %v6804 = vsel %vm2478, %v1706, 0
    %v6807 = vsel %vm2478, %v1709, 0
    %v6810 = vsel %vm2478, %v1712, 0
    %v6813 = vsel %vm2478, %v1715, 0
    %v6816 = vsel %vm2478, %v1718, 0
    %v6819 = vsel %vm2478, %v1721, 0
    %v6822 = vsel %vm2478, %v1724, 0
    %v6825 = vsel %vm2478, %v1727, 0
    %6827 = vmatpush.xpose.msra.mxu0 0.0
    %6828 = vmatpush.xpose.msra.mxu0 0.0
    %6829 = vmatpush.xpose.msra.mxu0 0.0
    %6830 = vmatpush.xpose.msra.mxu0 0.0
    %6831 = vmatpush.xpose.msra.mxu0 0.0
    %6832 = vmatpush.xpose.msra.mxu0 0.0
    %6833 = vmatpush.xpose.msra.mxu0 0.0
    %6834 = vmatpush.xpose.msra.mxu0 0.0
    %6835 = vmatpush.xpose.msra.mxu0 %v6825
    %6836 = vmatpush.xpose.msra.mxu0 %v6822
    %6837 = vmatpush.xpose.msra.mxu0 %v6819
    %6838 = vmatpush.xpose.msra.mxu0 %v6816
    %6839 = vmatpush.xpose.msra.mxu0 %v6813
    %6840 = vmatpush.xpose.msra.mxu0 %v6810
    %6841 = vmatpush.xpose.msra.mxu0 %v6807
    %6842 = vmatpush.xpose.msra.mxu0 %v6804
    %6843 = vmatmul.f32.gmra.mxu0 %v6780
    %v6844 = vpop.f32.mrf.mxu0
    %v6845 = vadd.f32 0.0, %v6844
    %6846 = vmatmul.f32.gmra.mxu0 %v6783
    %v6847 = vpop.f32.mrf.mxu0
    %v6848 = vadd.f32 0.0, %v6847
    %6849 = vmatmul.f32.gmra.mxu0 %v6786
    %v6850 = vpop.f32.mrf.mxu0
    %v6851 = vadd.f32 0.0, %v6850
    %6852 = vmatmul.f32.gmra.mxu0 %v6789
    %v6853 = vpop.f32.mrf.mxu0
    %v6854 = vadd.f32 0.0, %v6853
    %6855 = vmatmul.f32.gmra.mxu0 %v6792
    %v6856 = vpop.f32.mrf.mxu0
    %v6857 = vadd.f32 0.0, %v6856
    %6858 = vmatmul.f32.gmra.mxu0 %v6795
    %v6859 = vpop.f32.mrf.mxu0
    %v6860 = vadd.f32 0.0, %v6859
    %6861 = vmatmul.f32.gmra.mxu0 %v6798
    %v6862 = vpop.f32.mrf.mxu0
    %v6863 = vadd.f32 0.0, %v6862
    %6864 = vmatmul.f32.gmra.mxu0 %v6801
    %v6865 = vpop.f32.mrf.mxu0
    %v6866 = vadd.f32 0.0, %v6865
    %6867 = vdwg.mxu0
    %v6868 = vsel %vm2470, %v6845, -inf
    %v6869 = vsel %vm2471, %v6848, -inf
    %v6870 = vsel %vm2472, %v6851, -inf
    %v6871 = vsel %vm2473, %v6854, -inf
    %v6872 = vsel %vm2474, %v6857, -inf
    %v6873 = vsel %vm2475, %v6860, -inf
    %v6874 = vsel %vm2476, %v6863, -inf
    %v6875 = vsel %vm2477, %v6866, -inf
    %v6876 = vsel %vm2478, %v6868, -inf
    %6877 = vmax.xlane.f32.xlu0 %v6876
    %v6878 = vpop.xlane.xlu0 %6877
    %v6879 = vsel %vm2478, %v6869, -inf
    %6880 = vmax.xlane.f32.xlu0 %v6879
    %v6881 = vpop.xlane.xlu0 %6880
    %v6882 = vsel %vm2478, %v6870, -inf
    %6883 = vmax.xlane.f32.xlu0 %v6882
    %v6884 = vpop.xlane.xlu0 %6883
    %v6885 = vsel %vm2478, %v6871, -inf
    %6886 = vmax.xlane.f32.xlu0 %v6885
    %v6887 = vpop.xlane.xlu0 %6886
    %v6888 = vsel %vm2478, %v6872, -inf
    %6889 = vmax.xlane.f32.xlu0 %v6888
    %v6890 = vpop.xlane.xlu0 %6889
    %v6891 = vsel %vm2478, %v6873, -inf
    %6892 = vmax.xlane.f32.xlu0 %v6891
    %v6893 = vpop.xlane.xlu0 %6892
    %v6894 = vsel %vm2478, %v6874, -inf
    %6895 = vmax.xlane.f32.xlu0 %v6894
    %v6896 = vpop.xlane.xlu0 %6895
    %v6897 = vsel %vm2478, %v6875, -inf
    %6898 = vmax.xlane.f32.xlu0 %v6897
    %v6899 = vpop.xlane.xlu0 %6898
    %v6900 = vsub.f32 %v6868, %v6878
    %v6901 = vsub.f32 %v6869, %v6881
    %v6902 = vsub.f32 %v6870, %v6884
    %v6903 = vsub.f32 %v6871, %v6887
    %v6904 = vsub.f32 %v6872, %v6890
    %v6905 = vsub.f32 %v6873, %v6893
    %v6906 = vsub.f32 %v6874, %v6896
    %v6907 = vsub.f32 %v6875, %v6899
    %v6908 = vmul.f32 %v6900, 1.442695
    %v6909 = vpow.pop %v6908
    %v6910 = vmul.f32 %v6901, 1.442695
    %v6911 = vpow.pop %v6910
    %v6912 = vmul.f32 %v6902, 1.442695
    %v6913 = vpow.pop %v6912
    %v6914 = vmul.f32 %v6903, 1.442695
    %v6915 = vpow.pop %v6914
    %v6916 = vmul.f32 %v6904, 1.442695
    %v6917 = vpow.pop %v6916
    %v6918 = vmul.f32 %v6905, 1.442695
    %v6919 = vpow.pop %v6918
    %v6920 = vmul.f32 %v6906, 1.442695
    %v6921 = vpow.pop %v6920
    %v6922 = vmul.f32 %v6907, 1.442695
    %v6923 = vpow.pop %v6922
    %v6924 = vsel %vm2478, %v6909, 0.0
    %6925 = vadd.xlane.f32.xlu0 %v6924
    %v6926 = vpop.xlane.xlu0 %6925
    %v6927 = vsel %vm2478, %v6911, 0.0
    %6928 = vadd.xlane.f32.xlu0 %v6927
    %v6929 = vpop.xlane.xlu0 %6928
    %v6930 = vsel %vm2478, %v6913, 0.0
    %6931 = vadd.xlane.f32.xlu0 %v6930
    %v6932 = vpop.xlane.xlu0 %6931
    %v6933 = vsel %vm2478, %v6915, 0.0
    %6934 = vadd.xlane.f32.xlu0 %v6933
    %v6935 = vpop.xlane.xlu0 %6934
    %v6936 = vsel %vm2478, %v6917, 0.0
    %6937 = vadd.xlane.f32.xlu0 %v6936
    %v6938 = vpop.xlane.xlu0 %6937
    %v6939 = vsel %vm2478, %v6919, 0.0
    %6940 = vadd.xlane.f32.xlu0 %v6939
    %v6941 = vpop.xlane.xlu0 %6940
    %v6942 = vsel %vm2478, %v6921, 0.0
    %6943 = vadd.xlane.f32.xlu0 %v6942
    %v6944 = vpop.xlane.xlu0 %6943
    %v6945 = vsel %vm2478, %v6923, 0.0
    %6946 = vadd.xlane.f32.xlu0 %v6945
    %v6947 = vpop.xlane.xlu0 %6946
    %v6948 = vrcp.pop %v6926
    %v6949 = vmul.f32 %v6926, %v6948
    %v6950 = vsub.f32 1.0, %v6949
    %v6951 = vmul.f32 %v6948, %v6950
    %v6952 = vadd.f32 %v6948, %v6951
    %vm6953 = vweird.f32 %v6926
    %vm6954 = vweird.f32 %v6948
    %vm6955 = vmor %vm6953, %vm6954
    %v6956 = vsel %vm6955, %v6948, %v6952
    %v6957 = vand.u32 2147483647, %v6926
    %vm6958 = vcmp.eq.f32.partialorder %v6957, 8.507059e+37
    %v6959 = vand.u32 %v6926, 2147483648
    %v6960 = vor.u32 1.1754944e-38, %v6959
    %v6961 = vsel %vm6958, %v6960, %v6956
    %v6962 = vmul.f32 %v6909, %v6961
    %v6963 = vrcp.pop %v6929
    %v6964 = vmul.f32 %v6929, %v6963
    %v6965 = vsub.f32 1.0, %v6964
    %v6966 = vmul.f32 %v6963, %v6965
    %v6967 = vadd.f32 %v6963, %v6966
    %vm6968 = vweird.f32 %v6929
    %vm6969 = vweird.f32 %v6963
    %vm6970 = vmor %vm6968, %vm6969
    %v6971 = vsel %vm6970, %v6963, %v6967
    %v6972 = vand.u32 2147483647, %v6929
    %vm6973 = vcmp.eq.f32.partialorder %v6972, 8.507059e+37
    %v6974 = vand.u32 %v6929, 2147483648
    %v6975 = vor.u32 1.1754944e-38, %v6974
    %v6976 = vsel %vm6973, %v6975, %v6971
    %v6977 = vmul.f32 %v6911, %v6976
    %v6978 = vrcp.pop %v6932
    %v6979 = vmul.f32 %v6932, %v6978
    %v6980 = vsub.f32 1.0, %v6979
    %v6981 = vmul.f32 %v6978, %v6980
    %v6982 = vadd.f32 %v6978, %v6981
    %vm6983 = vweird.f32 %v6932
    %vm6984 = vweird.f32 %v6978
    %vm6985 = vmor %vm6983, %vm6984
    %v6986 = vsel %vm6985, %v6978, %v6982
    %v6987 = vand.u32 2147483647, %v6932
    %vm6988 = vcmp.eq.f32.partialorder %v6987, 8.507059e+37
    %v6989 = vand.u32 %v6932, 2147483648
    %v6990 = vor.u32 1.1754944e-38, %v6989
    %v6991 = vsel %vm6988, %v6990, %v6986
    %v6992 = vmul.f32 %v6913, %v6991
    %v6993 = vrcp.pop %v6935
    %v6994 = vmul.f32 %v6935, %v6993
    %v6995 = vsub.f32 1.0, %v6994
    %v6996 = vmul.f32 %v6993, %v6995
    %v6997 = vadd.f32 %v6993, %v6996
    %vm6998 = vweird.f32 %v6935
    %vm6999 = vweird.f32 %v6993
    %vm7000 = vmor %vm6998, %vm6999
    %v7001 = vsel %vm7000, %v6993, %v6997
    %v7002 = vand.u32 2147483647, %v6935
    %vm7003 = vcmp.eq.f32.partialorder %v7002, 8.507059e+37
    %v7004 = vand.u32 %v6935, 2147483648
    %v7005 = vor.u32 1.1754944e-38, %v7004
    %v7006 = vsel %vm7003, %v7005, %v7001
    %v7007 = vmul.f32 %v6915, %v7006
    %v7008 = vrcp.pop %v6938
    %v7009 = vmul.f32 %v6938, %v7008
    %v7010 = vsub.f32 1.0, %v7009
    %v7011 = vmul.f32 %v7008, %v7010
    %v7012 = vadd.f32 %v7008, %v7011
    %vm7013 = vweird.f32 %v6938
    %vm7014 = vweird.f32 %v7008
    %vm7015 = vmor %vm7013, %vm7014
    %v7016 = vsel %vm7015, %v7008, %v7012
    %v7017 = vand.u32 2147483647, %v6938
    %vm7018 = vcmp.eq.f32.partialorder %v7017, 8.507059e+37
    %v7019 = vand.u32 %v6938, 2147483648
    %v7020 = vor.u32 1.1754944e-38, %v7019
    %v7021 = vsel %vm7018, %v7020, %v7016
    %v7022 = vmul.f32 %v6917, %v7021
    %v7023 = vrcp.pop %v6941
    %v7024 = vmul.f32 %v6941, %v7023
    %v7025 = vsub.f32 1.0, %v7024
    %v7026 = vmul.f32 %v7023, %v7025
    %v7027 = vadd.f32 %v7023, %v7026
    %vm7028 = vweird.f32 %v6941
    %vm7029 = vweird.f32 %v7023
    %vm7030 = vmor %vm7028, %vm7029
    %v7031 = vsel %vm7030, %v7023, %v7027
    %v7032 = vand.u32 2147483647, %v6941
    %vm7033 = vcmp.eq.f32.partialorder %v7032, 8.507059e+37
    %v7034 = vand.u32 %v6941, 2147483648
    %v7035 = vor.u32 1.1754944e-38, %v7034
    %v7036 = vsel %vm7033, %v7035, %v7031
    %v7037 = vmul.f32 %v6919, %v7036
    %v7038 = vrcp.pop %v6944
    %v7039 = vmul.f32 %v6944, %v7038
    %v7040 = vsub.f32 1.0, %v7039
    %v7041 = vmul.f32 %v7038, %v7040
    %v7042 = vadd.f32 %v7038, %v7041
    %vm7043 = vweird.f32 %v6944
    %vm7044 = vweird.f32 %v7038
    %vm7045 = vmor %vm7043, %vm7044
    %v7046 = vsel %vm7045, %v7038, %v7042
    %v7047 = vand.u32 2147483647, %v6944
    %vm7048 = vcmp.eq.f32.partialorder %v7047, 8.507059e+37
    %v7049 = vand.u32 %v6944, 2147483648
    %v7050 = vor.u32 1.1754944e-38, %v7049
    %v7051 = vsel %vm7048, %v7050, %v7046
    %v7052 = vmul.f32 %v6921, %v7051
    %v7053 = vrcp.pop %v6947
    %v7054 = vmul.f32 %v6947, %v7053
    %v7055 = vsub.f32 1.0, %v7054
    %v7056 = vmul.f32 %v7053, %v7055
    %v7057 = vadd.f32 %v7053, %v7056
    %vm7058 = vweird.f32 %v6947
    %vm7059 = vweird.f32 %v7053
    %vm7060 = vmor %vm7058, %vm7059
    %v7061 = vsel %vm7060, %v7053, %v7057
    %v7062 = vand.u32 2147483647, %v6947
    %vm7063 = vcmp.eq.f32.partialorder %v7062, 8.507059e+37
    %v7064 = vand.u32 %v6947, 2147483648
    %v7065 = vor.u32 1.1754944e-38, %v7064
    %v7066 = vsel %vm7063, %v7065, %v7061
    %v7067 = vmul.f32 %v6923, %v7066
    %v7069 = vsel %vm2478, %v6962, 0
    %v7072 = vsel %vm2478, %v6977, 0
    %v7075 = vsel %vm2478, %v6992, 0
    %v7078 = vsel %vm2478, %v7007, 0
    %v7081 = vsel %vm2478, %v7022, 0
    %v7084 = vsel %vm2478, %v7037, 0
    %v7087 = vsel %vm2478, %v7052, 0
    %v7090 = vsel %vm2478, %v7067, 0
    %7092 = vmatpush.msra.mxu0 0.0
    %7093 = vmatpush.msra.mxu0 0.0
    %7094 = vmatpush.msra.mxu0 0.0
    %7095 = vmatpush.msra.mxu0 0.0
    %7096 = vmatpush.msra.mxu0 0.0
    %7097 = vmatpush.msra.mxu0 0.0
    %7098 = vmatpush.msra.mxu0 0.0
    %7099 = vmatpush.msra.mxu0 0.0
    %7100 = vmatpush.msra.mxu0 %v2312
    %7101 = vmatpush.msra.mxu0 %v2309
    %7102 = vmatpush.msra.mxu0 %v2306
    %7103 = vmatpush.msra.mxu0 %v2303
    %7104 = vmatpush.msra.mxu0 %v2300
    %7105 = vmatpush.msra.mxu0 %v2297
    %7106 = vmatpush.msra.mxu0 %v2294
    %7107 = vmatpush.msra.mxu0 %v2291
    %7108 = vmatmul.f32.gmra.mxu0 %v7069
    %v7109 = vpop.f32.mrf.mxu0
    %v7110 = vadd.f32 0.0, %v7109
    %7111 = vmatmul.f32.gmra.mxu0 %v7072
    %v7112 = vpop.f32.mrf.mxu0
    %v7113 = vadd.f32 0.0, %v7112
    %7114 = vmatmul.f32.gmra.mxu0 %v7075
    %v7115 = vpop.f32.mrf.mxu0
    %v7116 = vadd.f32 0.0, %v7115
    %7117 = vmatmul.f32.gmra.mxu0 %v7078
    %v7118 = vpop.f32.mrf.mxu0
    %v7119 = vadd.f32 0.0, %v7118
    %7120 = vmatmul.f32.gmra.mxu0 %v7081
    %v7121 = vpop.f32.mrf.mxu0
    %v7122 = vadd.f32 0.0, %v7121
    %7123 = vmatmul.f32.gmra.mxu0 %v7084
    %v7124 = vpop.f32.mrf.mxu0
    %v7125 = vadd.f32 0.0, %v7124
    %7126 = vmatmul.f32.gmra.mxu0 %v7087
    %v7127 = vpop.f32.mrf.mxu0
    %v7128 = vadd.f32 0.0, %v7127
    %7129 = vmatmul.f32.gmra.mxu0 %v7090
    %v7130 = vpop.f32.mrf.mxu0
    %v7131 = vadd.f32 0.0, %v7130
    %7132 = vdwg.mxu0
    %7133 = vrot.lane.b32.xlu0 %v1121, 64
    %v7134 = vpop.permute.xlu0 %7133
    %7135 = vrot.lane.b32.xlu0 %v1124, 64
    %v7136 = vpop.permute.xlu0 %7135
    %7137 = vrot.lane.b32.xlu0 %v1127, 64
    %v7138 = vpop.permute.xlu0 %7137
    %7139 = vrot.lane.b32.xlu0 %v1130, 64
    %v7140 = vpop.permute.xlu0 %7139
    %7141 = vrot.lane.b32.xlu0 %v1133, 64
    %v7142 = vpop.permute.xlu0 %7141
    %7143 = vrot.lane.b32.xlu0 %v1136, 64
    %v7144 = vpop.permute.xlu0 %7143
    %7145 = vrot.lane.b32.xlu0 %v1139, 64
    %v7146 = vpop.permute.xlu0 %7145
    %7147 = vrot.lane.b32.xlu0 %v1142, 64
    %v7148 = vpop.permute.xlu0 %7147
    %7149 = vrot.lane.b32.xlu0 %v1706, 64
    %v7150 = vpop.permute.xlu0 %7149
    %7151 = vrot.lane.b32.xlu0 %v1709, 64
    %v7152 = vpop.permute.xlu0 %7151
    %7153 = vrot.lane.b32.xlu0 %v1712, 64
    %v7154 = vpop.permute.xlu0 %7153
    %7155 = vrot.lane.b32.xlu0 %v1715, 64
    %v7156 = vpop.permute.xlu0 %7155
    %7157 = vrot.lane.b32.xlu0 %v1718, 64
    %v7158 = vpop.permute.xlu0 %7157
    %7159 = vrot.lane.b32.xlu0 %v1721, 64
    %v7160 = vpop.permute.xlu0 %7159
    %7161 = vrot.lane.b32.xlu0 %v1724, 64
    %v7162 = vpop.permute.xlu0 %7161
    %7163 = vrot.lane.b32.xlu0 %v1727, 64
    %v7164 = vpop.permute.xlu0 %7163
    %v7165 = vsel %vm2478, %v7134, 0
    %v7167 = vsel %vm2478, %v7136, 0
    %v7169 = vsel %vm2478, %v7138, 0
    %v7171 = vsel %vm2478, %v7140, 0
    %v7173 = vsel %vm2478, %v7142, 0
    %v7175 = vsel %vm2478, %v7144, 0
    %v7177 = vsel %vm2478, %v7146, 0
    %v7179 = vsel %vm2478, %v7148, 0
    %v7181 = vsel %vm2478, %v7150, 0
    %v7183 = vsel %vm2478, %v7152, 0
    %v7185 = vsel %vm2478, %v7154, 0
    %v7187 = vsel %vm2478, %v7156, 0
    %v7189 = vsel %vm2478, %v7158, 0
    %v7191 = vsel %vm2478, %v7160, 0
    %v7193 = vsel %vm2478, %v7162, 0
    %v7195 = vsel %vm2478, %v7164, 0
    %7197 = vmatpush.xpose.msra.mxu0 0.0
    %7198 = vmatpush.xpose.msra.mxu0 0.0
    %7199 = vmatpush.xpose.msra.mxu0 0.0
    %7200 = vmatpush.xpose.msra.mxu0 0.0
    %7201 = vmatpush.xpose.msra.mxu0 0.0
    %7202 = vmatpush.xpose.msra.mxu0 0.0
    %7203 = vmatpush.xpose.msra.mxu0 0.0
    %7204 = vmatpush.xpose.msra.mxu0 0.0
    %7205 = vmatpush.xpose.msra.mxu0 %v7195
    %7206 = vmatpush.xpose.msra.mxu0 %v7193
    %7207 = vmatpush.xpose.msra.mxu0 %v7191
    %7208 = vmatpush.xpose.msra.mxu0 %v7189
    %7209 = vmatpush.xpose.msra.mxu0 %v7187
    %7210 = vmatpush.xpose.msra.mxu0 %v7185
    %7211 = vmatpush.xpose.msra.mxu0 %v7183
    %7212 = vmatpush.xpose.msra.mxu0 %v7181
    %7213 = vmatmul.f32.gmra.mxu0 %v7165
    %v7214 = vpop.f32.mrf.mxu0
    %v7215 = vadd.f32 0.0, %v7214
    %7216 = vmatmul.f32.gmra.mxu0 %v7167
    %v7217 = vpop.f32.mrf.mxu0
    %v7218 = vadd.f32 0.0, %v7217
    %7219 = vmatmul.f32.gmra.mxu0 %v7169
    %v7220 = vpop.f32.mrf.mxu0
    %v7221 = vadd.f32 0.0, %v7220
    %7222 = vmatmul.f32.gmra.mxu0 %v7171
    %v7223 = vpop.f32.mrf.mxu0
    %v7224 = vadd.f32 0.0, %v7223
    %7225 = vmatmul.f32.gmra.mxu0 %v7173
    %v7226 = vpop.f32.mrf.mxu0
    %v7227 = vadd.f32 0.0, %v7226
    %7228 = vmatmul.f32.gmra.mxu0 %v7175
    %v7229 = vpop.f32.mrf.mxu0
    %v7230 = vadd.f32 0.0, %v7229
    %7231 = vmatmul.f32.gmra.mxu0 %v7177
    %v7232 = vpop.f32.mrf.mxu0
    %v7233 = vadd.f32 0.0, %v7232
    %7234 = vmatmul.f32.gmra.mxu0 %v7179
    %v7235 = vpop.f32.mrf.mxu0
    %v7236 = vadd.f32 0.0, %v7235
    %7237 = vdwg.mxu0
    %v7238 = vsel %vm2470, %v7215, -inf
    %v7239 = vsel %vm2471, %v7218, -inf
    %v7240 = vsel %vm2472, %v7221, -inf
    %v7241 = vsel %vm2473, %v7224, -inf
    %v7242 = vsel %vm2474, %v7227, -inf
    %v7243 = vsel %vm2475, %v7230, -inf
    %v7244 = vsel %vm2476, %v7233, -inf
    %v7245 = vsel %vm2477, %v7236, -inf
    %v7246 = vsel %vm2478, %v7238, -inf
    %7247 = vmax.xlane.f32.xlu0 %v7246
    %v7248 = vpop.xlane.xlu0 %7247
    %v7249 = vsel %vm2478, %v7239, -inf
    %7250 = vmax.xlane.f32.xlu0 %v7249
    %v7251 = vpop.xlane.xlu0 %7250
    %v7252 = vsel %vm2478, %v7240, -inf
    %7253 = vmax.xlane.f32.xlu0 %v7252
    %v7254 = vpop.xlane.xlu0 %7253
    %v7255 = vsel %vm2478, %v7241, -inf
    %7256 = vmax.xlane.f32.xlu0 %v7255
    %v7257 = vpop.xlane.xlu0 %7256
    %v7258 = vsel %vm2478, %v7242, -inf
    %7259 = vmax.xlane.f32.xlu0 %v7258
    %v7260 = vpop.xlane.xlu0 %7259
    %v7261 = vsel %vm2478, %v7243, -inf
    %7262 = vmax.xlane.f32.xlu0 %v7261
    %v7263 = vpop.xlane.xlu0 %7262
    %v7264 = vsel %vm2478, %v7244, -inf
    %7265 = vmax.xlane.f32.xlu0 %v7264
    %v7266 = vpop.xlane.xlu0 %7265
    %v7267 = vsel %vm2478, %v7245, -inf
    %7268 = vmax.xlane.f32.xlu0 %v7267
    %v7269 = vpop.xlane.xlu0 %7268
    %v7270 = vsub.f32 %v7238, %v7248
    %v7271 = vsub.f32 %v7239, %v7251
    %v7272 = vsub.f32 %v7240, %v7254
    %v7273 = vsub.f32 %v7241, %v7257
    %v7274 = vsub.f32 %v7242, %v7260
    %v7275 = vsub.f32 %v7243, %v7263
    %v7276 = vsub.f32 %v7244, %v7266
    %v7277 = vsub.f32 %v7245, %v7269
    %v7278 = vmul.f32 %v7270, 1.442695
    %v7279 = vpow.pop %v7278
    %v7280 = vmul.f32 %v7271, 1.442695
    %v7281 = vpow.pop %v7280
    %v7282 = vmul.f32 %v7272, 1.442695
    %v7283 = vpow.pop %v7282
    %v7284 = vmul.f32 %v7273, 1.442695
    %v7285 = vpow.pop %v7284
    %v7286 = vmul.f32 %v7274, 1.442695
    %v7287 = vpow.pop %v7286
    %v7288 = vmul.f32 %v7275, 1.442695
    %v7289 = vpow.pop %v7288
    %v7290 = vmul.f32 %v7276, 1.442695
    %v7291 = vpow.pop %v7290
    %v7292 = vmul.f32 %v7277, 1.442695
    %v7293 = vpow.pop %v7292
    %v7294 = vsel %vm2478, %v7279, 0.0
    %7295 = vadd.xlane.f32.xlu0 %v7294
    %v7296 = vpop.xlane.xlu0 %7295
    %v7297 = vsel %vm2478, %v7281, 0.0
    %7298 = vadd.xlane.f32.xlu0 %v7297
    %v7299 = vpop.xlane.xlu0 %7298
    %v7300 = vsel %vm2478, %v7283, 0.0
    %7301 = vadd.xlane.f32.xlu0 %v7300
    %v7302 = vpop.xlane.xlu0 %7301
    %v7303 = vsel %vm2478, %v7285, 0.0
    %7304 = vadd.xlane.f32.xlu0 %v7303
    %v7305 = vpop.xlane.xlu0 %7304
    %v7306 = vsel %vm2478, %v7287, 0.0
    %7307 = vadd.xlane.f32.xlu0 %v7306
    %v7308 = vpop.xlane.xlu0 %7307
    %v7309 = vsel %vm2478, %v7289, 0.0
    %7310 = vadd.xlane.f32.xlu0 %v7309
    %v7311 = vpop.xlane.xlu0 %7310
    %v7312 = vsel %vm2478, %v7291, 0.0
    %7313 = vadd.xlane.f32.xlu0 %v7312
    %v7314 = vpop.xlane.xlu0 %7313
    %v7315 = vsel %vm2478, %v7293, 0.0
    %7316 = vadd.xlane.f32.xlu0 %v7315
    %v7317 = vpop.xlane.xlu0 %7316
    %v7318 = vrcp.pop %v7296
    %v7319 = vmul.f32 %v7296, %v7318
    %v7320 = vsub.f32 1.0, %v7319
    %v7321 = vmul.f32 %v7318, %v7320
    %v7322 = vadd.f32 %v7318, %v7321
    %vm7323 = vweird.f32 %v7296
    %vm7324 = vweird.f32 %v7318
    %vm7325 = vmor %vm7323, %vm7324
    %v7326 = vsel %vm7325, %v7318, %v7322
    %v7327 = vand.u32 2147483647, %v7296
    %vm7328 = vcmp.eq.f32.partialorder %v7327, 8.507059e+37
    %v7329 = vand.u32 %v7296, 2147483648
    %v7330 = vor.u32 1.1754944e-38, %v7329
    %v7331 = vsel %vm7328, %v7330, %v7326
    %v7332 = vmul.f32 %v7279, %v7331
    %v7333 = vrcp.pop %v7299
    %v7334 = vmul.f32 %v7299, %v7333
    %v7335 = vsub.f32 1.0, %v7334
    %v7336 = vmul.f32 %v7333, %v7335
    %v7337 = vadd.f32 %v7333, %v7336
    %vm7338 = vweird.f32 %v7299
    %vm7339 = vweird.f32 %v7333
    %vm7340 = vmor %vm7338, %vm7339
    %v7341 = vsel %vm7340, %v7333, %v7337
    %v7342 = vand.u32 2147483647, %v7299
    %vm7343 = vcmp.eq.f32.partialorder %v7342, 8.507059e+37
    %v7344 = vand.u32 %v7299, 2147483648
    %v7345 = vor.u32 1.1754944e-38, %v7344
    %v7346 = vsel %vm7343, %v7345, %v7341
    %v7347 = vmul.f32 %v7281, %v7346
    %v7348 = vrcp.pop %v7302
    %v7349 = vmul.f32 %v7302, %v7348
    %v7350 = vsub.f32 1.0, %v7349
    %v7351 = vmul.f32 %v7348, %v7350
    %v7352 = vadd.f32 %v7348, %v7351
    %vm7353 = vweird.f32 %v7302
    %vm7354 = vweird.f32 %v7348
    %vm7355 = vmor %vm7353, %vm7354
    %v7356 = vsel %vm7355, %v7348, %v7352
    %v7357 = vand.u32 2147483647, %v7302
    %vm7358 = vcmp.eq.f32.partialorder %v7357, 8.507059e+37
    %v7359 = vand.u32 %v7302, 2147483648
    %v7360 = vor.u32 1.1754944e-38, %v7359
    %v7361 = vsel %vm7358, %v7360, %v7356
    %v7362 = vmul.f32 %v7283, %v7361
    %v7363 = vrcp.pop %v7305
    %v7364 = vmul.f32 %v7305, %v7363
    %v7365 = vsub.f32 1.0, %v7364
    %v7366 = vmul.f32 %v7363, %v7365
    %v7367 = vadd.f32 %v7363, %v7366
    %vm7368 = vweird.f32 %v7305
    %vm7369 = vweird.f32 %v7363
    %vm7370 = vmor %vm7368, %vm7369
    %v7371 = vsel %vm7370, %v7363, %v7367
    %v7372 = vand.u32 2147483647, %v7305
    %vm7373 = vcmp.eq.f32.partialorder %v7372, 8.507059e+37
    %v7374 = vand.u32 %v7305, 2147483648
    %v7375 = vor.u32 1.1754944e-38, %v7374
    %v7376 = vsel %vm7373, %v7375, %v7371
    %v7377 = vmul.f32 %v7285, %v7376
    %v7378 = vrcp.pop %v7308
    %v7379 = vmul.f32 %v7308, %v7378
    %v7380 = vsub.f32 1.0, %v7379
    %v7381 = vmul.f32 %v7378, %v7380
    %v7382 = vadd.f32 %v7378, %v7381
    %vm7383 = vweird.f32 %v7308
    %vm7384 = vweird.f32 %v7378
    %vm7385 = vmor %vm7383, %vm7384
    %v7386 = vsel %vm7385, %v7378, %v7382
    %v7387 = vand.u32 2147483647, %v7308
    %vm7388 = vcmp.eq.f32.partialorder %v7387, 8.507059e+37
    %v7389 = vand.u32 %v7308, 2147483648
    %v7390 = vor.u32 1.1754944e-38, %v7389
    %v7391 = vsel %vm7388, %v7390, %v7386
    %v7392 = vmul.f32 %v7287, %v7391
    %v7393 = vrcp.pop %v7311
    %v7394 = vmul.f32 %v7311, %v7393
    %v7395 = vsub.f32 1.0, %v7394
    %v7396 = vmul.f32 %v7393, %v7395
    %v7397 = vadd.f32 %v7393, %v7396
    %vm7398 = vweird.f32 %v7311
    %vm7399 = vweird.f32 %v7393
    %vm7400 = vmor %vm7398, %vm7399
    %v7401 = vsel %vm7400, %v7393, %v7397
    %v7402 = vand.u32 2147483647, %v7311
    %vm7403 = vcmp.eq.f32.partialorder %v7402, 8.507059e+37
    %v7404 = vand.u32 %v7311, 2147483648
    %v7405 = vor.u32 1.1754944e-38, %v7404
    %v7406 = vsel %vm7403, %v7405, %v7401
    %v7407 = vmul.f32 %v7289, %v7406
    %v7408 = vrcp.pop %v7314
    %v7409 = vmul.f32 %v7314, %v7408
    %v7410 = vsub.f32 1.0, %v7409
    %v7411 = vmul.f32 %v7408, %v7410
    %v7412 = vadd.f32 %v7408, %v7411
    %vm7413 = vweird.f32 %v7314
    %vm7414 = vweird.f32 %v7408
    %vm7415 = vmor %vm7413, %vm7414
    %v7416 = vsel %vm7415, %v7408, %v7412
    %v7417 = vand.u32 2147483647, %v7314
    %vm7418 = vcmp.eq.f32.partialorder %v7417, 8.507059e+37
    %v7419 = vand.u32 %v7314, 2147483648
    %v7420 = vor.u32 1.1754944e-38, %v7419
    %v7421 = vsel %vm7418, %v7420, %v7416
    %v7422 = vmul.f32 %v7291, %v7421
    %v7423 = vrcp.pop %v7317
    %v7424 = vmul.f32 %v7317, %v7423
    %v7425 = vsub.f32 1.0, %v7424
    %v7426 = vmul.f32 %v7423, %v7425
    %v7427 = vadd.f32 %v7423, %v7426
    %vm7428 = vweird.f32 %v7317
    %vm7429 = vweird.f32 %v7423
    %vm7430 = vmor %vm7428, %vm7429
    %v7431 = vsel %vm7430, %v7423, %v7427
    %v7432 = vand.u32 2147483647, %v7317
    %vm7433 = vcmp.eq.f32.partialorder %v7432, 8.507059e+37
    %v7434 = vand.u32 %v7317, 2147483648
    %v7435 = vor.u32 1.1754944e-38, %v7434
    %v7436 = vsel %vm7433, %v7435, %v7431
    %v7437 = vmul.f32 %v7293, %v7436
    %7446 = vrot.lane.b32.xlu0 %v2291, 64
    %v7447 = vpop.permute.xlu0 %7446
    %7448 = vrot.lane.b32.xlu0 %v2294, 64
    %v7449 = vpop.permute.xlu0 %7448
    %7450 = vrot.lane.b32.xlu0 %v2297, 64
    %v7451 = vpop.permute.xlu0 %7450
    %7452 = vrot.lane.b32.xlu0 %v2300, 64
    %v7453 = vpop.permute.xlu0 %7452
    %7454 = vrot.lane.b32.xlu0 %v2303, 64
    %v7455 = vpop.permute.xlu0 %7454
    %7456 = vrot.lane.b32.xlu0 %v2306, 64
    %v7457 = vpop.permute.xlu0 %7456
    %7458 = vrot.lane.b32.xlu0 %v2309, 64
    %v7459 = vpop.permute.xlu0 %7458
    %7460 = vrot.lane.b32.xlu0 %v2312, 64
    %v7461 = vpop.permute.xlu0 %7460
    %v7471 = vsel %vm2478, %v7332, 0
    %v7474 = vsel %vm2478, %v7347, 0
    %v7477 = vsel %vm2478, %v7362, 0
    %v7480 = vsel %vm2478, %v7377, 0
    %v7483 = vsel %vm2478, %v7392, 0
    %v7486 = vsel %vm2478, %v7407, 0
    %v7489 = vsel %vm2478, %v7422, 0
    %v7492 = vsel %vm2478, %v7437, 0
    %7494 = vmatpush.msra.mxu0 0.0
    %7495 = vmatpush.msra.mxu0 0.0
    %7496 = vmatpush.msra.mxu0 0.0
    %7497 = vmatpush.msra.mxu0 0.0
    %7498 = vmatpush.msra.mxu0 0.0
    %7499 = vmatpush.msra.mxu0 0.0
    %7500 = vmatpush.msra.mxu0 0.0
    %7501 = vmatpush.msra.mxu0 0.0
    %7502 = vmatpush.msra.mxu0 %v7461
    %7503 = vmatpush.msra.mxu0 %v7459
    %7504 = vmatpush.msra.mxu0 %v7457
    %7505 = vmatpush.msra.mxu0 %v7455
    %7506 = vmatpush.msra.mxu0 %v7453
    %7507 = vmatpush.msra.mxu0 %v7451
    %7508 = vmatpush.msra.mxu0 %v7449
    %7509 = vmatpush.msra.mxu0 %v7447
    %7510 = vmatmul.f32.gmra.mxu0 %v7471
    %v7511 = vpop.f32.mrf.mxu0
    %v7512 = vadd.f32 0.0, %v7511
    %7513 = vmatmul.f32.gmra.mxu0 %v7474
    %v7514 = vpop.f32.mrf.mxu0
    %v7515 = vadd.f32 0.0, %v7514
    %7516 = vmatmul.f32.gmra.mxu0 %v7477
    %v7517 = vpop.f32.mrf.mxu0
    %v7518 = vadd.f32 0.0, %v7517
    %7519 = vmatmul.f32.gmra.mxu0 %v7480
    %v7520 = vpop.f32.mrf.mxu0
    %v7521 = vadd.f32 0.0, %v7520
    %7522 = vmatmul.f32.gmra.mxu0 %v7483
    %v7523 = vpop.f32.mrf.mxu0
    %v7524 = vadd.f32 0.0, %v7523
    %7525 = vmatmul.f32.gmra.mxu0 %v7486
    %v7526 = vpop.f32.mrf.mxu0
    %v7527 = vadd.f32 0.0, %v7526
    %7528 = vmatmul.f32.gmra.mxu0 %v7489
    %v7529 = vpop.f32.mrf.mxu0
    %v7530 = vadd.f32 0.0, %v7529
    %7531 = vmatmul.f32.gmra.mxu0 %v7492
    %v7532 = vpop.f32.mrf.mxu0
    %v7533 = vadd.f32 0.0, %v7532
    %7534 = vdwg.mxu0
    %7543 = vrot.lane.b32.xlu0 %v6000, 64
    %v7544 = vpop.permute.xlu0 %7543
    %7545 = vrot.lane.b32.xlu0 %v6003, 64
    %v7546 = vpop.permute.xlu0 %7545
    %7547 = vrot.lane.b32.xlu0 %v6006, 64
    %v7548 = vpop.permute.xlu0 %7547
    %7549 = vrot.lane.b32.xlu0 %v6009, 64
    %v7550 = vpop.permute.xlu0 %7549
    %7551 = vrot.lane.b32.xlu0 %v6012, 64
    %v7552 = vpop.permute.xlu0 %7551
    %7553 = vrot.lane.b32.xlu0 %v6015, 64
    %v7554 = vpop.permute.xlu0 %7553
    %7555 = vrot.lane.b32.xlu0 %v6018, 64
    %v7556 = vpop.permute.xlu0 %7555
    %7557 = vrot.lane.b32.xlu0 %v6021, 64
    %v7558 = vpop.permute.xlu0 %7557
    %7575 = vrot.lane.b32.xlu0 %v6756, 64
    %v7576 = vpop.permute.xlu0 %7575
    %7577 = vrot.lane.b32.xlu0 %v6759, 64
    %v7578 = vpop.permute.xlu0 %7577
    %7579 = vrot.lane.b32.xlu0 %v6762, 64
    %v7580 = vpop.permute.xlu0 %7579
    %7581 = vrot.lane.b32.xlu0 %v6765, 64
    %v7582 = vpop.permute.xlu0 %7581
    %7583 = vrot.lane.b32.xlu0 %v6768, 64
    %v7584 = vpop.permute.xlu0 %7583
    %7585 = vrot.lane.b32.xlu0 %v6771, 64
    %v7586 = vpop.permute.xlu0 %7585
    %7587 = vrot.lane.b32.xlu0 %v6774, 64
    %v7588 = vpop.permute.xlu0 %7587
    %7589 = vrot.lane.b32.xlu0 %v6777, 64
    %v7590 = vpop.permute.xlu0 %7589
    %7607 = vrot.lane.b32.xlu0 %v7512, 64
    %v7608 = vpop.permute.xlu0 %7607
    %7609 = vrot.lane.b32.xlu0 %v7515, 64
    %v7610 = vpop.permute.xlu0 %7609
    %7611 = vrot.lane.b32.xlu0 %v7518, 64
    %v7612 = vpop.permute.xlu0 %7611
    %7613 = vrot.lane.b32.xlu0 %v7521, 64
    %v7614 = vpop.permute.xlu0 %7613
    %7615 = vrot.lane.b32.xlu0 %v7524, 64
    %v7616 = vpop.permute.xlu0 %7615
    %7617 = vrot.lane.b32.xlu0 %v7527, 64
    %v7618 = vpop.permute.xlu0 %7617
    %7619 = vrot.lane.b32.xlu0 %v7530, 64
    %v7620 = vpop.permute.xlu0 %7619
    %7621 = vrot.lane.b32.xlu0 %v7533, 64
    %v7622 = vpop.permute.xlu0 %7621
    %v7631 = vsel %vm2478, %v5598, %v7544
    %v7632 = vsel %vm2478, %v5601, %v7546
    %v7633 = vsel %vm2478, %v5604, %v7548
    %v7634 = vsel %vm2478, %v5607, %v7550
    %v7635 = vsel %vm2478, %v5610, %v7552
    %v7636 = vsel %vm2478, %v5613, %v7554
    %v7637 = vsel %vm2478, %v5616, %v7556
    %v7638 = vsel %vm2478, %v5619, %v7558
    %v7639 = vsel %vm2478, %v6354, %v7576
    %v7640 = vsel %vm2478, %v6357, %v7578
    %v7641 = vsel %vm2478, %v6360, %v7580
    %v7642 = vsel %vm2478, %v6363, %v7582
    %v7643 = vsel %vm2478, %v6366, %v7584
    %v7644 = vsel %vm2478, %v6369, %v7586
    %v7645 = vsel %vm2478, %v6372, %v7588
    %v7646 = vsel %vm2478, %v6375, %v7590
    %v7647 = vsel %vm2478, %v7110, %v7608
    %v7648 = vsel %vm2478, %v7113, %v7610
    %v7649 = vsel %vm2478, %v7116, %v7612
    %v7650 = vsel %vm2478, %v7119, %v7614
    %v7651 = vsel %vm2478, %v7122, %v7616
    %v7652 = vsel %vm2478, %v7125, %v7618
    %v7653 = vsel %vm2478, %v7128, %v7620
    %v7654 = vsel %vm2478, %v7131, %v7622
    %7655 = vmatpush.msra.mxu0 %v2359
    %7656 = vmatpush.msra.mxu0 %v2356
    %7657 = vmatpush.msra.mxu0 %v2353
    %7658 = vmatpush.msra.mxu0 %v2350
    %7659 = vmatpush.msra.mxu0 %v2347
    %7660 = vmatpush.msra.mxu0 %v2344
    %7661 = vmatpush.msra.mxu0 %v2341
    %7662 = vmatpush.msra.mxu0 %v2338
    %7663 = vmatpush.msra.mxu0 %v2335
    %7664 = vmatpush.msra.mxu0 %v2332
    %7665 = vmatpush.msra.mxu0 %v2329
    %7666 = vmatpush.msra.mxu0 %v2326
    %7667 = vmatpush.msra.mxu0 %v2323
    %7668 = vmatpush.msra.mxu0 %v2320
    %7669 = vmatpush.msra.mxu0 %v2317
    %7670 = vmatpush.msra.mxu0 %v2314
    %7671 = vmatmul.f32.gmra.mxu0 %v7631
    %v7672 = vpop.f32.mrf.mxu0
    %v7673 = vadd.f32 %v4868, %v7672
    %7674 = vmatmul.f32.gmra.mxu0 %v7632
    %v7675 = vpop.f32.mrf.mxu0
    %v7676 = vadd.f32 %v4868, %v7675
    %7677 = vmatmul.f32.gmra.mxu0 %v7633
    %v7678 = vpop.f32.mrf.mxu0
    %v7679 = vadd.f32 %v4868, %v7678
    %7680 = vmatmul.f32.gmra.mxu0 %v7634
    %v7681 = vpop.f32.mrf.mxu0
    %v7682 = vadd.f32 %v4868, %v7681
    %7683 = vmatmul.f32.gmra.mxu0 %v7635
    %v7684 = vpop.f32.mrf.mxu0
    %v7685 = vadd.f32 %v4868, %v7684
    %7686 = vmatmul.f32.gmra.mxu0 %v7636
    %v7687 = vpop.f32.mrf.mxu0
    %v7688 = vadd.f32 %v4868, %v7687
    %7689 = vmatmul.f32.gmra.mxu0 %v7637
    %v7690 = vpop.f32.mrf.mxu0
    %v7691 = vadd.f32 %v4868, %v7690
    %7692 = vmatmul.f32.gmra.mxu0 %v7638
    %v7693 = vpop.f32.mrf.mxu0
    %v7694 = vadd.f32 %v4868, %v7693
    %7695 = vdwg.mxu0
    %7696 = vmatpush.msra.mxu0 %v2407
    %7697 = vmatpush.msra.mxu0 %v2404
    %7698 = vmatpush.msra.mxu0 %v2401
    %7699 = vmatpush.msra.mxu0 %v2398
    %7700 = vmatpush.msra.mxu0 %v2395
    %7701 = vmatpush.msra.mxu0 %v2392
    %7702 = vmatpush.msra.mxu0 %v2389
    %7703 = vmatpush.msra.mxu0 %v2386
    %7704 = vmatpush.msra.mxu0 %v2383
    %7705 = vmatpush.msra.mxu0 %v2380
    %7706 = vmatpush.msra.mxu0 %v2377
    %7707 = vmatpush.msra.mxu0 %v2374
    %7708 = vmatpush.msra.mxu0 %v2371
    %7709 = vmatpush.msra.mxu0 %v2368
    %7710 = vmatpush.msra.mxu0 %v2365
    %7711 = vmatpush.msra.mxu0 %v2362
    %7712 = vmatmul.f32.gmra.mxu0 %v7639
    %v7713 = vpop.f32.mrf.mxu0
    %v7714 = vadd.f32 %v7673, %v7713
    %7715 = vmatmul.f32.gmra.mxu0 %v7640
    %v7716 = vpop.f32.mrf.mxu0
    %v7717 = vadd.f32 %v7676, %v7716
    %7718 = vmatmul.f32.gmra.mxu0 %v7641
    %v7719 = vpop.f32.mrf.mxu0
    %v7720 = vadd.f32 %v7679, %v7719
    %7721 = vmatmul.f32.gmra.mxu0 %v7642
    %v7722 = vpop.f32.mrf.mxu0
    %v7723 = vadd.f32 %v7682, %v7722
    %7724 = vmatmul.f32.gmra.mxu0 %v7643
    %v7725 = vpop.f32.mrf.mxu0
    %v7726 = vadd.f32 %v7685, %v7725
    %7727 = vmatmul.f32.gmra.mxu0 %v7644
    %v7728 = vpop.f32.mrf.mxu0
    %v7729 = vadd.f32 %v7688, %v7728
    %7730 = vmatmul.f32.gmra.mxu0 %v7645
    %v7731 = vpop.f32.mrf.mxu0
    %v7732 = vadd.f32 %v7691, %v7731
    %7733 = vmatmul.f32.gmra.mxu0 %v7646
    %v7734 = vpop.f32.mrf.mxu0
    %v7735 = vadd.f32 %v7694, %v7734
    %7736 = vdwg.mxu0
    %7737 = vmatpush.msra.mxu0 %v2455
    %7738 = vmatpush.msra.mxu0 %v2452
    %7739 = vmatpush.msra.mxu0 %v2449
    %7740 = vmatpush.msra.mxu0 %v2446
    %7741 = vmatpush.msra.mxu0 %v2443
    %7742 = vmatpush.msra.mxu0 %v2440
    %7743 = vmatpush.msra.mxu0 %v2437
    %7744 = vmatpush.msra.mxu0 %v2434
    %7745 = vmatpush.msra.mxu0 %v2431
    %7746 = vmatpush.msra.mxu0 %v2428
    %7747 = vmatpush.msra.mxu0 %v2425
    %7748 = vmatpush.msra.mxu0 %v2422
    %7749 = vmatpush.msra.mxu0 %v2419
    %7750 = vmatpush.msra.mxu0 %v2416
    %7751 = vmatpush.msra.mxu0 %v2413
    %7752 = vmatpush.msra.mxu0 %v2410
    %7753 = vmatmul.f32.gmra.mxu0 %v7647
    %v7754 = vpop.f32.mrf.mxu0
    %v7755 = vadd.f32 %v7714, %v7754
    %7756 = vmatmul.f32.gmra.mxu0 %v7648
    %v7757 = vpop.f32.mrf.mxu0
    %v7758 = vadd.f32 %v7717, %v7757
    %7759 = vmatmul.f32.gmra.mxu0 %v7649
    %v7760 = vpop.f32.mrf.mxu0
    %v7761 = vadd.f32 %v7720, %v7760
    %7762 = vmatmul.f32.gmra.mxu0 %v7650
    %v7763 = vpop.f32.mrf.mxu0
    %v7764 = vadd.f32 %v7723, %v7763
    %7765 = vmatmul.f32.gmra.mxu0 %v7651
    %v7766 = vpop.f32.mrf.mxu0
    %v7767 = vadd.f32 %v7726, %v7766
    %7768 = vmatmul.f32.gmra.mxu0 %v7652
    %v7769 = vpop.f32.mrf.mxu0
    %v7770 = vadd.f32 %v7729, %v7769
    %7771 = vmatmul.f32.gmra.mxu0 %v7653
    %v7772 = vpop.f32.mrf.mxu0
    %v7773 = vadd.f32 %v7732, %v7772
    %7774 = vmatmul.f32.gmra.mxu0 %v7654
    %v7775 = vpop.f32.mrf.mxu0
    %v7776 = vadd.f32 %v7735, %v7775
    %7777 = vdwg.mxu0
    %7778 = vmatpush.msra.mxu0 %v2360
    %7779 = vmatpush.msra.mxu0 %v2357
    %7780 = vmatpush.msra.mxu0 %v2354
    %7781 = vmatpush.msra.mxu0 %v2351
    %7782 = vmatpush.msra.mxu0 %v2348
    %7783 = vmatpush.msra.mxu0 %v2345
    %7784 = vmatpush.msra.mxu0 %v2342
    %7785 = vmatpush.msra.mxu0 %v2339
    %7786 = vmatpush.msra.mxu0 %v2336
    %7787 = vmatpush.msra.mxu0 %v2333
    %7788 = vmatpush.msra.mxu0 %v2330
    %7789 = vmatpush.msra.mxu0 %v2327
    %7790 = vmatpush.msra.mxu0 %v2324
    %7791 = vmatpush.msra.mxu0 %v2321
    %7792 = vmatpush.msra.mxu0 %v2318
    %7793 = vmatpush.msra.mxu0 %v2315
    %7794 = vmatmul.f32.gmra.mxu0 %v7631
    %v7795 = vpop.f32.mrf.mxu0
    %v7796 = vadd.f32 %v4869, %v7795
    %7797 = vmatmul.f32.gmra.mxu0 %v7632
    %v7798 = vpop.f32.mrf.mxu0
    %v7799 = vadd.f32 %v4869, %v7798
    %7800 = vmatmul.f32.gmra.mxu0 %v7633
    %v7801 = vpop.f32.mrf.mxu0
    %v7802 = vadd.f32 %v4869, %v7801
    %7803 = vmatmul.f32.gmra.mxu0 %v7634
    %v7804 = vpop.f32.mrf.mxu0
    %v7805 = vadd.f32 %v4869, %v7804
    %7806 = vmatmul.f32.gmra.mxu0 %v7635
    %v7807 = vpop.f32.mrf.mxu0
    %v7808 = vadd.f32 %v4869, %v7807
    %7809 = vmatmul.f32.gmra.mxu0 %v7636
    %v7810 = vpop.f32.mrf.mxu0
    %v7811 = vadd.f32 %v4869, %v7810
    %7812 = vmatmul.f32.gmra.mxu0 %v7637
    %v7813 = vpop.f32.mrf.mxu0
    %v7814 = vadd.f32 %v4869, %v7813
    %7815 = vmatmul.f32.gmra.mxu0 %v7638
    %v7816 = vpop.f32.mrf.mxu0
    %v7817 = vadd.f32 %v4869, %v7816
    %7818 = vdwg.mxu0
    %7819 = vmatpush.msra.mxu0 %v2408
    %7820 = vmatpush.msra.mxu0 %v2405
    %7821 = vmatpush.msra.mxu0 %v2402
    %7822 = vmatpush.msra.mxu0 %v2399
    %7823 = vmatpush.msra.mxu0 %v2396
    %7824 = vmatpush.msra.mxu0 %v2393
    %7825 = vmatpush.msra.mxu0 %v2390
    %7826 = vmatpush.msra.mxu0 %v2387
    %7827 = vmatpush.msra.mxu0 %v2384
    %7828 = vmatpush.msra.mxu0 %v2381
    %7829 = vmatpush.msra.mxu0 %v2378
    %7830 = vmatpush.msra.mxu0 %v2375
    %7831 = vmatpush.msra.mxu0 %v2372
    %7832 = vmatpush.msra.mxu0 %v2369
    %7833 = vmatpush.msra.mxu0 %v2366
    %7834 = vmatpush.msra.mxu0 %v2363
    %7835 = vmatmul.f32.gmra.mxu0 %v7639
    %v7836 = vpop.f32.mrf.mxu0
    %v7837 = vadd.f32 %v7796, %v7836
    %7838 = vmatmul.f32.gmra.mxu0 %v7640
    %v7839 = vpop.f32.mrf.mxu0
    %v7840 = vadd.f32 %v7799, %v7839
    %7841 = vmatmul.f32.gmra.mxu0 %v7641
    %v7842 = vpop.f32.mrf.mxu0
    %v7843 = vadd.f32 %v7802, %v7842
    %7844 = vmatmul.f32.gmra.mxu0 %v7642
    %v7845 = vpop.f32.mrf.mxu0
    %v7846 = vadd.f32 %v7805, %v7845
    %7847 = vmatmul.f32.gmra.mxu0 %v7643
    %v7848 = vpop.f32.mrf.mxu0
    %v7849 = vadd.f32 %v7808, %v7848
    %7850 = vmatmul.f32.gmra.mxu0 %v7644
    %v7851 = vpop.f32.mrf.mxu0
    %v7852 = vadd.f32 %v7811, %v7851
    %7853 = vmatmul.f32.gmra.mxu0 %v7645
    %v7854 = vpop.f32.mrf.mxu0
    %v7855 = vadd.f32 %v7814, %v7854
    %7856 = vmatmul.f32.gmra.mxu0 %v7646
    %v7857 = vpop.f32.mrf.mxu0
    %v7858 = vadd.f32 %v7817, %v7857
    %7859 = vdwg.mxu0
    %7860 = vmatpush.msra.mxu0 %v2456
    %7861 = vmatpush.msra.mxu0 %v2453
    %7862 = vmatpush.msra.mxu0 %v2450
    %7863 = vmatpush.msra.mxu0 %v2447
    %7864 = vmatpush.msra.mxu0 %v2444
    %7865 = vmatpush.msra.mxu0 %v2441
    %7866 = vmatpush.msra.mxu0 %v2438
    %7867 = vmatpush.msra.mxu0 %v2435
    %7868 = vmatpush.msra.mxu0 %v2432
    %7869 = vmatpush.msra.mxu0 %v2429
    %7870 = vmatpush.msra.mxu0 %v2426
    %7871 = vmatpush.msra.mxu0 %v2423
    %7872 = vmatpush.msra.mxu0 %v2420
    %7873 = vmatpush.msra.mxu0 %v2417
    %7874 = vmatpush.msra.mxu0 %v2414
    %7875 = vmatpush.msra.mxu0 %v2411
    %7876 = vmatmul.f32.gmra.mxu0 %v7647
    %v7877 = vpop.f32.mrf.mxu0
    %v7878 = vadd.f32 %v7837, %v7877
    %7879 = vmatmul.f32.gmra.mxu0 %v7648
    %v7880 = vpop.f32.mrf.mxu0
    %v7881 = vadd.f32 %v7840, %v7880
    %7882 = vmatmul.f32.gmra.mxu0 %v7649
    %v7883 = vpop.f32.mrf.mxu0
    %v7884 = vadd.f32 %v7843, %v7883
    %7885 = vmatmul.f32.gmra.mxu0 %v7650
    %v7886 = vpop.f32.mrf.mxu0
    %v7887 = vadd.f32 %v7846, %v7886
    %7888 = vmatmul.f32.gmra.mxu0 %v7651
    %v7889 = vpop.f32.mrf.mxu0
    %v7890 = vadd.f32 %v7849, %v7889
    %7891 = vmatmul.f32.gmra.mxu0 %v7652
    %v7892 = vpop.f32.mrf.mxu0
    %v7893 = vadd.f32 %v7852, %v7892
    %7894 = vmatmul.f32.gmra.mxu0 %v7653
    %v7895 = vpop.f32.mrf.mxu0
    %v7896 = vadd.f32 %v7855, %v7895
    %7897 = vmatmul.f32.gmra.mxu0 %v7654
    %v7898 = vpop.f32.mrf.mxu0
    %v7899 = vadd.f32 %v7858, %v7898
    %7900 = vdwg.mxu0
    %7901 = vmatpush.msra.mxu0 %v2361
    %7902 = vmatpush.msra.mxu0 %v2358
    %7903 = vmatpush.msra.mxu0 %v2355
    %7904 = vmatpush.msra.mxu0 %v2352
    %7905 = vmatpush.msra.mxu0 %v2349
    %7906 = vmatpush.msra.mxu0 %v2346
    %7907 = vmatpush.msra.mxu0 %v2343
    %7908 = vmatpush.msra.mxu0 %v2340
    %7909 = vmatpush.msra.mxu0 %v2337
    %7910 = vmatpush.msra.mxu0 %v2334
    %7911 = vmatpush.msra.mxu0 %v2331
    %7912 = vmatpush.msra.mxu0 %v2328
    %7913 = vmatpush.msra.mxu0 %v2325
    %7914 = vmatpush.msra.mxu0 %v2322
    %7915 = vmatpush.msra.mxu0 %v2319
    %7916 = vmatpush.msra.mxu0 %v2316
    %7917 = vmatmul.f32.gmra.mxu0 %v7631
    %v7918 = vpop.f32.mrf.mxu0
    %v7919 = vadd.f32 %v4870, %v7918
    %7920 = vmatmul.f32.gmra.mxu0 %v7632
    %v7921 = vpop.f32.mrf.mxu0
    %v7922 = vadd.f32 %v4870, %v7921
    %7923 = vmatmul.f32.gmra.mxu0 %v7633
    %v7924 = vpop.f32.mrf.mxu0
    %v7925 = vadd.f32 %v4870, %v7924
    %7926 = vmatmul.f32.gmra.mxu0 %v7634
    %v7927 = vpop.f32.mrf.mxu0
    %v7928 = vadd.f32 %v4870, %v7927
    %7929 = vmatmul.f32.gmra.mxu0 %v7635
    %v7930 = vpop.f32.mrf.mxu0
    %v7931 = vadd.f32 %v4870, %v7930
    %7932 = vmatmul.f32.gmra.mxu0 %v7636
    %v7933 = vpop.f32.mrf.mxu0
    %v7934 = vadd.f32 %v4870, %v7933
    %7935 = vmatmul.f32.gmra.mxu0 %v7637
    %v7936 = vpop.f32.mrf.mxu0
    %v7937 = vadd.f32 %v4870, %v7936
    %7938 = vmatmul.f32.gmra.mxu0 %v7638
    %v7939 = vpop.f32.mrf.mxu0
    %v7940 = vadd.f32 %v4870, %v7939
    %7941 = vdwg.mxu0
    %7942 = vmatpush.msra.mxu0 %v2409
    %7943 = vmatpush.msra.mxu0 %v2406
    %7944 = vmatpush.msra.mxu0 %v2403
    %7945 = vmatpush.msra.mxu0 %v2400
    %7946 = vmatpush.msra.mxu0 %v2397
    %7947 = vmatpush.msra.mxu0 %v2394
    %7948 = vmatpush.msra.mxu0 %v2391
    %7949 = vmatpush.msra.mxu0 %v2388
    %7950 = vmatpush.msra.mxu0 %v2385
    %7951 = vmatpush.msra.mxu0 %v2382
    %7952 = vmatpush.msra.mxu0 %v2379
    %7953 = vmatpush.msra.mxu0 %v2376
    %7954 = vmatpush.msra.mxu0 %v2373
    %7955 = vmatpush.msra.mxu0 %v2370
    %7956 = vmatpush.msra.mxu0 %v2367
    %7957 = vmatpush.msra.mxu0 %v2364
    %7958 = vmatmul.f32.gmra.mxu0 %v7639
    %v7959 = vpop.f32.mrf.mxu0
    %v7960 = vadd.f32 %v7919, %v7959
    %7961 = vmatmul.f32.gmra.mxu0 %v7640
    %v7962 = vpop.f32.mrf.mxu0
    %v7963 = vadd.f32 %v7922, %v7962
    %7964 = vmatmul.f32.gmra.mxu0 %v7641
    %v7965 = vpop.f32.mrf.mxu0
    %v7966 = vadd.f32 %v7925, %v7965
    %7967 = vmatmul.f32.gmra.mxu0 %v7642
    %v7968 = vpop.f32.mrf.mxu0
    %v7969 = vadd.f32 %v7928, %v7968
    %7970 = vmatmul.f32.gmra.mxu0 %v7643
    %v7971 = vpop.f32.mrf.mxu0
    %v7972 = vadd.f32 %v7931, %v7971
    %7973 = vmatmul.f32.gmra.mxu0 %v7644
    %v7974 = vpop.f32.mrf.mxu0
    %v7975 = vadd.f32 %v7934, %v7974
    %7976 = vmatmul.f32.gmra.mxu0 %v7645
    %v7977 = vpop.f32.mrf.mxu0
    %v7978 = vadd.f32 %v7937, %v7977
    %7979 = vmatmul.f32.gmra.mxu0 %v7646
    %v7980 = vpop.f32.mrf.mxu0
    %v7981 = vadd.f32 %v7940, %v7980
    %7982 = vdwg.mxu0
    %7983 = vmatpush.msra.mxu0 %v2457
    %7984 = vmatpush.msra.mxu0 %v2454
    %7985 = vmatpush.msra.mxu0 %v2451
    %7986 = vmatpush.msra.mxu0 %v2448
    %7987 = vmatpush.msra.mxu0 %v2445
    %7988 = vmatpush.msra.mxu0 %v2442
    %7989 = vmatpush.msra.mxu0 %v2439
    %7990 = vmatpush.msra.mxu0 %v2436
    %7991 = vmatpush.msra.mxu0 %v2433
    %7992 = vmatpush.msra.mxu0 %v2430
    %7993 = vmatpush.msra.mxu0 %v2427
    %7994 = vmatpush.msra.mxu0 %v2424
    %7995 = vmatpush.msra.mxu0 %v2421
    %7996 = vmatpush.msra.mxu0 %v2418
    %7997 = vmatpush.msra.mxu0 %v2415
    %7998 = vmatpush.msra.mxu0 %v2412
    %7999 = vmatmul.f32.gmra.mxu0 %v7647
    %v8000 = vpop.f32.mrf.mxu0
    %v8001 = vadd.f32 %v7960, %v8000
    %8002 = vmatmul.f32.gmra.mxu0 %v7648
    %v8003 = vpop.f32.mrf.mxu0
    %v8004 = vadd.f32 %v7963, %v8003
    %8005 = vmatmul.f32.gmra.mxu0 %v7649
    %v8006 = vpop.f32.mrf.mxu0
    %v8007 = vadd.f32 %v7966, %v8006
    %8008 = vmatmul.f32.gmra.mxu0 %v7650
    %v8009 = vpop.f32.mrf.mxu0
    %v8010 = vadd.f32 %v7969, %v8009
    %8011 = vmatmul.f32.gmra.mxu0 %v7651
    %v8012 = vpop.f32.mrf.mxu0
    %v8013 = vadd.f32 %v7972, %v8012
    %8014 = vmatmul.f32.gmra.mxu0 %v7652
    %v8015 = vpop.f32.mrf.mxu0
    %v8016 = vadd.f32 %v7975, %v8015
    %8017 = vmatmul.f32.gmra.mxu0 %v7653
    %v8018 = vpop.f32.mrf.mxu0
    %v8019 = vadd.f32 %v7978, %v8018
    %8020 = vmatmul.f32.gmra.mxu0 %v7654
    %v8021 = vpop.f32.mrf.mxu0
    %v8022 = vadd.f32 %v7981, %v8021
    %8023 = vdwg.mxu0
    %8024 = vst [vmem:[#allocation10 + $0xc0] sm:$0xff] %v7755
    %8025 = vst [vmem:[#allocation10 + $0xc8] sm:$0xff] %v7878
    %8026 = vst [vmem:[#allocation10 + $0xd0] sm:$0xff] %v8001
    %8027 = vst [vmem:[#allocation10 + $0xd8] sm:$0xff] %v7758
    %8028 = vst [vmem:[#allocation10 + $0xe0] sm:$0xff] %v7881
    %8029 = vst [vmem:[#allocation10 + $0xe8] sm:$0xff] %v8004
    %8030 = vst [vmem:[#allocation10 + $0xf0] sm:$0xff] %v7761
    %8031 = vst [vmem:[#allocation10 + $0xf8] sm:$0xff] %v7884
    %8032 = vst [vmem:[#allocation10 + $0x100] sm:$0xff] %v8007
    %8033 = vst [vmem:[#allocation10 + $0x108] sm:$0xff] %v7764
    %8034 = vst [vmem:[#allocation10 + $0x110] sm:$0xff] %v7887
    %8035 = vst [vmem:[#allocation10 + $0x118] sm:$0xff] %v8010
    %8036 = vst [vmem:[#allocation10 + $0x120] sm:$0xff] %v7767
    %8037 = vst [vmem:[#allocation10 + $0x128] sm:$0xff] %v7890
    %8038 = vst [vmem:[#allocation10 + $0x130] sm:$0xff] %v8013
    %8039 = vst [vmem:[#allocation10 + $0x138] sm:$0xff] %v7770
    %8040 = vst [vmem:[#allocation10 + $0x140] sm:$0xff] %v7893
    %8041 = vst [vmem:[#allocation10 + $0x148] sm:$0xff] %v8016
    %8042 = vst [vmem:[#allocation10 + $0x150] sm:$0xff] %v7773
    %8043 = vst [vmem:[#allocation10 + $0x158] sm:$0xff] %v7896
    %8044 = vst [vmem:[#allocation10 + $0x160] sm:$0xff] %v8019
    %8045 = vst [vmem:[#allocation10 + $0x168] sm:$0xff] %v7776
    %8046 = vst [vmem:[#allocation10 + $0x170] sm:$0xff] %v7899
    %8047 = vst [vmem:[#allocation10 + $0x178] sm:$0xff] %v8022
    // Predicated region
    $region34: #{tpu_custom_call.1} parent=1 // pred_check
      _
    $region35: #{tpu_custom_call.1} parent=1 // pred_check_branch
      %8049 = sbr.rel (0) target = $region37
    $region36: #{tpu_custom_call.1} parent=1 // pred_region
      %8051 = vsyncadd [#allocation4], 0
      %s8052 = sshll.u32 [#allocation10], 4
      %s8053 = int_to_ptr.vmem [resolvable:$true] %s8052
      %s8054 = sshll.u32 %s4, 4
      %s8055 = int_to_ptr.hbm [resolvable:$true] %s8054
      %8060 = dma.vmem_to_hbm [thread:$0]  %s8053, 6144, %s8055, [#allocation4], 384, 384, 24
    $region37: #{tpu_custom_call.1} parent=1 // pred_fallthru
      _
    // Predicated region
    $region38: #{tpu_custom_call.1} parent=1 // pred_check
      _
    $region39: #{tpu_custom_call.1} parent=1 // pred_check_branch
      %8062 = sbr.rel (0) target = $region41
    $region40: #{tpu_custom_call.1} parent=1 // pred_region
      %8064 = dma.done [#allocation4], 6144
    $region41: #{tpu_custom_call.1} parent=1 // pred_fallthru
      _
    %8065 = vsyncpa [#allocation3], 1
    %8066 = vsyncpa [#allocation6], 1
    %8067 = vsyncpa [#allocation9], 1
    %8068 = vsyncpa [#allocation4], 1

</llo_original>
